<compile_context>
chip_gen: v7x
topology: tpu7x:2x2x1
jax: 0.10.0
libtpu: 0.0.40
codegen_flags: <defaults>
</compile_context>

<pallas_src>
import functools

import jax
import jax.numpy as jnp
from jax.experimental import pallas as pl
from jax.experimental.pallas import tpu as pltpu


# ----------------------------- Pallas kernel --------------------------------


def _conv_stem_kernel(xq_ref, w1_ref, sh1_ref, w2_ref, sh2_ref, w3_ref, b3_ref,
                      out_ref, *, W, C, D1, D2):
    """Fully fused ConvStem for one (batch, output-row) grid step.

    xq_ref : (1, 4*(H+2), W//4 + 1, C) mod-4 column phases of the zero-padded
             input image: xq[0, 4*h + q, m, :] == x_pad[h, 4*m + q, :].
    w1_ref : (9*C,  D1) conv1 weights per 3x3 tap (BN1 scale folded in).
    w2_ref : (9*D1, D2) conv2 weights per 3x3 tap (BN2 scale folded in).
    w3_ref : (D2, D)    1x1 projection weights.
    sh1/sh2/b3 : per-channel shift / bias, shape (1, ch).
    out_ref: (1, 1, W//4, D) -- one row of the final patch embedding.
    """
    Wo2 = W // 4                       # stage-2 (= output) row width
    i = pl.program_id(1)               # which stage-2 output row
    sh1 = sh1_ref[...]                 # (1, D1)

    def w1_tap(t):                     # (C, D1)
        return w1_ref[t * C:(t + 1) * C, :]

    def w2_tap(t):                     # (D1, D2)
        return w2_ref[t * D1:(t + 1) * D1, :]

    def y1_row(r):
        """Stage-1 activation row r, split into even / odd output columns."""
        acc_e = jnp.zeros((Wo2, D1), jnp.float32)
        acc_o = jnp.zeros((Wo2, D1), jnp.float32)
        for ky in range(3):
            base = 8 * r + 4 * ky                    # = 4 * (2r + ky)
            for kx in range(3):
                w_t = w1_tap(3 * ky + kx)
                # even output cols 2m  -> padded col 4m + kx  (phase kx, block m)
                xe = xq_ref[0, base + kx, 0:Wo2, :]
                acc_e = acc_e + jnp.dot(xe, w_t,
                                        preferred_element_type=jnp.float32)
                # odd output cols 2m+1 -> padded col 4m + 2 + kx
                q = (2 + kx) % 4
                s = 1 if kx == 2 else 0
                xo = xq_ref[0, base + q, s:s + Wo2, :]
                acc_o = acc_o + jnp.dot(xo, w_t,
                                        preferred_element_type=jnp.float32)
        e = jnp.maximum(acc_e + sh1, 0.0)            # folded BN1 shift + ReLU
        o = jnp.maximum(acc_o + sh1, 0.0)
        return e, o

    # ---- Stage 1: the three stage-1 rows feeding stage-2 row i (VMEM only).
    top_valid = (i > 0).astype(jnp.float32)          # row 2i-1 is zero padding at i=0
    e0, o0 = y1_row(jnp.maximum(2 * i - 1, 0))
    e0 = e0 * top_valid
    o0 = o0 * top_valid
    e1, o1 = y1_row(2 * i)
    e2, o2 = y1_row(2 * i + 1)
    rows = ((e0, o0), (e1, o1), (e2, o2))

    # ---- Stage 2: 3x3/s2 conv row i as 9 tap matmuls (+ folded BN2, ReLU).
    acc = jnp.zeros((Wo2, D2), jnp.float32)
    left = jnp.zeros((Wo2, D2), jnp.float32)
    for ky in range(3):
        e, o = rows[ky]
        acc = acc + jnp.dot(e, w2_tap(3 * ky + 1),
                            preferred_element_type=jnp.float32)
        acc = acc + jnp.dot(o, w2_tap(3 * ky + 2),
                            preferred_element_type=jnp.float32)
        left = left + jnp.dot(o, w2_tap(3 * ky + 0),
                              preferred_element_type=jnp.float32)
    # kx == 0 taps read y1[:, 2j-1] == odd column j-1 -> shift the "left"
    # contribution down by one output column (column 0 sees zero padding).
    # Done with a tiny constant subdiagonal matmul (bullet-proof lowering).
    r_ids = jax.lax.broadcasted_iota(jnp.int32, (Wo2, Wo2), 0)
    c_ids = jax.lax.broadcasted_iota(jnp.int32, (Wo2, Wo2), 1)
    shift_mat = (r_ids == c_ids + 1).astype(jnp.float32)
    shifted = jnp.dot(shift_mat, left, preferred_element_type=jnp.float32)
    y2 = jnp.maximum(acc + shifted + sh2_ref[...], 0.0)      # (Wo2, D2)

    # ---- Stage 3: 1x1 conv to embed_dim (bias, no activation), fused store.
    out = jnp.dot(y2, w3_ref[...], preferred_element_type=jnp.float32)
    out = out + b3_ref[...]
    out_ref[0, 0, :, :] = out.astype(out_ref.dtype)


# ------------------------------ JAX wrapper ----------------------------------


def conv_stem_forward(params, x_nchw, *, img_size):
    """ConvStem forward: (B, C, H, W) -> (B, (H//4)*(W//4), embed_dim)."""
    B, C, H, W = x_nchw.shape
    assert H == img_size and W == img_size, "Input image size doesn't match model."
    assert H % 4 == 0 and W % 4 == 0, "ConvStem (patch_size=4) needs H, W % 4 == 0."

    D1 = params["w1f"].shape[1]
    D2 = params["w2f"].shape[1]
    D = params["w3"].shape[1]
    Ho1, Wo1 = H // 2, W // 2
    Ho2, Wo2 = H // 4, W // 4
    Wq = W // 4 + 1                                   # mod-4 column blocks

    # Layout-only prep (no 9x im2col expansion): NCHW -> NHWC, zero pad,
    # mod-4 column-phase split so the kernel only needs contiguous slices.
    x = jnp.transpose(x_nchw, (0, 2, 3, 1)).astype(jnp.float32)     # (B,H,W,C)
    xp = jnp.pad(x, ((0, 0), (1, 1), (1, 3), (0, 0)))               # (B,H+2,W+4,C)
    xq = xp.reshape(B, H + 2, Wq, 4, C).transpose(0, 1, 3, 2, 4)    # (B,H+2,4,Wq,C)
    xq = xq.reshape(B, 4 * (H + 2), Wq, C)

    kernel = functools.partial(_conv_stem_kernel, W=W, C=C, D1=D1, D2=D2)

    flops = 2 * B * (Ho1 * Wo1 * 9 * C * D1
                     + Ho2 * Wo2 * 9 * D1 * D2
                     + Ho2 * Wo2 * D2 * D)
    bytes_accessed = 4 * (xq.size + params["w1f"].size + params["w2f"].size
                          + params["w3"].size + params["sh1"].size
                          + params["sh2"].size + params["b3"].size
                          + B * Ho2 * Wo2 * D)

    out = pl.pallas_call(
        kernel,
        out_shape=jax.ShapeDtypeStruct((B, Ho2, Wo2, D), jnp.float32),
        grid=(B, Ho2),
        in_specs=[
            pl.BlockSpec((1, 4 * (H + 2), Wq, C), lambda b, i: (b, 0, 0, 0)),
            pl.BlockSpec((9 * C, D1), lambda b, i: (0, 0)),
            pl.BlockSpec((1, D1), lambda b, i: (0, 0)),
            pl.BlockSpec((9 * D1, D2), lambda b, i: (0, 0)),
            pl.BlockSpec((1, D2), lambda b, i: (0, 0)),
            pl.BlockSpec((D2, D), lambda b, i: (0, 0)),
            pl.BlockSpec((1, D), lambda b, i: (0, 0)),
        ],
        out_specs=pl.BlockSpec((1, 1, Wo2, D), lambda b, i: (b, i, 0, 0)),
        compiler_params=pltpu.CompilerParams(
            dimension_semantics=("parallel", "parallel")),
        cost_estimate=pl.CostEstimate(flops=flops, transcendentals=0,
                                      bytes_accessed=bytes_accessed),
    )(xq, params["w1f"], params["sh1"], params["w2f"], params["sh2"],
      params["w3"], params["b3"])

    # flatten(2).transpose(1, 2); norm_layer=None -> Identity.
    return out.reshape(B, Ho2 * Wo2, D)


# ------------------------------ parameters -----------------------------------


def fold_bn(gamma, beta, mean, var, eps=1e-5):
    scale = gamma / jnp.sqrt(var + eps)
    shift = beta - mean * scale
    return scale, shift


def init_raw_params(key, embed_dim=32, in_chans=3):
    """Torch-like ConvStem parameters (eval-mode BatchNorm statistics)."""
    assert embed_dim % 8 == 0
    d1, d2 = embed_dim // 8, embed_dim // 4
    ks = jax.random.split(key, 12)

    def bn(kg, kb, km, kv, c):
        gamma = 1.0 + 0.1 * jax.random.normal(kg, (c,), jnp.float32)
        beta = 0.05 * jax.random.normal(kb, (c,), jnp.float32)
        mean = 0.1 * jax.random.normal(km, (c,), jnp.float32)
        var = 1.0 + 0.1 * jax.random.uniform(kv, (c,), jnp.float32)
        return fold_bn(gamma, beta, mean, var)

    w1 = 0.1 * jax.random.normal(ks[0], (3, 3, in_chans, d1), jnp.float32)  # HWIO
    scale1, shift1 = bn(ks[1], ks[2], ks[3], ks[4], d1)
    w2 = 0.1 * jax.random.normal(ks[5], (3, 3, d1, d2), jnp.float32)
    scale2, shift2 = bn(ks[6], ks[7], ks[8], ks[9], d2)
    w3 = 0.1 * jax.random.normal(ks[10], (d2, embed_dim), jnp.float32)
    b3 = 0.05 * jax.random.normal(ks[11], (embed_dim,), jnp.float32)
    return dict(w1=w1, scale1=scale1, shift1=shift1,
                w2=w2, scale2=scale2, shift2=shift2, w3=w3, b3=b3)


def fold_params(raw):
    """Fold eval-mode BN scale into the conv weights; kernel-ready layout."""
    # TODO(synk): BatchNorm is folded in eval (running-stats) mode; a fresh torch
    # module in train mode would use batch statistics instead.
    c = raw["w1"].shape[2]
    d1 = raw["w1"].shape[3]
    w1 = raw["w1"] * raw["scale1"][None, None, None, :]
    w2 = raw["w2"] * raw["scale2"][None, None, None, :]
    return dict(
        w1f=w1.reshape(9 * c, d1),
        sh1=raw["shift1"].reshape(1, -1),
        w2f=w2.reshape(9 * d1, -1),
        sh2=raw["shift2"].reshape(1, -1),
        w3=raw["w3"],
        b3=raw["b3"].reshape(1, -1),
    )


# ------------------------------ XLA reference ---------------------------------


def conv_stem_reference(raw, x_nchw):
    """Pure-JAX (XLA) reference of the same eval-mode ConvStem."""
    hi = jax.lax.Precision.HIGHEST
    dn = ("NHWC", "HWIO", "NHWC")
    x = jnp.transpose(x_nchw, (0, 2, 3, 1)).astype(jnp.float32)
    y = jax.lax.conv_general_dilated(x, raw["w1"], (2, 2), ((1, 1), (1, 1)),
                                     dimension_numbers=dn, precision=hi)
    y = jnp.maximum(y * raw["scale1"] + raw["shift1"], 0.0)
    y = jax.lax.conv_general_dilated(y, raw["w2"], (2, 2), ((1, 1), (1, 1)),
                                     dimension_numbers=dn, precision=hi)
    y = jnp.maximum(y * raw["scale2"] + raw["shift2"], 0.0)
    y = jnp.einsum("bhwc,cd->bhwd", y, raw["w3"], precision=hi) + raw["b3"]
    B, Hh, Ww, D = y.shape
    return y.reshape(B, Hh * Ww, D)


# --------------------------------- main ---------------------------------------

if __name__ == "__main__":
    key = jax.random.PRNGKey(0)
    k_param, k_x = jax.random.split(key)

    img_size = 16        # patch_size = 4 -> 4x4 grid, 16 patches
    embed_dim = 32       # embed_dim % 8 == 0
    batch = 2
    in_chans = 3         # the torch stem hard-codes 3 input channels

    raw = init_raw_params(k_param, embed_dim=embed_dim, in_chans=in_chans)
    params = fold_params(raw)
    x = jax.random.normal(k_x, (batch, in_chans, img_size, img_size), jnp.float32)

    fwd = jax.jit(functools.partial(conv_stem_forward, img_size=img_size))
    out = jax.block_until_ready(fwd(params, x))

    assert out.shape == (batch, (img_size // 4) ** 2, embed_dim), out.shape
    assert bool(jnp.all(jnp.isfinite(out)))

    ref = conv_stem_reference(raw, x)
    max_err = float(jnp.max(jnp.abs(out - ref)))
    assert max_err < 1e-3, f"mismatch vs XLA reference: {max_err}"

    print("KERNEL_OK")
</pallas_src>

<mosaic_0001>
module attributes {stable_mosaic.version = 11 : i64} {
  func.func @_conv_stem_kernel(%arg0: i32, %arg1: i32, %arg2: memref<1x72x5x3xf32, #tpu.memory_space<vmem>>, %arg3: memref<27x4xf32, #tpu.memory_space<vmem>>, %arg4: memref<1x4xf32, #tpu.memory_space<vmem>>, %arg5: memref<36x8xf32, #tpu.memory_space<vmem>>, %arg6: memref<1x8xf32, #tpu.memory_space<vmem>>, %arg7: memref<8x32xf32, #tpu.memory_space<vmem>>, %arg8: memref<1x32xf32, #tpu.memory_space<vmem>>, %arg9: memref<1x1x4x32xf32, #tpu.memory_space<vmem>>) attributes {dimension_semantics = [#tpu.dimension_semantics<parallel>, #tpu.dimension_semantics<parallel>], iteration_bounds = array<i64: 2, 4>, scalar_prefetch = 0 : i64, scratch_operands = 0 : i64, tpu.core_type = #tpu.core_type<tc>, window_params = [{transform_indices = @transform_0, window_bounds = array<i64: 1, 72, 5, 3>}, {pipeline_mode = #tpu.pipeline_mode<synchronous>, transform_indices = @transform_1, window_bounds = array<i64: 27, 4>}, {pipeline_mode = #tpu.pipeline_mode<synchronous>, transform_indices = @transform_2, window_bounds = array<i64: 1, 4>}, {pipeline_mode = #tpu.pipeline_mode<synchronous>, transform_indices = @transform_3, window_bounds = array<i64: 36, 8>}, {pipeline_mode = #tpu.pipeline_mode<synchronous>, transform_indices = @transform_4, window_bounds = array<i64: 1, 8>}, {pipeline_mode = #tpu.pipeline_mode<synchronous>, transform_indices = @transform_5, window_bounds = array<i64: 8, 32>}, {pipeline_mode = #tpu.pipeline_mode<synchronous>, transform_indices = @transform_6, window_bounds = array<i64: 1, 32>}, {transform_indices = @transform_7, window_bounds = array<i64: 1, 1, 4, 32>}]} {
    %c0 = arith.constant 0 : index
    %c0_0 = arith.constant 0 : index
    %0 = vector.load %arg4[%c0, %c0_0] : memref<1x4xf32, #tpu.memory_space<vmem>>, vector<1x4xf32>
    %c0_i32 = arith.constant 0 : i32
    %1 = arith.cmpi sgt, %arg1, %c0_i32 : i32
    %2 = arith.extui %1 : i1 to i32
    %3 = arith.sitofp %2 : i32 to f32
    %c2_i32 = arith.constant 2 : i32
    %4 = arith.muli %c2_i32, %arg1 : i32
    %c1_i32 = arith.constant 1 : i32
    %5 = arith.subi %4, %c1_i32 : i32
    %c0_i32_1 = arith.constant 0 : i32
    %6 = arith.maxsi %5, %c0_i32_1 : i32
    %cst = arith.constant 0.000000e+00 : f32
    %7 = vector.broadcast %cst : f32 to vector<4x4xf32>
    %cst_2 = arith.constant 0.000000e+00 : f32
    %8 = vector.broadcast %cst_2 : f32 to vector<4x4xf32>
    %c8_i32 = arith.constant 8 : i32
    %9 = arith.muli %c8_i32, %6 : i32
    %c0_i32_3 = arith.constant 0 : i32
    %10 = arith.addi %9, %c0_i32_3 : i32
    %c0_4 = arith.constant 0 : index
    %c0_5 = arith.constant 0 : index
    %11 = vector.load %arg3[%c0_4, %c0_5] : memref<27x4xf32, #tpu.memory_space<vmem>>, vector<3x4xf32>
    %c0_i32_6 = arith.constant 0 : i32
    %12 = arith.addi %10, %c0_i32_6 : i32
    %c0_7 = arith.constant 0 : index
    %13 = arith.index_cast %12 : i32 to index
    %c0_8 = arith.constant 0 : index
    %c0_9 = arith.constant 0 : index
    %14 = vector.load %arg2[%c0_7, %13, %c0_8, %c0_9] : memref<1x72x5x3xf32, #tpu.memory_space<vmem>>, vector<1x1x4x3xf32>
    %15 = vector.shape_cast %14 : vector<1x1x4x3xf32> to vector<4x3xf32>
    %cst_10 = arith.constant dense<0.000000e+00> : vector<4x4xf32>
    %16 = tpu.matmul %15, %11, %cst_10 {dimension_numbers = #tpu.dot_dimension_numbers<[1], [0], [0], [1], [0, 0, 1, 1], [], []>} : vector<4x3xf32>, vector<3x4xf32>, vector<4x4xf32> -> vector<4x4xf32>
    %17 = arith.addf %7, %16 : vector<4x4xf32>
    %c2_i32_11 = arith.constant 2 : i32
    %18 = arith.addi %10, %c2_i32_11 : i32
    %c0_12 = arith.constant 0 : index
    %19 = arith.index_cast %18 : i32 to index
    %c0_13 = arith.constant 0 : index
    %c0_14 = arith.constant 0 : index
    %20 = vector.load %arg2[%c0_12, %19, %c0_13, %c0_14] : memref<1x72x5x3xf32, #tpu.memory_space<vmem>>, vector<1x1x4x3xf32>
    %21 = vector.shape_cast %20 : vector<1x1x4x3xf32> to vector<4x3xf32>
    %cst_15 = arith.constant dense<0.000000e+00> : vector<4x4xf32>
    %22 = tpu.matmul %21, %11, %cst_15 {dimension_numbers = #tpu.dot_dimension_numbers<[1], [0], [0], [1], [0, 0, 1, 1], [], []>} : vector<4x3xf32>, vector<3x4xf32>, vector<4x4xf32> -> vector<4x4xf32>
    %23 = arith.addf %8, %22 : vector<4x4xf32>
    %c3 = arith.constant 3 : index
    %c0_16 = arith.constant 0 : index
    %24 = vector.load %arg3[%c3, %c0_16] : memref<27x4xf32, #tpu.memory_space<vmem>>, vector<3x4xf32>
    %c1_i32_17 = arith.constant 1 : i32
    %25 = arith.addi %10, %c1_i32_17 : i32
    %c0_18 = arith.constant 0 : index
    %26 = arith.index_cast %25 : i32 to index
    %c0_19 = arith.constant 0 : index
    %c0_20 = arith.constant 0 : index
    %27 = vector.load %arg2[%c0_18, %26, %c0_19, %c0_20] : memref<1x72x5x3xf32, #tpu.memory_space<vmem>>, vector<1x1x4x3xf32>
    %28 = vector.shape_cast %27 : vector<1x1x4x3xf32> to vector<4x3xf32>
    %cst_21 = arith.constant dense<0.000000e+00> : vector<4x4xf32>
    %29 = tpu.matmul %28, %24, %cst_21 {dimension_numbers = #tpu.dot_dimension_numbers<[1], [0], [0], [1], [0, 0, 1, 1], [], []>} : vector<4x3xf32>, vector<3x4xf32>, vector<4x4xf32> -> vector<4x4xf32>
    %30 = arith.addf %17, %29 : vector<4x4xf32>
    %c3_i32 = arith.constant 3 : i32
    %31 = arith.addi %10, %c3_i32 : i32
    %c0_22 = arith.constant 0 : index
    %32 = arith.index_cast %31 : i32 to index
    %c0_23 = arith.constant 0 : index
    %c0_24 = arith.constant 0 : index
    %33 = vector.load %arg2[%c0_22, %32, %c0_23, %c0_24] : memref<1x72x5x3xf32, #tpu.memory_space<vmem>>, vector<1x1x4x3xf32>
    %34 = vector.shape_cast %33 : vector<1x1x4x3xf32> to vector<4x3xf32>
    %cst_25 = arith.constant dense<0.000000e+00> : vector<4x4xf32>
    %35 = tpu.matmul %34, %24, %cst_25 {dimension_numbers = #tpu.dot_dimension_numbers<[1], [0], [0], [1], [0, 0, 1, 1], [], []>} : vector<4x3xf32>, vector<3x4xf32>, vector<4x4xf32> -> vector<4x4xf32>
    %36 = arith.addf %23, %35 : vector<4x4xf32>
    %c6 = arith.constant 6 : index
    %c0_26 = arith.constant 0 : index
    %37 = vector.load %arg3[%c6, %c0_26] : memref<27x4xf32, #tpu.memory_space<vmem>>, vector<3x4xf32>
    %c2_i32_27 = arith.constant 2 : i32
    %38 = arith.addi %10, %c2_i32_27 : i32
    %c0_28 = arith.constant 0 : index
    %39 = arith.index_cast %38 : i32 to index
    %c0_29 = arith.constant 0 : index
    %c0_30 = arith.constant 0 : index
    %40 = vector.load %arg2[%c0_28, %39, %c0_29, %c0_30] : memref<1x72x5x3xf32, #tpu.memory_space<vmem>>, vector<1x1x4x3xf32>
    %41 = vector.shape_cast %40 : vector<1x1x4x3xf32> to vector<4x3xf32>
    %cst_31 = arith.constant dense<0.000000e+00> : vector<4x4xf32>
    %42 = tpu.matmul %41, %37, %cst_31 {dimension_numbers = #tpu.dot_dimension_numbers<[1], [0], [0], [1], [0, 0, 1, 1], [], []>} : vector<4x3xf32>, vector<3x4xf32>, vector<4x4xf32> -> vector<4x4xf32>
    %43 = arith.addf %30, %42 : vector<4x4xf32>
    %c0_i32_32 = arith.constant 0 : i32
    %44 = arith.addi %10, %c0_i32_32 : i32
    %c0_33 = arith.constant 0 : index
    %45 = arith.index_cast %44 : i32 to index
    %c1 = arith.constant 1 : index
    %c0_34 = arith.constant 0 : index
    %46 = vector.load %arg2[%c0_33, %45, %c1, %c0_34] : memref<1x72x5x3xf32, #tpu.memory_space<vmem>>, vector<1x1x4x3xf32>
    %47 = vector.shape_cast %46 : vector<1x1x4x3xf32> to vector<4x3xf32>
    %cst_35 = arith.constant dense<0.000000e+00> : vector<4x4xf32>
    %48 = tpu.matmul %47, %37, %cst_35 {dimension_numbers = #tpu.dot_dimension_numbers<[1], [0], [0], [1], [0, 0, 1, 1], [], []>} : vector<4x3xf32>, vector<3x4xf32>, vector<4x4xf32> -> vector<4x4xf32>
    %49 = arith.addf %36, %48 : vector<4x4xf32>
    %c8_i32_36 = arith.constant 8 : i32
    %50 = arith.muli %c8_i32_36, %6 : i32
    %c4_i32 = arith.constant 4 : i32
    %51 = arith.addi %50, %c4_i32 : i32
    %c9 = arith.constant 9 : index
    %c0_37 = arith.constant 0 : index
    %52 = vector.load %arg3[%c9, %c0_37] : memref<27x4xf32, #tpu.memory_space<vmem>>, vector<3x4xf32>
    %c0_i32_38 = arith.constant 0 : i32
    %53 = arith.addi %51, %c0_i32_38 : i32
    %c0_39 = arith.constant 0 : index
    %54 = arith.index_cast %53 : i32 to index
    %c0_40 = arith.constant 0 : index
    %c0_41 = arith.constant 0 : index
    %55 = vector.load %arg2[%c0_39, %54, %c0_40, %c0_41] : memref<1x72x5x3xf32, #tpu.memory_space<vmem>>, vector<1x1x4x3xf32>
    %56 = vector.shape_cast %55 : vector<1x1x4x3xf32> to vector<4x3xf32>
    %cst_42 = arith.constant dense<0.000000e+00> : vector<4x4xf32>
    %57 = tpu.matmul %56, %52, %cst_42 {dimension_numbers = #tpu.dot_dimension_numbers<[1], [0], [0], [1], [0, 0, 1, 1], [], []>} : vector<4x3xf32>, vector<3x4xf32>, vector<4x4xf32> -> vector<4x4xf32>
    %58 = arith.addf %43, %57 : vector<4x4xf32>
    %c2_i32_43 = arith.constant 2 : i32
    %59 = arith.addi %51, %c2_i32_43 : i32
    %c0_44 = arith.constant 0 : index
    %60 = arith.index_cast %59 : i32 to index
    %c0_45 = arith.constant 0 : index
    %c0_46 = arith.constant 0 : index
    %61 = vector.load %arg2[%c0_44, %60, %c0_45, %c0_46] : memref<1x72x5x3xf32, #tpu.memory_space<vmem>>, vector<1x1x4x3xf32>
    %62 = vector.shape_cast %61 : vector<1x1x4x3xf32> to vector<4x3xf32>
    %cst_47 = arith.constant dense<0.000000e+00> : vector<4x4xf32>
    %63 = tpu.matmul %62, %52, %cst_47 {dimension_numbers = #tpu.dot_dimension_numbers<[1], [0], [0], [1], [0, 0, 1, 1], [], []>} : vector<4x3xf32>, vector<3x4xf32>, vector<4x4xf32> -> vector<4x4xf32>
    %64 = arith.addf %49, %63 : vector<4x4xf32>
    %c12 = arith.constant 12 : index
    %c0_48 = arith.constant 0 : index
    %65 = vector.load %arg3[%c12, %c0_48] : memref<27x4xf32, #tpu.memory_space<vmem>>, vector<3x4xf32>
    %c1_i32_49 = arith.constant 1 : i32
    %66 = arith.addi %51, %c1_i32_49 : i32
    %c0_50 = arith.constant 0 : index
    %67 = arith.index_cast %66 : i32 to index
    %c0_51 = arith.constant 0 : index
    %c0_52 = arith.constant 0 : index
    %68 = vector.load %arg2[%c0_50, %67, %c0_51, %c0_52] : memref<1x72x5x3xf32, #tpu.memory_space<vmem>>, vector<1x1x4x3xf32>
    %69 = vector.shape_cast %68 : vector<1x1x4x3xf32> to vector<4x3xf32>
    %cst_53 = arith.constant dense<0.000000e+00> : vector<4x4xf32>
    %70 = tpu.matmul %69, %65, %cst_53 {dimension_numbers = #tpu.dot_dimension_numbers<[1], [0], [0], [1], [0, 0, 1, 1], [], []>} : vector<4x3xf32>, vector<3x4xf32>, vector<4x4xf32> -> vector<4x4xf32>
    %71 = arith.addf %58, %70 : vector<4x4xf32>
    %c3_i32_54 = arith.constant 3 : i32
    %72 = arith.addi %51, %c3_i32_54 : i32
    %c0_55 = arith.constant 0 : index
    %73 = arith.index_cast %72 : i32 to index
    %c0_56 = arith.constant 0 : index
    %c0_57 = arith.constant 0 : index
    %74 = vector.load %arg2[%c0_55, %73, %c0_56, %c0_57] : memref<1x72x5x3xf32, #tpu.memory_space<vmem>>, vector<1x1x4x3xf32>
    %75 = vector.shape_cast %74 : vector<1x1x4x3xf32> to vector<4x3xf32>
    %cst_58 = arith.constant dense<0.000000e+00> : vector<4x4xf32>
    %76 = tpu.matmul %75, %65, %cst_58 {dimension_numbers = #tpu.dot_dimension_numbers<[1], [0], [0], [1], [0, 0, 1, 1], [], []>} : vector<4x3xf32>, vector<3x4xf32>, vector<4x4xf32> -> vector<4x4xf32>
    %77 = arith.addf %64, %76 : vector<4x4xf32>
    %c15 = arith.constant 15 : index
    %c0_59 = arith.constant 0 : index
    %78 = vector.load %arg3[%c15, %c0_59] : memref<27x4xf32, #tpu.memory_space<vmem>>, vector<3x4xf32>
    %c2_i32_60 = arith.constant 2 : i32
    %79 = arith.addi %51, %c2_i32_60 : i32
    %c0_61 = arith.constant 0 : index
    %80 = arith.index_cast %79 : i32 to index
    %c0_62 = arith.constant 0 : index
    %c0_63 = arith.constant 0 : index
    %81 = vector.load %arg2[%c0_61, %80, %c0_62, %c0_63] : memref<1x72x5x3xf32, #tpu.memory_space<vmem>>, vector<1x1x4x3xf32>
    %82 = vector.shape_cast %81 : vector<1x1x4x3xf32> to vector<4x3xf32>
    %cst_64 = arith.constant dense<0.000000e+00> : vector<4x4xf32>
    %83 = tpu.matmul %82, %78, %cst_64 {dimension_numbers = #tpu.dot_dimension_numbers<[1], [0], [0], [1], [0, 0, 1, 1], [], []>} : vector<4x3xf32>, vector<3x4xf32>, vector<4x4xf32> -> vector<4x4xf32>
    %84 = arith.addf %71, %83 : vector<4x4xf32>
    %c0_i32_65 = arith.constant 0 : i32
    %85 = arith.addi %51, %c0_i32_65 : i32
    %c0_66 = arith.constant 0 : index
    %86 = arith.index_cast %85 : i32 to index
    %c1_67 = arith.constant 1 : index
    %c0_68 = arith.constant 0 : index
    %87 = vector.load %arg2[%c0_66, %86, %c1_67, %c0_68] : memref<1x72x5x3xf32, #tpu.memory_space<vmem>>, vector<1x1x4x3xf32>
    %88 = vector.shape_cast %87 : vector<1x1x4x3xf32> to vector<4x3xf32>
    %cst_69 = arith.constant dense<0.000000e+00> : vector<4x4xf32>
    %89 = tpu.matmul %88, %78, %cst_69 {dimension_numbers = #tpu.dot_dimension_numbers<[1], [0], [0], [1], [0, 0, 1, 1], [], []>} : vector<4x3xf32>, vector<3x4xf32>, vector<4x4xf32> -> vector<4x4xf32>
    %90 = arith.addf %77, %89 : vector<4x4xf32>
    %c8_i32_70 = arith.constant 8 : i32
    %91 = arith.muli %c8_i32_70, %6 : i32
    %c8_i32_71 = arith.constant 8 : i32
    %92 = arith.addi %91, %c8_i32_71 : i32
    %c18 = arith.constant 18 : index
    %c0_72 = arith.constant 0 : index
    %93 = vector.load %arg3[%c18, %c0_72] : memref<27x4xf32, #tpu.memory_space<vmem>>, vector<3x4xf32>
    %c0_i32_73 = arith.constant 0 : i32
    %94 = arith.addi %92, %c0_i32_73 : i32
    %c0_74 = arith.constant 0 : index
    %95 = arith.index_cast %94 : i32 to index
    %c0_75 = arith.constant 0 : index
    %c0_76 = arith.constant 0 : index
    %96 = vector.load %arg2[%c0_74, %95, %c0_75, %c0_76] : memref<1x72x5x3xf32, #tpu.memory_space<vmem>>, vector<1x1x4x3xf32>
    %97 = vector.shape_cast %96 : vector<1x1x4x3xf32> to vector<4x3xf32>
    %cst_77 = arith.constant dense<0.000000e+00> : vector<4x4xf32>
    %98 = tpu.matmul %97, %93, %cst_77 {dimension_numbers = #tpu.dot_dimension_numbers<[1], [0], [0], [1], [0, 0, 1, 1], [], []>} : vector<4x3xf32>, vector<3x4xf32>, vector<4x4xf32> -> vector<4x4xf32>
    %99 = arith.addf %84, %98 : vector<4x4xf32>
    %c2_i32_78 = arith.constant 2 : i32
    %100 = arith.addi %92, %c2_i32_78 : i32
    %c0_79 = arith.constant 0 : index
    %101 = arith.index_cast %100 : i32 to index
    %c0_80 = arith.constant 0 : index
    %c0_81 = arith.constant 0 : index
    %102 = vector.load %arg2[%c0_79, %101, %c0_80, %c0_81] : memref<1x72x5x3xf32, #tpu.memory_space<vmem>>, vector<1x1x4x3xf32>
    %103 = vector.shape_cast %102 : vector<1x1x4x3xf32> to vector<4x3xf32>
    %cst_82 = arith.constant dense<0.000000e+00> : vector<4x4xf32>
    %104 = tpu.matmul %103, %93, %cst_82 {dimension_numbers = #tpu.dot_dimension_numbers<[1], [0], [0], [1], [0, 0, 1, 1], [], []>} : vector<4x3xf32>, vector<3x4xf32>, vector<4x4xf32> -> vector<4x4xf32>
    %105 = arith.addf %90, %104 : vector<4x4xf32>
    %c21 = arith.constant 21 : index
    %c0_83 = arith.constant 0 : index
    %106 = vector.load %arg3[%c21, %c0_83] : memref<27x4xf32, #tpu.memory_space<vmem>>, vector<3x4xf32>
    %c1_i32_84 = arith.constant 1 : i32
    %107 = arith.addi %92, %c1_i32_84 : i32
    %c0_85 = arith.constant 0 : index
    %108 = arith.index_cast %107 : i32 to index
    %c0_86 = arith.constant 0 : index
    %c0_87 = arith.constant 0 : index
    %109 = vector.load %arg2[%c0_85, %108, %c0_86, %c0_87] : memref<1x72x5x3xf32, #tpu.memory_space<vmem>>, vector<1x1x4x3xf32>
    %110 = vector.shape_cast %109 : vector<1x1x4x3xf32> to vector<4x3xf32>
    %cst_88 = arith.constant dense<0.000000e+00> : vector<4x4xf32>
    %111 = tpu.matmul %110, %106, %cst_88 {dimension_numbers = #tpu.dot_dimension_numbers<[1], [0], [0], [1], [0, 0, 1, 1], [], []>} : vector<4x3xf32>, vector<3x4xf32>, vector<4x4xf32> -> vector<4x4xf32>
    %112 = arith.addf %99, %111 : vector<4x4xf32>
    %c3_i32_89 = arith.constant 3 : i32
    %113 = arith.addi %92, %c3_i32_89 : i32
    %c0_90 = arith.constant 0 : index
    %114 = arith.index_cast %113 : i32 to index
    %c0_91 = arith.constant 0 : index
    %c0_92 = arith.constant 0 : index
    %115 = vector.load %arg2[%c0_90, %114, %c0_91, %c0_92] : memref<1x72x5x3xf32, #tpu.memory_space<vmem>>, vector<1x1x4x3xf32>
    %116 = vector.shape_cast %115 : vector<1x1x4x3xf32> to vector<4x3xf32>
    %cst_93 = arith.constant dense<0.000000e+00> : vector<4x4xf32>
    %117 = tpu.matmul %116, %106, %cst_93 {dimension_numbers = #tpu.dot_dimension_numbers<[1], [0], [0], [1], [0, 0, 1, 1], [], []>} : vector<4x3xf32>, vector<3x4xf32>, vector<4x4xf32> -> vector<4x4xf32>
    %118 = arith.addf %105, %117 : vector<4x4xf32>
    %c24 = arith.constant 24 : index
    %c0_94 = arith.constant 0 : index
    %119 = vector.load %arg3[%c24, %c0_94] : memref<27x4xf32, #tpu.memory_space<vmem>>, vector<3x4xf32>
    %c2_i32_95 = arith.constant 2 : i32
    %120 = arith.addi %92, %c2_i32_95 : i32
    %c0_96 = arith.constant 0 : index
    %121 = arith.index_cast %120 : i32 to index
    %c0_97 = arith.constant 0 : index
    %c0_98 = arith.constant 0 : index
    %122 = vector.load %arg2[%c0_96, %121, %c0_97, %c0_98] : memref<1x72x5x3xf32, #tpu.memory_space<vmem>>, vector<1x1x4x3xf32>
    %123 = vector.shape_cast %122 : vector<1x1x4x3xf32> to vector<4x3xf32>
    %cst_99 = arith.constant dense<0.000000e+00> : vector<4x4xf32>
    %124 = tpu.matmul %123, %119, %cst_99 {dimension_numbers = #tpu.dot_dimension_numbers<[1], [0], [0], [1], [0, 0, 1, 1], [], []>} : vector<4x3xf32>, vector<3x4xf32>, vector<4x4xf32> -> vector<4x4xf32>
    %125 = arith.addf %112, %124 : vector<4x4xf32>
    %c0_i32_100 = arith.constant 0 : i32
    %126 = arith.addi %92, %c0_i32_100 : i32
    %c0_101 = arith.constant 0 : index
    %127 = arith.index_cast %126 : i32 to index
    %c1_102 = arith.constant 1 : index
    %c0_103 = arith.constant 0 : index
    %128 = vector.load %arg2[%c0_101, %127, %c1_102, %c0_103] : memref<1x72x5x3xf32, #tpu.memory_space<vmem>>, vector<1x1x4x3xf32>
    %129 = vector.shape_cast %128 : vector<1x1x4x3xf32> to vector<4x3xf32>
    %cst_104 = arith.constant dense<0.000000e+00> : vector<4x4xf32>
    %130 = tpu.matmul %129, %119, %cst_104 {dimension_numbers = #tpu.dot_dimension_numbers<[1], [0], [0], [1], [0, 0, 1, 1], [], []>} : vector<4x3xf32>, vector<3x4xf32>, vector<4x4xf32> -> vector<4x4xf32>
    %131 = arith.addf %118, %130 : vector<4x4xf32>
    %132 = vector.broadcast %0 : vector<1x4xf32> to vector<4x4xf32>
    %133 = arith.addf %125, %132 : vector<4x4xf32>
    %cst_105 = arith.constant 0.000000e+00 : f32
    %134 = vector.broadcast %cst_105 : f32 to vector<4x4xf32>
    %135 = arith.maximumf %133, %134 : vector<4x4xf32>
    %136 = vector.broadcast %0 : vector<1x4xf32> to vector<4x4xf32>
    %137 = arith.addf %131, %136 : vector<4x4xf32>
    %cst_106 = arith.constant 0.000000e+00 : f32
    %138 = vector.broadcast %cst_106 : f32 to vector<4x4xf32>
    %139 = arith.maximumf %137, %138 : vector<4x4xf32>
    %140 = vector.broadcast %3 : f32 to vector<4x4xf32>
    %141 = arith.mulf %135, %140 : vector<4x4xf32>
    %142 = vector.broadcast %3 : f32 to vector<4x4xf32>
    %143 = arith.mulf %139, %142 : vector<4x4xf32>
    %c2_i32_107 = arith.constant 2 : i32
    %144 = arith.muli %c2_i32_107, %arg1 : i32
    %cst_108 = arith.constant 0.000000e+00 : f32
    %145 = vector.broadcast %cst_108 : f32 to vector<4x4xf32>
    %cst_109 = arith.constant 0.000000e+00 : f32
    %146 = vector.broadcast %cst_109 : f32 to vector<4x4xf32>
    %c8_i32_110 = arith.constant 8 : i32
    %147 = arith.muli %c8_i32_110, %144 : i32
    %c0_i32_111 = arith.constant 0 : i32
    %148 = arith.addi %147, %c0_i32_111 : i32
    %c0_112 = arith.constant 0 : index
    %c0_113 = arith.constant 0 : index
    %149 = vector.load %arg3[%c0_112, %c0_113] : memref<27x4xf32, #tpu.memory_space<vmem>>, vector<3x4xf32>
    %c0_i32_114 = arith.constant 0 : i32
    %150 = arith.addi %148, %c0_i32_114 : i32
    %c0_115 = arith.constant 0 : index
    %151 = arith.index_cast %150 : i32 to index
    %c0_116 = arith.constant 0 : index
    %c0_117 = arith.constant 0 : index
    %152 = vector.load %arg2[%c0_115, %151, %c0_116, %c0_117] : memref<1x72x5x3xf32, #tpu.memory_space<vmem>>, vector<1x1x4x3xf32>
    %153 = vector.shape_cast %152 : vector<1x1x4x3xf32> to vector<4x3xf32>
    %cst_118 = arith.constant dense<0.000000e+00> : vector<4x4xf32>
    %154 = tpu.matmul %153, %149, %cst_118 {dimension_numbers = #tpu.dot_dimension_numbers<[1], [0], [0], [1], [0, 0, 1, 1], [], []>} : vector<4x3xf32>, vector<3x4xf32>, vector<4x4xf32> -> vector<4x4xf32>
    %155 = arith.addf %145, %154 : vector<4x4xf32>
    %c2_i32_119 = arith.constant 2 : i32
    %156 = arith.addi %148, %c2_i32_119 : i32
    %c0_120 = arith.constant 0 : index
    %157 = arith.index_cast %156 : i32 to index
    %c0_121 = arith.constant 0 : index
    %c0_122 = arith.constant 0 : index
    %158 = vector.load %arg2[%c0_120, %157, %c0_121, %c0_122] : memref<1x72x5x3xf32, #tpu.memory_space<vmem>>, vector<1x1x4x3xf32>
    %159 = vector.shape_cast %158 : vector<1x1x4x3xf32> to vector<4x3xf32>
    %cst_123 = arith.constant dense<0.000000e+00> : vector<4x4xf32>
    %160 = tpu.matmul %159, %149, %cst_123 {dimension_numbers = #tpu.dot_dimension_numbers<[1], [0], [0], [1], [0, 0, 1, 1], [], []>} : vector<4x3xf32>, vector<3x4xf32>, vector<4x4xf32> -> vector<4x4xf32>
    %161 = arith.addf %146, %160 : vector<4x4xf32>
    %c3_124 = arith.constant 3 : index
    %c0_125 = arith.constant 0 : index
    %162 = vector.load %arg3[%c3_124, %c0_125] : memref<27x4xf32, #tpu.memory_space<vmem>>, vector<3x4xf32>
    %c1_i32_126 = arith.constant 1 : i32
    %163 = arith.addi %148, %c1_i32_126 : i32
    %c0_127 = arith.constant 0 : index
    %164 = arith.index_cast %163 : i32 to index
    %c0_128 = arith.constant 0 : index
    %c0_129 = arith.constant 0 : index
    %165 = vector.load %arg2[%c0_127, %164, %c0_128, %c0_129] : memref<1x72x5x3xf32, #tpu.memory_space<vmem>>, vector<1x1x4x3xf32>
    %166 = vector.shape_cast %165 : vector<1x1x4x3xf32> to vector<4x3xf32>
    %cst_130 = arith.constant dense<0.000000e+00> : vector<4x4xf32>
    %167 = tpu.matmul %166, %162, %cst_130 {dimension_numbers = #tpu.dot_dimension_numbers<[1], [0], [0], [1], [0, 0, 1, 1], [], []>} : vector<4x3xf32>, vector<3x4xf32>, vector<4x4xf32> -> vector<4x4xf32>
    %168 = arith.addf %155, %167 : vector<4x4xf32>
    %c3_i32_131 = arith.constant 3 : i32
    %169 = arith.addi %148, %c3_i32_131 : i32
    %c0_132 = arith.constant 0 : index
    %170 = arith.index_cast %169 : i32 to index
    %c0_133 = arith.constant 0 : index
    %c0_134 = arith.constant 0 : index
    %171 = vector.load %arg2[%c0_132, %170, %c0_133, %c0_134] : memref<1x72x5x3xf32, #tpu.memory_space<vmem>>, vector<1x1x4x3xf32>
    %172 = vector.shape_cast %171 : vector<1x1x4x3xf32> to vector<4x3xf32>
    %cst_135 = arith.constant dense<0.000000e+00> : vector<4x4xf32>
    %173 = tpu.matmul %172, %162, %cst_135 {dimension_numbers = #tpu.dot_dimension_numbers<[1], [0], [0], [1], [0, 0, 1, 1], [], []>} : vector<4x3xf32>, vector<3x4xf32>, vector<4x4xf32> -> vector<4x4xf32>
    %174 = arith.addf %161, %173 : vector<4x4xf32>
    %c6_136 = arith.constant 6 : index
    %c0_137 = arith.constant 0 : index
    %175 = vector.load %arg3[%c6_136, %c0_137] : memref<27x4xf32, #tpu.memory_space<vmem>>, vector<3x4xf32>
    %c2_i32_138 = arith.constant 2 : i32
    %176 = arith.addi %148, %c2_i32_138 : i32
    %c0_139 = arith.constant 0 : index
    %177 = arith.index_cast %176 : i32 to index
    %c0_140 = arith.constant 0 : index
    %c0_141 = arith.constant 0 : index
    %178 = vector.load %arg2[%c0_139, %177, %c0_140, %c0_141] : memref<1x72x5x3xf32, #tpu.memory_space<vmem>>, vector<1x1x4x3xf32>
    %179 = vector.shape_cast %178 : vector<1x1x4x3xf32> to vector<4x3xf32>
    %cst_142 = arith.constant dense<0.000000e+00> : vector<4x4xf32>
    %180 = tpu.matmul %179, %175, %cst_142 {dimension_numbers = #tpu.dot_dimension_numbers<[1], [0], [0], [1], [0, 0, 1, 1], [], []>} : vector<4x3xf32>, vector<3x4xf32>, vector<4x4xf32> -> vector<4x4xf32>
    %181 = arith.addf %168, %180 : vector<4x4xf32>
    %c0_i32_143 = arith.constant 0 : i32
    %182 = arith.addi %148, %c0_i32_143 : i32
    %c0_144 = arith.constant 0 : index
    %183 = arith.index_cast %182 : i32 to index
    %c1_145 = arith.constant 1 : index
    %c0_146 = arith.constant 0 : index
    %184 = vector.load %arg2[%c0_144, %183, %c1_145, %c0_146] : memref<1x72x5x3xf32, #tpu.memory_space<vmem>>, vector<1x1x4x3xf32>
    %185 = vector.shape_cast %184 : vector<1x1x4x3xf32> to vector<4x3xf32>
    %cst_147 = arith.constant dense<0.000000e+00> : vector<4x4xf32>
    %186 = tpu.matmul %185, %175, %cst_147 {dimension_numbers = #tpu.dot_dimension_numbers<[1], [0], [0], [1], [0, 0, 1, 1], [], []>} : vector<4x3xf32>, vector<3x4xf32>, vector<4x4xf32> -> vector<4x4xf32>
    %187 = arith.addf %174, %186 : vector<4x4xf32>
    %c8_i32_148 = arith.constant 8 : i32
    %188 = arith.muli %c8_i32_148, %144 : i32
    %c4_i32_149 = arith.constant 4 : i32
    %189 = arith.addi %188, %c4_i32_149 : i32
    %c9_150 = arith.constant 9 : index
    %c0_151 = arith.constant 0 : index
    %190 = vector.load %arg3[%c9_150, %c0_151] : memref<27x4xf32, #tpu.memory_space<vmem>>, vector<3x4xf32>
    %c0_i32_152 = arith.constant 0 : i32
    %191 = arith.addi %189, %c0_i32_152 : i32
    %c0_153 = arith.constant 0 : index
    %192 = arith.index_cast %191 : i32 to index
    %c0_154 = arith.constant 0 : index
    %c0_155 = arith.constant 0 : index
    %193 = vector.load %arg2[%c0_153, %192, %c0_154, %c0_155] : memref<1x72x5x3xf32, #tpu.memory_space<vmem>>, vector<1x1x4x3xf32>
    %194 = vector.shape_cast %193 : vector<1x1x4x3xf32> to vector<4x3xf32>
    %cst_156 = arith.constant dense<0.000000e+00> : vector<4x4xf32>
    %195 = tpu.matmul %194, %190, %cst_156 {dimension_numbers = #tpu.dot_dimension_numbers<[1], [0], [0], [1], [0, 0, 1, 1], [], []>} : vector<4x3xf32>, vector<3x4xf32>, vector<4x4xf32> -> vector<4x4xf32>
    %196 = arith.addf %181, %195 : vector<4x4xf32>
    %c2_i32_157 = arith.constant 2 : i32
    %197 = arith.addi %189, %c2_i32_157 : i32
    %c0_158 = arith.constant 0 : index
    %198 = arith.index_cast %197 : i32 to index
    %c0_159 = arith.constant 0 : index
    %c0_160 = arith.constant 0 : index
    %199 = vector.load %arg2[%c0_158, %198, %c0_159, %c0_160] : memref<1x72x5x3xf32, #tpu.memory_space<vmem>>, vector<1x1x4x3xf32>
    %200 = vector.shape_cast %199 : vector<1x1x4x3xf32> to vector<4x3xf32>
    %cst_161 = arith.constant dense<0.000000e+00> : vector<4x4xf32>
    %201 = tpu.matmul %200, %190, %cst_161 {dimension_numbers = #tpu.dot_dimension_numbers<[1], [0], [0], [1], [0, 0, 1, 1], [], []>} : vector<4x3xf32>, vector<3x4xf32>, vector<4x4xf32> -> vector<4x4xf32>
    %202 = arith.addf %187, %201 : vector<4x4xf32>
    %c12_162 = arith.constant 12 : index
    %c0_163 = arith.constant 0 : index
    %203 = vector.load %arg3[%c12_162, %c0_163] : memref<27x4xf32, #tpu.memory_space<vmem>>, vector<3x4xf32>
    %c1_i32_164 = arith.constant 1 : i32
    %204 = arith.addi %189, %c1_i32_164 : i32
    %c0_165 = arith.constant 0 : index
    %205 = arith.index_cast %204 : i32 to index
    %c0_166 = arith.constant 0 : index
    %c0_167 = arith.constant 0 : index
    %206 = vector.load %arg2[%c0_165, %205, %c0_166, %c0_167] : memref<1x72x5x3xf32, #tpu.memory_space<vmem>>, vector<1x1x4x3xf32>
    %207 = vector.shape_cast %206 : vector<1x1x4x3xf32> to vector<4x3xf32>
    %cst_168 = arith.constant dense<0.000000e+00> : vector<4x4xf32>
    %208 = tpu.matmul %207, %203, %cst_168 {dimension_numbers = #tpu.dot_dimension_numbers<[1], [0], [0], [1], [0, 0, 1, 1], [], []>} : vector<4x3xf32>, vector<3x4xf32>, vector<4x4xf32> -> vector<4x4xf32>
    %209 = arith.addf %196, %208 : vector<4x4xf32>
    %c3_i32_169 = arith.constant 3 : i32
    %210 = arith.addi %189, %c3_i32_169 : i32
    %c0_170 = arith.constant 0 : index
    %211 = arith.index_cast %210 : i32 to index
    %c0_171 = arith.constant 0 : index
    %c0_172 = arith.constant 0 : index
    %212 = vector.load %arg2[%c0_170, %211, %c0_171, %c0_172] : memref<1x72x5x3xf32, #tpu.memory_space<vmem>>, vector<1x1x4x3xf32>
    %213 = vector.shape_cast %212 : vector<1x1x4x3xf32> to vector<4x3xf32>
    %cst_173 = arith.constant dense<0.000000e+00> : vector<4x4xf32>
    %214 = tpu.matmul %213, %203, %cst_173 {dimension_numbers = #tpu.dot_dimension_numbers<[1], [0], [0], [1], [0, 0, 1, 1], [], []>} : vector<4x3xf32>, vector<3x4xf32>, vector<4x4xf32> -> vector<4x4xf32>
    %215 = arith.addf %202, %214 : vector<4x4xf32>
    %c15_174 = arith.constant 15 : index
    %c0_175 = arith.constant 0 : index
    %216 = vector.load %arg3[%c15_174, %c0_175] : memref<27x4xf32, #tpu.memory_space<vmem>>, vector<3x4xf32>
    %c2_i32_176 = arith.constant 2 : i32
    %217 = arith.addi %189, %c2_i32_176 : i32
    %c0_177 = arith.constant 0 : index
    %218 = arith.index_cast %217 : i32 to index
    %c0_178 = arith.constant 0 : index
    %c0_179 = arith.constant 0 : index
    %219 = vector.load %arg2[%c0_177, %218, %c0_178, %c0_179] : memref<1x72x5x3xf32, #tpu.memory_space<vmem>>, vector<1x1x4x3xf32>
    %220 = vector.shape_cast %219 : vector<1x1x4x3xf32> to vector<4x3xf32>
    %cst_180 = arith.constant dense<0.000000e+00> : vector<4x4xf32>
    %221 = tpu.matmul %220, %216, %cst_180 {dimension_numbers = #tpu.dot_dimension_numbers<[1], [0], [0], [1], [0, 0, 1, 1], [], []>} : vector<4x3xf32>, vector<3x4xf32>, vector<4x4xf32> -> vector<4x4xf32>
    %222 = arith.addf %209, %221 : vector<4x4xf32>
    %c0_i32_181 = arith.constant 0 : i32
    %223 = arith.addi %189, %c0_i32_181 : i32
    %c0_182 = arith.constant 0 : index
    %224 = arith.index_cast %223 : i32 to index
    %c1_183 = arith.constant 1 : index
    %c0_184 = arith.constant 0 : index
    %225 = vector.load %arg2[%c0_182, %224, %c1_183, %c0_184] : memref<1x72x5x3xf32, #tpu.memory_space<vmem>>, vector<1x1x4x3xf32>
    %226 = vector.shape_cast %225 : vector<1x1x4x3xf32> to vector<4x3xf32>
    %cst_185 = arith.constant dense<0.000000e+00> : vector<4x4xf32>
    %227 = tpu.matmul %226, %216, %cst_185 {dimension_numbers = #tpu.dot_dimension_numbers<[1], [0], [0], [1], [0, 0, 1, 1], [], []>} : vector<4x3xf32>, vector<3x4xf32>, vector<4x4xf32> -> vector<4x4xf32>
    %228 = arith.addf %215, %227 : vector<4x4xf32>
    %c8_i32_186 = arith.constant 8 : i32
    %229 = arith.muli %c8_i32_186, %144 : i32
    %c8_i32_187 = arith.constant 8 : i32
    %230 = arith.addi %229, %c8_i32_187 : i32
    %c18_188 = arith.constant 18 : index
    %c0_189 = arith.constant 0 : index
    %231 = vector.load %arg3[%c18_188, %c0_189] : memref<27x4xf32, #tpu.memory_space<vmem>>, vector<3x4xf32>
    %c0_i32_190 = arith.constant 0 : i32
    %232 = arith.addi %230, %c0_i32_190 : i32
    %c0_191 = arith.constant 0 : index
    %233 = arith.index_cast %232 : i32 to index
    %c0_192 = arith.constant 0 : index
    %c0_193 = arith.constant 0 : index
    %234 = vector.load %arg2[%c0_191, %233, %c0_192, %c0_193] : memref<1x72x5x3xf32, #tpu.memory_space<vmem>>, vector<1x1x4x3xf32>
    %235 = vector.shape_cast %234 : vector<1x1x4x3xf32> to vector<4x3xf32>
    %cst_194 = arith.constant dense<0.000000e+00> : vector<4x4xf32>
    %236 = tpu.matmul %235, %231, %cst_194 {dimension_numbers = #tpu.dot_dimension_numbers<[1], [0], [0], [1], [0, 0, 1, 1], [], []>} : vector<4x3xf32>, vector<3x4xf32>, vector<4x4xf32> -> vector<4x4xf32>
    %237 = arith.addf %222, %236 : vector<4x4xf32>
    %c2_i32_195 = arith.constant 2 : i32
    %238 = arith.addi %230, %c2_i32_195 : i32
    %c0_196 = arith.constant 0 : index
    %239 = arith.index_cast %238 : i32 to index
    %c0_197 = arith.constant 0 : index
    %c0_198 = arith.constant 0 : index
    %240 = vector.load %arg2[%c0_196, %239, %c0_197, %c0_198] : memref<1x72x5x3xf32, #tpu.memory_space<vmem>>, vector<1x1x4x3xf32>
    %241 = vector.shape_cast %240 : vector<1x1x4x3xf32> to vector<4x3xf32>
    %cst_199 = arith.constant dense<0.000000e+00> : vector<4x4xf32>
    %242 = tpu.matmul %241, %231, %cst_199 {dimension_numbers = #tpu.dot_dimension_numbers<[1], [0], [0], [1], [0, 0, 1, 1], [], []>} : vector<4x3xf32>, vector<3x4xf32>, vector<4x4xf32> -> vector<4x4xf32>
    %243 = arith.addf %228, %242 : vector<4x4xf32>
    %c21_200 = arith.constant 21 : index
    %c0_201 = arith.constant 0 : index
    %244 = vector.load %arg3[%c21_200, %c0_201] : memref<27x4xf32, #tpu.memory_space<vmem>>, vector<3x4xf32>
    %c1_i32_202 = arith.constant 1 : i32
    %245 = arith.addi %230, %c1_i32_202 : i32
    %c0_203 = arith.constant 0 : index
    %246 = arith.index_cast %245 : i32 to index
    %c0_204 = arith.constant 0 : index
    %c0_205 = arith.constant 0 : index
    %247 = vector.load %arg2[%c0_203, %246, %c0_204, %c0_205] : memref<1x72x5x3xf32, #tpu.memory_space<vmem>>, vector<1x1x4x3xf32>
    %248 = vector.shape_cast %247 : vector<1x1x4x3xf32> to vector<4x3xf32>
    %cst_206 = arith.constant dense<0.000000e+00> : vector<4x4xf32>
    %249 = tpu.matmul %248, %244, %cst_206 {dimension_numbers = #tpu.dot_dimension_numbers<[1], [0], [0], [1], [0, 0, 1, 1], [], []>} : vector<4x3xf32>, vector<3x4xf32>, vector<4x4xf32> -> vector<4x4xf32>
    %250 = arith.addf %237, %249 : vector<4x4xf32>
    %c3_i32_207 = arith.constant 3 : i32
    %251 = arith.addi %230, %c3_i32_207 : i32
    %c0_208 = arith.constant 0 : index
    %252 = arith.index_cast %251 : i32 to index
    %c0_209 = arith.constant 0 : index
    %c0_210 = arith.constant 0 : index
    %253 = vector.load %arg2[%c0_208, %252, %c0_209, %c0_210] : memref<1x72x5x3xf32, #tpu.memory_space<vmem>>, vector<1x1x4x3xf32>
    %254 = vector.shape_cast %253 : vector<1x1x4x3xf32> to vector<4x3xf32>
    %cst_211 = arith.constant dense<0.000000e+00> : vector<4x4xf32>
    %255 = tpu.matmul %254, %244, %cst_211 {dimension_numbers = #tpu.dot_dimension_numbers<[1], [0], [0], [1], [0, 0, 1, 1], [], []>} : vector<4x3xf32>, vector<3x4xf32>, vector<4x4xf32> -> vector<4x4xf32>
    %256 = arith.addf %243, %255 : vector<4x4xf32>
    %c24_212 = arith.constant 24 : index
    %c0_213 = arith.constant 0 : index
    %257 = vector.load %arg3[%c24_212, %c0_213] : memref<27x4xf32, #tpu.memory_space<vmem>>, vector<3x4xf32>
    %c2_i32_214 = arith.constant 2 : i32
    %258 = arith.addi %230, %c2_i32_214 : i32
    %c0_215 = arith.constant 0 : index
    %259 = arith.index_cast %258 : i32 to index
    %c0_216 = arith.constant 0 : index
    %c0_217 = arith.constant 0 : index
    %260 = vector.load %arg2[%c0_215, %259, %c0_216, %c0_217] : memref<1x72x5x3xf32, #tpu.memory_space<vmem>>, vector<1x1x4x3xf32>
    %261 = vector.shape_cast %260 : vector<1x1x4x3xf32> to vector<4x3xf32>
    %cst_218 = arith.constant dense<0.000000e+00> : vector<4x4xf32>
    %262 = tpu.matmul %261, %257, %cst_218 {dimension_numbers = #tpu.dot_dimension_numbers<[1], [0], [0], [1], [0, 0, 1, 1], [], []>} : vector<4x3xf32>, vector<3x4xf32>, vector<4x4xf32> -> vector<4x4xf32>
    %263 = arith.addf %250, %262 : vector<4x4xf32>
    %c0_i32_219 = arith.constant 0 : i32
    %264 = arith.addi %230, %c0_i32_219 : i32
    %c0_220 = arith.constant 0 : index
    %265 = arith.index_cast %264 : i32 to index
    %c1_221 = arith.constant 1 : index
    %c0_222 = arith.constant 0 : index
    %266 = vector.load %arg2[%c0_220, %265, %c1_221, %c0_222] : memref<1x72x5x3xf32, #tpu.memory_space<vmem>>, vector<1x1x4x3xf32>
    %267 = vector.shape_cast %266 : vector<1x1x4x3xf32> to vector<4x3xf32>
    %cst_223 = arith.constant dense<0.000000e+00> : vector<4x4xf32>
    %268 = tpu.matmul %267, %257, %cst_223 {dimension_numbers = #tpu.dot_dimension_numbers<[1], [0], [0], [1], [0, 0, 1, 1], [], []>} : vector<4x3xf32>, vector<3x4xf32>, vector<4x4xf32> -> vector<4x4xf32>
    %269 = arith.addf %256, %268 : vector<4x4xf32>
    %270 = vector.broadcast %0 : vector<1x4xf32> to vector<4x4xf32>
    %271 = arith.addf %263, %270 : vector<4x4xf32>
    %cst_224 = arith.constant 0.000000e+00 : f32
    %272 = vector.broadcast %cst_224 : f32 to vector<4x4xf32>
    %273 = arith.maximumf %271, %272 : vector<4x4xf32>
    %274 = vector.broadcast %0 : vector<1x4xf32> to vector<4x4xf32>
    %275 = arith.addf %269, %274 : vector<4x4xf32>
    %cst_225 = arith.constant 0.000000e+00 : f32
    %276 = vector.broadcast %cst_225 : f32 to vector<4x4xf32>
    %277 = arith.maximumf %275, %276 : vector<4x4xf32>
    %c2_i32_226 = arith.constant 2 : i32
    %278 = arith.muli %c2_i32_226, %arg1 : i32
    %c1_i32_227 = arith.constant 1 : i32
    %279 = arith.addi %278, %c1_i32_227 : i32
    %cst_228 = arith.constant 0.000000e+00 : f32
    %280 = vector.broadcast %cst_228 : f32 to vector<4x4xf32>
    %cst_229 = arith.constant 0.000000e+00 : f32
    %281 = vector.broadcast %cst_229 : f32 to vector<4x4xf32>
    %c8_i32_230 = arith.constant 8 : i32
    %282 = arith.muli %c8_i32_230, %279 : i32
    %c0_i32_231 = arith.constant 0 : i32
    %283 = arith.addi %282, %c0_i32_231 : i32
    %c0_232 = arith.constant 0 : index
    %c0_233 = arith.constant 0 : index
    %284 = vector.load %arg3[%c0_232, %c0_233] : memref<27x4xf32, #tpu.memory_space<vmem>>, vector<3x4xf32>
    %c0_i32_234 = arith.constant 0 : i32
    %285 = arith.addi %283, %c0_i32_234 : i32
    %c0_235 = arith.constant 0 : index
    %286 = arith.index_cast %285 : i32 to index
    %c0_236 = arith.constant 0 : index
    %c0_237 = arith.constant 0 : index
    %287 = vector.load %arg2[%c0_235, %286, %c0_236, %c0_237] : memref<1x72x5x3xf32, #tpu.memory_space<vmem>>, vector<1x1x4x3xf32>
    %288 = vector.shape_cast %287 : vector<1x1x4x3xf32> to vector<4x3xf32>
    %cst_238 = arith.constant dense<0.000000e+00> : vector<4x4xf32>
    %289 = tpu.matmul %288, %284, %cst_238 {dimension_numbers = #tpu.dot_dimension_numbers<[1], [0], [0], [1], [0, 0, 1, 1], [], []>} : vector<4x3xf32>, vector<3x4xf32>, vector<4x4xf32> -> vector<4x4xf32>
    %290 = arith.addf %280, %289 : vector<4x4xf32>
    %c2_i32_239 = arith.constant 2 : i32
    %291 = arith.addi %283, %c2_i32_239 : i32
    %c0_240 = arith.constant 0 : index
    %292 = arith.index_cast %291 : i32 to index
    %c0_241 = arith.constant 0 : index
    %c0_242 = arith.constant 0 : index
    %293 = vector.load %arg2[%c0_240, %292, %c0_241, %c0_242] : memref<1x72x5x3xf32, #tpu.memory_space<vmem>>, vector<1x1x4x3xf32>
    %294 = vector.shape_cast %293 : vector<1x1x4x3xf32> to vector<4x3xf32>
    %cst_243 = arith.constant dense<0.000000e+00> : vector<4x4xf32>
    %295 = tpu.matmul %294, %284, %cst_243 {dimension_numbers = #tpu.dot_dimension_numbers<[1], [0], [0], [1], [0, 0, 1, 1], [], []>} : vector<4x3xf32>, vector<3x4xf32>, vector<4x4xf32> -> vector<4x4xf32>
    %296 = arith.addf %281, %295 : vector<4x4xf32>
    %c3_244 = arith.constant 3 : index
    %c0_245 = arith.constant 0 : index
    %297 = vector.load %arg3[%c3_244, %c0_245] : memref<27x4xf32, #tpu.memory_space<vmem>>, vector<3x4xf32>
    %c1_i32_246 = arith.constant 1 : i32
    %298 = arith.addi %283, %c1_i32_246 : i32
    %c0_247 = arith.constant 0 : index
    %299 = arith.index_cast %298 : i32 to index
    %c0_248 = arith.constant 0 : index
    %c0_249 = arith.constant 0 : index
    %300 = vector.load %arg2[%c0_247, %299, %c0_248, %c0_249] : memref<1x72x5x3xf32, #tpu.memory_space<vmem>>, vector<1x1x4x3xf32>
    %301 = vector.shape_cast %300 : vector<1x1x4x3xf32> to vector<4x3xf32>
    %cst_250 = arith.constant dense<0.000000e+00> : vector<4x4xf32>
    %302 = tpu.matmul %301, %297, %cst_250 {dimension_numbers = #tpu.dot_dimension_numbers<[1], [0], [0], [1], [0, 0, 1, 1], [], []>} : vector<4x3xf32>, vector<3x4xf32>, vector<4x4xf32> -> vector<4x4xf32>
    %303 = arith.addf %290, %302 : vector<4x4xf32>
    %c3_i32_251 = arith.constant 3 : i32
    %304 = arith.addi %283, %c3_i32_251 : i32
    %c0_252 = arith.constant 0 : index
    %305 = arith.index_cast %304 : i32 to index
    %c0_253 = arith.constant 0 : index
    %c0_254 = arith.constant 0 : index
    %306 = vector.load %arg2[%c0_252, %305, %c0_253, %c0_254] : memref<1x72x5x3xf32, #tpu.memory_space<vmem>>, vector<1x1x4x3xf32>
    %307 = vector.shape_cast %306 : vector<1x1x4x3xf32> to vector<4x3xf32>
    %cst_255 = arith.constant dense<0.000000e+00> : vector<4x4xf32>
    %308 = tpu.matmul %307, %297, %cst_255 {dimension_numbers = #tpu.dot_dimension_numbers<[1], [0], [0], [1], [0, 0, 1, 1], [], []>} : vector<4x3xf32>, vector<3x4xf32>, vector<4x4xf32> -> vector<4x4xf32>
    %309 = arith.addf %296, %308 : vector<4x4xf32>
    %c6_256 = arith.constant 6 : index
    %c0_257 = arith.constant 0 : index
    %310 = vector.load %arg3[%c6_256, %c0_257] : memref<27x4xf32, #tpu.memory_space<vmem>>, vector<3x4xf32>
    %c2_i32_258 = arith.constant 2 : i32
    %311 = arith.addi %283, %c2_i32_258 : i32
    %c0_259 = arith.constant 0 : index
    %312 = arith.index_cast %311 : i32 to index
    %c0_260 = arith.constant 0 : index
    %c0_261 = arith.constant 0 : index
    %313 = vector.load %arg2[%c0_259, %312, %c0_260, %c0_261] : memref<1x72x5x3xf32, #tpu.memory_space<vmem>>, vector<1x1x4x3xf32>
    %314 = vector.shape_cast %313 : vector<1x1x4x3xf32> to vector<4x3xf32>
    %cst_262 = arith.constant dense<0.000000e+00> : vector<4x4xf32>
    %315 = tpu.matmul %314, %310, %cst_262 {dimension_numbers = #tpu.dot_dimension_numbers<[1], [0], [0], [1], [0, 0, 1, 1], [], []>} : vector<4x3xf32>, vector<3x4xf32>, vector<4x4xf32> -> vector<4x4xf32>
    %316 = arith.addf %303, %315 : vector<4x4xf32>
    %c0_i32_263 = arith.constant 0 : i32
    %317 = arith.addi %283, %c0_i32_263 : i32
    %c0_264 = arith.constant 0 : index
    %318 = arith.index_cast %317 : i32 to index
    %c1_265 = arith.constant 1 : index
    %c0_266 = arith.constant 0 : index
    %319 = vector.load %arg2[%c0_264, %318, %c1_265, %c0_266] : memref<1x72x5x3xf32, #tpu.memory_space<vmem>>, vector<1x1x4x3xf32>
    %320 = vector.shape_cast %319 : vector<1x1x4x3xf32> to vector<4x3xf32>
    %cst_267 = arith.constant dense<0.000000e+00> : vector<4x4xf32>
    %321 = tpu.matmul %320, %310, %cst_267 {dimension_numbers = #tpu.dot_dimension_numbers<[1], [0], [0], [1], [0, 0, 1, 1], [], []>} : vector<4x3xf32>, vector<3x4xf32>, vector<4x4xf32> -> vector<4x4xf32>
    %322 = arith.addf %309, %321 : vector<4x4xf32>
    %c8_i32_268 = arith.constant 8 : i32
    %323 = arith.muli %c8_i32_268, %279 : i32
    %c4_i32_269 = arith.constant 4 : i32
    %324 = arith.addi %323, %c4_i32_269 : i32
    %c9_270 = arith.constant 9 : index
    %c0_271 = arith.constant 0 : index
    %325 = vector.load %arg3[%c9_270, %c0_271] : memref<27x4xf32, #tpu.memory_space<vmem>>, vector<3x4xf32>
    %c0_i32_272 = arith.constant 0 : i32
    %326 = arith.addi %324, %c0_i32_272 : i32
    %c0_273 = arith.constant 0 : index
    %327 = arith.index_cast %326 : i32 to index
    %c0_274 = arith.constant 0 : index
    %c0_275 = arith.constant 0 : index
    %328 = vector.load %arg2[%c0_273, %327, %c0_274, %c0_275] : memref<1x72x5x3xf32, #tpu.memory_space<vmem>>, vector<1x1x4x3xf32>
    %329 = vector.shape_cast %328 : vector<1x1x4x3xf32> to vector<4x3xf32>
    %cst_276 = arith.constant dense<0.000000e+00> : vector<4x4xf32>
    %330 = tpu.matmul %329, %325, %cst_276 {dimension_numbers = #tpu.dot_dimension_numbers<[1], [0], [0], [1], [0, 0, 1, 1], [], []>} : vector<4x3xf32>, vector<3x4xf32>, vector<4x4xf32> -> vector<4x4xf32>
    %331 = arith.addf %316, %330 : vector<4x4xf32>
    %c2_i32_277 = arith.constant 2 : i32
    %332 = arith.addi %324, %c2_i32_277 : i32
    %c0_278 = arith.constant 0 : index
    %333 = arith.index_cast %332 : i32 to index
    %c0_279 = arith.constant 0 : index
    %c0_280 = arith.constant 0 : index
    %334 = vector.load %arg2[%c0_278, %333, %c0_279, %c0_280] : memref<1x72x5x3xf32, #tpu.memory_space<vmem>>, vector<1x1x4x3xf32>
    %335 = vector.shape_cast %334 : vector<1x1x4x3xf32> to vector<4x3xf32>
    %cst_281 = arith.constant dense<0.000000e+00> : vector<4x4xf32>
    %336 = tpu.matmul %335, %325, %cst_281 {dimension_numbers = #tpu.dot_dimension_numbers<[1], [0], [0], [1], [0, 0, 1, 1], [], []>} : vector<4x3xf32>, vector<3x4xf32>, vector<4x4xf32> -> vector<4x4xf32>
    %337 = arith.addf %322, %336 : vector<4x4xf32>
    %c12_282 = arith.constant 12 : index
    %c0_283 = arith.constant 0 : index
    %338 = vector.load %arg3[%c12_282, %c0_283] : memref<27x4xf32, #tpu.memory_space<vmem>>, vector<3x4xf32>
    %c1_i32_284 = arith.constant 1 : i32
    %339 = arith.addi %324, %c1_i32_284 : i32
    %c0_285 = arith.constant 0 : index
    %340 = arith.index_cast %339 : i32 to index
    %c0_286 = arith.constant 0 : index
    %c0_287 = arith.constant 0 : index
    %341 = vector.load %arg2[%c0_285, %340, %c0_286, %c0_287] : memref<1x72x5x3xf32, #tpu.memory_space<vmem>>, vector<1x1x4x3xf32>
    %342 = vector.shape_cast %341 : vector<1x1x4x3xf32> to vector<4x3xf32>
    %cst_288 = arith.constant dense<0.000000e+00> : vector<4x4xf32>
    %343 = tpu.matmul %342, %338, %cst_288 {dimension_numbers = #tpu.dot_dimension_numbers<[1], [0], [0], [1], [0, 0, 1, 1], [], []>} : vector<4x3xf32>, vector<3x4xf32>, vector<4x4xf32> -> vector<4x4xf32>
    %344 = arith.addf %331, %343 : vector<4x4xf32>
    %c3_i32_289 = arith.constant 3 : i32
    %345 = arith.addi %324, %c3_i32_289 : i32
    %c0_290 = arith.constant 0 : index
    %346 = arith.index_cast %345 : i32 to index
    %c0_291 = arith.constant 0 : index
    %c0_292 = arith.constant 0 : index
    %347 = vector.load %arg2[%c0_290, %346, %c0_291, %c0_292] : memref<1x72x5x3xf32, #tpu.memory_space<vmem>>, vector<1x1x4x3xf32>
    %348 = vector.shape_cast %347 : vector<1x1x4x3xf32> to vector<4x3xf32>
    %cst_293 = arith.constant dense<0.000000e+00> : vector<4x4xf32>
    %349 = tpu.matmul %348, %338, %cst_293 {dimension_numbers = #tpu.dot_dimension_numbers<[1], [0], [0], [1], [0, 0, 1, 1], [], []>} : vector<4x3xf32>, vector<3x4xf32>, vector<4x4xf32> -> vector<4x4xf32>
    %350 = arith.addf %337, %349 : vector<4x4xf32>
    %c15_294 = arith.constant 15 : index
    %c0_295 = arith.constant 0 : index
    %351 = vector.load %arg3[%c15_294, %c0_295] : memref<27x4xf32, #tpu.memory_space<vmem>>, vector<3x4xf32>
    %c2_i32_296 = arith.constant 2 : i32
    %352 = arith.addi %324, %c2_i32_296 : i32
    %c0_297 = arith.constant 0 : index
    %353 = arith.index_cast %352 : i32 to index
    %c0_298 = arith.constant 0 : index
    %c0_299 = arith.constant 0 : index
    %354 = vector.load %arg2[%c0_297, %353, %c0_298, %c0_299] : memref<1x72x5x3xf32, #tpu.memory_space<vmem>>, vector<1x1x4x3xf32>
    %355 = vector.shape_cast %354 : vector<1x1x4x3xf32> to vector<4x3xf32>
    %cst_300 = arith.constant dense<0.000000e+00> : vector<4x4xf32>
    %356 = tpu.matmul %355, %351, %cst_300 {dimension_numbers = #tpu.dot_dimension_numbers<[1], [0], [0], [1], [0, 0, 1, 1], [], []>} : vector<4x3xf32>, vector<3x4xf32>, vector<4x4xf32> -> vector<4x4xf32>
    %357 = arith.addf %344, %356 : vector<4x4xf32>
    %c0_i32_301 = arith.constant 0 : i32
    %358 = arith.addi %324, %c0_i32_301 : i32
    %c0_302 = arith.constant 0 : index
    %359 = arith.index_cast %358 : i32 to index
    %c1_303 = arith.constant 1 : index
    %c0_304 = arith.constant 0 : index
    %360 = vector.load %arg2[%c0_302, %359, %c1_303, %c0_304] : memref<1x72x5x3xf32, #tpu.memory_space<vmem>>, vector<1x1x4x3xf32>
    %361 = vector.shape_cast %360 : vector<1x1x4x3xf32> to vector<4x3xf32>
    %cst_305 = arith.constant dense<0.000000e+00> : vector<4x4xf32>
    %362 = tpu.matmul %361, %351, %cst_305 {dimension_numbers = #tpu.dot_dimension_numbers<[1], [0], [0], [1], [0, 0, 1, 1], [], []>} : vector<4x3xf32>, vector<3x4xf32>, vector<4x4xf32> -> vector<4x4xf32>
    %363 = arith.addf %350, %362 : vector<4x4xf32>
    %c8_i32_306 = arith.constant 8 : i32
    %364 = arith.muli %c8_i32_306, %279 : i32
    %c8_i32_307 = arith.constant 8 : i32
    %365 = arith.addi %364, %c8_i32_307 : i32
    %c18_308 = arith.constant 18 : index
    %c0_309 = arith.constant 0 : index
    %366 = vector.load %arg3[%c18_308, %c0_309] : memref<27x4xf32, #tpu.memory_space<vmem>>, vector<3x4xf32>
    %c0_i32_310 = arith.constant 0 : i32
    %367 = arith.addi %365, %c0_i32_310 : i32
    %c0_311 = arith.constant 0 : index
    %368 = arith.index_cast %367 : i32 to index
    %c0_312 = arith.constant 0 : index
    %c0_313 = arith.constant 0 : index
    %369 = vector.load %arg2[%c0_311, %368, %c0_312, %c0_313] : memref<1x72x5x3xf32, #tpu.memory_space<vmem>>, vector<1x1x4x3xf32>
    %370 = vector.shape_cast %369 : vector<1x1x4x3xf32> to vector<4x3xf32>
    %cst_314 = arith.constant dense<0.000000e+00> : vector<4x4xf32>
    %371 = tpu.matmul %370, %366, %cst_314 {dimension_numbers = #tpu.dot_dimension_numbers<[1], [0], [0], [1], [0, 0, 1, 1], [], []>} : vector<4x3xf32>, vector<3x4xf32>, vector<4x4xf32> -> vector<4x4xf32>
    %372 = arith.addf %357, %371 : vector<4x4xf32>
    %c2_i32_315 = arith.constant 2 : i32
    %373 = arith.addi %365, %c2_i32_315 : i32
    %c0_316 = arith.constant 0 : index
    %374 = arith.index_cast %373 : i32 to index
    %c0_317 = arith.constant 0 : index
    %c0_318 = arith.constant 0 : index
    %375 = vector.load %arg2[%c0_316, %374, %c0_317, %c0_318] : memref<1x72x5x3xf32, #tpu.memory_space<vmem>>, vector<1x1x4x3xf32>
    %376 = vector.shape_cast %375 : vector<1x1x4x3xf32> to vector<4x3xf32>
    %cst_319 = arith.constant dense<0.000000e+00> : vector<4x4xf32>
    %377 = tpu.matmul %376, %366, %cst_319 {dimension_numbers = #tpu.dot_dimension_numbers<[1], [0], [0], [1], [0, 0, 1, 1], [], []>} : vector<4x3xf32>, vector<3x4xf32>, vector<4x4xf32> -> vector<4x4xf32>
    %378 = arith.addf %363, %377 : vector<4x4xf32>
    %c21_320 = arith.constant 21 : index
    %c0_321 = arith.constant 0 : index
    %379 = vector.load %arg3[%c21_320, %c0_321] : memref<27x4xf32, #tpu.memory_space<vmem>>, vector<3x4xf32>
    %c1_i32_322 = arith.constant 1 : i32
    %380 = arith.addi %365, %c1_i32_322 : i32
    %c0_323 = arith.constant 0 : index
    %381 = arith.index_cast %380 : i32 to index
    %c0_324 = arith.constant 0 : index
    %c0_325 = arith.constant 0 : index
    %382 = vector.load %arg2[%c0_323, %381, %c0_324, %c0_325] : memref<1x72x5x3xf32, #tpu.memory_space<vmem>>, vector<1x1x4x3xf32>
    %383 = vector.shape_cast %382 : vector<1x1x4x3xf32> to vector<4x3xf32>
    %cst_326 = arith.constant dense<0.000000e+00> : vector<4x4xf32>
    %384 = tpu.matmul %383, %379, %cst_326 {dimension_numbers = #tpu.dot_dimension_numbers<[1], [0], [0], [1], [0, 0, 1, 1], [], []>} : vector<4x3xf32>, vector<3x4xf32>, vector<4x4xf32> -> vector<4x4xf32>
    %385 = arith.addf %372, %384 : vector<4x4xf32>
    %c3_i32_327 = arith.constant 3 : i32
    %386 = arith.addi %365, %c3_i32_327 : i32
    %c0_328 = arith.constant 0 : index
    %387 = arith.index_cast %386 : i32 to index
    %c0_329 = arith.constant 0 : index
    %c0_330 = arith.constant 0 : index
    %388 = vector.load %arg2[%c0_328, %387, %c0_329, %c0_330] : memref<1x72x5x3xf32, #tpu.memory_space<vmem>>, vector<1x1x4x3xf32>
    %389 = vector.shape_cast %388 : vector<1x1x4x3xf32> to vector<4x3xf32>
    %cst_331 = arith.constant dense<0.000000e+00> : vector<4x4xf32>
    %390 = tpu.matmul %389, %379, %cst_331 {dimension_numbers = #tpu.dot_dimension_numbers<[1], [0], [0], [1], [0, 0, 1, 1], [], []>} : vector<4x3xf32>, vector<3x4xf32>, vector<4x4xf32> -> vector<4x4xf32>
    %391 = arith.addf %378, %390 : vector<4x4xf32>
    %c24_332 = arith.constant 24 : index
    %c0_333 = arith.constant 0 : index
    %392 = vector.load %arg3[%c24_332, %c0_333] : memref<27x4xf32, #tpu.memory_space<vmem>>, vector<3x4xf32>
    %c2_i32_334 = arith.constant 2 : i32
    %393 = arith.addi %365, %c2_i32_334 : i32
    %c0_335 = arith.constant 0 : index
    %394 = arith.index_cast %393 : i32 to index
    %c0_336 = arith.constant 0 : index
    %c0_337 = arith.constant 0 : index
    %395 = vector.load %arg2[%c0_335, %394, %c0_336, %c0_337] : memref<1x72x5x3xf32, #tpu.memory_space<vmem>>, vector<1x1x4x3xf32>
    %396 = vector.shape_cast %395 : vector<1x1x4x3xf32> to vector<4x3xf32>
    %cst_338 = arith.constant dense<0.000000e+00> : vector<4x4xf32>
    %397 = tpu.matmul %396, %392, %cst_338 {dimension_numbers = #tpu.dot_dimension_numbers<[1], [0], [0], [1], [0, 0, 1, 1], [], []>} : vector<4x3xf32>, vector<3x4xf32>, vector<4x4xf32> -> vector<4x4xf32>
    %398 = arith.addf %385, %397 : vector<4x4xf32>
    %c0_i32_339 = arith.constant 0 : i32
    %399 = arith.addi %365, %c0_i32_339 : i32
    %c0_340 = arith.constant 0 : index
    %400 = arith.index_cast %399 : i32 to index
    %c1_341 = arith.constant 1 : index
    %c0_342 = arith.constant 0 : index
    %401 = vector.load %arg2[%c0_340, %400, %c1_341, %c0_342] : memref<1x72x5x3xf32, #tpu.memory_space<vmem>>, vector<1x1x4x3xf32>
    %402 = vector.shape_cast %401 : vector<1x1x4x3xf32> to vector<4x3xf32>
    %cst_343 = arith.constant dense<0.000000e+00> : vector<4x4xf32>
    %403 = tpu.matmul %402, %392, %cst_343 {dimension_numbers = #tpu.dot_dimension_numbers<[1], [0], [0], [1], [0, 0, 1, 1], [], []>} : vector<4x3xf32>, vector<3x4xf32>, vector<4x4xf32> -> vector<4x4xf32>
    %404 = arith.addf %391, %403 : vector<4x4xf32>
    %405 = vector.broadcast %0 : vector<1x4xf32> to vector<4x4xf32>
    %406 = arith.addf %398, %405 : vector<4x4xf32>
    %cst_344 = arith.constant 0.000000e+00 : f32
    %407 = vector.broadcast %cst_344 : f32 to vector<4x4xf32>
    %408 = arith.maximumf %406, %407 : vector<4x4xf32>
    %409 = vector.broadcast %0 : vector<1x4xf32> to vector<4x4xf32>
    %410 = arith.addf %404, %409 : vector<4x4xf32>
    %cst_345 = arith.constant 0.000000e+00 : f32
    %411 = vector.broadcast %cst_345 : f32 to vector<4x4xf32>
    %412 = arith.maximumf %410, %411 : vector<4x4xf32>
    %cst_346 = arith.constant 0.000000e+00 : f32
    %413 = vector.broadcast %cst_346 : f32 to vector<4x8xf32>
    %cst_347 = arith.constant 0.000000e+00 : f32
    %414 = vector.broadcast %cst_347 : f32 to vector<4x8xf32>
    %c4 = arith.constant 4 : index
    %c0_348 = arith.constant 0 : index
    %415 = vector.load %arg5[%c4, %c0_348] : memref<36x8xf32, #tpu.memory_space<vmem>>, vector<4x8xf32>
    %cst_349 = arith.constant dense<0.000000e+00> : vector<4x8xf32>
    %416 = tpu.matmul %141, %415, %cst_349 {dimension_numbers = #tpu.dot_dimension_numbers<[1], [0], [0], [1], [0, 0, 1, 1], [], []>} : vector<4x4xf32>, vector<4x8xf32>, vector<4x8xf32> -> vector<4x8xf32>
    %417 = arith.addf %413, %416 : vector<4x8xf32>
    %c8 = arith.constant 8 : index
    %c0_350 = arith.constant 0 : index
    %418 = vector.load %arg5[%c8, %c0_350] : memref<36x8xf32, #tpu.memory_space<vmem>>, vector<4x8xf32>
    %cst_351 = arith.constant dense<0.000000e+00> : vector<4x8xf32>
    %419 = tpu.matmul %143, %418, %cst_351 {dimension_numbers = #tpu.dot_dimension_numbers<[1], [0], [0], [1], [0, 0, 1, 1], [], []>} : vector<4x4xf32>, vector<4x8xf32>, vector<4x8xf32> -> vector<4x8xf32>
    %420 = arith.addf %417, %419 : vector<4x8xf32>
    %c0_352 = arith.constant 0 : index
    %c0_353 = arith.constant 0 : index
    %421 = vector.load %arg5[%c0_352, %c0_353] : memref<36x8xf32, #tpu.memory_space<vmem>>, vector<4x8xf32>
    %cst_354 = arith.constant dense<0.000000e+00> : vector<4x8xf32>
    %422 = tpu.matmul %143, %421, %cst_354 {dimension_numbers = #tpu.dot_dimension_numbers<[1], [0], [0], [1], [0, 0, 1, 1], [], []>} : vector<4x4xf32>, vector<4x8xf32>, vector<4x8xf32> -> vector<4x8xf32>
    %423 = arith.addf %414, %422 : vector<4x8xf32>
    %c16 = arith.constant 16 : index
    %c0_355 = arith.constant 0 : index
    %424 = vector.load %arg5[%c16, %c0_355] : memref<36x8xf32, #tpu.memory_space<vmem>>, vector<4x8xf32>
    %cst_356 = arith.constant dense<0.000000e+00> : vector<4x8xf32>
    %425 = tpu.matmul %273, %424, %cst_356 {dimension_numbers = #tpu.dot_dimension_numbers<[1], [0], [0], [1], [0, 0, 1, 1], [], []>} : vector<4x4xf32>, vector<4x8xf32>, vector<4x8xf32> -> vector<4x8xf32>
    %426 = arith.addf %420, %425 : vector<4x8xf32>
    %c20 = arith.constant 20 : index
    %c0_357 = arith.constant 0 : index
    %427 = vector.load %arg5[%c20, %c0_357] : memref<36x8xf32, #tpu.memory_space<vmem>>, vector<4x8xf32>
    %cst_358 = arith.constant dense<0.000000e+00> : vector<4x8xf32>
    %428 = tpu.matmul %277, %427, %cst_358 {dimension_numbers = #tpu.dot_dimension_numbers<[1], [0], [0], [1], [0, 0, 1, 1], [], []>} : vector<4x4xf32>, vector<4x8xf32>, vector<4x8xf32> -> vector<4x8xf32>
    %429 = arith.addf %426, %428 : vector<4x8xf32>
    %c12_359 = arith.constant 12 : index
    %c0_360 = arith.constant 0 : index
    %430 = vector.load %arg5[%c12_359, %c0_360] : memref<36x8xf32, #tpu.memory_space<vmem>>, vector<4x8xf32>
    %cst_361 = arith.constant dense<0.000000e+00> : vector<4x8xf32>
    %431 = tpu.matmul %277, %430, %cst_361 {dimension_numbers = #tpu.dot_dimension_numbers<[1], [0], [0], [1], [0, 0, 1, 1], [], []>} : vector<4x4xf32>, vector<4x8xf32>, vector<4x8xf32> -> vector<4x8xf32>
    %432 = arith.addf %423, %431 : vector<4x8xf32>
    %c28 = arith.constant 28 : index
    %c0_362 = arith.constant 0 : index
    %433 = vector.load %arg5[%c28, %c0_362] : memref<36x8xf32, #tpu.memory_space<vmem>>, vector<4x8xf32>
    %cst_363 = arith.constant dense<0.000000e+00> : vector<4x8xf32>
    %434 = tpu.matmul %408, %433, %cst_363 {dimension_numbers = #tpu.dot_dimension_numbers<[1], [0], [0], [1], [0, 0, 1, 1], [], []>} : vector<4x4xf32>, vector<4x8xf32>, vector<4x8xf32> -> vector<4x8xf32>
    %435 = arith.addf %429, %434 : vector<4x8xf32>
    %c32 = arith.constant 32 : index
    %c0_364 = arith.constant 0 : index
    %436 = vector.load %arg5[%c32, %c0_364] : memref<36x8xf32, #tpu.memory_space<vmem>>, vector<4x8xf32>
    %cst_365 = arith.constant dense<0.000000e+00> : vector<4x8xf32>
    %437 = tpu.matmul %412, %436, %cst_365 {dimension_numbers = #tpu.dot_dimension_numbers<[1], [0], [0], [1], [0, 0, 1, 1], [], []>} : vector<4x4xf32>, vector<4x8xf32>, vector<4x8xf32> -> vector<4x8xf32>
    %438 = arith.addf %435, %437 : vector<4x8xf32>
    %c24_366 = arith.constant 24 : index
    %c0_367 = arith.constant 0 : index
    %439 = vector.load %arg5[%c24_366, %c0_367] : memref<36x8xf32, #tpu.memory_space<vmem>>, vector<4x8xf32>
    %cst_368 = arith.constant dense<0.000000e+00> : vector<4x8xf32>
    %440 = tpu.matmul %412, %439, %cst_368 {dimension_numbers = #tpu.dot_dimension_numbers<[1], [0], [0], [1], [0, 0, 1, 1], [], []>} : vector<4x4xf32>, vector<4x8xf32>, vector<4x8xf32> -> vector<4x8xf32>
    %441 = arith.addf %432, %440 : vector<4x8xf32>
    %442 = tpu.iota {dimensions = array<i32: 0>} : vector<4x4xi32>
    %443 = tpu.iota {dimensions = array<i32: 1>} : vector<4x4xi32>
    %c1_i32_369 = arith.constant 1 : i32
    %444 = vector.broadcast %c1_i32_369 : i32 to vector<4x4xi32>
    %445 = arith.addi %443, %444 : vector<4x4xi32>
    %446 = arith.cmpi eq, %442, %445 : vector<4x4xi32>
    %447 = arith.extui %446 : vector<4x4xi1> to vector<4x4xi32>
    %448 = arith.sitofp %447 : vector<4x4xi32> to vector<4x4xf32>
    %cst_370 = arith.constant dense<0.000000e+00> : vector<4x8xf32>
    %449 = tpu.matmul %448, %441, %cst_370 {dimension_numbers = #tpu.dot_dimension_numbers<[1], [0], [0], [1], [0, 0, 1, 1], [], []>} : vector<4x4xf32>, vector<4x8xf32>, vector<4x8xf32> -> vector<4x8xf32>
    %450 = arith.addf %438, %449 : vector<4x8xf32>
    %c0_371 = arith.constant 0 : index
    %c0_372 = arith.constant 0 : index
    %451 = vector.load %arg6[%c0_371, %c0_372] : memref<1x8xf32, #tpu.memory_space<vmem>>, vector<1x8xf32>
    %452 = vector.broadcast %451 : vector<1x8xf32> to vector<4x8xf32>
    %453 = arith.addf %450, %452 : vector<4x8xf32>
    %cst_373 = arith.constant 0.000000e+00 : f32
    %454 = vector.broadcast %cst_373 : f32 to vector<4x8xf32>
    %455 = arith.maximumf %453, %454 : vector<4x8xf32>
    %c0_374 = arith.constant 0 : index
    %c0_375 = arith.constant 0 : index
    %456 = vector.load %arg7[%c0_374, %c0_375] : memref<8x32xf32, #tpu.memory_space<vmem>>, vector<8x32xf32>
    %cst_376 = arith.constant dense<0.000000e+00> : vector<4x32xf32>
    %457 = tpu.matmul %455, %456, %cst_376 {dimension_numbers = #tpu.dot_dimension_numbers<[1], [0], [0], [1], [0, 0, 1, 1], [], []>} : vector<4x8xf32>, vector<8x32xf32>, vector<4x32xf32> -> vector<4x32xf32>
    %c0_377 = arith.constant 0 : index
    %c0_378 = arith.constant 0 : index
    %458 = vector.load %arg8[%c0_377, %c0_378] : memref<1x32xf32, #tpu.memory_space<vmem>>, vector<1x32xf32>
    %459 = vector.broadcast %458 : vector<1x32xf32> to vector<4x32xf32>
    %460 = arith.addf %457, %459 : vector<4x32xf32>
    %c0_379 = arith.constant 0 : index
    %c0_380 = arith.constant 0 : index
    %c0_381 = arith.constant 0 : index
    %c0_382 = arith.constant 0 : index
    %461 = vector.load %arg9[%c0_379, %c0_380, %c0_381, %c0_382] : memref<1x1x4x32xf32, #tpu.memory_space<vmem>>, vector<1x1x4x32xf32>
    %462 = vector.shape_cast %461 : vector<1x1x4x32xf32> to vector<4x32xf32>
    %463 = vector.shape_cast %460 : vector<4x32xf32> to vector<1x1x4x32xf32>
    tpu.vector_store %arg9[%c0_379, %c0_380, %c0_381, %c0_382], %463 {strides = array<i32>} : memref<1x1x4x32xf32, #tpu.memory_space<vmem>>, vector<1x1x4x32xf32>,
    return
  }
  func.func @transform_0(%arg0: i32, %arg1: i32) -> (i32, i32, i32, i32) {
    %c0_i32 = arith.constant 0 : i32
    %c0_i32_0 = arith.constant 0 : i32
    %c0_i32_1 = arith.constant 0 : i32
    %c0_i32_2 = arith.constant 0 : i32
    return %arg0, %c0_i32, %c0_i32_0, %c0_i32_1 : i32, i32, i32, i32
  }
  func.func @transform_1(%arg0: i32, %arg1: i32) -> (i32, i32) {
    %c0_i32 = arith.constant 0 : i32
    %c0_i32_0 = arith.constant 0 : i32
    %c0_i32_1 = arith.constant 0 : i32
    return %c0_i32, %c0_i32_0 : i32, i32
  }
  func.func @transform_2(%arg0: i32, %arg1: i32) -> (i32, i32) {
    %c0_i32 = arith.constant 0 : i32
    %c0_i32_0 = arith.constant 0 : i32
    %c0_i32_1 = arith.constant 0 : i32
    return %c0_i32, %c0_i32_0 : i32, i32
  }
  func.func @transform_3(%arg0: i32, %arg1: i32) -> (i32, i32) {
    %c0_i32 = arith.constant 0 : i32
    %c0_i32_0 = arith.constant 0 : i32
    %c0_i32_1 = arith.constant 0 : i32
    return %c0_i32, %c0_i32_0 : i32, i32
  }
  func.func @transform_4(%arg0: i32, %arg1: i32) -> (i32, i32) {
    %c0_i32 = arith.constant 0 : i32
    %c0_i32_0 = arith.constant 0 : i32
    %c0_i32_1 = arith.constant 0 : i32
    return %c0_i32, %c0_i32_0 : i32, i32
  }
  func.func @transform_5(%arg0: i32, %arg1: i32) -> (i32, i32) {
    %c0_i32 = arith.constant 0 : i32
    %c0_i32_0 = arith.constant 0 : i32
    %c0_i32_1 = arith.constant 0 : i32
    return %c0_i32, %c0_i32_0 : i32, i32
  }
  func.func @transform_6(%arg0: i32, %arg1: i32) -> (i32, i32) {
    %c0_i32 = arith.constant 0 : i32
    %c0_i32_0 = arith.constant 0 : i32
    %c0_i32_1 = arith.constant 0 : i32
    return %c0_i32, %c0_i32_0 : i32, i32
  }
  func.func @transform_7(%arg0: i32, %arg1: i32) -> (i32, i32, i32, i32) {
    %c0_i32 = arith.constant 0 : i32
    %c0_i32_0 = arith.constant 0 : i32
    %c0_i32_1 = arith.constant 0 : i32
    return %arg0, %arg1, %c0_i32, %c0_i32_0 : i32, i32, i32, i32
  }
}

</mosaic_0001>

<llo_original>
// kernel: conv_stem_forward.1
$region0: #{conv_stem_forward.1}
  #allocation0 [shape = 'u32[]', space=smem, size = 0x4, offset = 0x4, fixed_abs, tag = 'smem constant byte address 0x4 - core index']
  #allocation1 [shape = 'u32[144,128]{1,0:T(1,128)}', space=vmem, size = 0x12000, scoped, tag = 'internal scratch']
  %s0 = inlined_call_operand.vmem [shape: f32[2,72,5,3], index: 0, kind: input, shape index: {}]
  %s1 = inlined_call_operand.vmem [shape: f32[27,4], index: 1, kind: input, shape index: {}]
  %s2 = inlined_call_operand.vmem [shape: f32[1,4], index: 2, kind: input, shape index: {}]
  %s3 = inlined_call_operand.vmem [shape: f32[36,8], index: 3, kind: input, shape index: {}]
  %s4 = inlined_call_operand.vmem [shape: f32[1,8], index: 4, kind: input, shape index: {}]
  %s5 = inlined_call_operand.vmem [shape: f32[8,32], index: 5, kind: input, shape index: {}]
  %s6 = inlined_call_operand.vmem [shape: f32[1,32], index: 6, kind: input, shape index: {}]
  %s7 = inlined_call_operand.hbm [shape: f32[2,4,4,32], index: 7, kind: output, shape index: {}]
  %s8 = sld [smem:[#allocation0]]
  $region61: #{conv_stem_forward.1} parent=0
    _
  %s10 = ssub.s32 1, %s8
  %s11 = scalar_select 0, %s10, %s8
  $region1: #{conv_stem_forward.1} parent=0
    #allocation2 [shape = 'u8[4096]{0}', space=vmem, size = 0x1000, scoped, tag = 'output window, operand 0']
    #allocation3 [shape = 's32[2]{0}', space=sflag, size = 0x8, scoped, tag = 'scoped memory for conv_stem_forward.1']
    %12 = vsyncpa [#allocation3], 0
    %s13 = scalar_lea.sflag [#allocation3], 1
    %14 = vsyncpa %s13, 0
    loop: start=0, step=1, limit=10
    $region2: #{conv_stem_forward.1} parent=1 // loop_pre_header
      _
    $region3: #{conv_stem_forward.1} parent=1 // loop_header
      %s16 = sphi 0, %s20
      %p17 = scmp.ge.s32.totalorder %s16, 10
      %s23 = sphi 0, %s35
      %s24 = sphi 0, %s31
      %s25 = sphi 0, %s23
      %s26 = sphi 0, %s24
      %s27 = sphi 0, %s25
      %s28 = sphi 0, %s26
      %s38 = sphi 0, %s40
      %s41 = sphi 0, %s38
      %s42 = sphi 0, %s41
      %s58 = sphi 0, %s42
      %s62 = sphi 0, %s62
      %s64 = sphi 0, %s62
      %s65 = sphi 0, %s64
      %s79 = sphi 0, %s65
      %s83 = sphi 0, %s83
      %s85 = sphi 0, %s83
      %s86 = sphi 0, %s85
      %s100 = sphi 0, %s86
      %s104 = sphi 0, %s104
      %s106 = sphi 0, %s104
      %s107 = sphi 0, %s106
      %s121 = sphi 0, %s107
      %s125 = sphi 0, %s125
      %s127 = sphi 0, %s125
      %s128 = sphi 0, %s127
      %s142 = sphi 0, %s128
      %s146 = sphi 0, %s146
      %s148 = sphi 0, %s146
      %s149 = sphi 0, %s148
      %s163 = sphi 0, %s149
      %s167 = sphi 0, %s167
      %s169 = sphi 0, %s167
      %s170 = sphi 0, %s169
      %s184 = sphi 0, %s170
      %s192 = sphi 0, %s194
      %s195 = sphi 0, %s192
      %s196 = sphi 0, %s195
      %s212 = sphi 0, %s196
    $region4: #{conv_stem_forward.1} parent=1 // loop_header_branch
      %19 = sbr.rel (%p17) target = $region8
    $region5: #{conv_stem_forward.1} parent=1 // loop_body
      %s21 = ssub.s32 %s16, 1
      %s22 = ssub.s32 %s16, 2
      %s29 = sadd.s32 1, %s24
      %p30 = scmp.ge.s32.totalorder %s29, 4
      %s31 = scalar_select %p30, 0, %s29
      %s32 = sadd.s32 1, %s23
      %s33 = scalar_select %p30, %s32, %s23
      %p34 = scmp.ge.s32.totalorder %s33, 2
      %s35 = scalar_select %p34, 0, %s33
      %s36 = ssub.s32 %s23, %s35
      %p37 = scmp.eq.s32.totalorder %s36, 0
      %s39 = sadd.s32 %s38, 1
      %s40 = scalar_select %p37, %s38, %s39
      %p43 = pneg %p37
      %p44 = scmp.eq.s32.totalorder %s16, 7
      %p45 = por %p43, %p44
      %p46 = scmp.ne.s32.totalorder %s38, %s41
      %p47 = scmp.eq.s32.totalorder %s16, 0
      %p48 = por %p46, %p47
      %p49 = scmp.ne.s32.totalorder %s38, %s41
      %p50 = scmp.eq.s32.totalorder %s21, 7
      %p51 = por %p49, %p50
      %p52 = scmp.ne.s32.totalorder %s41, %s42
      %p53 = scmp.eq.s32.totalorder %s21, 0
      %p54 = por %p52, %p53
      %p55 = scmp.ne.s32.totalorder %s41, %s42
      %p56 = scmp.eq.s32.totalorder %s22, 7
      %p57 = por %p55, %p56
      %p59 = scmp.ne.s32.totalorder %s42, %s58
      %p60 = scmp.eq.s32.totalorder %s22, 0
      %p61 = por %p59, %p60
      %s63 = sadd.s32 %s62, 1
      %p66 = scmp.eq.s32.totalorder %s16, 7
      %p67 = scmp.ne.s32.totalorder %s62, %s64
      %p68 = scmp.eq.s32.totalorder %s16, 0
      %p69 = por %p67, %p68
      %p70 = scmp.ne.s32.totalorder %s62, %s64
      %p71 = scmp.eq.s32.totalorder %s21, 7
      %p72 = por %p70, %p71
      %p73 = scmp.ne.s32.totalorder %s64, %s65
      %p74 = scmp.eq.s32.totalorder %s21, 0
      %p75 = por %p73, %p74
      %p76 = scmp.ne.s32.totalorder %s64, %s65
      %p77 = scmp.eq.s32.totalorder %s22, 7
      %p78 = por %p76, %p77
      %p80 = scmp.ne.s32.totalorder %s65, %s79
      %p81 = scmp.eq.s32.totalorder %s22, 0
      %p82 = por %p80, %p81
      %s84 = sadd.s32 %s83, 1
      %p87 = scmp.eq.s32.totalorder %s16, 7
      %p88 = scmp.ne.s32.totalorder %s83, %s85
      %p89 = scmp.eq.s32.totalorder %s16, 0
      %p90 = por %p88, %p89
      %p91 = scmp.ne.s32.totalorder %s83, %s85
      %p92 = scmp.eq.s32.totalorder %s21, 7
      %p93 = por %p91, %p92
      %p94 = scmp.ne.s32.totalorder %s85, %s86
      %p95 = scmp.eq.s32.totalorder %s21, 0
      %p96 = por %p94, %p95
      %p97 = scmp.ne.s32.totalorder %s85, %s86
      %p98 = scmp.eq.s32.totalorder %s22, 7
      %p99 = por %p97, %p98
      %p101 = scmp.ne.s32.totalorder %s86, %s100
      %p102 = scmp.eq.s32.totalorder %s22, 0
      %p103 = por %p101, %p102
      %s105 = sadd.s32 %s104, 1
      %p108 = scmp.eq.s32.totalorder %s16, 7
      %p109 = scmp.ne.s32.totalorder %s104, %s106
      %p110 = scmp.eq.s32.totalorder %s16, 0
      %p111 = por %p109, %p110
      %p112 = scmp.ne.s32.totalorder %s104, %s106
      %p113 = scmp.eq.s32.totalorder %s21, 7
      %p114 = por %p112, %p113
      %p115 = scmp.ne.s32.totalorder %s106, %s107
      %p116 = scmp.eq.s32.totalorder %s21, 0
      %p117 = por %p115, %p116
      %p118 = scmp.ne.s32.totalorder %s106, %s107
      %p119 = scmp.eq.s32.totalorder %s22, 7
      %p120 = por %p118, %p119
      %p122 = scmp.ne.s32.totalorder %s107, %s121
      %p123 = scmp.eq.s32.totalorder %s22, 0
      %p124 = por %p122, %p123
      %s126 = sadd.s32 %s125, 1
      %p129 = scmp.eq.s32.totalorder %s16, 7
      %p130 = scmp.ne.s32.totalorder %s125, %s127
      %p131 = scmp.eq.s32.totalorder %s16, 0
      %p132 = por %p130, %p131
      %p133 = scmp.ne.s32.totalorder %s125, %s127
      %p134 = scmp.eq.s32.totalorder %s21, 7
      %p135 = por %p133, %p134
      %p136 = scmp.ne.s32.totalorder %s127, %s128
      %p137 = scmp.eq.s32.totalorder %s21, 0
      %p138 = por %p136, %p137
      %p139 = scmp.ne.s32.totalorder %s127, %s128
      %p140 = scmp.eq.s32.totalorder %s22, 7
      %p141 = por %p139, %p140
      %p143 = scmp.ne.s32.totalorder %s128, %s142
      %p144 = scmp.eq.s32.totalorder %s22, 0
      %p145 = por %p143, %p144
      %s147 = sadd.s32 %s146, 1
      %p150 = scmp.eq.s32.totalorder %s16, 7
      %p151 = scmp.ne.s32.totalorder %s146, %s148
      %p152 = scmp.eq.s32.totalorder %s16, 0
      %p153 = por %p151, %p152
      %p154 = scmp.ne.s32.totalorder %s146, %s148
      %p155 = scmp.eq.s32.totalorder %s21, 7
      %p156 = por %p154, %p155
      %p157 = scmp.ne.s32.totalorder %s148, %s149
      %p158 = scmp.eq.s32.totalorder %s21, 0
      %p159 = por %p157, %p158
      %p160 = scmp.ne.s32.totalorder %s148, %s149
      %p161 = scmp.eq.s32.totalorder %s22, 7
      %p162 = por %p160, %p161
      %p164 = scmp.ne.s32.totalorder %s149, %s163
      %p165 = scmp.eq.s32.totalorder %s22, 0
      %p166 = por %p164, %p165
      %s168 = sadd.s32 %s167, 1
      %p171 = scmp.eq.s32.totalorder %s16, 7
      %p172 = scmp.ne.s32.totalorder %s167, %s169
      %p173 = scmp.eq.s32.totalorder %s16, 0
      %p174 = por %p172, %p173
      %p175 = scmp.ne.s32.totalorder %s167, %s169
      %p176 = scmp.eq.s32.totalorder %s21, 7
      %p177 = por %p175, %p176
      %p178 = scmp.ne.s32.totalorder %s169, %s170
      %p179 = scmp.eq.s32.totalorder %s21, 0
      %p180 = por %p178, %p179
      %p181 = scmp.ne.s32.totalorder %s169, %s170
      %p182 = scmp.eq.s32.totalorder %s22, 7
      %p183 = por %p181, %p182
      %p185 = scmp.ne.s32.totalorder %s170, %s184
      %p186 = scmp.eq.s32.totalorder %s22, 0
      %p187 = por %p185, %p186
      %s188 = ssub.s32 %s23, %s35
      %s189 = ssub.s32 %s24, %s31
      %s190 = sor.u32 %s188, %s189
      %p191 = scmp.eq.s32.totalorder %s190, 0
      %s193 = sadd.s32 %s192, 1
      %s194 = scalar_select %p191, %s192, %s193
      %p197 = pneg %p191
      %p198 = scmp.eq.s32.totalorder %s16, 7
      %p199 = por %p197, %p198
      %p200 = scmp.ne.s32.totalorder %s192, %s195
      %p201 = scmp.eq.s32.totalorder %s16, 0
      %p202 = por %p200, %p201
      %p203 = scmp.ne.s32.totalorder %s192, %s195
      %p204 = scmp.eq.s32.totalorder %s21, 7
      %p205 = por %p203, %p204
      %p206 = scmp.ne.s32.totalorder %s195, %s196
      %p207 = scmp.eq.s32.totalorder %s21, 0
      %p208 = por %p206, %p207
      %p209 = scmp.ne.s32.totalorder %s195, %s196
      %p210 = scmp.eq.s32.totalorder %s22, 7
      %p211 = por %p209, %p210
      %p213 = scmp.ne.s32.totalorder %s196, %s212
      %p214 = scmp.eq.s32.totalorder %s22, 0
      %p215 = por %p213, %p214
      %p216 = scmp.le.s32.totalorder 1, %s16
      %p217 = scmp.lt.s32.totalorder %s16, 9
      %p218 = pnand %p216, %p217
      %p219 = pneg %p218
      // Predicated region
      $region9: #{conv_stem_forward.1} parent=5 // pred_check
        _
      $region10: #{conv_stem_forward.1} parent=5 // pred_check_branch
        %221 = sbr.rel (%p218) target = $region12
      $region11: #{conv_stem_forward.1} parent=5 // pred_region
        %s222 = ssub.s32 %s16, 1
        // Predicated region
        $region13: #{conv_stem_forward.1} parent=11 // pred_check
          %p223 = pneg %p75
        $region14: #{conv_stem_forward.1} parent=11 // pred_check_branch
          %225 = sbr.rel (%p223) target = $region16
        $region15: #{conv_stem_forward.1} parent=11 // pred_region
          _
        $region16: #{conv_stem_forward.1} parent=11 // pred_fallthru
          _
        // Predicated region
        $region17: #{conv_stem_forward.1} parent=11 // pred_check
          %p226 = pneg %p96
        $region18: #{conv_stem_forward.1} parent=11 // pred_check_branch
          %228 = sbr.rel (%p226) target = $region20
        $region19: #{conv_stem_forward.1} parent=11 // pred_region
          _
        $region20: #{conv_stem_forward.1} parent=11 // pred_fallthru
          _
        // Predicated region
        $region21: #{conv_stem_forward.1} parent=11 // pred_check
          %p229 = pneg %p117
        $region22: #{conv_stem_forward.1} parent=11 // pred_check_branch
          %231 = sbr.rel (%p229) target = $region24
        $region23: #{conv_stem_forward.1} parent=11 // pred_region
          _
        $region24: #{conv_stem_forward.1} parent=11 // pred_fallthru
          _
        // Predicated region
        $region25: #{conv_stem_forward.1} parent=11 // pred_check
          %p232 = pneg %p138
        $region26: #{conv_stem_forward.1} parent=11 // pred_check_branch
          %234 = sbr.rel (%p232) target = $region28
        $region27: #{conv_stem_forward.1} parent=11 // pred_region
          _
        $region28: #{conv_stem_forward.1} parent=11 // pred_fallthru
          _
        // Predicated region
        $region29: #{conv_stem_forward.1} parent=11 // pred_check
          %p235 = pneg %p159
        $region30: #{conv_stem_forward.1} parent=11 // pred_check_branch
          %237 = sbr.rel (%p235) target = $region32
        $region31: #{conv_stem_forward.1} parent=11 // pred_region
          _
        $region32: #{conv_stem_forward.1} parent=11 // pred_fallthru
          _
        // Predicated region
        $region33: #{conv_stem_forward.1} parent=11 // pred_check
          %p238 = pneg %p180
        $region34: #{conv_stem_forward.1} parent=11 // pred_check_branch
          %240 = sbr.rel (%p238) target = $region36
        $region35: #{conv_stem_forward.1} parent=11 // pred_region
          _
        $region36: #{conv_stem_forward.1} parent=11 // pred_fallthru
          _
      $region12: #{conv_stem_forward.1} parent=5 // pred_fallthru
        _
      %p241 = scmp.lt.s32.totalorder %s16, 8
      // Predicated region
      $region37: #{conv_stem_forward.1} parent=5 // pred_check
        %p242 = pneg %p241
      $region38: #{conv_stem_forward.1} parent=5 // pred_check_branch
        %244 = sbr.rel (%p242) target = $region40
      $region39: #{conv_stem_forward.1} parent=5 // pred_region
        // Predicated region
        $region41: #{conv_stem_forward.1} parent=39 // pred_check
          %p245 = pneg %p48
        $region42: #{conv_stem_forward.1} parent=39 // pred_check_branch
          %247 = sbr.rel (%p245) target = $region44
        $region43: #{conv_stem_forward.1} parent=39 // pred_region
          %p248 = scmp.lt.s32.totalorder %s23, 1
          %s249 = scalar_select %p248, %s23, 1
          %s250 = smul.addr %s249, 72
          %s251 = smul.addr %s250, 8
          %s252 = scalar_lea.vmem %s0, %s251
        $region44: #{conv_stem_forward.1} parent=39 // pred_fallthru
          _
      $region40: #{conv_stem_forward.1} parent=5 // pred_fallthru
        _
      %p253 = scmp.le.s32.totalorder 1, %s16
      %p254 = scmp.lt.s32.totalorder %s16, 9
      %p255 = pnand %p253, %p254
      %p256 = pneg %p255
      // Predicated region
      $region45: #{conv_stem_forward.1} parent=5 // pred_check
        _
      $region46: #{conv_stem_forward.1} parent=5 // pred_check_branch
        %258 = sbr.rel (%p255) target = $region48
      $region47: #{conv_stem_forward.1} parent=5 // pred_region
        %s259 = ssub.s32 %s16, 1
        %p260 = scmp.lt.s32.totalorder %s25, 1
        %s261 = scalar_select %p260, %s25, 1
        %s262 = smul.addr %s261, 72
        %s263 = smul.addr %s262, 8
        %s264 = scalar_lea.vmem %s0, %s263
        %p265 = pneg %p54
        %p266 = pneg %p51
        %p267 = pneg %p75
        %p268 = pneg %p72
        %p269 = pneg %p96
        %p270 = pneg %p93
        %p271 = pneg %p117
        %p272 = pneg %p114
        %p273 = pneg %p138
        %p274 = pneg %p135
        %p275 = pneg %p159
        %p276 = pneg %p156
        %p277 = pneg %p180
        %p278 = pneg %p177
        %p279 = pneg %p208
        %p280 = pneg %p205
        %s281 = sand.u32 %s195, 1
        %s282 = scalar_lea.sflag [#allocation3], %s281
        %s283 = sand.u32 %s195, 1
        %s284 = smul.addr %s283, 4
        %s285 = scalar_lea.vmem [#allocation2], %s284
        %p286 = scmp.lt.s32.totalorder %s25, 1
        %s287 = scalar_select %p286, %s25, 1
        %s288 = smul.addr %s287, 72
        %s289 = smul.addr %s288, 8
        %s290 = scalar_lea.vmem %s0, %s289
        %v291 = vld [vmem:[%s2] sm:$0x1]
        %p292 = scmp.gt.s32.totalorder %s26, 0
        %s293 = scalar_select %p292, 1, 0
        %s294 = scvt.s32.f32 %s293
        %s295 = smul.u32 %s26, 2
        %s296 = ssub.s32 %s295, 1
        %p297 = scmp.gt.s32.totalorder %s296, 0
        %s298 = scalar_select %p297, %s296, 0
        %s299 = smul.u32 %s298, 8
        %v300 = vld [vmem:[%s1] sm:$0x7]
        %s301 = smul.u32 %s299, 8
        %s302 = scalar_lea.vmem %s290, %s301
        %v303 = vld [vmem:[%s302] sm:$0xf]
        %s304 = sadd.s32 %s299, 2
        %s305 = smul.u32 %s304, 8
        %s306 = scalar_lea.vmem %s290, %s305
        %v307 = vld [vmem:[%s306] sm:$0xf]
        %v308 = vld [vmem:[%s1 + $0x3] sm:$0x7]
        %s309 = sadd.s32 %s299, 1
        %s310 = smul.u32 %s309, 8
        %s311 = scalar_lea.vmem %s290, %s310
        %v312 = vld [vmem:[%s311] sm:$0xf]
        %vm313 = vcmask 23552
        %v315 = vsel %vm313, %v312, 0
        %vm317 = vcmask 1042432
        %v319 = vsel %vm317, %v308, 0
        %321 = vmatprep.subr.mxu0 0.0
        %322 = vmatpush1.msra.mxu0 %v319
        %323 = vmatprep.subr.mxu0 0.0
        %324 = vmatpush1.msra.mxu0 0.0
        %325 = vmatprep.subr.mxu0 0.0
        %326 = vmatpush1.msra.mxu0 0.0
        %327 = vmatprep.subr.mxu0 0.0
        %328 = vmatpush1.msra.mxu0 0.0
        %329 = vmatprep.subr.mxu0 0.0
        %330 = vmatpush1.msra.mxu0 0.0
        %331 = vmatprep.subr.mxu0 0.0
        %332 = vmatpush1.msra.mxu0 0.0
        %333 = vmatprep.subr.mxu0 0.0
        %334 = vmatpush1.msra.mxu0 0.0
        %335 = vmatprep.subr.mxu0 0.0
        %336 = vmatpush1.msra.mxu0 0.0
        %337 = vmatprep.subr.mxu0 0.0
        %338 = vmatpush1.msra.mxu0 0.0
        %339 = vmatprep.subr.mxu0 0.0
        %340 = vmatpush1.msra.mxu0 0.0
        %341 = vmatprep.subr.mxu0 0.0
        %342 = vmatpush1.msra.mxu0 0.0
        %343 = vmatprep.subr.mxu0 0.0
        %344 = vmatpush1.msra.mxu0 0.0
        %345 = vmatprep.subr.mxu0 0.0
        %346 = vmatpush1.msra.mxu0 0.0
        %347 = vmatprep.subr.mxu0 0.0
        %348 = vmatpush1.msra.mxu0 0.0
        %349 = vmatprep.subr.mxu0 0.0
        %350 = vmatpush1.msra.mxu0 0.0
        %351 = vmatprep.subr.mxu0 0.0
        %352 = vmatpush1.msra.mxu0 0.0
        %353 = vmatprep.subr.mxu0 0.0
        %354 = vmatpush1.msra.mxu0 0.0
        %355 = vmatprep.subr.mxu0 0.0
        %356 = vmatpush1.msra.mxu0 0.0
        %357 = vmatprep.subr.mxu0 0.0
        %358 = vmatpush1.msra.mxu0 0.0
        %359 = vmatprep.subr.mxu0 0.0
        %360 = vmatpush1.msra.mxu0 0.0
        %361 = vmatprep.subr.mxu0 0.0
        %362 = vmatpush1.msra.mxu0 0.0
        %363 = vmatprep.subr.mxu0 0.0
        %364 = vmatpush1.msra.mxu0 0.0
        %365 = vmatprep.subr.mxu0 0.0
        %366 = vmatpush1.msra.mxu0 0.0
        %367 = vmatprep.subr.mxu0 0.0
        %368 = vmatpush1.msra.mxu0 0.0
        %369 = vmatprep.subr.mxu0 0.0
        %370 = vmatpush1.msra.mxu0 0.0
        %371 = vmatprep.subr.mxu0 0.0
        %372 = vmatpush1.msra.mxu0 0.0
        %373 = vmatprep.subr.mxu0 0.0
        %374 = vmatpush1.msra.mxu0 0.0
        %375 = vmatprep.subr.mxu0 0.0
        %376 = vmatpush1.msra.mxu0 0.0
        %377 = vmatprep.subr.mxu0 0.0
        %378 = vmatpush1.msra.mxu0 0.0
        %379 = vmatprep.subr.mxu0 0.0
        %380 = vmatpush1.msra.mxu0 0.0
        %381 = vmatprep.subr.mxu0 0.0
        %382 = vmatpush1.msra.mxu0 0.0
        %383 = vmatprep.subr.mxu0 0.0
        %384 = vmatpush1.msra.mxu0 0.0
        %385 = vmatprep.mubr.f32.mxu0 0.0
        %386 = vmatmul.mubr.f32.gmra.mrb[0].mxu0 %v315
        %v387 = vpop.f32.mrb[0].mxu0
        %v388 = vadd.f32 0.0, %v387
        %v389 = vpop.f32.mrb[0].mxu0
        %390 = vdwg.mxu0
        %v392 = vsel %vm313, %v303, 0
        %v395 = vsel %vm317, %v300, 0
        %397 = vmatprep.subr.mxu0 0.0
        %398 = vmatpush1.msra.mxu0 %v395
        %399 = vmatprep.subr.mxu0 0.0
        %400 = vmatpush1.msra.mxu0 0.0
        %401 = vmatprep.subr.mxu0 0.0
        %402 = vmatpush1.msra.mxu0 0.0
        %403 = vmatprep.subr.mxu0 0.0
        %404 = vmatpush1.msra.mxu0 0.0
        %405 = vmatprep.subr.mxu0 0.0
        %406 = vmatpush1.msra.mxu0 0.0
        %407 = vmatprep.subr.mxu0 0.0
        %408 = vmatpush1.msra.mxu0 0.0
        %409 = vmatprep.subr.mxu0 0.0
        %410 = vmatpush1.msra.mxu0 0.0
        %411 = vmatprep.subr.mxu0 0.0
        %412 = vmatpush1.msra.mxu0 0.0
        %413 = vmatprep.subr.mxu0 0.0
        %414 = vmatpush1.msra.mxu0 0.0
        %415 = vmatprep.subr.mxu0 0.0
        %416 = vmatpush1.msra.mxu0 0.0
        %417 = vmatprep.subr.mxu0 0.0
        %418 = vmatpush1.msra.mxu0 0.0
        %419 = vmatprep.subr.mxu0 0.0
        %420 = vmatpush1.msra.mxu0 0.0
        %421 = vmatprep.subr.mxu0 0.0
        %422 = vmatpush1.msra.mxu0 0.0
        %423 = vmatprep.subr.mxu0 0.0
        %424 = vmatpush1.msra.mxu0 0.0
        %425 = vmatprep.subr.mxu0 0.0
        %426 = vmatpush1.msra.mxu0 0.0
        %427 = vmatprep.subr.mxu0 0.0
        %428 = vmatpush1.msra.mxu0 0.0
        %429 = vmatprep.subr.mxu0 0.0
        %430 = vmatpush1.msra.mxu0 0.0
        %431 = vmatprep.subr.mxu0 0.0
        %432 = vmatpush1.msra.mxu0 0.0
        %433 = vmatprep.subr.mxu0 0.0
        %434 = vmatpush1.msra.mxu0 0.0
        %435 = vmatprep.subr.mxu0 0.0
        %436 = vmatpush1.msra.mxu0 0.0
        %437 = vmatprep.subr.mxu0 0.0
        %438 = vmatpush1.msra.mxu0 0.0
        %439 = vmatprep.subr.mxu0 0.0
        %440 = vmatpush1.msra.mxu0 0.0
        %441 = vmatprep.subr.mxu0 0.0
        %442 = vmatpush1.msra.mxu0 0.0
        %443 = vmatprep.subr.mxu0 0.0
        %444 = vmatpush1.msra.mxu0 0.0
        %445 = vmatprep.subr.mxu0 0.0
        %446 = vmatpush1.msra.mxu0 0.0
        %447 = vmatprep.subr.mxu0 0.0
        %448 = vmatpush1.msra.mxu0 0.0
        %449 = vmatprep.subr.mxu0 0.0
        %450 = vmatpush1.msra.mxu0 0.0
        %451 = vmatprep.subr.mxu0 0.0
        %452 = vmatpush1.msra.mxu0 0.0
        %453 = vmatprep.subr.mxu0 0.0
        %454 = vmatpush1.msra.mxu0 0.0
        %455 = vmatprep.subr.mxu0 0.0
        %456 = vmatpush1.msra.mxu0 0.0
        %457 = vmatprep.subr.mxu0 0.0
        %458 = vmatpush1.msra.mxu0 0.0
        %459 = vmatprep.subr.mxu0 0.0
        %460 = vmatpush1.msra.mxu0 0.0
        %461 = vmatprep.mubr.f32.mxu0 0.0
        %462 = vmatmul.mubr.f32.gmra.mrb[0].mxu0 %v392
        %v463 = vpop.f32.mrb[0].mxu0
        %v464 = vadd.f32 %v388, %v463
        %v465 = vpop.f32.mrb[0].mxu0
        %466 = vdwg.mxu0
        %s467 = sadd.s32 %s299, 3
        %s468 = smul.u32 %s467, 8
        %s469 = scalar_lea.vmem %s290, %s468
        %v470 = vld [vmem:[%s469] sm:$0xf]
        %v472 = vsel %vm313, %v470, 0
        %474 = vmatprep.subr.mxu0 0.0
        %475 = vmatpush1.msra.mxu0 %v319
        %476 = vmatprep.subr.mxu0 0.0
        %477 = vmatpush1.msra.mxu0 0.0
        %478 = vmatprep.subr.mxu0 0.0
        %479 = vmatpush1.msra.mxu0 0.0
        %480 = vmatprep.subr.mxu0 0.0
        %481 = vmatpush1.msra.mxu0 0.0
        %482 = vmatprep.subr.mxu0 0.0
        %483 = vmatpush1.msra.mxu0 0.0
        %484 = vmatprep.subr.mxu0 0.0
        %485 = vmatpush1.msra.mxu0 0.0
        %486 = vmatprep.subr.mxu0 0.0
        %487 = vmatpush1.msra.mxu0 0.0
        %488 = vmatprep.subr.mxu0 0.0
        %489 = vmatpush1.msra.mxu0 0.0
        %490 = vmatprep.subr.mxu0 0.0
        %491 = vmatpush1.msra.mxu0 0.0
        %492 = vmatprep.subr.mxu0 0.0
        %493 = vmatpush1.msra.mxu0 0.0
        %494 = vmatprep.subr.mxu0 0.0
        %495 = vmatpush1.msra.mxu0 0.0
        %496 = vmatprep.subr.mxu0 0.0
        %497 = vmatpush1.msra.mxu0 0.0
        %498 = vmatprep.subr.mxu0 0.0
        %499 = vmatpush1.msra.mxu0 0.0
        %500 = vmatprep.subr.mxu0 0.0
        %501 = vmatpush1.msra.mxu0 0.0
        %502 = vmatprep.subr.mxu0 0.0
        %503 = vmatpush1.msra.mxu0 0.0
        %504 = vmatprep.subr.mxu0 0.0
        %505 = vmatpush1.msra.mxu0 0.0
        %506 = vmatprep.subr.mxu0 0.0
        %507 = vmatpush1.msra.mxu0 0.0
        %508 = vmatprep.subr.mxu0 0.0
        %509 = vmatpush1.msra.mxu0 0.0
        %510 = vmatprep.subr.mxu0 0.0
        %511 = vmatpush1.msra.mxu0 0.0
        %512 = vmatprep.subr.mxu0 0.0
        %513 = vmatpush1.msra.mxu0 0.0
        %514 = vmatprep.subr.mxu0 0.0
        %515 = vmatpush1.msra.mxu0 0.0
        %516 = vmatprep.subr.mxu0 0.0
        %517 = vmatpush1.msra.mxu0 0.0
        %518 = vmatprep.subr.mxu0 0.0
        %519 = vmatpush1.msra.mxu0 0.0
        %520 = vmatprep.subr.mxu0 0.0
        %521 = vmatpush1.msra.mxu0 0.0
        %522 = vmatprep.subr.mxu0 0.0
        %523 = vmatpush1.msra.mxu0 0.0
        %524 = vmatprep.subr.mxu0 0.0
        %525 = vmatpush1.msra.mxu0 0.0
        %526 = vmatprep.subr.mxu0 0.0
        %527 = vmatpush1.msra.mxu0 0.0
        %528 = vmatprep.subr.mxu0 0.0
        %529 = vmatpush1.msra.mxu0 0.0
        %530 = vmatprep.subr.mxu0 0.0
        %531 = vmatpush1.msra.mxu0 0.0
        %532 = vmatprep.subr.mxu0 0.0
        %533 = vmatpush1.msra.mxu0 0.0
        %534 = vmatprep.subr.mxu0 0.0
        %535 = vmatpush1.msra.mxu0 0.0
        %536 = vmatprep.subr.mxu0 0.0
        %537 = vmatpush1.msra.mxu0 0.0
        %538 = vmatprep.mubr.f32.mxu0 0.0
        %539 = vmatmul.mubr.f32.gmra.mrb[0].mxu0 %v472
        %v540 = vpop.f32.mrb[0].mxu0
        %v541 = vadd.f32 0.0, %v540
        %v542 = vpop.f32.mrb[0].mxu0
        %543 = vdwg.mxu0
        %v545 = vsel %vm313, %v307, 0
        %547 = vmatprep.subr.mxu0 0.0
        %548 = vmatpush1.msra.mxu0 %v395
        %549 = vmatprep.subr.mxu0 0.0
        %550 = vmatpush1.msra.mxu0 0.0
        %551 = vmatprep.subr.mxu0 0.0
        %552 = vmatpush1.msra.mxu0 0.0
        %553 = vmatprep.subr.mxu0 0.0
        %554 = vmatpush1.msra.mxu0 0.0
        %555 = vmatprep.subr.mxu0 0.0
        %556 = vmatpush1.msra.mxu0 0.0
        %557 = vmatprep.subr.mxu0 0.0
        %558 = vmatpush1.msra.mxu0 0.0
        %559 = vmatprep.subr.mxu0 0.0
        %560 = vmatpush1.msra.mxu0 0.0
        %561 = vmatprep.subr.mxu0 0.0
        %562 = vmatpush1.msra.mxu0 0.0
        %563 = vmatprep.subr.mxu0 0.0
        %564 = vmatpush1.msra.mxu0 0.0
        %565 = vmatprep.subr.mxu0 0.0
        %566 = vmatpush1.msra.mxu0 0.0
        %567 = vmatprep.subr.mxu0 0.0
        %568 = vmatpush1.msra.mxu0 0.0
        %569 = vmatprep.subr.mxu0 0.0
        %570 = vmatpush1.msra.mxu0 0.0
        %571 = vmatprep.subr.mxu0 0.0
        %572 = vmatpush1.msra.mxu0 0.0
        %573 = vmatprep.subr.mxu0 0.0
        %574 = vmatpush1.msra.mxu0 0.0
        %575 = vmatprep.subr.mxu0 0.0
        %576 = vmatpush1.msra.mxu0 0.0
        %577 = vmatprep.subr.mxu0 0.0
        %578 = vmatpush1.msra.mxu0 0.0
        %579 = vmatprep.subr.mxu0 0.0
        %580 = vmatpush1.msra.mxu0 0.0
        %581 = vmatprep.subr.mxu0 0.0
        %582 = vmatpush1.msra.mxu0 0.0
        %583 = vmatprep.subr.mxu0 0.0
        %584 = vmatpush1.msra.mxu0 0.0
        %585 = vmatprep.subr.mxu0 0.0
        %586 = vmatpush1.msra.mxu0 0.0
        %587 = vmatprep.subr.mxu0 0.0
        %588 = vmatpush1.msra.mxu0 0.0
        %589 = vmatprep.subr.mxu0 0.0
        %590 = vmatpush1.msra.mxu0 0.0
        %591 = vmatprep.subr.mxu0 0.0
        %592 = vmatpush1.msra.mxu0 0.0
        %593 = vmatprep.subr.mxu0 0.0
        %594 = vmatpush1.msra.mxu0 0.0
        %595 = vmatprep.subr.mxu0 0.0
        %596 = vmatpush1.msra.mxu0 0.0
        %597 = vmatprep.subr.mxu0 0.0
        %598 = vmatpush1.msra.mxu0 0.0
        %599 = vmatprep.subr.mxu0 0.0
        %600 = vmatpush1.msra.mxu0 0.0
        %601 = vmatprep.subr.mxu0 0.0
        %602 = vmatpush1.msra.mxu0 0.0
        %603 = vmatprep.subr.mxu0 0.0
        %604 = vmatpush1.msra.mxu0 0.0
        %605 = vmatprep.subr.mxu0 0.0
        %606 = vmatpush1.msra.mxu0 0.0
        %607 = vmatprep.subr.mxu0 0.0
        %608 = vmatpush1.msra.mxu0 0.0
        %609 = vmatprep.subr.mxu0 0.0
        %610 = vmatpush1.msra.mxu0 0.0
        %611 = vmatprep.mubr.f32.mxu0 0.0
        %612 = vmatmul.mubr.f32.gmra.mrb[0].mxu0 %v545
        %v613 = vpop.f32.mrb[0].mxu0
        %v614 = vadd.f32 %v541, %v613
        %v615 = vpop.f32.mrb[0].mxu0
        %616 = vdwg.mxu0
        %v617 = vld [vmem:[%s1 + $0x6] sm:$0x7]
        %v619 = vsel %vm317, %v617, 0
        %621 = vmatprep.subr.mxu0 0.0
        %622 = vmatpush1.msra.mxu0 %v619
        %623 = vmatprep.subr.mxu0 0.0
        %624 = vmatpush1.msra.mxu0 0.0
        %625 = vmatprep.subr.mxu0 0.0
        %626 = vmatpush1.msra.mxu0 0.0
        %627 = vmatprep.subr.mxu0 0.0
        %628 = vmatpush1.msra.mxu0 0.0
        %629 = vmatprep.subr.mxu0 0.0
        %630 = vmatpush1.msra.mxu0 0.0
        %631 = vmatprep.subr.mxu0 0.0
        %632 = vmatpush1.msra.mxu0 0.0
        %633 = vmatprep.subr.mxu0 0.0
        %634 = vmatpush1.msra.mxu0 0.0
        %635 = vmatprep.subr.mxu0 0.0
        %636 = vmatpush1.msra.mxu0 0.0
        %637 = vmatprep.subr.mxu0 0.0
        %638 = vmatpush1.msra.mxu0 0.0
        %639 = vmatprep.subr.mxu0 0.0
        %640 = vmatpush1.msra.mxu0 0.0
        %641 = vmatprep.subr.mxu0 0.0
        %642 = vmatpush1.msra.mxu0 0.0
        %643 = vmatprep.subr.mxu0 0.0
        %644 = vmatpush1.msra.mxu0 0.0
        %645 = vmatprep.subr.mxu0 0.0
        %646 = vmatpush1.msra.mxu0 0.0
        %647 = vmatprep.subr.mxu0 0.0
        %648 = vmatpush1.msra.mxu0 0.0
        %649 = vmatprep.subr.mxu0 0.0
        %650 = vmatpush1.msra.mxu0 0.0
        %651 = vmatprep.subr.mxu0 0.0
        %652 = vmatpush1.msra.mxu0 0.0
        %653 = vmatprep.subr.mxu0 0.0
        %654 = vmatpush1.msra.mxu0 0.0
        %655 = vmatprep.subr.mxu0 0.0
        %656 = vmatpush1.msra.mxu0 0.0
        %657 = vmatprep.subr.mxu0 0.0
        %658 = vmatpush1.msra.mxu0 0.0
        %659 = vmatprep.subr.mxu0 0.0
        %660 = vmatpush1.msra.mxu0 0.0
        %661 = vmatprep.subr.mxu0 0.0
        %662 = vmatpush1.msra.mxu0 0.0
        %663 = vmatprep.subr.mxu0 0.0
        %664 = vmatpush1.msra.mxu0 0.0
        %665 = vmatprep.subr.mxu0 0.0
        %666 = vmatpush1.msra.mxu0 0.0
        %667 = vmatprep.subr.mxu0 0.0
        %668 = vmatpush1.msra.mxu0 0.0
        %669 = vmatprep.subr.mxu0 0.0
        %670 = vmatpush1.msra.mxu0 0.0
        %671 = vmatprep.subr.mxu0 0.0
        %672 = vmatpush1.msra.mxu0 0.0
        %673 = vmatprep.subr.mxu0 0.0
        %674 = vmatpush1.msra.mxu0 0.0
        %675 = vmatprep.subr.mxu0 0.0
        %676 = vmatpush1.msra.mxu0 0.0
        %677 = vmatprep.subr.mxu0 0.0
        %678 = vmatpush1.msra.mxu0 0.0
        %679 = vmatprep.subr.mxu0 0.0
        %680 = vmatpush1.msra.mxu0 0.0
        %681 = vmatprep.subr.mxu0 0.0
        %682 = vmatpush1.msra.mxu0 0.0
        %683 = vmatprep.subr.mxu0 0.0
        %684 = vmatpush1.msra.mxu0 0.0
        %685 = vmatprep.mubr.f32.mxu0 0.0
        %686 = vmatmul.mubr.f32.gmra.mrb[0].mxu0 %v545
        %v687 = vpop.f32.mrb[0].mxu0
        %v688 = vadd.f32 0.0, %v687
        %v689 = vpop.f32.mrb[0].mxu0
        %690 = vdwg.mxu0
        %v691 = vadd.f32 %v464, %v688
        %v692 = vld [vmem:[%s302 + $0x1] sm:$0xf]
        %v694 = vsel %vm313, %v692, 0
        %696 = vmatprep.subr.mxu0 0.0
        %697 = vmatpush1.msra.mxu0 %v619
        %698 = vmatprep.subr.mxu0 0.0
        %699 = vmatpush1.msra.mxu0 0.0
        %700 = vmatprep.subr.mxu0 0.0
        %701 = vmatpush1.msra.mxu0 0.0
        %702 = vmatprep.subr.mxu0 0.0
        %703 = vmatpush1.msra.mxu0 0.0
        %704 = vmatprep.subr.mxu0 0.0
        %705 = vmatpush1.msra.mxu0 0.0
        %706 = vmatprep.subr.mxu0 0.0
        %707 = vmatpush1.msra.mxu0 0.0
        %708 = vmatprep.subr.mxu0 0.0
        %709 = vmatpush1.msra.mxu0 0.0
        %710 = vmatprep.subr.mxu0 0.0
        %711 = vmatpush1.msra.mxu0 0.0
        %712 = vmatprep.subr.mxu0 0.0
        %713 = vmatpush1.msra.mxu0 0.0
        %714 = vmatprep.subr.mxu0 0.0
        %715 = vmatpush1.msra.mxu0 0.0
        %716 = vmatprep.subr.mxu0 0.0
        %717 = vmatpush1.msra.mxu0 0.0
        %718 = vmatprep.subr.mxu0 0.0
        %719 = vmatpush1.msra.mxu0 0.0
        %720 = vmatprep.subr.mxu0 0.0
        %721 = vmatpush1.msra.mxu0 0.0
        %722 = vmatprep.subr.mxu0 0.0
        %723 = vmatpush1.msra.mxu0 0.0
        %724 = vmatprep.subr.mxu0 0.0
        %725 = vmatpush1.msra.mxu0 0.0
        %726 = vmatprep.subr.mxu0 0.0
        %727 = vmatpush1.msra.mxu0 0.0
        %728 = vmatprep.subr.mxu0 0.0
        %729 = vmatpush1.msra.mxu0 0.0
        %730 = vmatprep.subr.mxu0 0.0
        %731 = vmatpush1.msra.mxu0 0.0
        %732 = vmatprep.subr.mxu0 0.0
        %733 = vmatpush1.msra.mxu0 0.0
        %734 = vmatprep.subr.mxu0 0.0
        %735 = vmatpush1.msra.mxu0 0.0
        %736 = vmatprep.subr.mxu0 0.0
        %737 = vmatpush1.msra.mxu0 0.0
        %738 = vmatprep.subr.mxu0 0.0
        %739 = vmatpush1.msra.mxu0 0.0
        %740 = vmatprep.subr.mxu0 0.0
        %741 = vmatpush1.msra.mxu0 0.0
        %742 = vmatprep.subr.mxu0 0.0
        %743 = vmatpush1.msra.mxu0 0.0
        %744 = vmatprep.subr.mxu0 0.0
        %745 = vmatpush1.msra.mxu0 0.0
        %746 = vmatprep.subr.mxu0 0.0
        %747 = vmatpush1.msra.mxu0 0.0
        %748 = vmatprep.subr.mxu0 0.0
        %749 = vmatpush1.msra.mxu0 0.0
        %750 = vmatprep.subr.mxu0 0.0
        %751 = vmatpush1.msra.mxu0 0.0
        %752 = vmatprep.subr.mxu0 0.0
        %753 = vmatpush1.msra.mxu0 0.0
        %754 = vmatprep.subr.mxu0 0.0
        %755 = vmatpush1.msra.mxu0 0.0
        %756 = vmatprep.subr.mxu0 0.0
        %757 = vmatpush1.msra.mxu0 0.0
        %758 = vmatprep.subr.mxu0 0.0
        %759 = vmatpush1.msra.mxu0 0.0
        %760 = vmatprep.mubr.f32.mxu0 0.0
        %761 = vmatmul.mubr.f32.gmra.mrb[0].mxu0 %v694
        %v762 = vpop.f32.mrb[0].mxu0
        %v763 = vadd.f32 0.0, %v762
        %v764 = vpop.f32.mrb[0].mxu0
        %765 = vdwg.mxu0
        %v766 = vadd.f32 %v614, %v763
        %s767 = sadd.s32 %s299, 4
        %v768 = vld [vmem:[%s1 + $0x9] sm:$0x7]
        %s769 = smul.u32 %s767, 8
        %s770 = scalar_lea.vmem %s290, %s769
        %v771 = vld [vmem:[%s770] sm:$0xf]
        %v773 = vsel %vm313, %v771, 0
        %v776 = vsel %vm317, %v768, 0
        %778 = vmatprep.subr.mxu0 0.0
        %779 = vmatpush1.msra.mxu0 %v776
        %780 = vmatprep.subr.mxu0 0.0
        %781 = vmatpush1.msra.mxu0 0.0
        %782 = vmatprep.subr.mxu0 0.0
        %783 = vmatpush1.msra.mxu0 0.0
        %784 = vmatprep.subr.mxu0 0.0
        %785 = vmatpush1.msra.mxu0 0.0
        %786 = vmatprep.subr.mxu0 0.0
        %787 = vmatpush1.msra.mxu0 0.0
        %788 = vmatprep.subr.mxu0 0.0
        %789 = vmatpush1.msra.mxu0 0.0
        %790 = vmatprep.subr.mxu0 0.0
        %791 = vmatpush1.msra.mxu0 0.0
        %792 = vmatprep.subr.mxu0 0.0
        %793 = vmatpush1.msra.mxu0 0.0
        %794 = vmatprep.subr.mxu0 0.0
        %795 = vmatpush1.msra.mxu0 0.0
        %796 = vmatprep.subr.mxu0 0.0
        %797 = vmatpush1.msra.mxu0 0.0
        %798 = vmatprep.subr.mxu0 0.0
        %799 = vmatpush1.msra.mxu0 0.0
        %800 = vmatprep.subr.mxu0 0.0
        %801 = vmatpush1.msra.mxu0 0.0
        %802 = vmatprep.subr.mxu0 0.0
        %803 = vmatpush1.msra.mxu0 0.0
        %804 = vmatprep.subr.mxu0 0.0
        %805 = vmatpush1.msra.mxu0 0.0
        %806 = vmatprep.subr.mxu0 0.0
        %807 = vmatpush1.msra.mxu0 0.0
        %808 = vmatprep.subr.mxu0 0.0
        %809 = vmatpush1.msra.mxu0 0.0
        %810 = vmatprep.subr.mxu0 0.0
        %811 = vmatpush1.msra.mxu0 0.0
        %812 = vmatprep.subr.mxu0 0.0
        %813 = vmatpush1.msra.mxu0 0.0
        %814 = vmatprep.subr.mxu0 0.0
        %815 = vmatpush1.msra.mxu0 0.0
        %816 = vmatprep.subr.mxu0 0.0
        %817 = vmatpush1.msra.mxu0 0.0
        %818 = vmatprep.subr.mxu0 0.0
        %819 = vmatpush1.msra.mxu0 0.0
        %820 = vmatprep.subr.mxu0 0.0
        %821 = vmatpush1.msra.mxu0 0.0
        %822 = vmatprep.subr.mxu0 0.0
        %823 = vmatpush1.msra.mxu0 0.0
        %824 = vmatprep.subr.mxu0 0.0
        %825 = vmatpush1.msra.mxu0 0.0
        %826 = vmatprep.subr.mxu0 0.0
        %827 = vmatpush1.msra.mxu0 0.0
        %828 = vmatprep.subr.mxu0 0.0
        %829 = vmatpush1.msra.mxu0 0.0
        %830 = vmatprep.subr.mxu0 0.0
        %831 = vmatpush1.msra.mxu0 0.0
        %832 = vmatprep.subr.mxu0 0.0
        %833 = vmatpush1.msra.mxu0 0.0
        %834 = vmatprep.subr.mxu0 0.0
        %835 = vmatpush1.msra.mxu0 0.0
        %836 = vmatprep.subr.mxu0 0.0
        %837 = vmatpush1.msra.mxu0 0.0
        %838 = vmatprep.subr.mxu0 0.0
        %839 = vmatpush1.msra.mxu0 0.0
        %840 = vmatprep.subr.mxu0 0.0
        %841 = vmatpush1.msra.mxu0 0.0
        %842 = vmatprep.mubr.f32.mxu0 0.0
        %843 = vmatmul.mubr.f32.gmra.mrb[0].mxu0 %v773
        %v844 = vpop.f32.mrb[0].mxu0
        %v845 = vadd.f32 0.0, %v844
        %v846 = vpop.f32.mrb[0].mxu0
        %847 = vdwg.mxu0
        %v848 = vadd.f32 %v691, %v845
        %s849 = sadd.s32 %s299, 6
        %s850 = smul.u32 %s849, 8
        %s851 = scalar_lea.vmem %s290, %s850
        %v852 = vld [vmem:[%s851] sm:$0xf]
        %v854 = vsel %vm313, %v852, 0
        %856 = vmatprep.subr.mxu0 0.0
        %857 = vmatpush1.msra.mxu0 %v776
        %858 = vmatprep.subr.mxu0 0.0
        %859 = vmatpush1.msra.mxu0 0.0
        %860 = vmatprep.subr.mxu0 0.0
        %861 = vmatpush1.msra.mxu0 0.0
        %862 = vmatprep.subr.mxu0 0.0
        %863 = vmatpush1.msra.mxu0 0.0
        %864 = vmatprep.subr.mxu0 0.0
        %865 = vmatpush1.msra.mxu0 0.0
        %866 = vmatprep.subr.mxu0 0.0
        %867 = vmatpush1.msra.mxu0 0.0
        %868 = vmatprep.subr.mxu0 0.0
        %869 = vmatpush1.msra.mxu0 0.0
        %870 = vmatprep.subr.mxu0 0.0
        %871 = vmatpush1.msra.mxu0 0.0
        %872 = vmatprep.subr.mxu0 0.0
        %873 = vmatpush1.msra.mxu0 0.0
        %874 = vmatprep.subr.mxu0 0.0
        %875 = vmatpush1.msra.mxu0 0.0
        %876 = vmatprep.subr.mxu0 0.0
        %877 = vmatpush1.msra.mxu0 0.0
        %878 = vmatprep.subr.mxu0 0.0
        %879 = vmatpush1.msra.mxu0 0.0
        %880 = vmatprep.subr.mxu0 0.0
        %881 = vmatpush1.msra.mxu0 0.0
        %882 = vmatprep.subr.mxu0 0.0
        %883 = vmatpush1.msra.mxu0 0.0
        %884 = vmatprep.subr.mxu0 0.0
        %885 = vmatpush1.msra.mxu0 0.0
        %886 = vmatprep.subr.mxu0 0.0
        %887 = vmatpush1.msra.mxu0 0.0
        %888 = vmatprep.subr.mxu0 0.0
        %889 = vmatpush1.msra.mxu0 0.0
        %890 = vmatprep.subr.mxu0 0.0
        %891 = vmatpush1.msra.mxu0 0.0
        %892 = vmatprep.subr.mxu0 0.0
        %893 = vmatpush1.msra.mxu0 0.0
        %894 = vmatprep.subr.mxu0 0.0
        %895 = vmatpush1.msra.mxu0 0.0
        %896 = vmatprep.subr.mxu0 0.0
        %897 = vmatpush1.msra.mxu0 0.0
        %898 = vmatprep.subr.mxu0 0.0
        %899 = vmatpush1.msra.mxu0 0.0
        %900 = vmatprep.subr.mxu0 0.0
        %901 = vmatpush1.msra.mxu0 0.0
        %902 = vmatprep.subr.mxu0 0.0
        %903 = vmatpush1.msra.mxu0 0.0
        %904 = vmatprep.subr.mxu0 0.0
        %905 = vmatpush1.msra.mxu0 0.0
        %906 = vmatprep.subr.mxu0 0.0
        %907 = vmatpush1.msra.mxu0 0.0
        %908 = vmatprep.subr.mxu0 0.0
        %909 = vmatpush1.msra.mxu0 0.0
        %910 = vmatprep.subr.mxu0 0.0
        %911 = vmatpush1.msra.mxu0 0.0
        %912 = vmatprep.subr.mxu0 0.0
        %913 = vmatpush1.msra.mxu0 0.0
        %914 = vmatprep.subr.mxu0 0.0
        %915 = vmatpush1.msra.mxu0 0.0
        %916 = vmatprep.subr.mxu0 0.0
        %917 = vmatpush1.msra.mxu0 0.0
        %918 = vmatprep.subr.mxu0 0.0
        %919 = vmatpush1.msra.mxu0 0.0
        %920 = vmatprep.mubr.f32.mxu0 0.0
        %921 = vmatmul.mubr.f32.gmra.mrb[0].mxu0 %v854
        %v922 = vpop.f32.mrb[0].mxu0
        %v923 = vadd.f32 0.0, %v922
        %v924 = vpop.f32.mrb[0].mxu0
        %925 = vdwg.mxu0
        %v926 = vadd.f32 %v766, %v923
        %v927 = vld [vmem:[%s1 + $0xc] sm:$0x7]
        %s928 = sadd.s32 %s299, 5
        %s929 = smul.u32 %s928, 8
        %s930 = scalar_lea.vmem %s290, %s929
        %v931 = vld [vmem:[%s930] sm:$0xf]
        %v933 = vsel %vm313, %v931, 0
        %v936 = vsel %vm317, %v927, 0
        %938 = vmatprep.subr.mxu0 0.0
        %939 = vmatpush1.msra.mxu0 %v936
        %940 = vmatprep.subr.mxu0 0.0
        %941 = vmatpush1.msra.mxu0 0.0
        %942 = vmatprep.subr.mxu0 0.0
        %943 = vmatpush1.msra.mxu0 0.0
        %944 = vmatprep.subr.mxu0 0.0
        %945 = vmatpush1.msra.mxu0 0.0
        %946 = vmatprep.subr.mxu0 0.0
        %947 = vmatpush1.msra.mxu0 0.0
        %948 = vmatprep.subr.mxu0 0.0
        %949 = vmatpush1.msra.mxu0 0.0
        %950 = vmatprep.subr.mxu0 0.0
        %951 = vmatpush1.msra.mxu0 0.0
        %952 = vmatprep.subr.mxu0 0.0
        %953 = vmatpush1.msra.mxu0 0.0
        %954 = vmatprep.subr.mxu0 0.0
        %955 = vmatpush1.msra.mxu0 0.0
        %956 = vmatprep.subr.mxu0 0.0
        %957 = vmatpush1.msra.mxu0 0.0
        %958 = vmatprep.subr.mxu0 0.0
        %959 = vmatpush1.msra.mxu0 0.0
        %960 = vmatprep.subr.mxu0 0.0
        %961 = vmatpush1.msra.mxu0 0.0
        %962 = vmatprep.subr.mxu0 0.0
        %963 = vmatpush1.msra.mxu0 0.0
        %964 = vmatprep.subr.mxu0 0.0
        %965 = vmatpush1.msra.mxu0 0.0
        %966 = vmatprep.subr.mxu0 0.0
        %967 = vmatpush1.msra.mxu0 0.0
        %968 = vmatprep.subr.mxu0 0.0
        %969 = vmatpush1.msra.mxu0 0.0
        %970 = vmatprep.subr.mxu0 0.0
        %971 = vmatpush1.msra.mxu0 0.0
        %972 = vmatprep.subr.mxu0 0.0
        %973 = vmatpush1.msra.mxu0 0.0
        %974 = vmatprep.subr.mxu0 0.0
        %975 = vmatpush1.msra.mxu0 0.0
        %976 = vmatprep.subr.mxu0 0.0
        %977 = vmatpush1.msra.mxu0 0.0
        %978 = vmatprep.subr.mxu0 0.0
        %979 = vmatpush1.msra.mxu0 0.0
        %980 = vmatprep.subr.mxu0 0.0
        %981 = vmatpush1.msra.mxu0 0.0
        %982 = vmatprep.subr.mxu0 0.0
        %983 = vmatpush1.msra.mxu0 0.0
        %984 = vmatprep.subr.mxu0 0.0
        %985 = vmatpush1.msra.mxu0 0.0
        %986 = vmatprep.subr.mxu0 0.0
        %987 = vmatpush1.msra.mxu0 0.0
        %988 = vmatprep.subr.mxu0 0.0
        %989 = vmatpush1.msra.mxu0 0.0
        %990 = vmatprep.subr.mxu0 0.0
        %991 = vmatpush1.msra.mxu0 0.0
        %992 = vmatprep.subr.mxu0 0.0
        %993 = vmatpush1.msra.mxu0 0.0
        %994 = vmatprep.subr.mxu0 0.0
        %995 = vmatpush1.msra.mxu0 0.0
        %996 = vmatprep.subr.mxu0 0.0
        %997 = vmatpush1.msra.mxu0 0.0
        %998 = vmatprep.subr.mxu0 0.0
        %999 = vmatpush1.msra.mxu0 0.0
        %1000 = vmatprep.subr.mxu0 0.0
        %1001 = vmatpush1.msra.mxu0 0.0
        %1002 = vmatprep.mubr.f32.mxu0 0.0
        %1003 = vmatmul.mubr.f32.gmra.mrb[0].mxu0 %v933
        %v1004 = vpop.f32.mrb[0].mxu0
        %v1005 = vadd.f32 0.0, %v1004
        %v1006 = vpop.f32.mrb[0].mxu0
        %1007 = vdwg.mxu0
        %v1008 = vadd.f32 %v848, %v1005
        %s1009 = sadd.s32 %s299, 7
        %s1010 = smul.u32 %s1009, 8
        %s1011 = scalar_lea.vmem %s290, %s1010
        %v1012 = vld [vmem:[%s1011] sm:$0xf]
        %v1014 = vsel %vm313, %v1012, 0
        %1016 = vmatprep.subr.mxu0 0.0
        %1017 = vmatpush1.msra.mxu0 %v936
        %1018 = vmatprep.subr.mxu0 0.0
        %1019 = vmatpush1.msra.mxu0 0.0
        %1020 = vmatprep.subr.mxu0 0.0
        %1021 = vmatpush1.msra.mxu0 0.0
        %1022 = vmatprep.subr.mxu0 0.0
        %1023 = vmatpush1.msra.mxu0 0.0
        %1024 = vmatprep.subr.mxu0 0.0
        %1025 = vmatpush1.msra.mxu0 0.0
        %1026 = vmatprep.subr.mxu0 0.0
        %1027 = vmatpush1.msra.mxu0 0.0
        %1028 = vmatprep.subr.mxu0 0.0
        %1029 = vmatpush1.msra.mxu0 0.0
        %1030 = vmatprep.subr.mxu0 0.0
        %1031 = vmatpush1.msra.mxu0 0.0
        %1032 = vmatprep.subr.mxu0 0.0
        %1033 = vmatpush1.msra.mxu0 0.0
        %1034 = vmatprep.subr.mxu0 0.0
        %1035 = vmatpush1.msra.mxu0 0.0
        %1036 = vmatprep.subr.mxu0 0.0
        %1037 = vmatpush1.msra.mxu0 0.0
        %1038 = vmatprep.subr.mxu0 0.0
        %1039 = vmatpush1.msra.mxu0 0.0
        %1040 = vmatprep.subr.mxu0 0.0
        %1041 = vmatpush1.msra.mxu0 0.0
        %1042 = vmatprep.subr.mxu0 0.0
        %1043 = vmatpush1.msra.mxu0 0.0
        %1044 = vmatprep.subr.mxu0 0.0
        %1045 = vmatpush1.msra.mxu0 0.0
        %1046 = vmatprep.subr.mxu0 0.0
        %1047 = vmatpush1.msra.mxu0 0.0
        %1048 = vmatprep.subr.mxu0 0.0
        %1049 = vmatpush1.msra.mxu0 0.0
        %1050 = vmatprep.subr.mxu0 0.0
        %1051 = vmatpush1.msra.mxu0 0.0
        %1052 = vmatprep.subr.mxu0 0.0
        %1053 = vmatpush1.msra.mxu0 0.0
        %1054 = vmatprep.subr.mxu0 0.0
        %1055 = vmatpush1.msra.mxu0 0.0
        %1056 = vmatprep.subr.mxu0 0.0
        %1057 = vmatpush1.msra.mxu0 0.0
        %1058 = vmatprep.subr.mxu0 0.0
        %1059 = vmatpush1.msra.mxu0 0.0
        %1060 = vmatprep.subr.mxu0 0.0
        %1061 = vmatpush1.msra.mxu0 0.0
        %1062 = vmatprep.subr.mxu0 0.0
        %1063 = vmatpush1.msra.mxu0 0.0
        %1064 = vmatprep.subr.mxu0 0.0
        %1065 = vmatpush1.msra.mxu0 0.0
        %1066 = vmatprep.subr.mxu0 0.0
        %1067 = vmatpush1.msra.mxu0 0.0
        %1068 = vmatprep.subr.mxu0 0.0
        %1069 = vmatpush1.msra.mxu0 0.0
        %1070 = vmatprep.subr.mxu0 0.0
        %1071 = vmatpush1.msra.mxu0 0.0
        %1072 = vmatprep.subr.mxu0 0.0
        %1073 = vmatpush1.msra.mxu0 0.0
        %1074 = vmatprep.subr.mxu0 0.0
        %1075 = vmatpush1.msra.mxu0 0.0
        %1076 = vmatprep.subr.mxu0 0.0
        %1077 = vmatpush1.msra.mxu0 0.0
        %1078 = vmatprep.subr.mxu0 0.0
        %1079 = vmatpush1.msra.mxu0 0.0
        %1080 = vmatprep.mubr.f32.mxu0 0.0
        %1081 = vmatmul.mubr.f32.gmra.mrb[0].mxu0 %v1014
        %v1082 = vpop.f32.mrb[0].mxu0
        %v1083 = vadd.f32 0.0, %v1082
        %v1084 = vpop.f32.mrb[0].mxu0
        %1085 = vdwg.mxu0
        %v1086 = vadd.f32 %v926, %v1083
        %v1087 = vld [vmem:[%s1 + $0xf] sm:$0x7]
        %v1089 = vsel %vm317, %v1087, 0
        %1091 = vmatprep.subr.mxu0 0.0
        %1092 = vmatpush1.msra.mxu0 %v1089
        %1093 = vmatprep.subr.mxu0 0.0
        %1094 = vmatpush1.msra.mxu0 0.0
        %1095 = vmatprep.subr.mxu0 0.0
        %1096 = vmatpush1.msra.mxu0 0.0
        %1097 = vmatprep.subr.mxu0 0.0
        %1098 = vmatpush1.msra.mxu0 0.0
        %1099 = vmatprep.subr.mxu0 0.0
        %1100 = vmatpush1.msra.mxu0 0.0
        %1101 = vmatprep.subr.mxu0 0.0
        %1102 = vmatpush1.msra.mxu0 0.0
        %1103 = vmatprep.subr.mxu0 0.0
        %1104 = vmatpush1.msra.mxu0 0.0
        %1105 = vmatprep.subr.mxu0 0.0
        %1106 = vmatpush1.msra.mxu0 0.0
        %1107 = vmatprep.subr.mxu0 0.0
        %1108 = vmatpush1.msra.mxu0 0.0
        %1109 = vmatprep.subr.mxu0 0.0
        %1110 = vmatpush1.msra.mxu0 0.0
        %1111 = vmatprep.subr.mxu0 0.0
        %1112 = vmatpush1.msra.mxu0 0.0
        %1113 = vmatprep.subr.mxu0 0.0
        %1114 = vmatpush1.msra.mxu0 0.0
        %1115 = vmatprep.subr.mxu0 0.0
        %1116 = vmatpush1.msra.mxu0 0.0
        %1117 = vmatprep.subr.mxu0 0.0
        %1118 = vmatpush1.msra.mxu0 0.0
        %1119 = vmatprep.subr.mxu0 0.0
        %1120 = vmatpush1.msra.mxu0 0.0
        %1121 = vmatprep.subr.mxu0 0.0
        %1122 = vmatpush1.msra.mxu0 0.0
        %1123 = vmatprep.subr.mxu0 0.0
        %1124 = vmatpush1.msra.mxu0 0.0
        %1125 = vmatprep.subr.mxu0 0.0
        %1126 = vmatpush1.msra.mxu0 0.0
        %1127 = vmatprep.subr.mxu0 0.0
        %1128 = vmatpush1.msra.mxu0 0.0
        %1129 = vmatprep.subr.mxu0 0.0
        %1130 = vmatpush1.msra.mxu0 0.0
        %1131 = vmatprep.subr.mxu0 0.0
        %1132 = vmatpush1.msra.mxu0 0.0
        %1133 = vmatprep.subr.mxu0 0.0
        %1134 = vmatpush1.msra.mxu0 0.0
        %1135 = vmatprep.subr.mxu0 0.0
        %1136 = vmatpush1.msra.mxu0 0.0
        %1137 = vmatprep.subr.mxu0 0.0
        %1138 = vmatpush1.msra.mxu0 0.0
        %1139 = vmatprep.subr.mxu0 0.0
        %1140 = vmatpush1.msra.mxu0 0.0
        %1141 = vmatprep.subr.mxu0 0.0
        %1142 = vmatpush1.msra.mxu0 0.0
        %1143 = vmatprep.subr.mxu0 0.0
        %1144 = vmatpush1.msra.mxu0 0.0
        %1145 = vmatprep.subr.mxu0 0.0
        %1146 = vmatpush1.msra.mxu0 0.0
        %1147 = vmatprep.subr.mxu0 0.0
        %1148 = vmatpush1.msra.mxu0 0.0
        %1149 = vmatprep.subr.mxu0 0.0
        %1150 = vmatpush1.msra.mxu0 0.0
        %1151 = vmatprep.subr.mxu0 0.0
        %1152 = vmatpush1.msra.mxu0 0.0
        %1153 = vmatprep.subr.mxu0 0.0
        %1154 = vmatpush1.msra.mxu0 0.0
        %1155 = vmatprep.mubr.f32.mxu0 0.0
        %1156 = vmatmul.mubr.f32.gmra.mrb[0].mxu0 %v854
        %v1157 = vpop.f32.mrb[0].mxu0
        %v1158 = vadd.f32 0.0, %v1157
        %v1159 = vpop.f32.mrb[0].mxu0
        %1160 = vdwg.mxu0
        %v1161 = vadd.f32 %v1008, %v1158
        %v1162 = vld [vmem:[%s770 + $0x1] sm:$0xf]
        %v1164 = vsel %vm313, %v1162, 0
        %1166 = vmatprep.subr.mxu0 0.0
        %1167 = vmatpush1.msra.mxu0 %v1089
        %1168 = vmatprep.subr.mxu0 0.0
        %1169 = vmatpush1.msra.mxu0 0.0
        %1170 = vmatprep.subr.mxu0 0.0
        %1171 = vmatpush1.msra.mxu0 0.0
        %1172 = vmatprep.subr.mxu0 0.0
        %1173 = vmatpush1.msra.mxu0 0.0
        %1174 = vmatprep.subr.mxu0 0.0
        %1175 = vmatpush1.msra.mxu0 0.0
        %1176 = vmatprep.subr.mxu0 0.0
        %1177 = vmatpush1.msra.mxu0 0.0
        %1178 = vmatprep.subr.mxu0 0.0
        %1179 = vmatpush1.msra.mxu0 0.0
        %1180 = vmatprep.subr.mxu0 0.0
        %1181 = vmatpush1.msra.mxu0 0.0
        %1182 = vmatprep.subr.mxu0 0.0
        %1183 = vmatpush1.msra.mxu0 0.0
        %1184 = vmatprep.subr.mxu0 0.0
        %1185 = vmatpush1.msra.mxu0 0.0
        %1186 = vmatprep.subr.mxu0 0.0
        %1187 = vmatpush1.msra.mxu0 0.0
        %1188 = vmatprep.subr.mxu0 0.0
        %1189 = vmatpush1.msra.mxu0 0.0
        %1190 = vmatprep.subr.mxu0 0.0
        %1191 = vmatpush1.msra.mxu0 0.0
        %1192 = vmatprep.subr.mxu0 0.0
        %1193 = vmatpush1.msra.mxu0 0.0
        %1194 = vmatprep.subr.mxu0 0.0
        %1195 = vmatpush1.msra.mxu0 0.0
        %1196 = vmatprep.subr.mxu0 0.0
        %1197 = vmatpush1.msra.mxu0 0.0
        %1198 = vmatprep.subr.mxu0 0.0
        %1199 = vmatpush1.msra.mxu0 0.0
        %1200 = vmatprep.subr.mxu0 0.0
        %1201 = vmatpush1.msra.mxu0 0.0
        %1202 = vmatprep.subr.mxu0 0.0
        %1203 = vmatpush1.msra.mxu0 0.0
        %1204 = vmatprep.subr.mxu0 0.0
        %1205 = vmatpush1.msra.mxu0 0.0
        %1206 = vmatprep.subr.mxu0 0.0
        %1207 = vmatpush1.msra.mxu0 0.0
        %1208 = vmatprep.subr.mxu0 0.0
        %1209 = vmatpush1.msra.mxu0 0.0
        %1210 = vmatprep.subr.mxu0 0.0
        %1211 = vmatpush1.msra.mxu0 0.0
        %1212 = vmatprep.subr.mxu0 0.0
        %1213 = vmatpush1.msra.mxu0 0.0
        %1214 = vmatprep.subr.mxu0 0.0
        %1215 = vmatpush1.msra.mxu0 0.0
        %1216 = vmatprep.subr.mxu0 0.0
        %1217 = vmatpush1.msra.mxu0 0.0
        %1218 = vmatprep.subr.mxu0 0.0
        %1219 = vmatpush1.msra.mxu0 0.0
        %1220 = vmatprep.subr.mxu0 0.0
        %1221 = vmatpush1.msra.mxu0 0.0
        %1222 = vmatprep.subr.mxu0 0.0
        %1223 = vmatpush1.msra.mxu0 0.0
        %1224 = vmatprep.subr.mxu0 0.0
        %1225 = vmatpush1.msra.mxu0 0.0
        %1226 = vmatprep.subr.mxu0 0.0
        %1227 = vmatpush1.msra.mxu0 0.0
        %1228 = vmatprep.subr.mxu0 0.0
        %1229 = vmatpush1.msra.mxu0 0.0
        %1230 = vmatprep.mubr.f32.mxu0 0.0
        %1231 = vmatmul.mubr.f32.gmra.mrb[0].mxu0 %v1164
        %v1232 = vpop.f32.mrb[0].mxu0
        %v1233 = vadd.f32 0.0, %v1232
        %v1234 = vpop.f32.mrb[0].mxu0
        %1235 = vdwg.mxu0
        %v1236 = vadd.f32 %v1086, %v1233
        %s1237 = sadd.s32 %s299, 8
        %v1238 = vld [vmem:[%s1 + $0x12] sm:$0x7]
        %s1239 = smul.u32 %s1237, 8
        %s1240 = scalar_lea.vmem %s290, %s1239
        %v1241 = vld [vmem:[%s1240] sm:$0xf]
        %v1243 = vsel %vm313, %v1241, 0
        %v1246 = vsel %vm317, %v1238, 0
        %1248 = vmatprep.subr.mxu0 0.0
        %1249 = vmatpush1.msra.mxu0 %v1246
        %1250 = vmatprep.subr.mxu0 0.0
        %1251 = vmatpush1.msra.mxu0 0.0
        %1252 = vmatprep.subr.mxu0 0.0
        %1253 = vmatpush1.msra.mxu0 0.0
        %1254 = vmatprep.subr.mxu0 0.0
        %1255 = vmatpush1.msra.mxu0 0.0
        %1256 = vmatprep.subr.mxu0 0.0
        %1257 = vmatpush1.msra.mxu0 0.0
        %1258 = vmatprep.subr.mxu0 0.0
        %1259 = vmatpush1.msra.mxu0 0.0
        %1260 = vmatprep.subr.mxu0 0.0
        %1261 = vmatpush1.msra.mxu0 0.0
        %1262 = vmatprep.subr.mxu0 0.0
        %1263 = vmatpush1.msra.mxu0 0.0
        %1264 = vmatprep.subr.mxu0 0.0
        %1265 = vmatpush1.msra.mxu0 0.0
        %1266 = vmatprep.subr.mxu0 0.0
        %1267 = vmatpush1.msra.mxu0 0.0
        %1268 = vmatprep.subr.mxu0 0.0
        %1269 = vmatpush1.msra.mxu0 0.0
        %1270 = vmatprep.subr.mxu0 0.0
        %1271 = vmatpush1.msra.mxu0 0.0
        %1272 = vmatprep.subr.mxu0 0.0
        %1273 = vmatpush1.msra.mxu0 0.0
        %1274 = vmatprep.subr.mxu0 0.0
        %1275 = vmatpush1.msra.mxu0 0.0
        %1276 = vmatprep.subr.mxu0 0.0
        %1277 = vmatpush1.msra.mxu0 0.0
        %1278 = vmatprep.subr.mxu0 0.0
        %1279 = vmatpush1.msra.mxu0 0.0
        %1280 = vmatprep.subr.mxu0 0.0
        %1281 = vmatpush1.msra.mxu0 0.0
        %1282 = vmatprep.subr.mxu0 0.0
        %1283 = vmatpush1.msra.mxu0 0.0
        %1284 = vmatprep.subr.mxu0 0.0
        %1285 = vmatpush1.msra.mxu0 0.0
        %1286 = vmatprep.subr.mxu0 0.0
        %1287 = vmatpush1.msra.mxu0 0.0
        %1288 = vmatprep.subr.mxu0 0.0
        %1289 = vmatpush1.msra.mxu0 0.0
        %1290 = vmatprep.subr.mxu0 0.0
        %1291 = vmatpush1.msra.mxu0 0.0
        %1292 = vmatprep.subr.mxu0 0.0
        %1293 = vmatpush1.msra.mxu0 0.0
        %1294 = vmatprep.subr.mxu0 0.0
        %1295 = vmatpush1.msra.mxu0 0.0
        %1296 = vmatprep.subr.mxu0 0.0
        %1297 = vmatpush1.msra.mxu0 0.0
        %1298 = vmatprep.subr.mxu0 0.0
        %1299 = vmatpush1.msra.mxu0 0.0
        %1300 = vmatprep.subr.mxu0 0.0
        %1301 = vmatpush1.msra.mxu0 0.0
        %1302 = vmatprep.subr.mxu0 0.0
        %1303 = vmatpush1.msra.mxu0 0.0
        %1304 = vmatprep.subr.mxu0 0.0
        %1305 = vmatpush1.msra.mxu0 0.0
        %1306 = vmatprep.subr.mxu0 0.0
        %1307 = vmatpush1.msra.mxu0 0.0
        %1308 = vmatprep.subr.mxu0 0.0
        %1309 = vmatpush1.msra.mxu0 0.0
        %1310 = vmatprep.subr.mxu0 0.0
        %1311 = vmatpush1.msra.mxu0 0.0
        %1312 = vmatprep.mubr.f32.mxu0 0.0
        %1313 = vmatmul.mubr.f32.gmra.mrb[0].mxu0 %v1243
        %v1314 = vpop.f32.mrb[0].mxu0
        %v1315 = vadd.f32 0.0, %v1314
        %v1316 = vpop.f32.mrb[0].mxu0
        %1317 = vdwg.mxu0
        %v1318 = vadd.f32 %v1161, %v1315
        %s1319 = sadd.s32 %s299, 10
        %s1320 = smul.u32 %s1319, 8
        %s1321 = scalar_lea.vmem %s290, %s1320
        %v1322 = vld [vmem:[%s1321] sm:$0xf]
        %v1324 = vsel %vm313, %v1322, 0
        %1326 = vmatprep.subr.mxu0 0.0
        %1327 = vmatpush1.msra.mxu0 %v1246
        %1328 = vmatprep.subr.mxu0 0.0
        %1329 = vmatpush1.msra.mxu0 0.0
        %1330 = vmatprep.subr.mxu0 0.0
        %1331 = vmatpush1.msra.mxu0 0.0
        %1332 = vmatprep.subr.mxu0 0.0
        %1333 = vmatpush1.msra.mxu0 0.0
        %1334 = vmatprep.subr.mxu0 0.0
        %1335 = vmatpush1.msra.mxu0 0.0
        %1336 = vmatprep.subr.mxu0 0.0
        %1337 = vmatpush1.msra.mxu0 0.0
        %1338 = vmatprep.subr.mxu0 0.0
        %1339 = vmatpush1.msra.mxu0 0.0
        %1340 = vmatprep.subr.mxu0 0.0
        %1341 = vmatpush1.msra.mxu0 0.0
        %1342 = vmatprep.subr.mxu0 0.0
        %1343 = vmatpush1.msra.mxu0 0.0
        %1344 = vmatprep.subr.mxu0 0.0
        %1345 = vmatpush1.msra.mxu0 0.0
        %1346 = vmatprep.subr.mxu0 0.0
        %1347 = vmatpush1.msra.mxu0 0.0
        %1348 = vmatprep.subr.mxu0 0.0
        %1349 = vmatpush1.msra.mxu0 0.0
        %1350 = vmatprep.subr.mxu0 0.0
        %1351 = vmatpush1.msra.mxu0 0.0
        %1352 = vmatprep.subr.mxu0 0.0
        %1353 = vmatpush1.msra.mxu0 0.0
        %1354 = vmatprep.subr.mxu0 0.0
        %1355 = vmatpush1.msra.mxu0 0.0
        %1356 = vmatprep.subr.mxu0 0.0
        %1357 = vmatpush1.msra.mxu0 0.0
        %1358 = vmatprep.subr.mxu0 0.0
        %1359 = vmatpush1.msra.mxu0 0.0
        %1360 = vmatprep.subr.mxu0 0.0
        %1361 = vmatpush1.msra.mxu0 0.0
        %1362 = vmatprep.subr.mxu0 0.0
        %1363 = vmatpush1.msra.mxu0 0.0
        %1364 = vmatprep.subr.mxu0 0.0
        %1365 = vmatpush1.msra.mxu0 0.0
        %1366 = vmatprep.subr.mxu0 0.0
        %1367 = vmatpush1.msra.mxu0 0.0
        %1368 = vmatprep.subr.mxu0 0.0
        %1369 = vmatpush1.msra.mxu0 0.0
        %1370 = vmatprep.subr.mxu0 0.0
        %1371 = vmatpush1.msra.mxu0 0.0
        %1372 = vmatprep.subr.mxu0 0.0
        %1373 = vmatpush1.msra.mxu0 0.0
        %1374 = vmatprep.subr.mxu0 0.0
        %1375 = vmatpush1.msra.mxu0 0.0
        %1376 = vmatprep.subr.mxu0 0.0
        %1377 = vmatpush1.msra.mxu0 0.0
        %1378 = vmatprep.subr.mxu0 0.0
        %1379 = vmatpush1.msra.mxu0 0.0
        %1380 = vmatprep.subr.mxu0 0.0
        %1381 = vmatpush1.msra.mxu0 0.0
        %1382 = vmatprep.subr.mxu0 0.0
        %1383 = vmatpush1.msra.mxu0 0.0
        %1384 = vmatprep.subr.mxu0 0.0
        %1385 = vmatpush1.msra.mxu0 0.0
        %1386 = vmatprep.subr.mxu0 0.0
        %1387 = vmatpush1.msra.mxu0 0.0
        %1388 = vmatprep.subr.mxu0 0.0
        %1389 = vmatpush1.msra.mxu0 0.0
        %1390 = vmatprep.mubr.f32.mxu0 0.0
        %1391 = vmatmul.mubr.f32.gmra.mrb[0].mxu0 %v1324
        %v1392 = vpop.f32.mrb[0].mxu0
        %v1393 = vadd.f32 0.0, %v1392
        %v1394 = vpop.f32.mrb[0].mxu0
        %1395 = vdwg.mxu0
        %v1396 = vadd.f32 %v1236, %v1393
        %v1397 = vld [vmem:[%s1 + $0x15] sm:$0x7]
        %s1398 = sadd.s32 %s299, 9
        %s1399 = smul.u32 %s1398, 8
        %s1400 = scalar_lea.vmem %s290, %s1399
        %v1401 = vld [vmem:[%s1400] sm:$0xf]
        %v1403 = vsel %vm313, %v1401, 0
        %v1406 = vsel %vm317, %v1397, 0
        %1408 = vmatprep.subr.mxu0 0.0
        %1409 = vmatpush1.msra.mxu0 %v1406
        %1410 = vmatprep.subr.mxu0 0.0
        %1411 = vmatpush1.msra.mxu0 0.0
        %1412 = vmatprep.subr.mxu0 0.0
        %1413 = vmatpush1.msra.mxu0 0.0
        %1414 = vmatprep.subr.mxu0 0.0
        %1415 = vmatpush1.msra.mxu0 0.0
        %1416 = vmatprep.subr.mxu0 0.0
        %1417 = vmatpush1.msra.mxu0 0.0
        %1418 = vmatprep.subr.mxu0 0.0
        %1419 = vmatpush1.msra.mxu0 0.0
        %1420 = vmatprep.subr.mxu0 0.0
        %1421 = vmatpush1.msra.mxu0 0.0
        %1422 = vmatprep.subr.mxu0 0.0
        %1423 = vmatpush1.msra.mxu0 0.0
        %1424 = vmatprep.subr.mxu0 0.0
        %1425 = vmatpush1.msra.mxu0 0.0
        %1426 = vmatprep.subr.mxu0 0.0
        %1427 = vmatpush1.msra.mxu0 0.0
        %1428 = vmatprep.subr.mxu0 0.0
        %1429 = vmatpush1.msra.mxu0 0.0
        %1430 = vmatprep.subr.mxu0 0.0
        %1431 = vmatpush1.msra.mxu0 0.0
        %1432 = vmatprep.subr.mxu0 0.0
        %1433 = vmatpush1.msra.mxu0 0.0
        %1434 = vmatprep.subr.mxu0 0.0
        %1435 = vmatpush1.msra.mxu0 0.0
        %1436 = vmatprep.subr.mxu0 0.0
        %1437 = vmatpush1.msra.mxu0 0.0
        %1438 = vmatprep.subr.mxu0 0.0
        %1439 = vmatpush1.msra.mxu0 0.0
        %1440 = vmatprep.subr.mxu0 0.0
        %1441 = vmatpush1.msra.mxu0 0.0
        %1442 = vmatprep.subr.mxu0 0.0
        %1443 = vmatpush1.msra.mxu0 0.0
        %1444 = vmatprep.subr.mxu0 0.0
        %1445 = vmatpush1.msra.mxu0 0.0
        %1446 = vmatprep.subr.mxu0 0.0
        %1447 = vmatpush1.msra.mxu0 0.0
        %1448 = vmatprep.subr.mxu0 0.0
        %1449 = vmatpush1.msra.mxu0 0.0
        %1450 = vmatprep.subr.mxu0 0.0
        %1451 = vmatpush1.msra.mxu0 0.0
        %1452 = vmatprep.subr.mxu0 0.0
        %1453 = vmatpush1.msra.mxu0 0.0
        %1454 = vmatprep.subr.mxu0 0.0
        %1455 = vmatpush1.msra.mxu0 0.0
        %1456 = vmatprep.subr.mxu0 0.0
        %1457 = vmatpush1.msra.mxu0 0.0
        %1458 = vmatprep.subr.mxu0 0.0
        %1459 = vmatpush1.msra.mxu0 0.0
        %1460 = vmatprep.subr.mxu0 0.0
        %1461 = vmatpush1.msra.mxu0 0.0
        %1462 = vmatprep.subr.mxu0 0.0
        %1463 = vmatpush1.msra.mxu0 0.0
        %1464 = vmatprep.subr.mxu0 0.0
        %1465 = vmatpush1.msra.mxu0 0.0
        %1466 = vmatprep.subr.mxu0 0.0
        %1467 = vmatpush1.msra.mxu0 0.0
        %1468 = vmatprep.subr.mxu0 0.0
        %1469 = vmatpush1.msra.mxu0 0.0
        %1470 = vmatprep.subr.mxu0 0.0
        %1471 = vmatpush1.msra.mxu0 0.0
        %1472 = vmatprep.mubr.f32.mxu0 0.0
        %1473 = vmatmul.mubr.f32.gmra.mrb[0].mxu0 %v1403
        %v1474 = vpop.f32.mrb[0].mxu0
        %v1475 = vadd.f32 0.0, %v1474
        %v1476 = vpop.f32.mrb[0].mxu0
        %1477 = vdwg.mxu0
        %v1478 = vadd.f32 %v1318, %v1475
        %s1479 = sadd.s32 %s299, 11
        %s1480 = smul.u32 %s1479, 8
        %s1481 = scalar_lea.vmem %s290, %s1480
        %v1482 = vld [vmem:[%s1481] sm:$0xf]
        %v1484 = vsel %vm313, %v1482, 0
        %1486 = vmatprep.subr.mxu0 0.0
        %1487 = vmatpush1.msra.mxu0 %v1406
        %1488 = vmatprep.subr.mxu0 0.0
        %1489 = vmatpush1.msra.mxu0 0.0
        %1490 = vmatprep.subr.mxu0 0.0
        %1491 = vmatpush1.msra.mxu0 0.0
        %1492 = vmatprep.subr.mxu0 0.0
        %1493 = vmatpush1.msra.mxu0 0.0
        %1494 = vmatprep.subr.mxu0 0.0
        %1495 = vmatpush1.msra.mxu0 0.0
        %1496 = vmatprep.subr.mxu0 0.0
        %1497 = vmatpush1.msra.mxu0 0.0
        %1498 = vmatprep.subr.mxu0 0.0
        %1499 = vmatpush1.msra.mxu0 0.0
        %1500 = vmatprep.subr.mxu0 0.0
        %1501 = vmatpush1.msra.mxu0 0.0
        %1502 = vmatprep.subr.mxu0 0.0
        %1503 = vmatpush1.msra.mxu0 0.0
        %1504 = vmatprep.subr.mxu0 0.0
        %1505 = vmatpush1.msra.mxu0 0.0
        %1506 = vmatprep.subr.mxu0 0.0
        %1507 = vmatpush1.msra.mxu0 0.0
        %1508 = vmatprep.subr.mxu0 0.0
        %1509 = vmatpush1.msra.mxu0 0.0
        %1510 = vmatprep.subr.mxu0 0.0
        %1511 = vmatpush1.msra.mxu0 0.0
        %1512 = vmatprep.subr.mxu0 0.0
        %1513 = vmatpush1.msra.mxu0 0.0
        %1514 = vmatprep.subr.mxu0 0.0
        %1515 = vmatpush1.msra.mxu0 0.0
        %1516 = vmatprep.subr.mxu0 0.0
        %1517 = vmatpush1.msra.mxu0 0.0
        %1518 = vmatprep.subr.mxu0 0.0
        %1519 = vmatpush1.msra.mxu0 0.0
        %1520 = vmatprep.subr.mxu0 0.0
        %1521 = vmatpush1.msra.mxu0 0.0
        %1522 = vmatprep.subr.mxu0 0.0
        %1523 = vmatpush1.msra.mxu0 0.0
        %1524 = vmatprep.subr.mxu0 0.0
        %1525 = vmatpush1.msra.mxu0 0.0
        %1526 = vmatprep.subr.mxu0 0.0
        %1527 = vmatpush1.msra.mxu0 0.0
        %1528 = vmatprep.subr.mxu0 0.0
        %1529 = vmatpush1.msra.mxu0 0.0
        %1530 = vmatprep.subr.mxu0 0.0
        %1531 = vmatpush1.msra.mxu0 0.0
        %1532 = vmatprep.subr.mxu0 0.0
        %1533 = vmatpush1.msra.mxu0 0.0
        %1534 = vmatprep.subr.mxu0 0.0
        %1535 = vmatpush1.msra.mxu0 0.0
        %1536 = vmatprep.subr.mxu0 0.0
        %1537 = vmatpush1.msra.mxu0 0.0
        %1538 = vmatprep.subr.mxu0 0.0
        %1539 = vmatpush1.msra.mxu0 0.0
        %1540 = vmatprep.subr.mxu0 0.0
        %1541 = vmatpush1.msra.mxu0 0.0
        %1542 = vmatprep.subr.mxu0 0.0
        %1543 = vmatpush1.msra.mxu0 0.0
        %1544 = vmatprep.subr.mxu0 0.0
        %1545 = vmatpush1.msra.mxu0 0.0
        %1546 = vmatprep.subr.mxu0 0.0
        %1547 = vmatpush1.msra.mxu0 0.0
        %1548 = vmatprep.subr.mxu0 0.0
        %1549 = vmatpush1.msra.mxu0 0.0
        %1550 = vmatprep.mubr.f32.mxu0 0.0
        %1551 = vmatmul.mubr.f32.gmra.mrb[0].mxu0 %v1484
        %v1552 = vpop.f32.mrb[0].mxu0
        %v1553 = vadd.f32 0.0, %v1552
        %v1554 = vpop.f32.mrb[0].mxu0
        %1555 = vdwg.mxu0
        %v1556 = vadd.f32 %v1396, %v1553
        %v1557 = vld [vmem:[%s1 + $0x18] sm:$0x7]
        %v1559 = vsel %vm317, %v1557, 0
        %1561 = vmatprep.subr.mxu0 0.0
        %1562 = vmatpush1.msra.mxu0 %v1559
        %1563 = vmatprep.subr.mxu0 0.0
        %1564 = vmatpush1.msra.mxu0 0.0
        %1565 = vmatprep.subr.mxu0 0.0
        %1566 = vmatpush1.msra.mxu0 0.0
        %1567 = vmatprep.subr.mxu0 0.0
        %1568 = vmatpush1.msra.mxu0 0.0
        %1569 = vmatprep.subr.mxu0 0.0
        %1570 = vmatpush1.msra.mxu0 0.0
        %1571 = vmatprep.subr.mxu0 0.0
        %1572 = vmatpush1.msra.mxu0 0.0
        %1573 = vmatprep.subr.mxu0 0.0
        %1574 = vmatpush1.msra.mxu0 0.0
        %1575 = vmatprep.subr.mxu0 0.0
        %1576 = vmatpush1.msra.mxu0 0.0
        %1577 = vmatprep.subr.mxu0 0.0
        %1578 = vmatpush1.msra.mxu0 0.0
        %1579 = vmatprep.subr.mxu0 0.0
        %1580 = vmatpush1.msra.mxu0 0.0
        %1581 = vmatprep.subr.mxu0 0.0
        %1582 = vmatpush1.msra.mxu0 0.0
        %1583 = vmatprep.subr.mxu0 0.0
        %1584 = vmatpush1.msra.mxu0 0.0
        %1585 = vmatprep.subr.mxu0 0.0
        %1586 = vmatpush1.msra.mxu0 0.0
        %1587 = vmatprep.subr.mxu0 0.0
        %1588 = vmatpush1.msra.mxu0 0.0
        %1589 = vmatprep.subr.mxu0 0.0
        %1590 = vmatpush1.msra.mxu0 0.0
        %1591 = vmatprep.subr.mxu0 0.0
        %1592 = vmatpush1.msra.mxu0 0.0
        %1593 = vmatprep.subr.mxu0 0.0
        %1594 = vmatpush1.msra.mxu0 0.0
        %1595 = vmatprep.subr.mxu0 0.0
        %1596 = vmatpush1.msra.mxu0 0.0
        %1597 = vmatprep.subr.mxu0 0.0
        %1598 = vmatpush1.msra.mxu0 0.0
        %1599 = vmatprep.subr.mxu0 0.0
        %1600 = vmatpush1.msra.mxu0 0.0
        %1601 = vmatprep.subr.mxu0 0.0
        %1602 = vmatpush1.msra.mxu0 0.0
        %1603 = vmatprep.subr.mxu0 0.0
        %1604 = vmatpush1.msra.mxu0 0.0
        %1605 = vmatprep.subr.mxu0 0.0
        %1606 = vmatpush1.msra.mxu0 0.0
        %1607 = vmatprep.subr.mxu0 0.0
        %1608 = vmatpush1.msra.mxu0 0.0
        %1609 = vmatprep.subr.mxu0 0.0
        %1610 = vmatpush1.msra.mxu0 0.0
        %1611 = vmatprep.subr.mxu0 0.0
        %1612 = vmatpush1.msra.mxu0 0.0
        %1613 = vmatprep.subr.mxu0 0.0
        %1614 = vmatpush1.msra.mxu0 0.0
        %1615 = vmatprep.subr.mxu0 0.0
        %1616 = vmatpush1.msra.mxu0 0.0
        %1617 = vmatprep.subr.mxu0 0.0
        %1618 = vmatpush1.msra.mxu0 0.0
        %1619 = vmatprep.subr.mxu0 0.0
        %1620 = vmatpush1.msra.mxu0 0.0
        %1621 = vmatprep.subr.mxu0 0.0
        %1622 = vmatpush1.msra.mxu0 0.0
        %1623 = vmatprep.subr.mxu0 0.0
        %1624 = vmatpush1.msra.mxu0 0.0
        %1625 = vmatprep.mubr.f32.mxu0 0.0
        %1626 = vmatmul.mubr.f32.gmra.mrb[0].mxu0 %v1324
        %v1627 = vpop.f32.mrb[0].mxu0
        %v1628 = vadd.f32 0.0, %v1627
        %v1629 = vpop.f32.mrb[0].mxu0
        %1630 = vdwg.mxu0
        %v1631 = vadd.f32 %v1478, %v1628
        %v1632 = vld [vmem:[%s1240 + $0x1] sm:$0xf]
        %v1634 = vsel %vm313, %v1632, 0
        %1636 = vmatprep.subr.mxu0 0.0
        %1637 = vmatpush1.msra.mxu0 %v1559
        %1638 = vmatprep.subr.mxu0 0.0
        %1639 = vmatpush1.msra.mxu0 0.0
        %1640 = vmatprep.subr.mxu0 0.0
        %1641 = vmatpush1.msra.mxu0 0.0
        %1642 = vmatprep.subr.mxu0 0.0
        %1643 = vmatpush1.msra.mxu0 0.0
        %1644 = vmatprep.subr.mxu0 0.0
        %1645 = vmatpush1.msra.mxu0 0.0
        %1646 = vmatprep.subr.mxu0 0.0
        %1647 = vmatpush1.msra.mxu0 0.0
        %1648 = vmatprep.subr.mxu0 0.0
        %1649 = vmatpush1.msra.mxu0 0.0
        %1650 = vmatprep.subr.mxu0 0.0
        %1651 = vmatpush1.msra.mxu0 0.0
        %1652 = vmatprep.subr.mxu0 0.0
        %1653 = vmatpush1.msra.mxu0 0.0
        %1654 = vmatprep.subr.mxu0 0.0
        %1655 = vmatpush1.msra.mxu0 0.0
        %1656 = vmatprep.subr.mxu0 0.0
        %1657 = vmatpush1.msra.mxu0 0.0
        %1658 = vmatprep.subr.mxu0 0.0
        %1659 = vmatpush1.msra.mxu0 0.0
        %1660 = vmatprep.subr.mxu0 0.0
        %1661 = vmatpush1.msra.mxu0 0.0
        %1662 = vmatprep.subr.mxu0 0.0
        %1663 = vmatpush1.msra.mxu0 0.0
        %1664 = vmatprep.subr.mxu0 0.0
        %1665 = vmatpush1.msra.mxu0 0.0
        %1666 = vmatprep.subr.mxu0 0.0
        %1667 = vmatpush1.msra.mxu0 0.0
        %1668 = vmatprep.subr.mxu0 0.0
        %1669 = vmatpush1.msra.mxu0 0.0
        %1670 = vmatprep.subr.mxu0 0.0
        %1671 = vmatpush1.msra.mxu0 0.0
        %1672 = vmatprep.subr.mxu0 0.0
        %1673 = vmatpush1.msra.mxu0 0.0
        %1674 = vmatprep.subr.mxu0 0.0
        %1675 = vmatpush1.msra.mxu0 0.0
        %1676 = vmatprep.subr.mxu0 0.0
        %1677 = vmatpush1.msra.mxu0 0.0
        %1678 = vmatprep.subr.mxu0 0.0
        %1679 = vmatpush1.msra.mxu0 0.0
        %1680 = vmatprep.subr.mxu0 0.0
        %1681 = vmatpush1.msra.mxu0 0.0
        %1682 = vmatprep.subr.mxu0 0.0
        %1683 = vmatpush1.msra.mxu0 0.0
        %1684 = vmatprep.subr.mxu0 0.0
        %1685 = vmatpush1.msra.mxu0 0.0
        %1686 = vmatprep.subr.mxu0 0.0
        %1687 = vmatpush1.msra.mxu0 0.0
        %1688 = vmatprep.subr.mxu0 0.0
        %1689 = vmatpush1.msra.mxu0 0.0
        %1690 = vmatprep.subr.mxu0 0.0
        %1691 = vmatpush1.msra.mxu0 0.0
        %1692 = vmatprep.subr.mxu0 0.0
        %1693 = vmatpush1.msra.mxu0 0.0
        %1694 = vmatprep.subr.mxu0 0.0
        %1695 = vmatpush1.msra.mxu0 0.0
        %1696 = vmatprep.subr.mxu0 0.0
        %1697 = vmatpush1.msra.mxu0 0.0
        %1698 = vmatprep.subr.mxu0 0.0
        %1699 = vmatpush1.msra.mxu0 0.0
        %1700 = vmatprep.mubr.f32.mxu0 0.0
        %1701 = vmatmul.mubr.f32.gmra.mrb[0].mxu0 %v1634
        %v1702 = vpop.f32.mrb[0].mxu0
        %v1703 = vadd.f32 0.0, %v1702
        %v1704 = vpop.f32.mrb[0].mxu0
        %1705 = vdwg.mxu0
        %v1706 = vadd.f32 %v1556, %v1703
        %v1708 = vlaneseq
        %v1709 = vshrl.u32 %v1708, 7
        %v1710 = vsub.s32 0, %v1709
        %v1711 = vrot.slane %v291, %v1710
        %v1713 = vadd.f32 %v1631, %v1711
        %v1714 = vmax.f32 %v1713, 0.0
        %v1715 = vadd.f32 %v1706, %v1711
        %v1716 = vmax.f32 %v1715, 0.0
        %v1717 = vstv %s294
        %v1718 = vmul.f32 %v1714, %v1717
        %v1719 = vmul.f32 %v1716, %v1717
        %s1720 = smul.u32 %s26, 16
        %s1721 = smul.u32 %s1720, 8
        %s1722 = scalar_lea.vmem %s290, %s1721
        %v1723 = vld [vmem:[%s1722] sm:$0xf]
        %s1724 = sadd.s32 %s1720, 2
        %s1725 = smul.u32 %s1724, 8
        %s1726 = scalar_lea.vmem %s290, %s1725
        %v1727 = vld [vmem:[%s1726] sm:$0xf]
        %s1728 = sadd.s32 %s1720, 1
        %s1729 = smul.u32 %s1728, 8
        %s1730 = scalar_lea.vmem %s290, %s1729
        %v1731 = vld [vmem:[%s1730] sm:$0xf]
        %v1733 = vsel %vm313, %v1731, 0
        %1735 = vmatprep.subr.mxu0 0.0
        %1736 = vmatpush1.msra.mxu0 %v319
        %1737 = vmatprep.subr.mxu0 0.0
        %1738 = vmatpush1.msra.mxu0 0.0
        %1739 = vmatprep.subr.mxu0 0.0
        %1740 = vmatpush1.msra.mxu0 0.0
        %1741 = vmatprep.subr.mxu0 0.0
        %1742 = vmatpush1.msra.mxu0 0.0
        %1743 = vmatprep.subr.mxu0 0.0
        %1744 = vmatpush1.msra.mxu0 0.0
        %1745 = vmatprep.subr.mxu0 0.0
        %1746 = vmatpush1.msra.mxu0 0.0
        %1747 = vmatprep.subr.mxu0 0.0
        %1748 = vmatpush1.msra.mxu0 0.0
        %1749 = vmatprep.subr.mxu0 0.0
        %1750 = vmatpush1.msra.mxu0 0.0
        %1751 = vmatprep.subr.mxu0 0.0
        %1752 = vmatpush1.msra.mxu0 0.0
        %1753 = vmatprep.subr.mxu0 0.0
        %1754 = vmatpush1.msra.mxu0 0.0
        %1755 = vmatprep.subr.mxu0 0.0
        %1756 = vmatpush1.msra.mxu0 0.0
        %1757 = vmatprep.subr.mxu0 0.0
        %1758 = vmatpush1.msra.mxu0 0.0
        %1759 = vmatprep.subr.mxu0 0.0
        %1760 = vmatpush1.msra.mxu0 0.0
        %1761 = vmatprep.subr.mxu0 0.0
        %1762 = vmatpush1.msra.mxu0 0.0
        %1763 = vmatprep.subr.mxu0 0.0
        %1764 = vmatpush1.msra.mxu0 0.0
        %1765 = vmatprep.subr.mxu0 0.0
        %1766 = vmatpush1.msra.mxu0 0.0
        %1767 = vmatprep.subr.mxu0 0.0
        %1768 = vmatpush1.msra.mxu0 0.0
        %1769 = vmatprep.subr.mxu0 0.0
        %1770 = vmatpush1.msra.mxu0 0.0
        %1771 = vmatprep.subr.mxu0 0.0
        %1772 = vmatpush1.msra.mxu0 0.0
        %1773 = vmatprep.subr.mxu0 0.0
        %1774 = vmatpush1.msra.mxu0 0.0
        %1775 = vmatprep.subr.mxu0 0.0
        %1776 = vmatpush1.msra.mxu0 0.0
        %1777 = vmatprep.subr.mxu0 0.0
        %1778 = vmatpush1.msra.mxu0 0.0
        %1779 = vmatprep.subr.mxu0 0.0
        %1780 = vmatpush1.msra.mxu0 0.0
        %1781 = vmatprep.subr.mxu0 0.0
        %1782 = vmatpush1.msra.mxu0 0.0
        %1783 = vmatprep.subr.mxu0 0.0
        %1784 = vmatpush1.msra.mxu0 0.0
        %1785 = vmatprep.subr.mxu0 0.0
        %1786 = vmatpush1.msra.mxu0 0.0
        %1787 = vmatprep.subr.mxu0 0.0
        %1788 = vmatpush1.msra.mxu0 0.0
        %1789 = vmatprep.subr.mxu0 0.0
        %1790 = vmatpush1.msra.mxu0 0.0
        %1791 = vmatprep.subr.mxu0 0.0
        %1792 = vmatpush1.msra.mxu0 0.0
        %1793 = vmatprep.subr.mxu0 0.0
        %1794 = vmatpush1.msra.mxu0 0.0
        %1795 = vmatprep.subr.mxu0 0.0
        %1796 = vmatpush1.msra.mxu0 0.0
        %1797 = vmatprep.subr.mxu0 0.0
        %1798 = vmatpush1.msra.mxu0 0.0
        %1799 = vmatprep.mubr.f32.mxu0 0.0
        %1800 = vmatmul.mubr.f32.gmra.mrb[0].mxu0 %v1733
        %v1801 = vpop.f32.mrb[0].mxu0
        %v1802 = vadd.f32 0.0, %v1801
        %v1803 = vpop.f32.mrb[0].mxu0
        %1804 = vdwg.mxu0
        %v1806 = vsel %vm313, %v1723, 0
        %1808 = vmatprep.subr.mxu0 0.0
        %1809 = vmatpush1.msra.mxu0 %v395
        %1810 = vmatprep.subr.mxu0 0.0
        %1811 = vmatpush1.msra.mxu0 0.0
        %1812 = vmatprep.subr.mxu0 0.0
        %1813 = vmatpush1.msra.mxu0 0.0
        %1814 = vmatprep.subr.mxu0 0.0
        %1815 = vmatpush1.msra.mxu0 0.0
        %1816 = vmatprep.subr.mxu0 0.0
        %1817 = vmatpush1.msra.mxu0 0.0
        %1818 = vmatprep.subr.mxu0 0.0
        %1819 = vmatpush1.msra.mxu0 0.0
        %1820 = vmatprep.subr.mxu0 0.0
        %1821 = vmatpush1.msra.mxu0 0.0
        %1822 = vmatprep.subr.mxu0 0.0
        %1823 = vmatpush1.msra.mxu0 0.0
        %1824 = vmatprep.subr.mxu0 0.0
        %1825 = vmatpush1.msra.mxu0 0.0
        %1826 = vmatprep.subr.mxu0 0.0
        %1827 = vmatpush1.msra.mxu0 0.0
        %1828 = vmatprep.subr.mxu0 0.0
        %1829 = vmatpush1.msra.mxu0 0.0
        %1830 = vmatprep.subr.mxu0 0.0
        %1831 = vmatpush1.msra.mxu0 0.0
        %1832 = vmatprep.subr.mxu0 0.0
        %1833 = vmatpush1.msra.mxu0 0.0
        %1834 = vmatprep.subr.mxu0 0.0
        %1835 = vmatpush1.msra.mxu0 0.0
        %1836 = vmatprep.subr.mxu0 0.0
        %1837 = vmatpush1.msra.mxu0 0.0
        %1838 = vmatprep.subr.mxu0 0.0
        %1839 = vmatpush1.msra.mxu0 0.0
        %1840 = vmatprep.subr.mxu0 0.0
        %1841 = vmatpush1.msra.mxu0 0.0
        %1842 = vmatprep.subr.mxu0 0.0
        %1843 = vmatpush1.msra.mxu0 0.0
        %1844 = vmatprep.subr.mxu0 0.0
        %1845 = vmatpush1.msra.mxu0 0.0
        %1846 = vmatprep.subr.mxu0 0.0
        %1847 = vmatpush1.msra.mxu0 0.0
        %1848 = vmatprep.subr.mxu0 0.0
        %1849 = vmatpush1.msra.mxu0 0.0
        %1850 = vmatprep.subr.mxu0 0.0
        %1851 = vmatpush1.msra.mxu0 0.0
        %1852 = vmatprep.subr.mxu0 0.0
        %1853 = vmatpush1.msra.mxu0 0.0
        %1854 = vmatprep.subr.mxu0 0.0
        %1855 = vmatpush1.msra.mxu0 0.0
        %1856 = vmatprep.subr.mxu0 0.0
        %1857 = vmatpush1.msra.mxu0 0.0
        %1858 = vmatprep.subr.mxu0 0.0
        %1859 = vmatpush1.msra.mxu0 0.0
        %1860 = vmatprep.subr.mxu0 0.0
        %1861 = vmatpush1.msra.mxu0 0.0
        %1862 = vmatprep.subr.mxu0 0.0
        %1863 = vmatpush1.msra.mxu0 0.0
        %1864 = vmatprep.subr.mxu0 0.0
        %1865 = vmatpush1.msra.mxu0 0.0
        %1866 = vmatprep.subr.mxu0 0.0
        %1867 = vmatpush1.msra.mxu0 0.0
        %1868 = vmatprep.subr.mxu0 0.0
        %1869 = vmatpush1.msra.mxu0 0.0
        %1870 = vmatprep.subr.mxu0 0.0
        %1871 = vmatpush1.msra.mxu0 0.0
        %1872 = vmatprep.mubr.f32.mxu0 0.0
        %1873 = vmatmul.mubr.f32.gmra.mrb[0].mxu0 %v1806
        %v1874 = vpop.f32.mrb[0].mxu0
        %v1875 = vadd.f32 %v1802, %v1874
        %v1876 = vpop.f32.mrb[0].mxu0
        %1877 = vdwg.mxu0
        %s1878 = sadd.s32 %s1720, 3
        %s1879 = smul.u32 %s1878, 8
        %s1880 = scalar_lea.vmem %s290, %s1879
        %v1881 = vld [vmem:[%s1880] sm:$0xf]
        %v1883 = vsel %vm313, %v1881, 0
        %1885 = vmatprep.subr.mxu0 0.0
        %1886 = vmatpush1.msra.mxu0 %v319
        %1887 = vmatprep.subr.mxu0 0.0
        %1888 = vmatpush1.msra.mxu0 0.0
        %1889 = vmatprep.subr.mxu0 0.0
        %1890 = vmatpush1.msra.mxu0 0.0
        %1891 = vmatprep.subr.mxu0 0.0
        %1892 = vmatpush1.msra.mxu0 0.0
        %1893 = vmatprep.subr.mxu0 0.0
        %1894 = vmatpush1.msra.mxu0 0.0
        %1895 = vmatprep.subr.mxu0 0.0
        %1896 = vmatpush1.msra.mxu0 0.0
        %1897 = vmatprep.subr.mxu0 0.0
        %1898 = vmatpush1.msra.mxu0 0.0
        %1899 = vmatprep.subr.mxu0 0.0
        %1900 = vmatpush1.msra.mxu0 0.0
        %1901 = vmatprep.subr.mxu0 0.0
        %1902 = vmatpush1.msra.mxu0 0.0
        %1903 = vmatprep.subr.mxu0 0.0
        %1904 = vmatpush1.msra.mxu0 0.0
        %1905 = vmatprep.subr.mxu0 0.0
        %1906 = vmatpush1.msra.mxu0 0.0
        %1907 = vmatprep.subr.mxu0 0.0
        %1908 = vmatpush1.msra.mxu0 0.0
        %1909 = vmatprep.subr.mxu0 0.0
        %1910 = vmatpush1.msra.mxu0 0.0
        %1911 = vmatprep.subr.mxu0 0.0
        %1912 = vmatpush1.msra.mxu0 0.0
        %1913 = vmatprep.subr.mxu0 0.0
        %1914 = vmatpush1.msra.mxu0 0.0
        %1915 = vmatprep.subr.mxu0 0.0
        %1916 = vmatpush1.msra.mxu0 0.0
        %1917 = vmatprep.subr.mxu0 0.0
        %1918 = vmatpush1.msra.mxu0 0.0
        %1919 = vmatprep.subr.mxu0 0.0
        %1920 = vmatpush1.msra.mxu0 0.0
        %1921 = vmatprep.subr.mxu0 0.0
        %1922 = vmatpush1.msra.mxu0 0.0
        %1923 = vmatprep.subr.mxu0 0.0
        %1924 = vmatpush1.msra.mxu0 0.0
        %1925 = vmatprep.subr.mxu0 0.0
        %1926 = vmatpush1.msra.mxu0 0.0
        %1927 = vmatprep.subr.mxu0 0.0
        %1928 = vmatpush1.msra.mxu0 0.0
        %1929 = vmatprep.subr.mxu0 0.0
        %1930 = vmatpush1.msra.mxu0 0.0
        %1931 = vmatprep.subr.mxu0 0.0
        %1932 = vmatpush1.msra.mxu0 0.0
        %1933 = vmatprep.subr.mxu0 0.0
        %1934 = vmatpush1.msra.mxu0 0.0
        %1935 = vmatprep.subr.mxu0 0.0
        %1936 = vmatpush1.msra.mxu0 0.0
        %1937 = vmatprep.subr.mxu0 0.0
        %1938 = vmatpush1.msra.mxu0 0.0
        %1939 = vmatprep.subr.mxu0 0.0
        %1940 = vmatpush1.msra.mxu0 0.0
        %1941 = vmatprep.subr.mxu0 0.0
        %1942 = vmatpush1.msra.mxu0 0.0
        %1943 = vmatprep.subr.mxu0 0.0
        %1944 = vmatpush1.msra.mxu0 0.0
        %1945 = vmatprep.subr.mxu0 0.0
        %1946 = vmatpush1.msra.mxu0 0.0
        %1947 = vmatprep.subr.mxu0 0.0
        %1948 = vmatpush1.msra.mxu0 0.0
        %1949 = vmatprep.mubr.f32.mxu0 0.0
        %1950 = vmatmul.mubr.f32.gmra.mrb[0].mxu0 %v1883
        %v1951 = vpop.f32.mrb[0].mxu0
        %v1952 = vadd.f32 0.0, %v1951
        %v1953 = vpop.f32.mrb[0].mxu0
        %1954 = vdwg.mxu0
        %v1956 = vsel %vm313, %v1727, 0
        %1958 = vmatprep.subr.mxu0 0.0
        %1959 = vmatpush1.msra.mxu0 %v395
        %1960 = vmatprep.subr.mxu0 0.0
        %1961 = vmatpush1.msra.mxu0 0.0
        %1962 = vmatprep.subr.mxu0 0.0
        %1963 = vmatpush1.msra.mxu0 0.0
        %1964 = vmatprep.subr.mxu0 0.0
        %1965 = vmatpush1.msra.mxu0 0.0
        %1966 = vmatprep.subr.mxu0 0.0
        %1967 = vmatpush1.msra.mxu0 0.0
        %1968 = vmatprep.subr.mxu0 0.0
        %1969 = vmatpush1.msra.mxu0 0.0
        %1970 = vmatprep.subr.mxu0 0.0
        %1971 = vmatpush1.msra.mxu0 0.0
        %1972 = vmatprep.subr.mxu0 0.0
        %1973 = vmatpush1.msra.mxu0 0.0
        %1974 = vmatprep.subr.mxu0 0.0
        %1975 = vmatpush1.msra.mxu0 0.0
        %1976 = vmatprep.subr.mxu0 0.0
        %1977 = vmatpush1.msra.mxu0 0.0
        %1978 = vmatprep.subr.mxu0 0.0
        %1979 = vmatpush1.msra.mxu0 0.0
        %1980 = vmatprep.subr.mxu0 0.0
        %1981 = vmatpush1.msra.mxu0 0.0
        %1982 = vmatprep.subr.mxu0 0.0
        %1983 = vmatpush1.msra.mxu0 0.0
        %1984 = vmatprep.subr.mxu0 0.0
        %1985 = vmatpush1.msra.mxu0 0.0
        %1986 = vmatprep.subr.mxu0 0.0
        %1987 = vmatpush1.msra.mxu0 0.0
        %1988 = vmatprep.subr.mxu0 0.0
        %1989 = vmatpush1.msra.mxu0 0.0
        %1990 = vmatprep.subr.mxu0 0.0
        %1991 = vmatpush1.msra.mxu0 0.0
        %1992 = vmatprep.subr.mxu0 0.0
        %1993 = vmatpush1.msra.mxu0 0.0
        %1994 = vmatprep.subr.mxu0 0.0
        %1995 = vmatpush1.msra.mxu0 0.0
        %1996 = vmatprep.subr.mxu0 0.0
        %1997 = vmatpush1.msra.mxu0 0.0
        %1998 = vmatprep.subr.mxu0 0.0
        %1999 = vmatpush1.msra.mxu0 0.0
        %2000 = vmatprep.subr.mxu0 0.0
        %2001 = vmatpush1.msra.mxu0 0.0
        %2002 = vmatprep.subr.mxu0 0.0
        %2003 = vmatpush1.msra.mxu0 0.0
        %2004 = vmatprep.subr.mxu0 0.0
        %2005 = vmatpush1.msra.mxu0 0.0
        %2006 = vmatprep.subr.mxu0 0.0
        %2007 = vmatpush1.msra.mxu0 0.0
        %2008 = vmatprep.subr.mxu0 0.0
        %2009 = vmatpush1.msra.mxu0 0.0
        %2010 = vmatprep.subr.mxu0 0.0
        %2011 = vmatpush1.msra.mxu0 0.0
        %2012 = vmatprep.subr.mxu0 0.0
        %2013 = vmatpush1.msra.mxu0 0.0
        %2014 = vmatprep.subr.mxu0 0.0
        %2015 = vmatpush1.msra.mxu0 0.0
        %2016 = vmatprep.subr.mxu0 0.0
        %2017 = vmatpush1.msra.mxu0 0.0
        %2018 = vmatprep.subr.mxu0 0.0
        %2019 = vmatpush1.msra.mxu0 0.0
        %2020 = vmatprep.subr.mxu0 0.0
        %2021 = vmatpush1.msra.mxu0 0.0
        %2022 = vmatprep.mubr.f32.mxu0 0.0
        %2023 = vmatmul.mubr.f32.gmra.mrb[0].mxu0 %v1956
        %v2024 = vpop.f32.mrb[0].mxu0
        %v2025 = vadd.f32 %v1952, %v2024
        %v2026 = vpop.f32.mrb[0].mxu0
        %2027 = vdwg.mxu0
        %2028 = vmatprep.subr.mxu0 0.0
        %2029 = vmatpush1.msra.mxu0 %v619
        %2030 = vmatprep.subr.mxu0 0.0
        %2031 = vmatpush1.msra.mxu0 0.0
        %2032 = vmatprep.subr.mxu0 0.0
        %2033 = vmatpush1.msra.mxu0 0.0
        %2034 = vmatprep.subr.mxu0 0.0
        %2035 = vmatpush1.msra.mxu0 0.0
        %2036 = vmatprep.subr.mxu0 0.0
        %2037 = vmatpush1.msra.mxu0 0.0
        %2038 = vmatprep.subr.mxu0 0.0
        %2039 = vmatpush1.msra.mxu0 0.0
        %2040 = vmatprep.subr.mxu0 0.0
        %2041 = vmatpush1.msra.mxu0 0.0
        %2042 = vmatprep.subr.mxu0 0.0
        %2043 = vmatpush1.msra.mxu0 0.0
        %2044 = vmatprep.subr.mxu0 0.0
        %2045 = vmatpush1.msra.mxu0 0.0
        %2046 = vmatprep.subr.mxu0 0.0
        %2047 = vmatpush1.msra.mxu0 0.0
        %2048 = vmatprep.subr.mxu0 0.0
        %2049 = vmatpush1.msra.mxu0 0.0
        %2050 = vmatprep.subr.mxu0 0.0
        %2051 = vmatpush1.msra.mxu0 0.0
        %2052 = vmatprep.subr.mxu0 0.0
        %2053 = vmatpush1.msra.mxu0 0.0
        %2054 = vmatprep.subr.mxu0 0.0
        %2055 = vmatpush1.msra.mxu0 0.0
        %2056 = vmatprep.subr.mxu0 0.0
        %2057 = vmatpush1.msra.mxu0 0.0
        %2058 = vmatprep.subr.mxu0 0.0
        %2059 = vmatpush1.msra.mxu0 0.0
        %2060 = vmatprep.subr.mxu0 0.0
        %2061 = vmatpush1.msra.mxu0 0.0
        %2062 = vmatprep.subr.mxu0 0.0
        %2063 = vmatpush1.msra.mxu0 0.0
        %2064 = vmatprep.subr.mxu0 0.0
        %2065 = vmatpush1.msra.mxu0 0.0
        %2066 = vmatprep.subr.mxu0 0.0
        %2067 = vmatpush1.msra.mxu0 0.0
        %2068 = vmatprep.subr.mxu0 0.0
        %2069 = vmatpush1.msra.mxu0 0.0
        %2070 = vmatprep.subr.mxu0 0.0
        %2071 = vmatpush1.msra.mxu0 0.0
        %2072 = vmatprep.subr.mxu0 0.0
        %2073 = vmatpush1.msra.mxu0 0.0
        %2074 = vmatprep.subr.mxu0 0.0
        %2075 = vmatpush1.msra.mxu0 0.0
        %2076 = vmatprep.subr.mxu0 0.0
        %2077 = vmatpush1.msra.mxu0 0.0
        %2078 = vmatprep.subr.mxu0 0.0
        %2079 = vmatpush1.msra.mxu0 0.0
        %2080 = vmatprep.subr.mxu0 0.0
        %2081 = vmatpush1.msra.mxu0 0.0
        %2082 = vmatprep.subr.mxu0 0.0
        %2083 = vmatpush1.msra.mxu0 0.0
        %2084 = vmatprep.subr.mxu0 0.0
        %2085 = vmatpush1.msra.mxu0 0.0
        %2086 = vmatprep.subr.mxu0 0.0
        %2087 = vmatpush1.msra.mxu0 0.0
        %2088 = vmatprep.subr.mxu0 0.0
        %2089 = vmatpush1.msra.mxu0 0.0
        %2090 = vmatprep.subr.mxu0 0.0
        %2091 = vmatpush1.msra.mxu0 0.0
        %2092 = vmatprep.mubr.f32.mxu0 0.0
        %2093 = vmatmul.mubr.f32.gmra.mrb[0].mxu0 %v1956
        %v2094 = vpop.f32.mrb[0].mxu0
        %v2095 = vadd.f32 0.0, %v2094
        %v2096 = vpop.f32.mrb[0].mxu0
        %2097 = vdwg.mxu0
        %v2098 = vadd.f32 %v1875, %v2095
        %v2099 = vld [vmem:[%s1722 + $0x1] sm:$0xf]
        %v2101 = vsel %vm313, %v2099, 0
        %2103 = vmatprep.subr.mxu0 0.0
        %2104 = vmatpush1.msra.mxu0 %v619
        %2105 = vmatprep.subr.mxu0 0.0
        %2106 = vmatpush1.msra.mxu0 0.0
        %2107 = vmatprep.subr.mxu0 0.0
        %2108 = vmatpush1.msra.mxu0 0.0
        %2109 = vmatprep.subr.mxu0 0.0
        %2110 = vmatpush1.msra.mxu0 0.0
        %2111 = vmatprep.subr.mxu0 0.0
        %2112 = vmatpush1.msra.mxu0 0.0
        %2113 = vmatprep.subr.mxu0 0.0
        %2114 = vmatpush1.msra.mxu0 0.0
        %2115 = vmatprep.subr.mxu0 0.0
        %2116 = vmatpush1.msra.mxu0 0.0
        %2117 = vmatprep.subr.mxu0 0.0
        %2118 = vmatpush1.msra.mxu0 0.0
        %2119 = vmatprep.subr.mxu0 0.0
        %2120 = vmatpush1.msra.mxu0 0.0
        %2121 = vmatprep.subr.mxu0 0.0
        %2122 = vmatpush1.msra.mxu0 0.0
        %2123 = vmatprep.subr.mxu0 0.0
        %2124 = vmatpush1.msra.mxu0 0.0
        %2125 = vmatprep.subr.mxu0 0.0
        %2126 = vmatpush1.msra.mxu0 0.0
        %2127 = vmatprep.subr.mxu0 0.0
        %2128 = vmatpush1.msra.mxu0 0.0
        %2129 = vmatprep.subr.mxu0 0.0
        %2130 = vmatpush1.msra.mxu0 0.0
        %2131 = vmatprep.subr.mxu0 0.0
        %2132 = vmatpush1.msra.mxu0 0.0
        %2133 = vmatprep.subr.mxu0 0.0
        %2134 = vmatpush1.msra.mxu0 0.0
        %2135 = vmatprep.subr.mxu0 0.0
        %2136 = vmatpush1.msra.mxu0 0.0
        %2137 = vmatprep.subr.mxu0 0.0
        %2138 = vmatpush1.msra.mxu0 0.0
        %2139 = vmatprep.subr.mxu0 0.0
        %2140 = vmatpush1.msra.mxu0 0.0
        %2141 = vmatprep.subr.mxu0 0.0
        %2142 = vmatpush1.msra.mxu0 0.0
        %2143 = vmatprep.subr.mxu0 0.0
        %2144 = vmatpush1.msra.mxu0 0.0
        %2145 = vmatprep.subr.mxu0 0.0
        %2146 = vmatpush1.msra.mxu0 0.0
        %2147 = vmatprep.subr.mxu0 0.0
        %2148 = vmatpush1.msra.mxu0 0.0
        %2149 = vmatprep.subr.mxu0 0.0
        %2150 = vmatpush1.msra.mxu0 0.0
        %2151 = vmatprep.subr.mxu0 0.0
        %2152 = vmatpush1.msra.mxu0 0.0
        %2153 = vmatprep.subr.mxu0 0.0
        %2154 = vmatpush1.msra.mxu0 0.0
        %2155 = vmatprep.subr.mxu0 0.0
        %2156 = vmatpush1.msra.mxu0 0.0
        %2157 = vmatprep.subr.mxu0 0.0
        %2158 = vmatpush1.msra.mxu0 0.0
        %2159 = vmatprep.subr.mxu0 0.0
        %2160 = vmatpush1.msra.mxu0 0.0
        %2161 = vmatprep.subr.mxu0 0.0
        %2162 = vmatpush1.msra.mxu0 0.0
        %2163 = vmatprep.subr.mxu0 0.0
        %2164 = vmatpush1.msra.mxu0 0.0
        %2165 = vmatprep.subr.mxu0 0.0
        %2166 = vmatpush1.msra.mxu0 0.0
        %2167 = vmatprep.mubr.f32.mxu0 0.0
        %2168 = vmatmul.mubr.f32.gmra.mrb[0].mxu0 %v2101
        %v2169 = vpop.f32.mrb[0].mxu0
        %v2170 = vadd.f32 0.0, %v2169
        %v2171 = vpop.f32.mrb[0].mxu0
        %2172 = vdwg.mxu0
        %v2173 = vadd.f32 %v2025, %v2170
        %s2174 = sadd.s32 %s1720, 4
        %s2175 = smul.u32 %s2174, 8
        %s2176 = scalar_lea.vmem %s290, %s2175
        %v2177 = vld [vmem:[%s2176] sm:$0xf]
        %v2179 = vsel %vm313, %v2177, 0
        %2181 = vmatprep.subr.mxu0 0.0
        %2182 = vmatpush1.msra.mxu0 %v776
        %2183 = vmatprep.subr.mxu0 0.0
        %2184 = vmatpush1.msra.mxu0 0.0
        %2185 = vmatprep.subr.mxu0 0.0
        %2186 = vmatpush1.msra.mxu0 0.0
        %2187 = vmatprep.subr.mxu0 0.0
        %2188 = vmatpush1.msra.mxu0 0.0
        %2189 = vmatprep.subr.mxu0 0.0
        %2190 = vmatpush1.msra.mxu0 0.0
        %2191 = vmatprep.subr.mxu0 0.0
        %2192 = vmatpush1.msra.mxu0 0.0
        %2193 = vmatprep.subr.mxu0 0.0
        %2194 = vmatpush1.msra.mxu0 0.0
        %2195 = vmatprep.subr.mxu0 0.0
        %2196 = vmatpush1.msra.mxu0 0.0
        %2197 = vmatprep.subr.mxu0 0.0
        %2198 = vmatpush1.msra.mxu0 0.0
        %2199 = vmatprep.subr.mxu0 0.0
        %2200 = vmatpush1.msra.mxu0 0.0
        %2201 = vmatprep.subr.mxu0 0.0
        %2202 = vmatpush1.msra.mxu0 0.0
        %2203 = vmatprep.subr.mxu0 0.0
        %2204 = vmatpush1.msra.mxu0 0.0
        %2205 = vmatprep.subr.mxu0 0.0
        %2206 = vmatpush1.msra.mxu0 0.0
        %2207 = vmatprep.subr.mxu0 0.0
        %2208 = vmatpush1.msra.mxu0 0.0
        %2209 = vmatprep.subr.mxu0 0.0
        %2210 = vmatpush1.msra.mxu0 0.0
        %2211 = vmatprep.subr.mxu0 0.0
        %2212 = vmatpush1.msra.mxu0 0.0
        %2213 = vmatprep.subr.mxu0 0.0
        %2214 = vmatpush1.msra.mxu0 0.0
        %2215 = vmatprep.subr.mxu0 0.0
        %2216 = vmatpush1.msra.mxu0 0.0
        %2217 = vmatprep.subr.mxu0 0.0
        %2218 = vmatpush1.msra.mxu0 0.0
        %2219 = vmatprep.subr.mxu0 0.0
        %2220 = vmatpush1.msra.mxu0 0.0
        %2221 = vmatprep.subr.mxu0 0.0
        %2222 = vmatpush1.msra.mxu0 0.0
        %2223 = vmatprep.subr.mxu0 0.0
        %2224 = vmatpush1.msra.mxu0 0.0
        %2225 = vmatprep.subr.mxu0 0.0
        %2226 = vmatpush1.msra.mxu0 0.0
        %2227 = vmatprep.subr.mxu0 0.0
        %2228 = vmatpush1.msra.mxu0 0.0
        %2229 = vmatprep.subr.mxu0 0.0
        %2230 = vmatpush1.msra.mxu0 0.0
        %2231 = vmatprep.subr.mxu0 0.0
        %2232 = vmatpush1.msra.mxu0 0.0
        %2233 = vmatprep.subr.mxu0 0.0
        %2234 = vmatpush1.msra.mxu0 0.0
        %2235 = vmatprep.subr.mxu0 0.0
        %2236 = vmatpush1.msra.mxu0 0.0
        %2237 = vmatprep.subr.mxu0 0.0
        %2238 = vmatpush1.msra.mxu0 0.0
        %2239 = vmatprep.subr.mxu0 0.0
        %2240 = vmatpush1.msra.mxu0 0.0
        %2241 = vmatprep.subr.mxu0 0.0
        %2242 = vmatpush1.msra.mxu0 0.0
        %2243 = vmatprep.subr.mxu0 0.0
        %2244 = vmatpush1.msra.mxu0 0.0
        %2245 = vmatprep.mubr.f32.mxu0 0.0
        %2246 = vmatmul.mubr.f32.gmra.mrb[0].mxu0 %v2179
        %v2247 = vpop.f32.mrb[0].mxu0
        %v2248 = vadd.f32 0.0, %v2247
        %v2249 = vpop.f32.mrb[0].mxu0
        %2250 = vdwg.mxu0
        %v2251 = vadd.f32 %v2098, %v2248
        %s2252 = sadd.s32 %s1720, 6
        %s2253 = smul.u32 %s2252, 8
        %s2254 = scalar_lea.vmem %s290, %s2253
        %v2255 = vld [vmem:[%s2254] sm:$0xf]
        %v2257 = vsel %vm313, %v2255, 0
        %2259 = vmatprep.subr.mxu0 0.0
        %2260 = vmatpush1.msra.mxu0 %v776
        %2261 = vmatprep.subr.mxu0 0.0
        %2262 = vmatpush1.msra.mxu0 0.0
        %2263 = vmatprep.subr.mxu0 0.0
        %2264 = vmatpush1.msra.mxu0 0.0
        %2265 = vmatprep.subr.mxu0 0.0
        %2266 = vmatpush1.msra.mxu0 0.0
        %2267 = vmatprep.subr.mxu0 0.0
        %2268 = vmatpush1.msra.mxu0 0.0
        %2269 = vmatprep.subr.mxu0 0.0
        %2270 = vmatpush1.msra.mxu0 0.0
        %2271 = vmatprep.subr.mxu0 0.0
        %2272 = vmatpush1.msra.mxu0 0.0
        %2273 = vmatprep.subr.mxu0 0.0
        %2274 = vmatpush1.msra.mxu0 0.0
        %2275 = vmatprep.subr.mxu0 0.0
        %2276 = vmatpush1.msra.mxu0 0.0
        %2277 = vmatprep.subr.mxu0 0.0
        %2278 = vmatpush1.msra.mxu0 0.0
        %2279 = vmatprep.subr.mxu0 0.0
        %2280 = vmatpush1.msra.mxu0 0.0
        %2281 = vmatprep.subr.mxu0 0.0
        %2282 = vmatpush1.msra.mxu0 0.0
        %2283 = vmatprep.subr.mxu0 0.0
        %2284 = vmatpush1.msra.mxu0 0.0
        %2285 = vmatprep.subr.mxu0 0.0
        %2286 = vmatpush1.msra.mxu0 0.0
        %2287 = vmatprep.subr.mxu0 0.0
        %2288 = vmatpush1.msra.mxu0 0.0
        %2289 = vmatprep.subr.mxu0 0.0
        %2290 = vmatpush1.msra.mxu0 0.0
        %2291 = vmatprep.subr.mxu0 0.0
        %2292 = vmatpush1.msra.mxu0 0.0
        %2293 = vmatprep.subr.mxu0 0.0
        %2294 = vmatpush1.msra.mxu0 0.0
        %2295 = vmatprep.subr.mxu0 0.0
        %2296 = vmatpush1.msra.mxu0 0.0
        %2297 = vmatprep.subr.mxu0 0.0
        %2298 = vmatpush1.msra.mxu0 0.0
        %2299 = vmatprep.subr.mxu0 0.0
        %2300 = vmatpush1.msra.mxu0 0.0
        %2301 = vmatprep.subr.mxu0 0.0
        %2302 = vmatpush1.msra.mxu0 0.0
        %2303 = vmatprep.subr.mxu0 0.0
        %2304 = vmatpush1.msra.mxu0 0.0
        %2305 = vmatprep.subr.mxu0 0.0
        %2306 = vmatpush1.msra.mxu0 0.0
        %2307 = vmatprep.subr.mxu0 0.0
        %2308 = vmatpush1.msra.mxu0 0.0
        %2309 = vmatprep.subr.mxu0 0.0
        %2310 = vmatpush1.msra.mxu0 0.0
        %2311 = vmatprep.subr.mxu0 0.0
        %2312 = vmatpush1.msra.mxu0 0.0
        %2313 = vmatprep.subr.mxu0 0.0
        %2314 = vmatpush1.msra.mxu0 0.0
        %2315 = vmatprep.subr.mxu0 0.0
        %2316 = vmatpush1.msra.mxu0 0.0
        %2317 = vmatprep.subr.mxu0 0.0
        %2318 = vmatpush1.msra.mxu0 0.0
        %2319 = vmatprep.subr.mxu0 0.0
        %2320 = vmatpush1.msra.mxu0 0.0
        %2321 = vmatprep.subr.mxu0 0.0
        %2322 = vmatpush1.msra.mxu0 0.0
        %2323 = vmatprep.mubr.f32.mxu0 0.0
        %2324 = vmatmul.mubr.f32.gmra.mrb[0].mxu0 %v2257
        %v2325 = vpop.f32.mrb[0].mxu0
        %v2326 = vadd.f32 0.0, %v2325
        %v2327 = vpop.f32.mrb[0].mxu0
        %2328 = vdwg.mxu0
        %v2329 = vadd.f32 %v2173, %v2326
        %s2330 = sadd.s32 %s1720, 5
        %s2331 = smul.u32 %s2330, 8
        %s2332 = scalar_lea.vmem %s290, %s2331
        %v2333 = vld [vmem:[%s2332] sm:$0xf]
        %v2335 = vsel %vm313, %v2333, 0
        %2337 = vmatprep.subr.mxu0 0.0
        %2338 = vmatpush1.msra.mxu0 %v936
        %2339 = vmatprep.subr.mxu0 0.0
        %2340 = vmatpush1.msra.mxu0 0.0
        %2341 = vmatprep.subr.mxu0 0.0
        %2342 = vmatpush1.msra.mxu0 0.0
        %2343 = vmatprep.subr.mxu0 0.0
        %2344 = vmatpush1.msra.mxu0 0.0
        %2345 = vmatprep.subr.mxu0 0.0
        %2346 = vmatpush1.msra.mxu0 0.0
        %2347 = vmatprep.subr.mxu0 0.0
        %2348 = vmatpush1.msra.mxu0 0.0
        %2349 = vmatprep.subr.mxu0 0.0
        %2350 = vmatpush1.msra.mxu0 0.0
        %2351 = vmatprep.subr.mxu0 0.0
        %2352 = vmatpush1.msra.mxu0 0.0
        %2353 = vmatprep.subr.mxu0 0.0
        %2354 = vmatpush1.msra.mxu0 0.0
        %2355 = vmatprep.subr.mxu0 0.0
        %2356 = vmatpush1.msra.mxu0 0.0
        %2357 = vmatprep.subr.mxu0 0.0
        %2358 = vmatpush1.msra.mxu0 0.0
        %2359 = vmatprep.subr.mxu0 0.0
        %2360 = vmatpush1.msra.mxu0 0.0
        %2361 = vmatprep.subr.mxu0 0.0
        %2362 = vmatpush1.msra.mxu0 0.0
        %2363 = vmatprep.subr.mxu0 0.0
        %2364 = vmatpush1.msra.mxu0 0.0
        %2365 = vmatprep.subr.mxu0 0.0
        %2366 = vmatpush1.msra.mxu0 0.0
        %2367 = vmatprep.subr.mxu0 0.0
        %2368 = vmatpush1.msra.mxu0 0.0
        %2369 = vmatprep.subr.mxu0 0.0
        %2370 = vmatpush1.msra.mxu0 0.0
        %2371 = vmatprep.subr.mxu0 0.0
        %2372 = vmatpush1.msra.mxu0 0.0
        %2373 = vmatprep.subr.mxu0 0.0
        %2374 = vmatpush1.msra.mxu0 0.0
        %2375 = vmatprep.subr.mxu0 0.0
        %2376 = vmatpush1.msra.mxu0 0.0
        %2377 = vmatprep.subr.mxu0 0.0
        %2378 = vmatpush1.msra.mxu0 0.0
        %2379 = vmatprep.subr.mxu0 0.0
        %2380 = vmatpush1.msra.mxu0 0.0
        %2381 = vmatprep.subr.mxu0 0.0
        %2382 = vmatpush1.msra.mxu0 0.0
        %2383 = vmatprep.subr.mxu0 0.0
        %2384 = vmatpush1.msra.mxu0 0.0
        %2385 = vmatprep.subr.mxu0 0.0
        %2386 = vmatpush1.msra.mxu0 0.0
        %2387 = vmatprep.subr.mxu0 0.0
        %2388 = vmatpush1.msra.mxu0 0.0
        %2389 = vmatprep.subr.mxu0 0.0
        %2390 = vmatpush1.msra.mxu0 0.0
        %2391 = vmatprep.subr.mxu0 0.0
        %2392 = vmatpush1.msra.mxu0 0.0
        %2393 = vmatprep.subr.mxu0 0.0
        %2394 = vmatpush1.msra.mxu0 0.0
        %2395 = vmatprep.subr.mxu0 0.0
        %2396 = vmatpush1.msra.mxu0 0.0
        %2397 = vmatprep.subr.mxu0 0.0
        %2398 = vmatpush1.msra.mxu0 0.0
        %2399 = vmatprep.subr.mxu0 0.0
        %2400 = vmatpush1.msra.mxu0 0.0
        %2401 = vmatprep.mubr.f32.mxu0 0.0
        %2402 = vmatmul.mubr.f32.gmra.mrb[0].mxu0 %v2335
        %v2403 = vpop.f32.mrb[0].mxu0
        %v2404 = vadd.f32 0.0, %v2403
        %v2405 = vpop.f32.mrb[0].mxu0
        %2406 = vdwg.mxu0
        %v2407 = vadd.f32 %v2251, %v2404
        %s2408 = sadd.s32 %s1720, 7
        %s2409 = smul.u32 %s2408, 8
        %s2410 = scalar_lea.vmem %s290, %s2409
        %v2411 = vld [vmem:[%s2410] sm:$0xf]
        %v2413 = vsel %vm313, %v2411, 0
        %2415 = vmatprep.subr.mxu0 0.0
        %2416 = vmatpush1.msra.mxu0 %v936
        %2417 = vmatprep.subr.mxu0 0.0
        %2418 = vmatpush1.msra.mxu0 0.0
        %2419 = vmatprep.subr.mxu0 0.0
        %2420 = vmatpush1.msra.mxu0 0.0
        %2421 = vmatprep.subr.mxu0 0.0
        %2422 = vmatpush1.msra.mxu0 0.0
        %2423 = vmatprep.subr.mxu0 0.0
        %2424 = vmatpush1.msra.mxu0 0.0
        %2425 = vmatprep.subr.mxu0 0.0
        %2426 = vmatpush1.msra.mxu0 0.0
        %2427 = vmatprep.subr.mxu0 0.0
        %2428 = vmatpush1.msra.mxu0 0.0
        %2429 = vmatprep.subr.mxu0 0.0
        %2430 = vmatpush1.msra.mxu0 0.0
        %2431 = vmatprep.subr.mxu0 0.0
        %2432 = vmatpush1.msra.mxu0 0.0
        %2433 = vmatprep.subr.mxu0 0.0
        %2434 = vmatpush1.msra.mxu0 0.0
        %2435 = vmatprep.subr.mxu0 0.0
        %2436 = vmatpush1.msra.mxu0 0.0
        %2437 = vmatprep.subr.mxu0 0.0
        %2438 = vmatpush1.msra.mxu0 0.0
        %2439 = vmatprep.subr.mxu0 0.0
        %2440 = vmatpush1.msra.mxu0 0.0
        %2441 = vmatprep.subr.mxu0 0.0
        %2442 = vmatpush1.msra.mxu0 0.0
        %2443 = vmatprep.subr.mxu0 0.0
        %2444 = vmatpush1.msra.mxu0 0.0
        %2445 = vmatprep.subr.mxu0 0.0
        %2446 = vmatpush1.msra.mxu0 0.0
        %2447 = vmatprep.subr.mxu0 0.0
        %2448 = vmatpush1.msra.mxu0 0.0
        %2449 = vmatprep.subr.mxu0 0.0
        %2450 = vmatpush1.msra.mxu0 0.0
        %2451 = vmatprep.subr.mxu0 0.0
        %2452 = vmatpush1.msra.mxu0 0.0
        %2453 = vmatprep.subr.mxu0 0.0
        %2454 = vmatpush1.msra.mxu0 0.0
        %2455 = vmatprep.subr.mxu0 0.0
        %2456 = vmatpush1.msra.mxu0 0.0
        %2457 = vmatprep.subr.mxu0 0.0
        %2458 = vmatpush1.msra.mxu0 0.0
        %2459 = vmatprep.subr.mxu0 0.0
        %2460 = vmatpush1.msra.mxu0 0.0
        %2461 = vmatprep.subr.mxu0 0.0
        %2462 = vmatpush1.msra.mxu0 0.0
        %2463 = vmatprep.subr.mxu0 0.0
        %2464 = vmatpush1.msra.mxu0 0.0
        %2465 = vmatprep.subr.mxu0 0.0
        %2466 = vmatpush1.msra.mxu0 0.0
        %2467 = vmatprep.subr.mxu0 0.0
        %2468 = vmatpush1.msra.mxu0 0.0
        %2469 = vmatprep.subr.mxu0 0.0
        %2470 = vmatpush1.msra.mxu0 0.0
        %2471 = vmatprep.subr.mxu0 0.0
        %2472 = vmatpush1.msra.mxu0 0.0
        %2473 = vmatprep.subr.mxu0 0.0
        %2474 = vmatpush1.msra.mxu0 0.0
        %2475 = vmatprep.subr.mxu0 0.0
        %2476 = vmatpush1.msra.mxu0 0.0
        %2477 = vmatprep.subr.mxu0 0.0
        %2478 = vmatpush1.msra.mxu0 0.0
        %2479 = vmatprep.mubr.f32.mxu0 0.0
        %2480 = vmatmul.mubr.f32.gmra.mrb[0].mxu0 %v2413
        %v2481 = vpop.f32.mrb[0].mxu0
        %v2482 = vadd.f32 0.0, %v2481
        %v2483 = vpop.f32.mrb[0].mxu0
        %2484 = vdwg.mxu0
        %v2485 = vadd.f32 %v2329, %v2482
        %2486 = vmatprep.subr.mxu0 0.0
        %2487 = vmatpush1.msra.mxu0 %v1089
        %2488 = vmatprep.subr.mxu0 0.0
        %2489 = vmatpush1.msra.mxu0 0.0
        %2490 = vmatprep.subr.mxu0 0.0
        %2491 = vmatpush1.msra.mxu0 0.0
        %2492 = vmatprep.subr.mxu0 0.0
        %2493 = vmatpush1.msra.mxu0 0.0
        %2494 = vmatprep.subr.mxu0 0.0
        %2495 = vmatpush1.msra.mxu0 0.0
        %2496 = vmatprep.subr.mxu0 0.0
        %2497 = vmatpush1.msra.mxu0 0.0
        %2498 = vmatprep.subr.mxu0 0.0
        %2499 = vmatpush1.msra.mxu0 0.0
        %2500 = vmatprep.subr.mxu0 0.0
        %2501 = vmatpush1.msra.mxu0 0.0
        %2502 = vmatprep.subr.mxu0 0.0
        %2503 = vmatpush1.msra.mxu0 0.0
        %2504 = vmatprep.subr.mxu0 0.0
        %2505 = vmatpush1.msra.mxu0 0.0
        %2506 = vmatprep.subr.mxu0 0.0
        %2507 = vmatpush1.msra.mxu0 0.0
        %2508 = vmatprep.subr.mxu0 0.0
        %2509 = vmatpush1.msra.mxu0 0.0
        %2510 = vmatprep.subr.mxu0 0.0
        %2511 = vmatpush1.msra.mxu0 0.0
        %2512 = vmatprep.subr.mxu0 0.0
        %2513 = vmatpush1.msra.mxu0 0.0
        %2514 = vmatprep.subr.mxu0 0.0
        %2515 = vmatpush1.msra.mxu0 0.0
        %2516 = vmatprep.subr.mxu0 0.0
        %2517 = vmatpush1.msra.mxu0 0.0
        %2518 = vmatprep.subr.mxu0 0.0
        %2519 = vmatpush1.msra.mxu0 0.0
        %2520 = vmatprep.subr.mxu0 0.0
        %2521 = vmatpush1.msra.mxu0 0.0
        %2522 = vmatprep.subr.mxu0 0.0
        %2523 = vmatpush1.msra.mxu0 0.0
        %2524 = vmatprep.subr.mxu0 0.0
        %2525 = vmatpush1.msra.mxu0 0.0
        %2526 = vmatprep.subr.mxu0 0.0
        %2527 = vmatpush1.msra.mxu0 0.0
        %2528 = vmatprep.subr.mxu0 0.0
        %2529 = vmatpush1.msra.mxu0 0.0
        %2530 = vmatprep.subr.mxu0 0.0
        %2531 = vmatpush1.msra.mxu0 0.0
        %2532 = vmatprep.subr.mxu0 0.0
        %2533 = vmatpush1.msra.mxu0 0.0
        %2534 = vmatprep.subr.mxu0 0.0
        %2535 = vmatpush1.msra.mxu0 0.0
        %2536 = vmatprep.subr.mxu0 0.0
        %2537 = vmatpush1.msra.mxu0 0.0
        %2538 = vmatprep.subr.mxu0 0.0
        %2539 = vmatpush1.msra.mxu0 0.0
        %2540 = vmatprep.subr.mxu0 0.0
        %2541 = vmatpush1.msra.mxu0 0.0
        %2542 = vmatprep.subr.mxu0 0.0
        %2543 = vmatpush1.msra.mxu0 0.0
        %2544 = vmatprep.subr.mxu0 0.0
        %2545 = vmatpush1.msra.mxu0 0.0
        %2546 = vmatprep.subr.mxu0 0.0
        %2547 = vmatpush1.msra.mxu0 0.0
        %2548 = vmatprep.subr.mxu0 0.0
        %2549 = vmatpush1.msra.mxu0 0.0
        %2550 = vmatprep.mubr.f32.mxu0 0.0
        %2551 = vmatmul.mubr.f32.gmra.mrb[0].mxu0 %v2257
        %v2552 = vpop.f32.mrb[0].mxu0
        %v2553 = vadd.f32 0.0, %v2552
        %v2554 = vpop.f32.mrb[0].mxu0
        %2555 = vdwg.mxu0
        %v2556 = vadd.f32 %v2407, %v2553
        %v2557 = vld [vmem:[%s2176 + $0x1] sm:$0xf]
        %v2559 = vsel %vm313, %v2557, 0
        %2561 = vmatprep.subr.mxu0 0.0
        %2562 = vmatpush1.msra.mxu0 %v1089
        %2563 = vmatprep.subr.mxu0 0.0
        %2564 = vmatpush1.msra.mxu0 0.0
        %2565 = vmatprep.subr.mxu0 0.0
        %2566 = vmatpush1.msra.mxu0 0.0
        %2567 = vmatprep.subr.mxu0 0.0
        %2568 = vmatpush1.msra.mxu0 0.0
        %2569 = vmatprep.subr.mxu0 0.0
        %2570 = vmatpush1.msra.mxu0 0.0
        %2571 = vmatprep.subr.mxu0 0.0
        %2572 = vmatpush1.msra.mxu0 0.0
        %2573 = vmatprep.subr.mxu0 0.0
        %2574 = vmatpush1.msra.mxu0 0.0
        %2575 = vmatprep.subr.mxu0 0.0
        %2576 = vmatpush1.msra.mxu0 0.0
        %2577 = vmatprep.subr.mxu0 0.0
        %2578 = vmatpush1.msra.mxu0 0.0
        %2579 = vmatprep.subr.mxu0 0.0
        %2580 = vmatpush1.msra.mxu0 0.0
        %2581 = vmatprep.subr.mxu0 0.0
        %2582 = vmatpush1.msra.mxu0 0.0
        %2583 = vmatprep.subr.mxu0 0.0
        %2584 = vmatpush1.msra.mxu0 0.0
        %2585 = vmatprep.subr.mxu0 0.0
        %2586 = vmatpush1.msra.mxu0 0.0
        %2587 = vmatprep.subr.mxu0 0.0
        %2588 = vmatpush1.msra.mxu0 0.0
        %2589 = vmatprep.subr.mxu0 0.0
        %2590 = vmatpush1.msra.mxu0 0.0
        %2591 = vmatprep.subr.mxu0 0.0
        %2592 = vmatpush1.msra.mxu0 0.0
        %2593 = vmatprep.subr.mxu0 0.0
        %2594 = vmatpush1.msra.mxu0 0.0
        %2595 = vmatprep.subr.mxu0 0.0
        %2596 = vmatpush1.msra.mxu0 0.0
        %2597 = vmatprep.subr.mxu0 0.0
        %2598 = vmatpush1.msra.mxu0 0.0
        %2599 = vmatprep.subr.mxu0 0.0
        %2600 = vmatpush1.msra.mxu0 0.0
        %2601 = vmatprep.subr.mxu0 0.0
        %2602 = vmatpush1.msra.mxu0 0.0
        %2603 = vmatprep.subr.mxu0 0.0
        %2604 = vmatpush1.msra.mxu0 0.0
        %2605 = vmatprep.subr.mxu0 0.0
        %2606 = vmatpush1.msra.mxu0 0.0
        %2607 = vmatprep.subr.mxu0 0.0
        %2608 = vmatpush1.msra.mxu0 0.0
        %2609 = vmatprep.subr.mxu0 0.0
        %2610 = vmatpush1.msra.mxu0 0.0
        %2611 = vmatprep.subr.mxu0 0.0
        %2612 = vmatpush1.msra.mxu0 0.0
        %2613 = vmatprep.subr.mxu0 0.0
        %2614 = vmatpush1.msra.mxu0 0.0
        %2615 = vmatprep.subr.mxu0 0.0
        %2616 = vmatpush1.msra.mxu0 0.0
        %2617 = vmatprep.subr.mxu0 0.0
        %2618 = vmatpush1.msra.mxu0 0.0
        %2619 = vmatprep.subr.mxu0 0.0
        %2620 = vmatpush1.msra.mxu0 0.0
        %2621 = vmatprep.subr.mxu0 0.0
        %2622 = vmatpush1.msra.mxu0 0.0
        %2623 = vmatprep.subr.mxu0 0.0
        %2624 = vmatpush1.msra.mxu0 0.0
        %2625 = vmatprep.mubr.f32.mxu0 0.0
        %2626 = vmatmul.mubr.f32.gmra.mrb[0].mxu0 %v2559
        %v2627 = vpop.f32.mrb[0].mxu0
        %v2628 = vadd.f32 0.0, %v2627
        %v2629 = vpop.f32.mrb[0].mxu0
        %2630 = vdwg.mxu0
        %v2631 = vadd.f32 %v2485, %v2628
        %s2632 = sadd.s32 %s1720, 8
        %s2633 = smul.u32 %s2632, 8
        %s2634 = scalar_lea.vmem %s290, %s2633
        %v2635 = vld [vmem:[%s2634] sm:$0xf]
        %v2637 = vsel %vm313, %v2635, 0
        %2639 = vmatprep.subr.mxu0 0.0
        %2640 = vmatpush1.msra.mxu0 %v1246
        %2641 = vmatprep.subr.mxu0 0.0
        %2642 = vmatpush1.msra.mxu0 0.0
        %2643 = vmatprep.subr.mxu0 0.0
        %2644 = vmatpush1.msra.mxu0 0.0
        %2645 = vmatprep.subr.mxu0 0.0
        %2646 = vmatpush1.msra.mxu0 0.0
        %2647 = vmatprep.subr.mxu0 0.0
        %2648 = vmatpush1.msra.mxu0 0.0
        %2649 = vmatprep.subr.mxu0 0.0
        %2650 = vmatpush1.msra.mxu0 0.0
        %2651 = vmatprep.subr.mxu0 0.0
        %2652 = vmatpush1.msra.mxu0 0.0
        %2653 = vmatprep.subr.mxu0 0.0
        %2654 = vmatpush1.msra.mxu0 0.0
        %2655 = vmatprep.subr.mxu0 0.0
        %2656 = vmatpush1.msra.mxu0 0.0
        %2657 = vmatprep.subr.mxu0 0.0
        %2658 = vmatpush1.msra.mxu0 0.0
        %2659 = vmatprep.subr.mxu0 0.0
        %2660 = vmatpush1.msra.mxu0 0.0
        %2661 = vmatprep.subr.mxu0 0.0
        %2662 = vmatpush1.msra.mxu0 0.0
        %2663 = vmatprep.subr.mxu0 0.0
        %2664 = vmatpush1.msra.mxu0 0.0
        %2665 = vmatprep.subr.mxu0 0.0
        %2666 = vmatpush1.msra.mxu0 0.0
        %2667 = vmatprep.subr.mxu0 0.0
        %2668 = vmatpush1.msra.mxu0 0.0
        %2669 = vmatprep.subr.mxu0 0.0
        %2670 = vmatpush1.msra.mxu0 0.0
        %2671 = vmatprep.subr.mxu0 0.0
        %2672 = vmatpush1.msra.mxu0 0.0
        %2673 = vmatprep.subr.mxu0 0.0
        %2674 = vmatpush1.msra.mxu0 0.0
        %2675 = vmatprep.subr.mxu0 0.0
        %2676 = vmatpush1.msra.mxu0 0.0
        %2677 = vmatprep.subr.mxu0 0.0
        %2678 = vmatpush1.msra.mxu0 0.0
        %2679 = vmatprep.subr.mxu0 0.0
        %2680 = vmatpush1.msra.mxu0 0.0
        %2681 = vmatprep.subr.mxu0 0.0
        %2682 = vmatpush1.msra.mxu0 0.0
        %2683 = vmatprep.subr.mxu0 0.0
        %2684 = vmatpush1.msra.mxu0 0.0
        %2685 = vmatprep.subr.mxu0 0.0
        %2686 = vmatpush1.msra.mxu0 0.0
        %2687 = vmatprep.subr.mxu0 0.0
        %2688 = vmatpush1.msra.mxu0 0.0
        %2689 = vmatprep.subr.mxu0 0.0
        %2690 = vmatpush1.msra.mxu0 0.0
        %2691 = vmatprep.subr.mxu0 0.0
        %2692 = vmatpush1.msra.mxu0 0.0
        %2693 = vmatprep.subr.mxu0 0.0
        %2694 = vmatpush1.msra.mxu0 0.0
        %2695 = vmatprep.subr.mxu0 0.0
        %2696 = vmatpush1.msra.mxu0 0.0
        %2697 = vmatprep.subr.mxu0 0.0
        %2698 = vmatpush1.msra.mxu0 0.0
        %2699 = vmatprep.subr.mxu0 0.0
        %2700 = vmatpush1.msra.mxu0 0.0
        %2701 = vmatprep.subr.mxu0 0.0
        %2702 = vmatpush1.msra.mxu0 0.0
        %2703 = vmatprep.mubr.f32.mxu0 0.0
        %2704 = vmatmul.mubr.f32.gmra.mrb[0].mxu0 %v2637
        %v2705 = vpop.f32.mrb[0].mxu0
        %v2706 = vadd.f32 0.0, %v2705
        %v2707 = vpop.f32.mrb[0].mxu0
        %2708 = vdwg.mxu0
        %v2709 = vadd.f32 %v2556, %v2706
        %s2710 = sadd.s32 %s1720, 10
        %s2711 = smul.u32 %s2710, 8
        %s2712 = scalar_lea.vmem %s290, %s2711
        %v2713 = vld [vmem:[%s2712] sm:$0xf]
        %v2715 = vsel %vm313, %v2713, 0
        %2717 = vmatprep.subr.mxu0 0.0
        %2718 = vmatpush1.msra.mxu0 %v1246
        %2719 = vmatprep.subr.mxu0 0.0
        %2720 = vmatpush1.msra.mxu0 0.0
        %2721 = vmatprep.subr.mxu0 0.0
        %2722 = vmatpush1.msra.mxu0 0.0
        %2723 = vmatprep.subr.mxu0 0.0
        %2724 = vmatpush1.msra.mxu0 0.0
        %2725 = vmatprep.subr.mxu0 0.0
        %2726 = vmatpush1.msra.mxu0 0.0
        %2727 = vmatprep.subr.mxu0 0.0
        %2728 = vmatpush1.msra.mxu0 0.0
        %2729 = vmatprep.subr.mxu0 0.0
        %2730 = vmatpush1.msra.mxu0 0.0
        %2731 = vmatprep.subr.mxu0 0.0
        %2732 = vmatpush1.msra.mxu0 0.0
        %2733 = vmatprep.subr.mxu0 0.0
        %2734 = vmatpush1.msra.mxu0 0.0
        %2735 = vmatprep.subr.mxu0 0.0
        %2736 = vmatpush1.msra.mxu0 0.0
        %2737 = vmatprep.subr.mxu0 0.0
        %2738 = vmatpush1.msra.mxu0 0.0
        %2739 = vmatprep.subr.mxu0 0.0
        %2740 = vmatpush1.msra.mxu0 0.0
        %2741 = vmatprep.subr.mxu0 0.0
        %2742 = vmatpush1.msra.mxu0 0.0
        %2743 = vmatprep.subr.mxu0 0.0
        %2744 = vmatpush1.msra.mxu0 0.0
        %2745 = vmatprep.subr.mxu0 0.0
        %2746 = vmatpush1.msra.mxu0 0.0
        %2747 = vmatprep.subr.mxu0 0.0
        %2748 = vmatpush1.msra.mxu0 0.0
        %2749 = vmatprep.subr.mxu0 0.0
        %2750 = vmatpush1.msra.mxu0 0.0
        %2751 = vmatprep.subr.mxu0 0.0
        %2752 = vmatpush1.msra.mxu0 0.0
        %2753 = vmatprep.subr.mxu0 0.0
        %2754 = vmatpush1.msra.mxu0 0.0
        %2755 = vmatprep.subr.mxu0 0.0
        %2756 = vmatpush1.msra.mxu0 0.0
        %2757 = vmatprep.subr.mxu0 0.0
        %2758 = vmatpush1.msra.mxu0 0.0
        %2759 = vmatprep.subr.mxu0 0.0
        %2760 = vmatpush1.msra.mxu0 0.0
        %2761 = vmatprep.subr.mxu0 0.0
        %2762 = vmatpush1.msra.mxu0 0.0
        %2763 = vmatprep.subr.mxu0 0.0
        %2764 = vmatpush1.msra.mxu0 0.0
        %2765 = vmatprep.subr.mxu0 0.0
        %2766 = vmatpush1.msra.mxu0 0.0
        %2767 = vmatprep.subr.mxu0 0.0
        %2768 = vmatpush1.msra.mxu0 0.0
        %2769 = vmatprep.subr.mxu0 0.0
        %2770 = vmatpush1.msra.mxu0 0.0
        %2771 = vmatprep.subr.mxu0 0.0
        %2772 = vmatpush1.msra.mxu0 0.0
        %2773 = vmatprep.subr.mxu0 0.0
        %2774 = vmatpush1.msra.mxu0 0.0
        %2775 = vmatprep.subr.mxu0 0.0
        %2776 = vmatpush1.msra.mxu0 0.0
        %2777 = vmatprep.subr.mxu0 0.0
        %2778 = vmatpush1.msra.mxu0 0.0
        %2779 = vmatprep.subr.mxu0 0.0
        %2780 = vmatpush1.msra.mxu0 0.0
        %2781 = vmatprep.mubr.f32.mxu0 0.0
        %2782 = vmatmul.mubr.f32.gmra.mrb[0].mxu0 %v2715
        %v2783 = vpop.f32.mrb[0].mxu0
        %v2784 = vadd.f32 0.0, %v2783
        %v2785 = vpop.f32.mrb[0].mxu0
        %2786 = vdwg.mxu0
        %v2787 = vadd.f32 %v2631, %v2784
        %s2788 = sadd.s32 %s1720, 9
        %s2789 = smul.u32 %s2788, 8
        %s2790 = scalar_lea.vmem %s290, %s2789
        %v2791 = vld [vmem:[%s2790] sm:$0xf]
        %v2793 = vsel %vm313, %v2791, 0
        %2795 = vmatprep.subr.mxu0 0.0
        %2796 = vmatpush1.msra.mxu0 %v1406
        %2797 = vmatprep.subr.mxu0 0.0
        %2798 = vmatpush1.msra.mxu0 0.0
        %2799 = vmatprep.subr.mxu0 0.0
        %2800 = vmatpush1.msra.mxu0 0.0
        %2801 = vmatprep.subr.mxu0 0.0
        %2802 = vmatpush1.msra.mxu0 0.0
        %2803 = vmatprep.subr.mxu0 0.0
        %2804 = vmatpush1.msra.mxu0 0.0
        %2805 = vmatprep.subr.mxu0 0.0
        %2806 = vmatpush1.msra.mxu0 0.0
        %2807 = vmatprep.subr.mxu0 0.0
        %2808 = vmatpush1.msra.mxu0 0.0
        %2809 = vmatprep.subr.mxu0 0.0
        %2810 = vmatpush1.msra.mxu0 0.0
        %2811 = vmatprep.subr.mxu0 0.0
        %2812 = vmatpush1.msra.mxu0 0.0
        %2813 = vmatprep.subr.mxu0 0.0
        %2814 = vmatpush1.msra.mxu0 0.0
        %2815 = vmatprep.subr.mxu0 0.0
        %2816 = vmatpush1.msra.mxu0 0.0
        %2817 = vmatprep.subr.mxu0 0.0
        %2818 = vmatpush1.msra.mxu0 0.0
        %2819 = vmatprep.subr.mxu0 0.0
        %2820 = vmatpush1.msra.mxu0 0.0
        %2821 = vmatprep.subr.mxu0 0.0
        %2822 = vmatpush1.msra.mxu0 0.0
        %2823 = vmatprep.subr.mxu0 0.0
        %2824 = vmatpush1.msra.mxu0 0.0
        %2825 = vmatprep.subr.mxu0 0.0
        %2826 = vmatpush1.msra.mxu0 0.0
        %2827 = vmatprep.subr.mxu0 0.0
        %2828 = vmatpush1.msra.mxu0 0.0
        %2829 = vmatprep.subr.mxu0 0.0
        %2830 = vmatpush1.msra.mxu0 0.0
        %2831 = vmatprep.subr.mxu0 0.0
        %2832 = vmatpush1.msra.mxu0 0.0
        %2833 = vmatprep.subr.mxu0 0.0
        %2834 = vmatpush1.msra.mxu0 0.0
        %2835 = vmatprep.subr.mxu0 0.0
        %2836 = vmatpush1.msra.mxu0 0.0
        %2837 = vmatprep.subr.mxu0 0.0
        %2838 = vmatpush1.msra.mxu0 0.0
        %2839 = vmatprep.subr.mxu0 0.0
        %2840 = vmatpush1.msra.mxu0 0.0
        %2841 = vmatprep.subr.mxu0 0.0
        %2842 = vmatpush1.msra.mxu0 0.0
        %2843 = vmatprep.subr.mxu0 0.0
        %2844 = vmatpush1.msra.mxu0 0.0
        %2845 = vmatprep.subr.mxu0 0.0
        %2846 = vmatpush1.msra.mxu0 0.0
        %2847 = vmatprep.subr.mxu0 0.0
        %2848 = vmatpush1.msra.mxu0 0.0
        %2849 = vmatprep.subr.mxu0 0.0
        %2850 = vmatpush1.msra.mxu0 0.0
        %2851 = vmatprep.subr.mxu0 0.0
        %2852 = vmatpush1.msra.mxu0 0.0
        %2853 = vmatprep.subr.mxu0 0.0
        %2854 = vmatpush1.msra.mxu0 0.0
        %2855 = vmatprep.subr.mxu0 0.0
        %2856 = vmatpush1.msra.mxu0 0.0
        %2857 = vmatprep.subr.mxu0 0.0
        %2858 = vmatpush1.msra.mxu0 0.0
        %2859 = vmatprep.mubr.f32.mxu0 0.0
        %2860 = vmatmul.mubr.f32.gmra.mrb[0].mxu0 %v2793
        %v2861 = vpop.f32.mrb[0].mxu0
        %v2862 = vadd.f32 0.0, %v2861
        %v2863 = vpop.f32.mrb[0].mxu0
        %2864 = vdwg.mxu0
        %v2865 = vadd.f32 %v2709, %v2862
        %s2866 = sadd.s32 %s1720, 11
        %s2867 = smul.u32 %s2866, 8
        %s2868 = scalar_lea.vmem %s290, %s2867
        %v2869 = vld [vmem:[%s2868] sm:$0xf]
        %v2871 = vsel %vm313, %v2869, 0
        %2873 = vmatprep.subr.mxu0 0.0
        %2874 = vmatpush1.msra.mxu0 %v1406
        %2875 = vmatprep.subr.mxu0 0.0
        %2876 = vmatpush1.msra.mxu0 0.0
        %2877 = vmatprep.subr.mxu0 0.0
        %2878 = vmatpush1.msra.mxu0 0.0
        %2879 = vmatprep.subr.mxu0 0.0
        %2880 = vmatpush1.msra.mxu0 0.0
        %2881 = vmatprep.subr.mxu0 0.0
        %2882 = vmatpush1.msra.mxu0 0.0
        %2883 = vmatprep.subr.mxu0 0.0
        %2884 = vmatpush1.msra.mxu0 0.0
        %2885 = vmatprep.subr.mxu0 0.0
        %2886 = vmatpush1.msra.mxu0 0.0
        %2887 = vmatprep.subr.mxu0 0.0
        %2888 = vmatpush1.msra.mxu0 0.0
        %2889 = vmatprep.subr.mxu0 0.0
        %2890 = vmatpush1.msra.mxu0 0.0
        %2891 = vmatprep.subr.mxu0 0.0
        %2892 = vmatpush1.msra.mxu0 0.0
        %2893 = vmatprep.subr.mxu0 0.0
        %2894 = vmatpush1.msra.mxu0 0.0
        %2895 = vmatprep.subr.mxu0 0.0
        %2896 = vmatpush1.msra.mxu0 0.0
        %2897 = vmatprep.subr.mxu0 0.0
        %2898 = vmatpush1.msra.mxu0 0.0
        %2899 = vmatprep.subr.mxu0 0.0
        %2900 = vmatpush1.msra.mxu0 0.0
        %2901 = vmatprep.subr.mxu0 0.0
        %2902 = vmatpush1.msra.mxu0 0.0
        %2903 = vmatprep.subr.mxu0 0.0
        %2904 = vmatpush1.msra.mxu0 0.0
        %2905 = vmatprep.subr.mxu0 0.0
        %2906 = vmatpush1.msra.mxu0 0.0
        %2907 = vmatprep.subr.mxu0 0.0
        %2908 = vmatpush1.msra.mxu0 0.0
        %2909 = vmatprep.subr.mxu0 0.0
        %2910 = vmatpush1.msra.mxu0 0.0
        %2911 = vmatprep.subr.mxu0 0.0
        %2912 = vmatpush1.msra.mxu0 0.0
        %2913 = vmatprep.subr.mxu0 0.0
        %2914 = vmatpush1.msra.mxu0 0.0
        %2915 = vmatprep.subr.mxu0 0.0
        %2916 = vmatpush1.msra.mxu0 0.0
        %2917 = vmatprep.subr.mxu0 0.0
        %2918 = vmatpush1.msra.mxu0 0.0
        %2919 = vmatprep.subr.mxu0 0.0
        %2920 = vmatpush1.msra.mxu0 0.0
        %2921 = vmatprep.subr.mxu0 0.0
        %2922 = vmatpush1.msra.mxu0 0.0
        %2923 = vmatprep.subr.mxu0 0.0
        %2924 = vmatpush1.msra.mxu0 0.0
        %2925 = vmatprep.subr.mxu0 0.0
        %2926 = vmatpush1.msra.mxu0 0.0
        %2927 = vmatprep.subr.mxu0 0.0
        %2928 = vmatpush1.msra.mxu0 0.0
        %2929 = vmatprep.subr.mxu0 0.0
        %2930 = vmatpush1.msra.mxu0 0.0
        %2931 = vmatprep.subr.mxu0 0.0
        %2932 = vmatpush1.msra.mxu0 0.0
        %2933 = vmatprep.subr.mxu0 0.0
        %2934 = vmatpush1.msra.mxu0 0.0
        %2935 = vmatprep.subr.mxu0 0.0
        %2936 = vmatpush1.msra.mxu0 0.0
        %2937 = vmatprep.mubr.f32.mxu0 0.0
        %2938 = vmatmul.mubr.f32.gmra.mrb[0].mxu0 %v2871
        %v2939 = vpop.f32.mrb[0].mxu0
        %v2940 = vadd.f32 0.0, %v2939
        %v2941 = vpop.f32.mrb[0].mxu0
        %2942 = vdwg.mxu0
        %v2943 = vadd.f32 %v2787, %v2940
        %2944 = vmatprep.subr.mxu0 0.0
        %2945 = vmatpush1.msra.mxu0 %v1559
        %2946 = vmatprep.subr.mxu0 0.0
        %2947 = vmatpush1.msra.mxu0 0.0
        %2948 = vmatprep.subr.mxu0 0.0
        %2949 = vmatpush1.msra.mxu0 0.0
        %2950 = vmatprep.subr.mxu0 0.0
        %2951 = vmatpush1.msra.mxu0 0.0
        %2952 = vmatprep.subr.mxu0 0.0
        %2953 = vmatpush1.msra.mxu0 0.0
        %2954 = vmatprep.subr.mxu0 0.0
        %2955 = vmatpush1.msra.mxu0 0.0
        %2956 = vmatprep.subr.mxu0 0.0
        %2957 = vmatpush1.msra.mxu0 0.0
        %2958 = vmatprep.subr.mxu0 0.0
        %2959 = vmatpush1.msra.mxu0 0.0
        %2960 = vmatprep.subr.mxu0 0.0
        %2961 = vmatpush1.msra.mxu0 0.0
        %2962 = vmatprep.subr.mxu0 0.0
        %2963 = vmatpush1.msra.mxu0 0.0
        %2964 = vmatprep.subr.mxu0 0.0
        %2965 = vmatpush1.msra.mxu0 0.0
        %2966 = vmatprep.subr.mxu0 0.0
        %2967 = vmatpush1.msra.mxu0 0.0
        %2968 = vmatprep.subr.mxu0 0.0
        %2969 = vmatpush1.msra.mxu0 0.0
        %2970 = vmatprep.subr.mxu0 0.0
        %2971 = vmatpush1.msra.mxu0 0.0
        %2972 = vmatprep.subr.mxu0 0.0
        %2973 = vmatpush1.msra.mxu0 0.0
        %2974 = vmatprep.subr.mxu0 0.0
        %2975 = vmatpush1.msra.mxu0 0.0
        %2976 = vmatprep.subr.mxu0 0.0
        %2977 = vmatpush1.msra.mxu0 0.0
        %2978 = vmatprep.subr.mxu0 0.0
        %2979 = vmatpush1.msra.mxu0 0.0
        %2980 = vmatprep.subr.mxu0 0.0
        %2981 = vmatpush1.msra.mxu0 0.0
        %2982 = vmatprep.subr.mxu0 0.0
        %2983 = vmatpush1.msra.mxu0 0.0
        %2984 = vmatprep.subr.mxu0 0.0
        %2985 = vmatpush1.msra.mxu0 0.0
        %2986 = vmatprep.subr.mxu0 0.0
        %2987 = vmatpush1.msra.mxu0 0.0
        %2988 = vmatprep.subr.mxu0 0.0
        %2989 = vmatpush1.msra.mxu0 0.0
        %2990 = vmatprep.subr.mxu0 0.0
        %2991 = vmatpush1.msra.mxu0 0.0
        %2992 = vmatprep.subr.mxu0 0.0
        %2993 = vmatpush1.msra.mxu0 0.0
        %2994 = vmatprep.subr.mxu0 0.0
        %2995 = vmatpush1.msra.mxu0 0.0
        %2996 = vmatprep.subr.mxu0 0.0
        %2997 = vmatpush1.msra.mxu0 0.0
        %2998 = vmatprep.subr.mxu0 0.0
        %2999 = vmatpush1.msra.mxu0 0.0
        %3000 = vmatprep.subr.mxu0 0.0
        %3001 = vmatpush1.msra.mxu0 0.0
        %3002 = vmatprep.subr.mxu0 0.0
        %3003 = vmatpush1.msra.mxu0 0.0
        %3004 = vmatprep.subr.mxu0 0.0
        %3005 = vmatpush1.msra.mxu0 0.0
        %3006 = vmatprep.subr.mxu0 0.0
        %3007 = vmatpush1.msra.mxu0 0.0
        %3008 = vmatprep.mubr.f32.mxu0 0.0
        %3009 = vmatmul.mubr.f32.gmra.mrb[0].mxu0 %v2715
        %v3010 = vpop.f32.mrb[0].mxu0
        %v3011 = vadd.f32 0.0, %v3010
        %v3012 = vpop.f32.mrb[0].mxu0
        %3013 = vdwg.mxu0
        %v3014 = vadd.f32 %v2865, %v3011
        %v3015 = vld [vmem:[%s2634 + $0x1] sm:$0xf]
        %v3017 = vsel %vm313, %v3015, 0
        %3019 = vmatprep.subr.mxu0 0.0
        %3020 = vmatpush1.msra.mxu0 %v1559
        %3021 = vmatprep.subr.mxu0 0.0
        %3022 = vmatpush1.msra.mxu0 0.0
        %3023 = vmatprep.subr.mxu0 0.0
        %3024 = vmatpush1.msra.mxu0 0.0
        %3025 = vmatprep.subr.mxu0 0.0
        %3026 = vmatpush1.msra.mxu0 0.0
        %3027 = vmatprep.subr.mxu0 0.0
        %3028 = vmatpush1.msra.mxu0 0.0
        %3029 = vmatprep.subr.mxu0 0.0
        %3030 = vmatpush1.msra.mxu0 0.0
        %3031 = vmatprep.subr.mxu0 0.0
        %3032 = vmatpush1.msra.mxu0 0.0
        %3033 = vmatprep.subr.mxu0 0.0
        %3034 = vmatpush1.msra.mxu0 0.0
        %3035 = vmatprep.subr.mxu0 0.0
        %3036 = vmatpush1.msra.mxu0 0.0
        %3037 = vmatprep.subr.mxu0 0.0
        %3038 = vmatpush1.msra.mxu0 0.0
        %3039 = vmatprep.subr.mxu0 0.0
        %3040 = vmatpush1.msra.mxu0 0.0
        %3041 = vmatprep.subr.mxu0 0.0
        %3042 = vmatpush1.msra.mxu0 0.0
        %3043 = vmatprep.subr.mxu0 0.0
        %3044 = vmatpush1.msra.mxu0 0.0
        %3045 = vmatprep.subr.mxu0 0.0
        %3046 = vmatpush1.msra.mxu0 0.0
        %3047 = vmatprep.subr.mxu0 0.0
        %3048 = vmatpush1.msra.mxu0 0.0
        %3049 = vmatprep.subr.mxu0 0.0
        %3050 = vmatpush1.msra.mxu0 0.0
        %3051 = vmatprep.subr.mxu0 0.0
        %3052 = vmatpush1.msra.mxu0 0.0
        %3053 = vmatprep.subr.mxu0 0.0
        %3054 = vmatpush1.msra.mxu0 0.0
        %3055 = vmatprep.subr.mxu0 0.0
        %3056 = vmatpush1.msra.mxu0 0.0
        %3057 = vmatprep.subr.mxu0 0.0
        %3058 = vmatpush1.msra.mxu0 0.0
        %3059 = vmatprep.subr.mxu0 0.0
        %3060 = vmatpush1.msra.mxu0 0.0
        %3061 = vmatprep.subr.mxu0 0.0
        %3062 = vmatpush1.msra.mxu0 0.0
        %3063 = vmatprep.subr.mxu0 0.0
        %3064 = vmatpush1.msra.mxu0 0.0
        %3065 = vmatprep.subr.mxu0 0.0
        %3066 = vmatpush1.msra.mxu0 0.0
        %3067 = vmatprep.subr.mxu0 0.0
        %3068 = vmatpush1.msra.mxu0 0.0
        %3069 = vmatprep.subr.mxu0 0.0
        %3070 = vmatpush1.msra.mxu0 0.0
        %3071 = vmatprep.subr.mxu0 0.0
        %3072 = vmatpush1.msra.mxu0 0.0
        %3073 = vmatprep.subr.mxu0 0.0
        %3074 = vmatpush1.msra.mxu0 0.0
        %3075 = vmatprep.subr.mxu0 0.0
        %3076 = vmatpush1.msra.mxu0 0.0
        %3077 = vmatprep.subr.mxu0 0.0
        %3078 = vmatpush1.msra.mxu0 0.0
        %3079 = vmatprep.subr.mxu0 0.0
        %3080 = vmatpush1.msra.mxu0 0.0
        %3081 = vmatprep.subr.mxu0 0.0
        %3082 = vmatpush1.msra.mxu0 0.0
        %3083 = vmatprep.mubr.f32.mxu0 0.0
        %3084 = vmatmul.mubr.f32.gmra.mrb[0].mxu0 %v3017
        %v3085 = vpop.f32.mrb[0].mxu0
        %v3086 = vadd.f32 0.0, %v3085
        %v3087 = vpop.f32.mrb[0].mxu0
        %3088 = vdwg.mxu0
        %v3089 = vadd.f32 %v2943, %v3086
        %v3090 = vadd.f32 %v3014, %v1711
        %v3091 = vmax.f32 %v3090, 0.0
        %v3092 = vadd.f32 %v3089, %v1711
        %v3093 = vmax.f32 %v3092, 0.0
        %s3094 = sadd.s32 %s295, 1
        %s3095 = smul.u32 %s3094, 8
        %s3096 = smul.u32 %s3095, 8
        %s3097 = scalar_lea.vmem %s290, %s3096
        %v3098 = vld [vmem:[%s3097] sm:$0xf]
        %s3099 = sadd.s32 %s3095, 2
        %s3100 = smul.u32 %s3099, 8
        %s3101 = scalar_lea.vmem %s290, %s3100
        %v3102 = vld [vmem:[%s3101] sm:$0xf]
        %s3103 = sadd.s32 %s3095, 1
        %s3104 = smul.u32 %s3103, 8
        %s3105 = scalar_lea.vmem %s290, %s3104
        %v3106 = vld [vmem:[%s3105] sm:$0xf]
        %v3108 = vsel %vm313, %v3106, 0
        %3110 = vmatprep.subr.mxu0 0.0
        %3111 = vmatpush1.msra.mxu0 %v319
        %3112 = vmatprep.subr.mxu0 0.0
        %3113 = vmatpush1.msra.mxu0 0.0
        %3114 = vmatprep.subr.mxu0 0.0
        %3115 = vmatpush1.msra.mxu0 0.0
        %3116 = vmatprep.subr.mxu0 0.0
        %3117 = vmatpush1.msra.mxu0 0.0
        %3118 = vmatprep.subr.mxu0 0.0
        %3119 = vmatpush1.msra.mxu0 0.0
        %3120 = vmatprep.subr.mxu0 0.0
        %3121 = vmatpush1.msra.mxu0 0.0
        %3122 = vmatprep.subr.mxu0 0.0
        %3123 = vmatpush1.msra.mxu0 0.0
        %3124 = vmatprep.subr.mxu0 0.0
        %3125 = vmatpush1.msra.mxu0 0.0
        %3126 = vmatprep.subr.mxu0 0.0
        %3127 = vmatpush1.msra.mxu0 0.0
        %3128 = vmatprep.subr.mxu0 0.0
        %3129 = vmatpush1.msra.mxu0 0.0
        %3130 = vmatprep.subr.mxu0 0.0
        %3131 = vmatpush1.msra.mxu0 0.0
        %3132 = vmatprep.subr.mxu0 0.0
        %3133 = vmatpush1.msra.mxu0 0.0
        %3134 = vmatprep.subr.mxu0 0.0
        %3135 = vmatpush1.msra.mxu0 0.0
        %3136 = vmatprep.subr.mxu0 0.0
        %3137 = vmatpush1.msra.mxu0 0.0
        %3138 = vmatprep.subr.mxu0 0.0
        %3139 = vmatpush1.msra.mxu0 0.0
        %3140 = vmatprep.subr.mxu0 0.0
        %3141 = vmatpush1.msra.mxu0 0.0
        %3142 = vmatprep.subr.mxu0 0.0
        %3143 = vmatpush1.msra.mxu0 0.0
        %3144 = vmatprep.subr.mxu0 0.0
        %3145 = vmatpush1.msra.mxu0 0.0
        %3146 = vmatprep.subr.mxu0 0.0
        %3147 = vmatpush1.msra.mxu0 0.0
        %3148 = vmatprep.subr.mxu0 0.0
        %3149 = vmatpush1.msra.mxu0 0.0
        %3150 = vmatprep.subr.mxu0 0.0
        %3151 = vmatpush1.msra.mxu0 0.0
        %3152 = vmatprep.subr.mxu0 0.0
        %3153 = vmatpush1.msra.mxu0 0.0
        %3154 = vmatprep.subr.mxu0 0.0
        %3155 = vmatpush1.msra.mxu0 0.0
        %3156 = vmatprep.subr.mxu0 0.0
        %3157 = vmatpush1.msra.mxu0 0.0
        %3158 = vmatprep.subr.mxu0 0.0
        %3159 = vmatpush1.msra.mxu0 0.0
        %3160 = vmatprep.subr.mxu0 0.0
        %3161 = vmatpush1.msra.mxu0 0.0
        %3162 = vmatprep.subr.mxu0 0.0
        %3163 = vmatpush1.msra.mxu0 0.0
        %3164 = vmatprep.subr.mxu0 0.0
        %3165 = vmatpush1.msra.mxu0 0.0
        %3166 = vmatprep.subr.mxu0 0.0
        %3167 = vmatpush1.msra.mxu0 0.0
        %3168 = vmatprep.subr.mxu0 0.0
        %3169 = vmatpush1.msra.mxu0 0.0
        %3170 = vmatprep.subr.mxu0 0.0
        %3171 = vmatpush1.msra.mxu0 0.0
        %3172 = vmatprep.subr.mxu0 0.0
        %3173 = vmatpush1.msra.mxu0 0.0
        %3174 = vmatprep.mubr.f32.mxu0 0.0
        %3175 = vmatmul.mubr.f32.gmra.mrb[0].mxu0 %v3108
        %v3176 = vpop.f32.mrb[0].mxu0
        %v3177 = vadd.f32 0.0, %v3176
        %v3178 = vpop.f32.mrb[0].mxu0
        %3179 = vdwg.mxu0
        %v3181 = vsel %vm313, %v3098, 0
        %3183 = vmatprep.subr.mxu0 0.0
        %3184 = vmatpush1.msra.mxu0 %v395
        %3185 = vmatprep.subr.mxu0 0.0
        %3186 = vmatpush1.msra.mxu0 0.0
        %3187 = vmatprep.subr.mxu0 0.0
        %3188 = vmatpush1.msra.mxu0 0.0
        %3189 = vmatprep.subr.mxu0 0.0
        %3190 = vmatpush1.msra.mxu0 0.0
        %3191 = vmatprep.subr.mxu0 0.0
        %3192 = vmatpush1.msra.mxu0 0.0
        %3193 = vmatprep.subr.mxu0 0.0
        %3194 = vmatpush1.msra.mxu0 0.0
        %3195 = vmatprep.subr.mxu0 0.0
        %3196 = vmatpush1.msra.mxu0 0.0
        %3197 = vmatprep.subr.mxu0 0.0
        %3198 = vmatpush1.msra.mxu0 0.0
        %3199 = vmatprep.subr.mxu0 0.0
        %3200 = vmatpush1.msra.mxu0 0.0
        %3201 = vmatprep.subr.mxu0 0.0
        %3202 = vmatpush1.msra.mxu0 0.0
        %3203 = vmatprep.subr.mxu0 0.0
        %3204 = vmatpush1.msra.mxu0 0.0
        %3205 = vmatprep.subr.mxu0 0.0
        %3206 = vmatpush1.msra.mxu0 0.0
        %3207 = vmatprep.subr.mxu0 0.0
        %3208 = vmatpush1.msra.mxu0 0.0
        %3209 = vmatprep.subr.mxu0 0.0
        %3210 = vmatpush1.msra.mxu0 0.0
        %3211 = vmatprep.subr.mxu0 0.0
        %3212 = vmatpush1.msra.mxu0 0.0
        %3213 = vmatprep.subr.mxu0 0.0
        %3214 = vmatpush1.msra.mxu0 0.0
        %3215 = vmatprep.subr.mxu0 0.0
        %3216 = vmatpush1.msra.mxu0 0.0
        %3217 = vmatprep.subr.mxu0 0.0
        %3218 = vmatpush1.msra.mxu0 0.0
        %3219 = vmatprep.subr.mxu0 0.0
        %3220 = vmatpush1.msra.mxu0 0.0
        %3221 = vmatprep.subr.mxu0 0.0
        %3222 = vmatpush1.msra.mxu0 0.0
        %3223 = vmatprep.subr.mxu0 0.0
        %3224 = vmatpush1.msra.mxu0 0.0
        %3225 = vmatprep.subr.mxu0 0.0
        %3226 = vmatpush1.msra.mxu0 0.0
        %3227 = vmatprep.subr.mxu0 0.0
        %3228 = vmatpush1.msra.mxu0 0.0
        %3229 = vmatprep.subr.mxu0 0.0
        %3230 = vmatpush1.msra.mxu0 0.0
        %3231 = vmatprep.subr.mxu0 0.0
        %3232 = vmatpush1.msra.mxu0 0.0
        %3233 = vmatprep.subr.mxu0 0.0
        %3234 = vmatpush1.msra.mxu0 0.0
        %3235 = vmatprep.subr.mxu0 0.0
        %3236 = vmatpush1.msra.mxu0 0.0
        %3237 = vmatprep.subr.mxu0 0.0
        %3238 = vmatpush1.msra.mxu0 0.0
        %3239 = vmatprep.subr.mxu0 0.0
        %3240 = vmatpush1.msra.mxu0 0.0
        %3241 = vmatprep.subr.mxu0 0.0
        %3242 = vmatpush1.msra.mxu0 0.0
        %3243 = vmatprep.subr.mxu0 0.0
        %3244 = vmatpush1.msra.mxu0 0.0
        %3245 = vmatprep.subr.mxu0 0.0
        %3246 = vmatpush1.msra.mxu0 0.0
        %3247 = vmatprep.mubr.f32.mxu0 0.0
        %3248 = vmatmul.mubr.f32.gmra.mrb[0].mxu0 %v3181
        %v3249 = vpop.f32.mrb[0].mxu0
        %v3250 = vadd.f32 %v3177, %v3249
        %v3251 = vpop.f32.mrb[0].mxu0
        %3252 = vdwg.mxu0
        %s3253 = sadd.s32 %s3095, 3
        %s3254 = smul.u32 %s3253, 8
        %s3255 = scalar_lea.vmem %s290, %s3254
        %v3256 = vld [vmem:[%s3255] sm:$0xf]
        %v3258 = vsel %vm313, %v3256, 0
        %3260 = vmatprep.subr.mxu0 0.0
        %3261 = vmatpush1.msra.mxu0 %v319
        %3262 = vmatprep.subr.mxu0 0.0
        %3263 = vmatpush1.msra.mxu0 0.0
        %3264 = vmatprep.subr.mxu0 0.0
        %3265 = vmatpush1.msra.mxu0 0.0
        %3266 = vmatprep.subr.mxu0 0.0
        %3267 = vmatpush1.msra.mxu0 0.0
        %3268 = vmatprep.subr.mxu0 0.0
        %3269 = vmatpush1.msra.mxu0 0.0
        %3270 = vmatprep.subr.mxu0 0.0
        %3271 = vmatpush1.msra.mxu0 0.0
        %3272 = vmatprep.subr.mxu0 0.0
        %3273 = vmatpush1.msra.mxu0 0.0
        %3274 = vmatprep.subr.mxu0 0.0
        %3275 = vmatpush1.msra.mxu0 0.0
        %3276 = vmatprep.subr.mxu0 0.0
        %3277 = vmatpush1.msra.mxu0 0.0
        %3278 = vmatprep.subr.mxu0 0.0
        %3279 = vmatpush1.msra.mxu0 0.0
        %3280 = vmatprep.subr.mxu0 0.0
        %3281 = vmatpush1.msra.mxu0 0.0
        %3282 = vmatprep.subr.mxu0 0.0
        %3283 = vmatpush1.msra.mxu0 0.0
        %3284 = vmatprep.subr.mxu0 0.0
        %3285 = vmatpush1.msra.mxu0 0.0
        %3286 = vmatprep.subr.mxu0 0.0
        %3287 = vmatpush1.msra.mxu0 0.0
        %3288 = vmatprep.subr.mxu0 0.0
        %3289 = vmatpush1.msra.mxu0 0.0
        %3290 = vmatprep.subr.mxu0 0.0
        %3291 = vmatpush1.msra.mxu0 0.0
        %3292 = vmatprep.subr.mxu0 0.0
        %3293 = vmatpush1.msra.mxu0 0.0
        %3294 = vmatprep.subr.mxu0 0.0
        %3295 = vmatpush1.msra.mxu0 0.0
        %3296 = vmatprep.subr.mxu0 0.0
        %3297 = vmatpush1.msra.mxu0 0.0
        %3298 = vmatprep.subr.mxu0 0.0
        %3299 = vmatpush1.msra.mxu0 0.0
        %3300 = vmatprep.subr.mxu0 0.0
        %3301 = vmatpush1.msra.mxu0 0.0
        %3302 = vmatprep.subr.mxu0 0.0
        %3303 = vmatpush1.msra.mxu0 0.0
        %3304 = vmatprep.subr.mxu0 0.0
        %3305 = vmatpush1.msra.mxu0 0.0
        %3306 = vmatprep.subr.mxu0 0.0
        %3307 = vmatpush1.msra.mxu0 0.0
        %3308 = vmatprep.subr.mxu0 0.0
        %3309 = vmatpush1.msra.mxu0 0.0
        %3310 = vmatprep.subr.mxu0 0.0
        %3311 = vmatpush1.msra.mxu0 0.0
        %3312 = vmatprep.subr.mxu0 0.0
        %3313 = vmatpush1.msra.mxu0 0.0
        %3314 = vmatprep.subr.mxu0 0.0
        %3315 = vmatpush1.msra.mxu0 0.0
        %3316 = vmatprep.subr.mxu0 0.0
        %3317 = vmatpush1.msra.mxu0 0.0
        %3318 = vmatprep.subr.mxu0 0.0
        %3319 = vmatpush1.msra.mxu0 0.0
        %3320 = vmatprep.subr.mxu0 0.0
        %3321 = vmatpush1.msra.mxu0 0.0
        %3322 = vmatprep.subr.mxu0 0.0
        %3323 = vmatpush1.msra.mxu0 0.0
        %3324 = vmatprep.mubr.f32.mxu0 0.0
        %3325 = vmatmul.mubr.f32.gmra.mrb[0].mxu0 %v3258
        %v3326 = vpop.f32.mrb[0].mxu0
        %v3327 = vadd.f32 0.0, %v3326
        %v3328 = vpop.f32.mrb[0].mxu0
        %3329 = vdwg.mxu0
        %v3331 = vsel %vm313, %v3102, 0
        %3333 = vmatprep.subr.mxu0 0.0
        %3334 = vmatpush1.msra.mxu0 %v395
        %3335 = vmatprep.subr.mxu0 0.0
        %3336 = vmatpush1.msra.mxu0 0.0
        %3337 = vmatprep.subr.mxu0 0.0
        %3338 = vmatpush1.msra.mxu0 0.0
        %3339 = vmatprep.subr.mxu0 0.0
        %3340 = vmatpush1.msra.mxu0 0.0
        %3341 = vmatprep.subr.mxu0 0.0
        %3342 = vmatpush1.msra.mxu0 0.0
        %3343 = vmatprep.subr.mxu0 0.0
        %3344 = vmatpush1.msra.mxu0 0.0
        %3345 = vmatprep.subr.mxu0 0.0
        %3346 = vmatpush1.msra.mxu0 0.0
        %3347 = vmatprep.subr.mxu0 0.0
        %3348 = vmatpush1.msra.mxu0 0.0
        %3349 = vmatprep.subr.mxu0 0.0
        %3350 = vmatpush1.msra.mxu0 0.0
        %3351 = vmatprep.subr.mxu0 0.0
        %3352 = vmatpush1.msra.mxu0 0.0
        %3353 = vmatprep.subr.mxu0 0.0
        %3354 = vmatpush1.msra.mxu0 0.0
        %3355 = vmatprep.subr.mxu0 0.0
        %3356 = vmatpush1.msra.mxu0 0.0
        %3357 = vmatprep.subr.mxu0 0.0
        %3358 = vmatpush1.msra.mxu0 0.0
        %3359 = vmatprep.subr.mxu0 0.0
        %3360 = vmatpush1.msra.mxu0 0.0
        %3361 = vmatprep.subr.mxu0 0.0
        %3362 = vmatpush1.msra.mxu0 0.0
        %3363 = vmatprep.subr.mxu0 0.0
        %3364 = vmatpush1.msra.mxu0 0.0
        %3365 = vmatprep.subr.mxu0 0.0
        %3366 = vmatpush1.msra.mxu0 0.0
        %3367 = vmatprep.subr.mxu0 0.0
        %3368 = vmatpush1.msra.mxu0 0.0
        %3369 = vmatprep.subr.mxu0 0.0
        %3370 = vmatpush1.msra.mxu0 0.0
        %3371 = vmatprep.subr.mxu0 0.0
        %3372 = vmatpush1.msra.mxu0 0.0
        %3373 = vmatprep.subr.mxu0 0.0
        %3374 = vmatpush1.msra.mxu0 0.0
        %3375 = vmatprep.subr.mxu0 0.0
        %3376 = vmatpush1.msra.mxu0 0.0
        %3377 = vmatprep.subr.mxu0 0.0
        %3378 = vmatpush1.msra.mxu0 0.0
        %3379 = vmatprep.subr.mxu0 0.0
        %3380 = vmatpush1.msra.mxu0 0.0
        %3381 = vmatprep.subr.mxu0 0.0
        %3382 = vmatpush1.msra.mxu0 0.0
        %3383 = vmatprep.subr.mxu0 0.0
        %3384 = vmatpush1.msra.mxu0 0.0
        %3385 = vmatprep.subr.mxu0 0.0
        %3386 = vmatpush1.msra.mxu0 0.0
        %3387 = vmatprep.subr.mxu0 0.0
        %3388 = vmatpush1.msra.mxu0 0.0
        %3389 = vmatprep.subr.mxu0 0.0
        %3390 = vmatpush1.msra.mxu0 0.0
        %3391 = vmatprep.subr.mxu0 0.0
        %3392 = vmatpush1.msra.mxu0 0.0
        %3393 = vmatprep.subr.mxu0 0.0
        %3394 = vmatpush1.msra.mxu0 0.0
        %3395 = vmatprep.subr.mxu0 0.0
        %3396 = vmatpush1.msra.mxu0 0.0
        %3397 = vmatprep.mubr.f32.mxu0 0.0
        %3398 = vmatmul.mubr.f32.gmra.mrb[0].mxu0 %v3331
        %v3399 = vpop.f32.mrb[0].mxu0
        %v3400 = vadd.f32 %v3327, %v3399
        %v3401 = vpop.f32.mrb[0].mxu0
        %3402 = vdwg.mxu0
        %3403 = vmatprep.subr.mxu0 0.0
        %3404 = vmatpush1.msra.mxu0 %v619
        %3405 = vmatprep.subr.mxu0 0.0
        %3406 = vmatpush1.msra.mxu0 0.0
        %3407 = vmatprep.subr.mxu0 0.0
        %3408 = vmatpush1.msra.mxu0 0.0
        %3409 = vmatprep.subr.mxu0 0.0
        %3410 = vmatpush1.msra.mxu0 0.0
        %3411 = vmatprep.subr.mxu0 0.0
        %3412 = vmatpush1.msra.mxu0 0.0
        %3413 = vmatprep.subr.mxu0 0.0
        %3414 = vmatpush1.msra.mxu0 0.0
        %3415 = vmatprep.subr.mxu0 0.0
        %3416 = vmatpush1.msra.mxu0 0.0
        %3417 = vmatprep.subr.mxu0 0.0
        %3418 = vmatpush1.msra.mxu0 0.0
        %3419 = vmatprep.subr.mxu0 0.0
        %3420 = vmatpush1.msra.mxu0 0.0
        %3421 = vmatprep.subr.mxu0 0.0
        %3422 = vmatpush1.msra.mxu0 0.0
        %3423 = vmatprep.subr.mxu0 0.0
        %3424 = vmatpush1.msra.mxu0 0.0
        %3425 = vmatprep.subr.mxu0 0.0
        %3426 = vmatpush1.msra.mxu0 0.0
        %3427 = vmatprep.subr.mxu0 0.0
        %3428 = vmatpush1.msra.mxu0 0.0
        %3429 = vmatprep.subr.mxu0 0.0
        %3430 = vmatpush1.msra.mxu0 0.0
        %3431 = vmatprep.subr.mxu0 0.0
        %3432 = vmatpush1.msra.mxu0 0.0
        %3433 = vmatprep.subr.mxu0 0.0
        %3434 = vmatpush1.msra.mxu0 0.0
        %3435 = vmatprep.subr.mxu0 0.0
        %3436 = vmatpush1.msra.mxu0 0.0
        %3437 = vmatprep.subr.mxu0 0.0
        %3438 = vmatpush1.msra.mxu0 0.0
        %3439 = vmatprep.subr.mxu0 0.0
        %3440 = vmatpush1.msra.mxu0 0.0
        %3441 = vmatprep.subr.mxu0 0.0
        %3442 = vmatpush1.msra.mxu0 0.0
        %3443 = vmatprep.subr.mxu0 0.0
        %3444 = vmatpush1.msra.mxu0 0.0
        %3445 = vmatprep.subr.mxu0 0.0
        %3446 = vmatpush1.msra.mxu0 0.0
        %3447 = vmatprep.subr.mxu0 0.0
        %3448 = vmatpush1.msra.mxu0 0.0
        %3449 = vmatprep.subr.mxu0 0.0
        %3450 = vmatpush1.msra.mxu0 0.0
        %3451 = vmatprep.subr.mxu0 0.0
        %3452 = vmatpush1.msra.mxu0 0.0
        %3453 = vmatprep.subr.mxu0 0.0
        %3454 = vmatpush1.msra.mxu0 0.0
        %3455 = vmatprep.subr.mxu0 0.0
        %3456 = vmatpush1.msra.mxu0 0.0
        %3457 = vmatprep.subr.mxu0 0.0
        %3458 = vmatpush1.msra.mxu0 0.0
        %3459 = vmatprep.subr.mxu0 0.0
        %3460 = vmatpush1.msra.mxu0 0.0
        %3461 = vmatprep.subr.mxu0 0.0
        %3462 = vmatpush1.msra.mxu0 0.0
        %3463 = vmatprep.subr.mxu0 0.0
        %3464 = vmatpush1.msra.mxu0 0.0
        %3465 = vmatprep.subr.mxu0 0.0
        %3466 = vmatpush1.msra.mxu0 0.0
        %3467 = vmatprep.mubr.f32.mxu0 0.0
        %3468 = vmatmul.mubr.f32.gmra.mrb[0].mxu0 %v3331
        %v3469 = vpop.f32.mrb[0].mxu0
        %v3470 = vadd.f32 0.0, %v3469
        %v3471 = vpop.f32.mrb[0].mxu0
        %3472 = vdwg.mxu0
        %v3473 = vadd.f32 %v3250, %v3470
        %v3474 = vld [vmem:[%s3097 + $0x1] sm:$0xf]
        %v3476 = vsel %vm313, %v3474, 0
        %3478 = vmatprep.subr.mxu0 0.0
        %3479 = vmatpush1.msra.mxu0 %v619
        %3480 = vmatprep.subr.mxu0 0.0
        %3481 = vmatpush1.msra.mxu0 0.0
        %3482 = vmatprep.subr.mxu0 0.0
        %3483 = vmatpush1.msra.mxu0 0.0
        %3484 = vmatprep.subr.mxu0 0.0
        %3485 = vmatpush1.msra.mxu0 0.0
        %3486 = vmatprep.subr.mxu0 0.0
        %3487 = vmatpush1.msra.mxu0 0.0
        %3488 = vmatprep.subr.mxu0 0.0
        %3489 = vmatpush1.msra.mxu0 0.0
        %3490 = vmatprep.subr.mxu0 0.0
        %3491 = vmatpush1.msra.mxu0 0.0
        %3492 = vmatprep.subr.mxu0 0.0
        %3493 = vmatpush1.msra.mxu0 0.0
        %3494 = vmatprep.subr.mxu0 0.0
        %3495 = vmatpush1.msra.mxu0 0.0
        %3496 = vmatprep.subr.mxu0 0.0
        %3497 = vmatpush1.msra.mxu0 0.0
        %3498 = vmatprep.subr.mxu0 0.0
        %3499 = vmatpush1.msra.mxu0 0.0
        %3500 = vmatprep.subr.mxu0 0.0
        %3501 = vmatpush1.msra.mxu0 0.0
        %3502 = vmatprep.subr.mxu0 0.0
        %3503 = vmatpush1.msra.mxu0 0.0
        %3504 = vmatprep.subr.mxu0 0.0
        %3505 = vmatpush1.msra.mxu0 0.0
        %3506 = vmatprep.subr.mxu0 0.0
        %3507 = vmatpush1.msra.mxu0 0.0
        %3508 = vmatprep.subr.mxu0 0.0
        %3509 = vmatpush1.msra.mxu0 0.0
        %3510 = vmatprep.subr.mxu0 0.0
        %3511 = vmatpush1.msra.mxu0 0.0
        %3512 = vmatprep.subr.mxu0 0.0
        %3513 = vmatpush1.msra.mxu0 0.0
        %3514 = vmatprep.subr.mxu0 0.0
        %3515 = vmatpush1.msra.mxu0 0.0
        %3516 = vmatprep.subr.mxu0 0.0
        %3517 = vmatpush1.msra.mxu0 0.0
        %3518 = vmatprep.subr.mxu0 0.0
        %3519 = vmatpush1.msra.mxu0 0.0
        %3520 = vmatprep.subr.mxu0 0.0
        %3521 = vmatpush1.msra.mxu0 0.0
        %3522 = vmatprep.subr.mxu0 0.0
        %3523 = vmatpush1.msra.mxu0 0.0
        %3524 = vmatprep.subr.mxu0 0.0
        %3525 = vmatpush1.msra.mxu0 0.0
        %3526 = vmatprep.subr.mxu0 0.0
        %3527 = vmatpush1.msra.mxu0 0.0
        %3528 = vmatprep.subr.mxu0 0.0
        %3529 = vmatpush1.msra.mxu0 0.0
        %3530 = vmatprep.subr.mxu0 0.0
        %3531 = vmatpush1.msra.mxu0 0.0
        %3532 = vmatprep.subr.mxu0 0.0
        %3533 = vmatpush1.msra.mxu0 0.0
        %3534 = vmatprep.subr.mxu0 0.0
        %3535 = vmatpush1.msra.mxu0 0.0
        %3536 = vmatprep.subr.mxu0 0.0
        %3537 = vmatpush1.msra.mxu0 0.0
        %3538 = vmatprep.subr.mxu0 0.0
        %3539 = vmatpush1.msra.mxu0 0.0
        %3540 = vmatprep.subr.mxu0 0.0
        %3541 = vmatpush1.msra.mxu0 0.0
        %3542 = vmatprep.mubr.f32.mxu0 0.0
        %3543 = vmatmul.mubr.f32.gmra.mrb[0].mxu0 %v3476
        %v3544 = vpop.f32.mrb[0].mxu0
        %v3545 = vadd.f32 0.0, %v3544
        %v3546 = vpop.f32.mrb[0].mxu0
        %3547 = vdwg.mxu0
        %v3548 = vadd.f32 %v3400, %v3545
        %s3549 = sadd.s32 %s3095, 4
        %s3550 = smul.u32 %s3549, 8
        %s3551 = scalar_lea.vmem %s290, %s3550
        %v3552 = vld [vmem:[%s3551] sm:$0xf]
        %v3554 = vsel %vm313, %v3552, 0
        %3556 = vmatprep.subr.mxu0 0.0
        %3557 = vmatpush1.msra.mxu0 %v776
        %3558 = vmatprep.subr.mxu0 0.0
        %3559 = vmatpush1.msra.mxu0 0.0
        %3560 = vmatprep.subr.mxu0 0.0
        %3561 = vmatpush1.msra.mxu0 0.0
        %3562 = vmatprep.subr.mxu0 0.0
        %3563 = vmatpush1.msra.mxu0 0.0
        %3564 = vmatprep.subr.mxu0 0.0
        %3565 = vmatpush1.msra.mxu0 0.0
        %3566 = vmatprep.subr.mxu0 0.0
        %3567 = vmatpush1.msra.mxu0 0.0
        %3568 = vmatprep.subr.mxu0 0.0
        %3569 = vmatpush1.msra.mxu0 0.0
        %3570 = vmatprep.subr.mxu0 0.0
        %3571 = vmatpush1.msra.mxu0 0.0
        %3572 = vmatprep.subr.mxu0 0.0
        %3573 = vmatpush1.msra.mxu0 0.0
        %3574 = vmatprep.subr.mxu0 0.0
        %3575 = vmatpush1.msra.mxu0 0.0
        %3576 = vmatprep.subr.mxu0 0.0
        %3577 = vmatpush1.msra.mxu0 0.0
        %3578 = vmatprep.subr.mxu0 0.0
        %3579 = vmatpush1.msra.mxu0 0.0
        %3580 = vmatprep.subr.mxu0 0.0
        %3581 = vmatpush1.msra.mxu0 0.0
        %3582 = vmatprep.subr.mxu0 0.0
        %3583 = vmatpush1.msra.mxu0 0.0
        %3584 = vmatprep.subr.mxu0 0.0
        %3585 = vmatpush1.msra.mxu0 0.0
        %3586 = vmatprep.subr.mxu0 0.0
        %3587 = vmatpush1.msra.mxu0 0.0
        %3588 = vmatprep.subr.mxu0 0.0
        %3589 = vmatpush1.msra.mxu0 0.0
        %3590 = vmatprep.subr.mxu0 0.0
        %3591 = vmatpush1.msra.mxu0 0.0
        %3592 = vmatprep.subr.mxu0 0.0
        %3593 = vmatpush1.msra.mxu0 0.0
        %3594 = vmatprep.subr.mxu0 0.0
        %3595 = vmatpush1.msra.mxu0 0.0
        %3596 = vmatprep.subr.mxu0 0.0
        %3597 = vmatpush1.msra.mxu0 0.0
        %3598 = vmatprep.subr.mxu0 0.0
        %3599 = vmatpush1.msra.mxu0 0.0
        %3600 = vmatprep.subr.mxu0 0.0
        %3601 = vmatpush1.msra.mxu0 0.0
        %3602 = vmatprep.subr.mxu0 0.0
        %3603 = vmatpush1.msra.mxu0 0.0
        %3604 = vmatprep.subr.mxu0 0.0
        %3605 = vmatpush1.msra.mxu0 0.0
        %3606 = vmatprep.subr.mxu0 0.0
        %3607 = vmatpush1.msra.mxu0 0.0
        %3608 = vmatprep.subr.mxu0 0.0
        %3609 = vmatpush1.msra.mxu0 0.0
        %3610 = vmatprep.subr.mxu0 0.0
        %3611 = vmatpush1.msra.mxu0 0.0
        %3612 = vmatprep.subr.mxu0 0.0
        %3613 = vmatpush1.msra.mxu0 0.0
        %3614 = vmatprep.subr.mxu0 0.0
        %3615 = vmatpush1.msra.mxu0 0.0
        %3616 = vmatprep.subr.mxu0 0.0
        %3617 = vmatpush1.msra.mxu0 0.0
        %3618 = vmatprep.subr.mxu0 0.0
        %3619 = vmatpush1.msra.mxu0 0.0
        %3620 = vmatprep.mubr.f32.mxu0 0.0
        %3621 = vmatmul.mubr.f32.gmra.mrb[0].mxu0 %v3554
        %v3622 = vpop.f32.mrb[0].mxu0
        %v3623 = vadd.f32 0.0, %v3622
        %v3624 = vpop.f32.mrb[0].mxu0
        %3625 = vdwg.mxu0
        %v3626 = vadd.f32 %v3473, %v3623
        %s3627 = sadd.s32 %s3095, 6
        %s3628 = smul.u32 %s3627, 8
        %s3629 = scalar_lea.vmem %s290, %s3628
        %v3630 = vld [vmem:[%s3629] sm:$0xf]
        %v3632 = vsel %vm313, %v3630, 0
        %3634 = vmatprep.subr.mxu0 0.0
        %3635 = vmatpush1.msra.mxu0 %v776
        %3636 = vmatprep.subr.mxu0 0.0
        %3637 = vmatpush1.msra.mxu0 0.0
        %3638 = vmatprep.subr.mxu0 0.0
        %3639 = vmatpush1.msra.mxu0 0.0
        %3640 = vmatprep.subr.mxu0 0.0
        %3641 = vmatpush1.msra.mxu0 0.0
        %3642 = vmatprep.subr.mxu0 0.0
        %3643 = vmatpush1.msra.mxu0 0.0
        %3644 = vmatprep.subr.mxu0 0.0
        %3645 = vmatpush1.msra.mxu0 0.0
        %3646 = vmatprep.subr.mxu0 0.0
        %3647 = vmatpush1.msra.mxu0 0.0
        %3648 = vmatprep.subr.mxu0 0.0
        %3649 = vmatpush1.msra.mxu0 0.0
        %3650 = vmatprep.subr.mxu0 0.0
        %3651 = vmatpush1.msra.mxu0 0.0
        %3652 = vmatprep.subr.mxu0 0.0
        %3653 = vmatpush1.msra.mxu0 0.0
        %3654 = vmatprep.subr.mxu0 0.0
        %3655 = vmatpush1.msra.mxu0 0.0
        %3656 = vmatprep.subr.mxu0 0.0
        %3657 = vmatpush1.msra.mxu0 0.0
        %3658 = vmatprep.subr.mxu0 0.0
        %3659 = vmatpush1.msra.mxu0 0.0
        %3660 = vmatprep.subr.mxu0 0.0
        %3661 = vmatpush1.msra.mxu0 0.0
        %3662 = vmatprep.subr.mxu0 0.0
        %3663 = vmatpush1.msra.mxu0 0.0
        %3664 = vmatprep.subr.mxu0 0.0
        %3665 = vmatpush1.msra.mxu0 0.0
        %3666 = vmatprep.subr.mxu0 0.0
        %3667 = vmatpush1.msra.mxu0 0.0
        %3668 = vmatprep.subr.mxu0 0.0
        %3669 = vmatpush1.msra.mxu0 0.0
        %3670 = vmatprep.subr.mxu0 0.0
        %3671 = vmatpush1.msra.mxu0 0.0
        %3672 = vmatprep.subr.mxu0 0.0
        %3673 = vmatpush1.msra.mxu0 0.0
        %3674 = vmatprep.subr.mxu0 0.0
        %3675 = vmatpush1.msra.mxu0 0.0
        %3676 = vmatprep.subr.mxu0 0.0
        %3677 = vmatpush1.msra.mxu0 0.0
        %3678 = vmatprep.subr.mxu0 0.0
        %3679 = vmatpush1.msra.mxu0 0.0
        %3680 = vmatprep.subr.mxu0 0.0
        %3681 = vmatpush1.msra.mxu0 0.0
        %3682 = vmatprep.subr.mxu0 0.0
        %3683 = vmatpush1.msra.mxu0 0.0
        %3684 = vmatprep.subr.mxu0 0.0
        %3685 = vmatpush1.msra.mxu0 0.0
        %3686 = vmatprep.subr.mxu0 0.0
        %3687 = vmatpush1.msra.mxu0 0.0
        %3688 = vmatprep.subr.mxu0 0.0
        %3689 = vmatpush1.msra.mxu0 0.0
        %3690 = vmatprep.subr.mxu0 0.0
        %3691 = vmatpush1.msra.mxu0 0.0
        %3692 = vmatprep.subr.mxu0 0.0
        %3693 = vmatpush1.msra.mxu0 0.0
        %3694 = vmatprep.subr.mxu0 0.0
        %3695 = vmatpush1.msra.mxu0 0.0
        %3696 = vmatprep.subr.mxu0 0.0
        %3697 = vmatpush1.msra.mxu0 0.0
        %3698 = vmatprep.mubr.f32.mxu0 0.0
        %3699 = vmatmul.mubr.f32.gmra.mrb[0].mxu0 %v3632
        %v3700 = vpop.f32.mrb[0].mxu0
        %v3701 = vadd.f32 0.0, %v3700
        %v3702 = vpop.f32.mrb[0].mxu0
        %3703 = vdwg.mxu0
        %v3704 = vadd.f32 %v3548, %v3701
        %s3705 = sadd.s32 %s3095, 5
        %s3706 = smul.u32 %s3705, 8
        %s3707 = scalar_lea.vmem %s290, %s3706
        %v3708 = vld [vmem:[%s3707] sm:$0xf]
        %v3710 = vsel %vm313, %v3708, 0
        %3712 = vmatprep.subr.mxu0 0.0
        %3713 = vmatpush1.msra.mxu0 %v936
        %3714 = vmatprep.subr.mxu0 0.0
        %3715 = vmatpush1.msra.mxu0 0.0
        %3716 = vmatprep.subr.mxu0 0.0
        %3717 = vmatpush1.msra.mxu0 0.0
        %3718 = vmatprep.subr.mxu0 0.0
        %3719 = vmatpush1.msra.mxu0 0.0
        %3720 = vmatprep.subr.mxu0 0.0
        %3721 = vmatpush1.msra.mxu0 0.0
        %3722 = vmatprep.subr.mxu0 0.0
        %3723 = vmatpush1.msra.mxu0 0.0
        %3724 = vmatprep.subr.mxu0 0.0
        %3725 = vmatpush1.msra.mxu0 0.0
        %3726 = vmatprep.subr.mxu0 0.0
        %3727 = vmatpush1.msra.mxu0 0.0
        %3728 = vmatprep.subr.mxu0 0.0
        %3729 = vmatpush1.msra.mxu0 0.0
        %3730 = vmatprep.subr.mxu0 0.0
        %3731 = vmatpush1.msra.mxu0 0.0
        %3732 = vmatprep.subr.mxu0 0.0
        %3733 = vmatpush1.msra.mxu0 0.0
        %3734 = vmatprep.subr.mxu0 0.0
        %3735 = vmatpush1.msra.mxu0 0.0
        %3736 = vmatprep.subr.mxu0 0.0
        %3737 = vmatpush1.msra.mxu0 0.0
        %3738 = vmatprep.subr.mxu0 0.0
        %3739 = vmatpush1.msra.mxu0 0.0
        %3740 = vmatprep.subr.mxu0 0.0
        %3741 = vmatpush1.msra.mxu0 0.0
        %3742 = vmatprep.subr.mxu0 0.0
        %3743 = vmatpush1.msra.mxu0 0.0
        %3744 = vmatprep.subr.mxu0 0.0
        %3745 = vmatpush1.msra.mxu0 0.0
        %3746 = vmatprep.subr.mxu0 0.0
        %3747 = vmatpush1.msra.mxu0 0.0
        %3748 = vmatprep.subr.mxu0 0.0
        %3749 = vmatpush1.msra.mxu0 0.0
        %3750 = vmatprep.subr.mxu0 0.0
        %3751 = vmatpush1.msra.mxu0 0.0
        %3752 = vmatprep.subr.mxu0 0.0
        %3753 = vmatpush1.msra.mxu0 0.0
        %3754 = vmatprep.subr.mxu0 0.0
        %3755 = vmatpush1.msra.mxu0 0.0
        %3756 = vmatprep.subr.mxu0 0.0
        %3757 = vmatpush1.msra.mxu0 0.0
        %3758 = vmatprep.subr.mxu0 0.0
        %3759 = vmatpush1.msra.mxu0 0.0
        %3760 = vmatprep.subr.mxu0 0.0
        %3761 = vmatpush1.msra.mxu0 0.0
        %3762 = vmatprep.subr.mxu0 0.0
        %3763 = vmatpush1.msra.mxu0 0.0
        %3764 = vmatprep.subr.mxu0 0.0
        %3765 = vmatpush1.msra.mxu0 0.0
        %3766 = vmatprep.subr.mxu0 0.0
        %3767 = vmatpush1.msra.mxu0 0.0
        %3768 = vmatprep.subr.mxu0 0.0
        %3769 = vmatpush1.msra.mxu0 0.0
        %3770 = vmatprep.subr.mxu0 0.0
        %3771 = vmatpush1.msra.mxu0 0.0
        %3772 = vmatprep.subr.mxu0 0.0
        %3773 = vmatpush1.msra.mxu0 0.0
        %3774 = vmatprep.subr.mxu0 0.0
        %3775 = vmatpush1.msra.mxu0 0.0
        %3776 = vmatprep.mubr.f32.mxu0 0.0
        %3777 = vmatmul.mubr.f32.gmra.mrb[0].mxu0 %v3710
        %v3778 = vpop.f32.mrb[0].mxu0
        %v3779 = vadd.f32 0.0, %v3778
        %v3780 = vpop.f32.mrb[0].mxu0
        %3781 = vdwg.mxu0
        %v3782 = vadd.f32 %v3626, %v3779
        %s3783 = sadd.s32 %s3095, 7
        %s3784 = smul.u32 %s3783, 8
        %s3785 = scalar_lea.vmem %s290, %s3784
        %v3786 = vld [vmem:[%s3785] sm:$0xf]
        %v3788 = vsel %vm313, %v3786, 0
        %3790 = vmatprep.subr.mxu0 0.0
        %3791 = vmatpush1.msra.mxu0 %v936
        %3792 = vmatprep.subr.mxu0 0.0
        %3793 = vmatpush1.msra.mxu0 0.0
        %3794 = vmatprep.subr.mxu0 0.0
        %3795 = vmatpush1.msra.mxu0 0.0
        %3796 = vmatprep.subr.mxu0 0.0
        %3797 = vmatpush1.msra.mxu0 0.0
        %3798 = vmatprep.subr.mxu0 0.0
        %3799 = vmatpush1.msra.mxu0 0.0
        %3800 = vmatprep.subr.mxu0 0.0
        %3801 = vmatpush1.msra.mxu0 0.0
        %3802 = vmatprep.subr.mxu0 0.0
        %3803 = vmatpush1.msra.mxu0 0.0
        %3804 = vmatprep.subr.mxu0 0.0
        %3805 = vmatpush1.msra.mxu0 0.0
        %3806 = vmatprep.subr.mxu0 0.0
        %3807 = vmatpush1.msra.mxu0 0.0
        %3808 = vmatprep.subr.mxu0 0.0
        %3809 = vmatpush1.msra.mxu0 0.0
        %3810 = vmatprep.subr.mxu0 0.0
        %3811 = vmatpush1.msra.mxu0 0.0
        %3812 = vmatprep.subr.mxu0 0.0
        %3813 = vmatpush1.msra.mxu0 0.0
        %3814 = vmatprep.subr.mxu0 0.0
        %3815 = vmatpush1.msra.mxu0 0.0
        %3816 = vmatprep.subr.mxu0 0.0
        %3817 = vmatpush1.msra.mxu0 0.0
        %3818 = vmatprep.subr.mxu0 0.0
        %3819 = vmatpush1.msra.mxu0 0.0
        %3820 = vmatprep.subr.mxu0 0.0
        %3821 = vmatpush1.msra.mxu0 0.0
        %3822 = vmatprep.subr.mxu0 0.0
        %3823 = vmatpush1.msra.mxu0 0.0
        %3824 = vmatprep.subr.mxu0 0.0
        %3825 = vmatpush1.msra.mxu0 0.0
        %3826 = vmatprep.subr.mxu0 0.0
        %3827 = vmatpush1.msra.mxu0 0.0
        %3828 = vmatprep.subr.mxu0 0.0
        %3829 = vmatpush1.msra.mxu0 0.0
        %3830 = vmatprep.subr.mxu0 0.0
        %3831 = vmatpush1.msra.mxu0 0.0
        %3832 = vmatprep.subr.mxu0 0.0
        %3833 = vmatpush1.msra.mxu0 0.0
        %3834 = vmatprep.subr.mxu0 0.0
        %3835 = vmatpush1.msra.mxu0 0.0
        %3836 = vmatprep.subr.mxu0 0.0
        %3837 = vmatpush1.msra.mxu0 0.0
        %3838 = vmatprep.subr.mxu0 0.0
        %3839 = vmatpush1.msra.mxu0 0.0
        %3840 = vmatprep.subr.mxu0 0.0
        %3841 = vmatpush1.msra.mxu0 0.0
        %3842 = vmatprep.subr.mxu0 0.0
        %3843 = vmatpush1.msra.mxu0 0.0
        %3844 = vmatprep.subr.mxu0 0.0
        %3845 = vmatpush1.msra.mxu0 0.0
        %3846 = vmatprep.subr.mxu0 0.0
        %3847 = vmatpush1.msra.mxu0 0.0
        %3848 = vmatprep.subr.mxu0 0.0
        %3849 = vmatpush1.msra.mxu0 0.0
        %3850 = vmatprep.subr.mxu0 0.0
        %3851 = vmatpush1.msra.mxu0 0.0
        %3852 = vmatprep.subr.mxu0 0.0
        %3853 = vmatpush1.msra.mxu0 0.0
        %3854 = vmatprep.mubr.f32.mxu0 0.0
        %3855 = vmatmul.mubr.f32.gmra.mrb[0].mxu0 %v3788
        %v3856 = vpop.f32.mrb[0].mxu0
        %v3857 = vadd.f32 0.0, %v3856
        %v3858 = vpop.f32.mrb[0].mxu0
        %3859 = vdwg.mxu0
        %v3860 = vadd.f32 %v3704, %v3857
        %3861 = vmatprep.subr.mxu0 0.0
        %3862 = vmatpush1.msra.mxu0 %v1089
        %3863 = vmatprep.subr.mxu0 0.0
        %3864 = vmatpush1.msra.mxu0 0.0
        %3865 = vmatprep.subr.mxu0 0.0
        %3866 = vmatpush1.msra.mxu0 0.0
        %3867 = vmatprep.subr.mxu0 0.0
        %3868 = vmatpush1.msra.mxu0 0.0
        %3869 = vmatprep.subr.mxu0 0.0
        %3870 = vmatpush1.msra.mxu0 0.0
        %3871 = vmatprep.subr.mxu0 0.0
        %3872 = vmatpush1.msra.mxu0 0.0
        %3873 = vmatprep.subr.mxu0 0.0
        %3874 = vmatpush1.msra.mxu0 0.0
        %3875 = vmatprep.subr.mxu0 0.0
        %3876 = vmatpush1.msra.mxu0 0.0
        %3877 = vmatprep.subr.mxu0 0.0
        %3878 = vmatpush1.msra.mxu0 0.0
        %3879 = vmatprep.subr.mxu0 0.0
        %3880 = vmatpush1.msra.mxu0 0.0
        %3881 = vmatprep.subr.mxu0 0.0
        %3882 = vmatpush1.msra.mxu0 0.0
        %3883 = vmatprep.subr.mxu0 0.0
        %3884 = vmatpush1.msra.mxu0 0.0
        %3885 = vmatprep.subr.mxu0 0.0
        %3886 = vmatpush1.msra.mxu0 0.0
        %3887 = vmatprep.subr.mxu0 0.0
        %3888 = vmatpush1.msra.mxu0 0.0
        %3889 = vmatprep.subr.mxu0 0.0
        %3890 = vmatpush1.msra.mxu0 0.0
        %3891 = vmatprep.subr.mxu0 0.0
        %3892 = vmatpush1.msra.mxu0 0.0
        %3893 = vmatprep.subr.mxu0 0.0
        %3894 = vmatpush1.msra.mxu0 0.0
        %3895 = vmatprep.subr.mxu0 0.0
        %3896 = vmatpush1.msra.mxu0 0.0
        %3897 = vmatprep.subr.mxu0 0.0
        %3898 = vmatpush1.msra.mxu0 0.0
        %3899 = vmatprep.subr.mxu0 0.0
        %3900 = vmatpush1.msra.mxu0 0.0
        %3901 = vmatprep.subr.mxu0 0.0
        %3902 = vmatpush1.msra.mxu0 0.0
        %3903 = vmatprep.subr.mxu0 0.0
        %3904 = vmatpush1.msra.mxu0 0.0
        %3905 = vmatprep.subr.mxu0 0.0
        %3906 = vmatpush1.msra.mxu0 0.0
        %3907 = vmatprep.subr.mxu0 0.0
        %3908 = vmatpush1.msra.mxu0 0.0
        %3909 = vmatprep.subr.mxu0 0.0
        %3910 = vmatpush1.msra.mxu0 0.0
        %3911 = vmatprep.subr.mxu0 0.0
        %3912 = vmatpush1.msra.mxu0 0.0
        %3913 = vmatprep.subr.mxu0 0.0
        %3914 = vmatpush1.msra.mxu0 0.0
        %3915 = vmatprep.subr.mxu0 0.0
        %3916 = vmatpush1.msra.mxu0 0.0
        %3917 = vmatprep.subr.mxu0 0.0
        %3918 = vmatpush1.msra.mxu0 0.0
        %3919 = vmatprep.subr.mxu0 0.0
        %3920 = vmatpush1.msra.mxu0 0.0
        %3921 = vmatprep.subr.mxu0 0.0
        %3922 = vmatpush1.msra.mxu0 0.0
        %3923 = vmatprep.subr.mxu0 0.0
        %3924 = vmatpush1.msra.mxu0 0.0
        %3925 = vmatprep.mubr.f32.mxu0 0.0
        %3926 = vmatmul.mubr.f32.gmra.mrb[0].mxu0 %v3632
        %v3927 = vpop.f32.mrb[0].mxu0
        %v3928 = vadd.f32 0.0, %v3927
        %v3929 = vpop.f32.mrb[0].mxu0
        %3930 = vdwg.mxu0
        %v3931 = vadd.f32 %v3782, %v3928
        %v3932 = vld [vmem:[%s3551 + $0x1] sm:$0xf]
        %v3934 = vsel %vm313, %v3932, 0
        %3936 = vmatprep.subr.mxu0 0.0
        %3937 = vmatpush1.msra.mxu0 %v1089
        %3938 = vmatprep.subr.mxu0 0.0
        %3939 = vmatpush1.msra.mxu0 0.0
        %3940 = vmatprep.subr.mxu0 0.0
        %3941 = vmatpush1.msra.mxu0 0.0
        %3942 = vmatprep.subr.mxu0 0.0
        %3943 = vmatpush1.msra.mxu0 0.0
        %3944 = vmatprep.subr.mxu0 0.0
        %3945 = vmatpush1.msra.mxu0 0.0
        %3946 = vmatprep.subr.mxu0 0.0
        %3947 = vmatpush1.msra.mxu0 0.0
        %3948 = vmatprep.subr.mxu0 0.0
        %3949 = vmatpush1.msra.mxu0 0.0
        %3950 = vmatprep.subr.mxu0 0.0
        %3951 = vmatpush1.msra.mxu0 0.0
        %3952 = vmatprep.subr.mxu0 0.0
        %3953 = vmatpush1.msra.mxu0 0.0
        %3954 = vmatprep.subr.mxu0 0.0
        %3955 = vmatpush1.msra.mxu0 0.0
        %3956 = vmatprep.subr.mxu0 0.0
        %3957 = vmatpush1.msra.mxu0 0.0
        %3958 = vmatprep.subr.mxu0 0.0
        %3959 = vmatpush1.msra.mxu0 0.0
        %3960 = vmatprep.subr.mxu0 0.0
        %3961 = vmatpush1.msra.mxu0 0.0
        %3962 = vmatprep.subr.mxu0 0.0
        %3963 = vmatpush1.msra.mxu0 0.0
        %3964 = vmatprep.subr.mxu0 0.0
        %3965 = vmatpush1.msra.mxu0 0.0
        %3966 = vmatprep.subr.mxu0 0.0
        %3967 = vmatpush1.msra.mxu0 0.0
        %3968 = vmatprep.subr.mxu0 0.0
        %3969 = vmatpush1.msra.mxu0 0.0
        %3970 = vmatprep.subr.mxu0 0.0
        %3971 = vmatpush1.msra.mxu0 0.0
        %3972 = vmatprep.subr.mxu0 0.0
        %3973 = vmatpush1.msra.mxu0 0.0
        %3974 = vmatprep.subr.mxu0 0.0
        %3975 = vmatpush1.msra.mxu0 0.0
        %3976 = vmatprep.subr.mxu0 0.0
        %3977 = vmatpush1.msra.mxu0 0.0
        %3978 = vmatprep.subr.mxu0 0.0
        %3979 = vmatpush1.msra.mxu0 0.0
        %3980 = vmatprep.subr.mxu0 0.0
        %3981 = vmatpush1.msra.mxu0 0.0
        %3982 = vmatprep.subr.mxu0 0.0
        %3983 = vmatpush1.msra.mxu0 0.0
        %3984 = vmatprep.subr.mxu0 0.0
        %3985 = vmatpush1.msra.mxu0 0.0
        %3986 = vmatprep.subr.mxu0 0.0
        %3987 = vmatpush1.msra.mxu0 0.0
        %3988 = vmatprep.subr.mxu0 0.0
        %3989 = vmatpush1.msra.mxu0 0.0
        %3990 = vmatprep.subr.mxu0 0.0
        %3991 = vmatpush1.msra.mxu0 0.0
        %3992 = vmatprep.subr.mxu0 0.0
        %3993 = vmatpush1.msra.mxu0 0.0
        %3994 = vmatprep.subr.mxu0 0.0
        %3995 = vmatpush1.msra.mxu0 0.0
        %3996 = vmatprep.subr.mxu0 0.0
        %3997 = vmatpush1.msra.mxu0 0.0
        %3998 = vmatprep.subr.mxu0 0.0
        %3999 = vmatpush1.msra.mxu0 0.0
        %4000 = vmatprep.mubr.f32.mxu0 0.0
        %4001 = vmatmul.mubr.f32.gmra.mrb[0].mxu0 %v3934
        %v4002 = vpop.f32.mrb[0].mxu0
        %v4003 = vadd.f32 0.0, %v4002
        %v4004 = vpop.f32.mrb[0].mxu0
        %4005 = vdwg.mxu0
        %v4006 = vadd.f32 %v3860, %v4003
        %s4007 = sadd.s32 %s3095, 8
        %s4008 = smul.u32 %s4007, 8
        %s4009 = scalar_lea.vmem %s290, %s4008
        %v4010 = vld [vmem:[%s4009] sm:$0xf]
        %v4012 = vsel %vm313, %v4010, 0
        %4014 = vmatprep.subr.mxu0 0.0
        %4015 = vmatpush1.msra.mxu0 %v1246
        %4016 = vmatprep.subr.mxu0 0.0
        %4017 = vmatpush1.msra.mxu0 0.0
        %4018 = vmatprep.subr.mxu0 0.0
        %4019 = vmatpush1.msra.mxu0 0.0
        %4020 = vmatprep.subr.mxu0 0.0
        %4021 = vmatpush1.msra.mxu0 0.0
        %4022 = vmatprep.subr.mxu0 0.0
        %4023 = vmatpush1.msra.mxu0 0.0
        %4024 = vmatprep.subr.mxu0 0.0
        %4025 = vmatpush1.msra.mxu0 0.0
        %4026 = vmatprep.subr.mxu0 0.0
        %4027 = vmatpush1.msra.mxu0 0.0
        %4028 = vmatprep.subr.mxu0 0.0
        %4029 = vmatpush1.msra.mxu0 0.0
        %4030 = vmatprep.subr.mxu0 0.0
        %4031 = vmatpush1.msra.mxu0 0.0
        %4032 = vmatprep.subr.mxu0 0.0
        %4033 = vmatpush1.msra.mxu0 0.0
        %4034 = vmatprep.subr.mxu0 0.0
        %4035 = vmatpush1.msra.mxu0 0.0
        %4036 = vmatprep.subr.mxu0 0.0
        %4037 = vmatpush1.msra.mxu0 0.0
        %4038 = vmatprep.subr.mxu0 0.0
        %4039 = vmatpush1.msra.mxu0 0.0
        %4040 = vmatprep.subr.mxu0 0.0
        %4041 = vmatpush1.msra.mxu0 0.0
        %4042 = vmatprep.subr.mxu0 0.0
        %4043 = vmatpush1.msra.mxu0 0.0
        %4044 = vmatprep.subr.mxu0 0.0
        %4045 = vmatpush1.msra.mxu0 0.0
        %4046 = vmatprep.subr.mxu0 0.0
        %4047 = vmatpush1.msra.mxu0 0.0
        %4048 = vmatprep.subr.mxu0 0.0
        %4049 = vmatpush1.msra.mxu0 0.0
        %4050 = vmatprep.subr.mxu0 0.0
        %4051 = vmatpush1.msra.mxu0 0.0
        %4052 = vmatprep.subr.mxu0 0.0
        %4053 = vmatpush1.msra.mxu0 0.0
        %4054 = vmatprep.subr.mxu0 0.0
        %4055 = vmatpush1.msra.mxu0 0.0
        %4056 = vmatprep.subr.mxu0 0.0
        %4057 = vmatpush1.msra.mxu0 0.0
        %4058 = vmatprep.subr.mxu0 0.0
        %4059 = vmatpush1.msra.mxu0 0.0
        %4060 = vmatprep.subr.mxu0 0.0
        %4061 = vmatpush1.msra.mxu0 0.0
        %4062 = vmatprep.subr.mxu0 0.0
        %4063 = vmatpush1.msra.mxu0 0.0
        %4064 = vmatprep.subr.mxu0 0.0
        %4065 = vmatpush1.msra.mxu0 0.0
        %4066 = vmatprep.subr.mxu0 0.0
        %4067 = vmatpush1.msra.mxu0 0.0
        %4068 = vmatprep.subr.mxu0 0.0
        %4069 = vmatpush1.msra.mxu0 0.0
        %4070 = vmatprep.subr.mxu0 0.0
        %4071 = vmatpush1.msra.mxu0 0.0
        %4072 = vmatprep.subr.mxu0 0.0
        %4073 = vmatpush1.msra.mxu0 0.0
        %4074 = vmatprep.subr.mxu0 0.0
        %4075 = vmatpush1.msra.mxu0 0.0
        %4076 = vmatprep.subr.mxu0 0.0
        %4077 = vmatpush1.msra.mxu0 0.0
        %4078 = vmatprep.mubr.f32.mxu0 0.0
        %4079 = vmatmul.mubr.f32.gmra.mrb[0].mxu0 %v4012
        %v4080 = vpop.f32.mrb[0].mxu0
        %v4081 = vadd.f32 0.0, %v4080
        %v4082 = vpop.f32.mrb[0].mxu0
        %4083 = vdwg.mxu0
        %v4084 = vadd.f32 %v3931, %v4081
        %s4085 = sadd.s32 %s3095, 10
        %s4086 = smul.u32 %s4085, 8
        %s4087 = scalar_lea.vmem %s290, %s4086
        %v4088 = vld [vmem:[%s4087] sm:$0xf]
        %v4090 = vsel %vm313, %v4088, 0
        %4092 = vmatprep.subr.mxu0 0.0
        %4093 = vmatpush1.msra.mxu0 %v1246
        %4094 = vmatprep.subr.mxu0 0.0
        %4095 = vmatpush1.msra.mxu0 0.0
        %4096 = vmatprep.subr.mxu0 0.0
        %4097 = vmatpush1.msra.mxu0 0.0
        %4098 = vmatprep.subr.mxu0 0.0
        %4099 = vmatpush1.msra.mxu0 0.0
        %4100 = vmatprep.subr.mxu0 0.0
        %4101 = vmatpush1.msra.mxu0 0.0
        %4102 = vmatprep.subr.mxu0 0.0
        %4103 = vmatpush1.msra.mxu0 0.0
        %4104 = vmatprep.subr.mxu0 0.0
        %4105 = vmatpush1.msra.mxu0 0.0
        %4106 = vmatprep.subr.mxu0 0.0
        %4107 = vmatpush1.msra.mxu0 0.0
        %4108 = vmatprep.subr.mxu0 0.0
        %4109 = vmatpush1.msra.mxu0 0.0
        %4110 = vmatprep.subr.mxu0 0.0
        %4111 = vmatpush1.msra.mxu0 0.0
        %4112 = vmatprep.subr.mxu0 0.0
        %4113 = vmatpush1.msra.mxu0 0.0
        %4114 = vmatprep.subr.mxu0 0.0
        %4115 = vmatpush1.msra.mxu0 0.0
        %4116 = vmatprep.subr.mxu0 0.0
        %4117 = vmatpush1.msra.mxu0 0.0
        %4118 = vmatprep.subr.mxu0 0.0
        %4119 = vmatpush1.msra.mxu0 0.0
        %4120 = vmatprep.subr.mxu0 0.0
        %4121 = vmatpush1.msra.mxu0 0.0
        %4122 = vmatprep.subr.mxu0 0.0
        %4123 = vmatpush1.msra.mxu0 0.0
        %4124 = vmatprep.subr.mxu0 0.0
        %4125 = vmatpush1.msra.mxu0 0.0
        %4126 = vmatprep.subr.mxu0 0.0
        %4127 = vmatpush1.msra.mxu0 0.0
        %4128 = vmatprep.subr.mxu0 0.0
        %4129 = vmatpush1.msra.mxu0 0.0
        %4130 = vmatprep.subr.mxu0 0.0
        %4131 = vmatpush1.msra.mxu0 0.0
        %4132 = vmatprep.subr.mxu0 0.0
        %4133 = vmatpush1.msra.mxu0 0.0
        %4134 = vmatprep.subr.mxu0 0.0
        %4135 = vmatpush1.msra.mxu0 0.0
        %4136 = vmatprep.subr.mxu0 0.0
        %4137 = vmatpush1.msra.mxu0 0.0
        %4138 = vmatprep.subr.mxu0 0.0
        %4139 = vmatpush1.msra.mxu0 0.0
        %4140 = vmatprep.subr.mxu0 0.0
        %4141 = vmatpush1.msra.mxu0 0.0
        %4142 = vmatprep.subr.mxu0 0.0
        %4143 = vmatpush1.msra.mxu0 0.0
        %4144 = vmatprep.subr.mxu0 0.0
        %4145 = vmatpush1.msra.mxu0 0.0
        %4146 = vmatprep.subr.mxu0 0.0
        %4147 = vmatpush1.msra.mxu0 0.0
        %4148 = vmatprep.subr.mxu0 0.0
        %4149 = vmatpush1.msra.mxu0 0.0
        %4150 = vmatprep.subr.mxu0 0.0
        %4151 = vmatpush1.msra.mxu0 0.0
        %4152 = vmatprep.subr.mxu0 0.0
        %4153 = vmatpush1.msra.mxu0 0.0
        %4154 = vmatprep.subr.mxu0 0.0
        %4155 = vmatpush1.msra.mxu0 0.0
        %4156 = vmatprep.mubr.f32.mxu0 0.0
        %4157 = vmatmul.mubr.f32.gmra.mrb[0].mxu0 %v4090
        %v4158 = vpop.f32.mrb[0].mxu0
        %v4159 = vadd.f32 0.0, %v4158
        %v4160 = vpop.f32.mrb[0].mxu0
        %4161 = vdwg.mxu0
        %v4162 = vadd.f32 %v4006, %v4159
        %s4163 = sadd.s32 %s3095, 9
        %s4164 = smul.u32 %s4163, 8
        %s4165 = scalar_lea.vmem %s290, %s4164
        %v4166 = vld [vmem:[%s4165] sm:$0xf]
        %v4168 = vsel %vm313, %v4166, 0
        %4170 = vmatprep.subr.mxu0 0.0
        %4171 = vmatpush1.msra.mxu0 %v1406
        %4172 = vmatprep.subr.mxu0 0.0
        %4173 = vmatpush1.msra.mxu0 0.0
        %4174 = vmatprep.subr.mxu0 0.0
        %4175 = vmatpush1.msra.mxu0 0.0
        %4176 = vmatprep.subr.mxu0 0.0
        %4177 = vmatpush1.msra.mxu0 0.0
        %4178 = vmatprep.subr.mxu0 0.0
        %4179 = vmatpush1.msra.mxu0 0.0
        %4180 = vmatprep.subr.mxu0 0.0
        %4181 = vmatpush1.msra.mxu0 0.0
        %4182 = vmatprep.subr.mxu0 0.0
        %4183 = vmatpush1.msra.mxu0 0.0
        %4184 = vmatprep.subr.mxu0 0.0
        %4185 = vmatpush1.msra.mxu0 0.0
        %4186 = vmatprep.subr.mxu0 0.0
        %4187 = vmatpush1.msra.mxu0 0.0
        %4188 = vmatprep.subr.mxu0 0.0
        %4189 = vmatpush1.msra.mxu0 0.0
        %4190 = vmatprep.subr.mxu0 0.0
        %4191 = vmatpush1.msra.mxu0 0.0
        %4192 = vmatprep.subr.mxu0 0.0
        %4193 = vmatpush1.msra.mxu0 0.0
        %4194 = vmatprep.subr.mxu0 0.0
        %4195 = vmatpush1.msra.mxu0 0.0
        %4196 = vmatprep.subr.mxu0 0.0
        %4197 = vmatpush1.msra.mxu0 0.0
        %4198 = vmatprep.subr.mxu0 0.0
        %4199 = vmatpush1.msra.mxu0 0.0
        %4200 = vmatprep.subr.mxu0 0.0
        %4201 = vmatpush1.msra.mxu0 0.0
        %4202 = vmatprep.subr.mxu0 0.0
        %4203 = vmatpush1.msra.mxu0 0.0
        %4204 = vmatprep.subr.mxu0 0.0
        %4205 = vmatpush1.msra.mxu0 0.0
        %4206 = vmatprep.subr.mxu0 0.0
        %4207 = vmatpush1.msra.mxu0 0.0
        %4208 = vmatprep.subr.mxu0 0.0
        %4209 = vmatpush1.msra.mxu0 0.0
        %4210 = vmatprep.subr.mxu0 0.0
        %4211 = vmatpush1.msra.mxu0 0.0
        %4212 = vmatprep.subr.mxu0 0.0
        %4213 = vmatpush1.msra.mxu0 0.0
        %4214 = vmatprep.subr.mxu0 0.0
        %4215 = vmatpush1.msra.mxu0 0.0
        %4216 = vmatprep.subr.mxu0 0.0
        %4217 = vmatpush1.msra.mxu0 0.0
        %4218 = vmatprep.subr.mxu0 0.0
        %4219 = vmatpush1.msra.mxu0 0.0
        %4220 = vmatprep.subr.mxu0 0.0
        %4221 = vmatpush1.msra.mxu0 0.0
        %4222 = vmatprep.subr.mxu0 0.0
        %4223 = vmatpush1.msra.mxu0 0.0
        %4224 = vmatprep.subr.mxu0 0.0
        %4225 = vmatpush1.msra.mxu0 0.0
        %4226 = vmatprep.subr.mxu0 0.0
        %4227 = vmatpush1.msra.mxu0 0.0
        %4228 = vmatprep.subr.mxu0 0.0
        %4229 = vmatpush1.msra.mxu0 0.0
        %4230 = vmatprep.subr.mxu0 0.0
        %4231 = vmatpush1.msra.mxu0 0.0
        %4232 = vmatprep.subr.mxu0 0.0
        %4233 = vmatpush1.msra.mxu0 0.0
        %4234 = vmatprep.mubr.f32.mxu0 0.0
        %4235 = vmatmul.mubr.f32.gmra.mrb[0].mxu0 %v4168
        %v4236 = vpop.f32.mrb[0].mxu0
        %v4237 = vadd.f32 0.0, %v4236
        %v4238 = vpop.f32.mrb[0].mxu0
        %4239 = vdwg.mxu0
        %v4240 = vadd.f32 %v4084, %v4237
        %s4241 = sadd.s32 %s3095, 11
        %s4242 = smul.u32 %s4241, 8
        %s4243 = scalar_lea.vmem %s290, %s4242
        %v4244 = vld [vmem:[%s4243] sm:$0xf]
        %v4246 = vsel %vm313, %v4244, 0
        %4248 = vmatprep.subr.mxu0 0.0
        %4249 = vmatpush1.msra.mxu0 %v1406
        %4250 = vmatprep.subr.mxu0 0.0
        %4251 = vmatpush1.msra.mxu0 0.0
        %4252 = vmatprep.subr.mxu0 0.0
        %4253 = vmatpush1.msra.mxu0 0.0
        %4254 = vmatprep.subr.mxu0 0.0
        %4255 = vmatpush1.msra.mxu0 0.0
        %4256 = vmatprep.subr.mxu0 0.0
        %4257 = vmatpush1.msra.mxu0 0.0
        %4258 = vmatprep.subr.mxu0 0.0
        %4259 = vmatpush1.msra.mxu0 0.0
        %4260 = vmatprep.subr.mxu0 0.0
        %4261 = vmatpush1.msra.mxu0 0.0
        %4262 = vmatprep.subr.mxu0 0.0
        %4263 = vmatpush1.msra.mxu0 0.0
        %4264 = vmatprep.subr.mxu0 0.0
        %4265 = vmatpush1.msra.mxu0 0.0
        %4266 = vmatprep.subr.mxu0 0.0
        %4267 = vmatpush1.msra.mxu0 0.0
        %4268 = vmatprep.subr.mxu0 0.0
        %4269 = vmatpush1.msra.mxu0 0.0
        %4270 = vmatprep.subr.mxu0 0.0
        %4271 = vmatpush1.msra.mxu0 0.0
        %4272 = vmatprep.subr.mxu0 0.0
        %4273 = vmatpush1.msra.mxu0 0.0
        %4274 = vmatprep.subr.mxu0 0.0
        %4275 = vmatpush1.msra.mxu0 0.0
        %4276 = vmatprep.subr.mxu0 0.0
        %4277 = vmatpush1.msra.mxu0 0.0
        %4278 = vmatprep.subr.mxu0 0.0
        %4279 = vmatpush1.msra.mxu0 0.0
        %4280 = vmatprep.subr.mxu0 0.0
        %4281 = vmatpush1.msra.mxu0 0.0
        %4282 = vmatprep.subr.mxu0 0.0
        %4283 = vmatpush1.msra.mxu0 0.0
        %4284 = vmatprep.subr.mxu0 0.0
        %4285 = vmatpush1.msra.mxu0 0.0
        %4286 = vmatprep.subr.mxu0 0.0
        %4287 = vmatpush1.msra.mxu0 0.0
        %4288 = vmatprep.subr.mxu0 0.0
        %4289 = vmatpush1.msra.mxu0 0.0
        %4290 = vmatprep.subr.mxu0 0.0
        %4291 = vmatpush1.msra.mxu0 0.0
        %4292 = vmatprep.subr.mxu0 0.0
        %4293 = vmatpush1.msra.mxu0 0.0
        %4294 = vmatprep.subr.mxu0 0.0
        %4295 = vmatpush1.msra.mxu0 0.0
        %4296 = vmatprep.subr.mxu0 0.0
        %4297 = vmatpush1.msra.mxu0 0.0
        %4298 = vmatprep.subr.mxu0 0.0
        %4299 = vmatpush1.msra.mxu0 0.0
        %4300 = vmatprep.subr.mxu0 0.0
        %4301 = vmatpush1.msra.mxu0 0.0
        %4302 = vmatprep.subr.mxu0 0.0
        %4303 = vmatpush1.msra.mxu0 0.0
        %4304 = vmatprep.subr.mxu0 0.0
        %4305 = vmatpush1.msra.mxu0 0.0
        %4306 = vmatprep.subr.mxu0 0.0
        %4307 = vmatpush1.msra.mxu0 0.0
        %4308 = vmatprep.subr.mxu0 0.0
        %4309 = vmatpush1.msra.mxu0 0.0
        %4310 = vmatprep.subr.mxu0 0.0
        %4311 = vmatpush1.msra.mxu0 0.0
        %4312 = vmatprep.mubr.f32.mxu0 0.0
        %4313 = vmatmul.mubr.f32.gmra.mrb[0].mxu0 %v4246
        %v4314 = vpop.f32.mrb[0].mxu0
        %v4315 = vadd.f32 0.0, %v4314
        %v4316 = vpop.f32.mrb[0].mxu0
        %4317 = vdwg.mxu0
        %v4318 = vadd.f32 %v4162, %v4315
        %4319 = vmatprep.subr.mxu0 0.0
        %4320 = vmatpush1.msra.mxu0 %v1559
        %4321 = vmatprep.subr.mxu0 0.0
        %4322 = vmatpush1.msra.mxu0 0.0
        %4323 = vmatprep.subr.mxu0 0.0
        %4324 = vmatpush1.msra.mxu0 0.0
        %4325 = vmatprep.subr.mxu0 0.0
        %4326 = vmatpush1.msra.mxu0 0.0
        %4327 = vmatprep.subr.mxu0 0.0
        %4328 = vmatpush1.msra.mxu0 0.0
        %4329 = vmatprep.subr.mxu0 0.0
        %4330 = vmatpush1.msra.mxu0 0.0
        %4331 = vmatprep.subr.mxu0 0.0
        %4332 = vmatpush1.msra.mxu0 0.0
        %4333 = vmatprep.subr.mxu0 0.0
        %4334 = vmatpush1.msra.mxu0 0.0
        %4335 = vmatprep.subr.mxu0 0.0
        %4336 = vmatpush1.msra.mxu0 0.0
        %4337 = vmatprep.subr.mxu0 0.0
        %4338 = vmatpush1.msra.mxu0 0.0
        %4339 = vmatprep.subr.mxu0 0.0
        %4340 = vmatpush1.msra.mxu0 0.0
        %4341 = vmatprep.subr.mxu0 0.0
        %4342 = vmatpush1.msra.mxu0 0.0
        %4343 = vmatprep.subr.mxu0 0.0
        %4344 = vmatpush1.msra.mxu0 0.0
        %4345 = vmatprep.subr.mxu0 0.0
        %4346 = vmatpush1.msra.mxu0 0.0
        %4347 = vmatprep.subr.mxu0 0.0
        %4348 = vmatpush1.msra.mxu0 0.0
        %4349 = vmatprep.subr.mxu0 0.0
        %4350 = vmatpush1.msra.mxu0 0.0
        %4351 = vmatprep.subr.mxu0 0.0
        %4352 = vmatpush1.msra.mxu0 0.0
        %4353 = vmatprep.subr.mxu0 0.0
        %4354 = vmatpush1.msra.mxu0 0.0
        %4355 = vmatprep.subr.mxu0 0.0
        %4356 = vmatpush1.msra.mxu0 0.0
        %4357 = vmatprep.subr.mxu0 0.0
        %4358 = vmatpush1.msra.mxu0 0.0
        %4359 = vmatprep.subr.mxu0 0.0
        %4360 = vmatpush1.msra.mxu0 0.0
        %4361 = vmatprep.subr.mxu0 0.0
        %4362 = vmatpush1.msra.mxu0 0.0
        %4363 = vmatprep.subr.mxu0 0.0
        %4364 = vmatpush1.msra.mxu0 0.0
        %4365 = vmatprep.subr.mxu0 0.0
        %4366 = vmatpush1.msra.mxu0 0.0
        %4367 = vmatprep.subr.mxu0 0.0
        %4368 = vmatpush1.msra.mxu0 0.0
        %4369 = vmatprep.subr.mxu0 0.0
        %4370 = vmatpush1.msra.mxu0 0.0
        %4371 = vmatprep.subr.mxu0 0.0
        %4372 = vmatpush1.msra.mxu0 0.0
        %4373 = vmatprep.subr.mxu0 0.0
        %4374 = vmatpush1.msra.mxu0 0.0
        %4375 = vmatprep.subr.mxu0 0.0
        %4376 = vmatpush1.msra.mxu0 0.0
        %4377 = vmatprep.subr.mxu0 0.0
        %4378 = vmatpush1.msra.mxu0 0.0
        %4379 = vmatprep.subr.mxu0 0.0
        %4380 = vmatpush1.msra.mxu0 0.0
        %4381 = vmatprep.subr.mxu0 0.0
        %4382 = vmatpush1.msra.mxu0 0.0
        %4383 = vmatprep.mubr.f32.mxu0 0.0
        %4384 = vmatmul.mubr.f32.gmra.mrb[0].mxu0 %v4090
        %v4385 = vpop.f32.mrb[0].mxu0
        %v4386 = vadd.f32 0.0, %v4385
        %v4387 = vpop.f32.mrb[0].mxu0
        %4388 = vdwg.mxu0
        %v4389 = vadd.f32 %v4240, %v4386
        %v4390 = vld [vmem:[%s4009 + $0x1] sm:$0xf]
        %v4392 = vsel %vm313, %v4390, 0
        %4394 = vmatprep.subr.mxu0 0.0
        %4395 = vmatpush1.msra.mxu0 %v1559
        %4396 = vmatprep.subr.mxu0 0.0
        %4397 = vmatpush1.msra.mxu0 0.0
        %4398 = vmatprep.subr.mxu0 0.0
        %4399 = vmatpush1.msra.mxu0 0.0
        %4400 = vmatprep.subr.mxu0 0.0
        %4401 = vmatpush1.msra.mxu0 0.0
        %4402 = vmatprep.subr.mxu0 0.0
        %4403 = vmatpush1.msra.mxu0 0.0
        %4404 = vmatprep.subr.mxu0 0.0
        %4405 = vmatpush1.msra.mxu0 0.0
        %4406 = vmatprep.subr.mxu0 0.0
        %4407 = vmatpush1.msra.mxu0 0.0
        %4408 = vmatprep.subr.mxu0 0.0
        %4409 = vmatpush1.msra.mxu0 0.0
        %4410 = vmatprep.subr.mxu0 0.0
        %4411 = vmatpush1.msra.mxu0 0.0
        %4412 = vmatprep.subr.mxu0 0.0
        %4413 = vmatpush1.msra.mxu0 0.0
        %4414 = vmatprep.subr.mxu0 0.0
        %4415 = vmatpush1.msra.mxu0 0.0
        %4416 = vmatprep.subr.mxu0 0.0
        %4417 = vmatpush1.msra.mxu0 0.0
        %4418 = vmatprep.subr.mxu0 0.0
        %4419 = vmatpush1.msra.mxu0 0.0
        %4420 = vmatprep.subr.mxu0 0.0
        %4421 = vmatpush1.msra.mxu0 0.0
        %4422 = vmatprep.subr.mxu0 0.0
        %4423 = vmatpush1.msra.mxu0 0.0
        %4424 = vmatprep.subr.mxu0 0.0
        %4425 = vmatpush1.msra.mxu0 0.0
        %4426 = vmatprep.subr.mxu0 0.0
        %4427 = vmatpush1.msra.mxu0 0.0
        %4428 = vmatprep.subr.mxu0 0.0
        %4429 = vmatpush1.msra.mxu0 0.0
        %4430 = vmatprep.subr.mxu0 0.0
        %4431 = vmatpush1.msra.mxu0 0.0
        %4432 = vmatprep.subr.mxu0 0.0
        %4433 = vmatpush1.msra.mxu0 0.0
        %4434 = vmatprep.subr.mxu0 0.0
        %4435 = vmatpush1.msra.mxu0 0.0
        %4436 = vmatprep.subr.mxu0 0.0
        %4437 = vmatpush1.msra.mxu0 0.0
        %4438 = vmatprep.subr.mxu0 0.0
        %4439 = vmatpush1.msra.mxu0 0.0
        %4440 = vmatprep.subr.mxu0 0.0
        %4441 = vmatpush1.msra.mxu0 0.0
        %4442 = vmatprep.subr.mxu0 0.0
        %4443 = vmatpush1.msra.mxu0 0.0
        %4444 = vmatprep.subr.mxu0 0.0
        %4445 = vmatpush1.msra.mxu0 0.0
        %4446 = vmatprep.subr.mxu0 0.0
        %4447 = vmatpush1.msra.mxu0 0.0
        %4448 = vmatprep.subr.mxu0 0.0
        %4449 = vmatpush1.msra.mxu0 0.0
        %4450 = vmatprep.subr.mxu0 0.0
        %4451 = vmatpush1.msra.mxu0 0.0
        %4452 = vmatprep.subr.mxu0 0.0
        %4453 = vmatpush1.msra.mxu0 0.0
        %4454 = vmatprep.subr.mxu0 0.0
        %4455 = vmatpush1.msra.mxu0 0.0
        %4456 = vmatprep.subr.mxu0 0.0
        %4457 = vmatpush1.msra.mxu0 0.0
        %4458 = vmatprep.mubr.f32.mxu0 0.0
        %4459 = vmatmul.mubr.f32.gmra.mrb[0].mxu0 %v4392
        %v4460 = vpop.f32.mrb[0].mxu0
        %v4461 = vadd.f32 0.0, %v4460
        %v4462 = vpop.f32.mrb[0].mxu0
        %4463 = vdwg.mxu0
        %v4464 = vadd.f32 %v4318, %v4461
        %v4465 = vadd.f32 %v4389, %v1711
        %v4466 = vmax.f32 %v4465, 0.0
        %v4467 = vadd.f32 %v4464, %v1711
        %v4468 = vmax.f32 %v4467, 0.0
        %v4469 = vld [vmem:[%s3 + $0x4] sm:$0xf]
        %v4470 = vld [vmem:[%s3 + $0x8] sm:$0xf]
        %vm4471 = vcmask 31744
        %v4473 = vsel %vm4471, %v1719, 0
        %vm4475 = vcmask 1043456
        %v4477 = vsel %vm4475, %v4470, 0
        %4479 = vmatprep.subr.mxu0 0.0
        %4480 = vmatpush1.msra.mxu0 %v4477
        %4481 = vmatprep.subr.mxu0 0.0
        %4482 = vmatpush1.msra.mxu0 0.0
        %4483 = vmatprep.subr.mxu0 0.0
        %4484 = vmatpush1.msra.mxu0 0.0
        %4485 = vmatprep.subr.mxu0 0.0
        %4486 = vmatpush1.msra.mxu0 0.0
        %4487 = vmatprep.subr.mxu0 0.0
        %4488 = vmatpush1.msra.mxu0 0.0
        %4489 = vmatprep.subr.mxu0 0.0
        %4490 = vmatpush1.msra.mxu0 0.0
        %4491 = vmatprep.subr.mxu0 0.0
        %4492 = vmatpush1.msra.mxu0 0.0
        %4493 = vmatprep.subr.mxu0 0.0
        %4494 = vmatpush1.msra.mxu0 0.0
        %4495 = vmatprep.subr.mxu0 0.0
        %4496 = vmatpush1.msra.mxu0 0.0
        %4497 = vmatprep.subr.mxu0 0.0
        %4498 = vmatpush1.msra.mxu0 0.0
        %4499 = vmatprep.subr.mxu0 0.0
        %4500 = vmatpush1.msra.mxu0 0.0
        %4501 = vmatprep.subr.mxu0 0.0
        %4502 = vmatpush1.msra.mxu0 0.0
        %4503 = vmatprep.subr.mxu0 0.0
        %4504 = vmatpush1.msra.mxu0 0.0
        %4505 = vmatprep.subr.mxu0 0.0
        %4506 = vmatpush1.msra.mxu0 0.0
        %4507 = vmatprep.subr.mxu0 0.0
        %4508 = vmatpush1.msra.mxu0 0.0
        %4509 = vmatprep.subr.mxu0 0.0
        %4510 = vmatpush1.msra.mxu0 0.0
        %4511 = vmatprep.subr.mxu0 0.0
        %4512 = vmatpush1.msra.mxu0 0.0
        %4513 = vmatprep.subr.mxu0 0.0
        %4514 = vmatpush1.msra.mxu0 0.0
        %4515 = vmatprep.subr.mxu0 0.0
        %4516 = vmatpush1.msra.mxu0 0.0
        %4517 = vmatprep.subr.mxu0 0.0
        %4518 = vmatpush1.msra.mxu0 0.0
        %4519 = vmatprep.subr.mxu0 0.0
        %4520 = vmatpush1.msra.mxu0 0.0
        %4521 = vmatprep.subr.mxu0 0.0
        %4522 = vmatpush1.msra.mxu0 0.0
        %4523 = vmatprep.subr.mxu0 0.0
        %4524 = vmatpush1.msra.mxu0 0.0
        %4525 = vmatprep.subr.mxu0 0.0
        %4526 = vmatpush1.msra.mxu0 0.0
        %4527 = vmatprep.subr.mxu0 0.0
        %4528 = vmatpush1.msra.mxu0 0.0
        %4529 = vmatprep.subr.mxu0 0.0
        %4530 = vmatpush1.msra.mxu0 0.0
        %4531 = vmatprep.subr.mxu0 0.0
        %4532 = vmatpush1.msra.mxu0 0.0
        %4533 = vmatprep.subr.mxu0 0.0
        %4534 = vmatpush1.msra.mxu0 0.0
        %4535 = vmatprep.subr.mxu0 0.0
        %4536 = vmatpush1.msra.mxu0 0.0
        %4537 = vmatprep.subr.mxu0 0.0
        %4538 = vmatpush1.msra.mxu0 0.0
        %4539 = vmatprep.subr.mxu0 0.0
        %4540 = vmatpush1.msra.mxu0 0.0
        %4541 = vmatprep.subr.mxu0 0.0
        %4542 = vmatpush1.msra.mxu0 0.0
        %4543 = vmatprep.mubr.f32.mxu0 0.0
        %4544 = vmatmul.mubr.f32.gmra.mrb[0].mxu0 %v4473
        %v4545 = vpop.f32.mrb[0].mxu0
        %v4546 = vadd.f32 0.0, %v4545
        %v4547 = vpop.f32.mrb[0].mxu0
        %4548 = vdwg.mxu0
        %v4550 = vsel %vm4471, %v1718, 0
        %v4553 = vsel %vm4475, %v4469, 0
        %4555 = vmatprep.subr.mxu0 0.0
        %4556 = vmatpush1.msra.mxu0 %v4553
        %4557 = vmatprep.subr.mxu0 0.0
        %4558 = vmatpush1.msra.mxu0 0.0
        %4559 = vmatprep.subr.mxu0 0.0
        %4560 = vmatpush1.msra.mxu0 0.0
        %4561 = vmatprep.subr.mxu0 0.0
        %4562 = vmatpush1.msra.mxu0 0.0
        %4563 = vmatprep.subr.mxu0 0.0
        %4564 = vmatpush1.msra.mxu0 0.0
        %4565 = vmatprep.subr.mxu0 0.0
        %4566 = vmatpush1.msra.mxu0 0.0
        %4567 = vmatprep.subr.mxu0 0.0
        %4568 = vmatpush1.msra.mxu0 0.0
        %4569 = vmatprep.subr.mxu0 0.0
        %4570 = vmatpush1.msra.mxu0 0.0
        %4571 = vmatprep.subr.mxu0 0.0
        %4572 = vmatpush1.msra.mxu0 0.0
        %4573 = vmatprep.subr.mxu0 0.0
        %4574 = vmatpush1.msra.mxu0 0.0
        %4575 = vmatprep.subr.mxu0 0.0
        %4576 = vmatpush1.msra.mxu0 0.0
        %4577 = vmatprep.subr.mxu0 0.0
        %4578 = vmatpush1.msra.mxu0 0.0
        %4579 = vmatprep.subr.mxu0 0.0
        %4580 = vmatpush1.msra.mxu0 0.0
        %4581 = vmatprep.subr.mxu0 0.0
        %4582 = vmatpush1.msra.mxu0 0.0
        %4583 = vmatprep.subr.mxu0 0.0
        %4584 = vmatpush1.msra.mxu0 0.0
        %4585 = vmatprep.subr.mxu0 0.0
        %4586 = vmatpush1.msra.mxu0 0.0
        %4587 = vmatprep.subr.mxu0 0.0
        %4588 = vmatpush1.msra.mxu0 0.0
        %4589 = vmatprep.subr.mxu0 0.0
        %4590 = vmatpush1.msra.mxu0 0.0
        %4591 = vmatprep.subr.mxu0 0.0
        %4592 = vmatpush1.msra.mxu0 0.0
        %4593 = vmatprep.subr.mxu0 0.0
        %4594 = vmatpush1.msra.mxu0 0.0
        %4595 = vmatprep.subr.mxu0 0.0
        %4596 = vmatpush1.msra.mxu0 0.0
        %4597 = vmatprep.subr.mxu0 0.0
        %4598 = vmatpush1.msra.mxu0 0.0
        %4599 = vmatprep.subr.mxu0 0.0
        %4600 = vmatpush1.msra.mxu0 0.0
        %4601 = vmatprep.subr.mxu0 0.0
        %4602 = vmatpush1.msra.mxu0 0.0
        %4603 = vmatprep.subr.mxu0 0.0
        %4604 = vmatpush1.msra.mxu0 0.0
        %4605 = vmatprep.subr.mxu0 0.0
        %4606 = vmatpush1.msra.mxu0 0.0
        %4607 = vmatprep.subr.mxu0 0.0
        %4608 = vmatpush1.msra.mxu0 0.0
        %4609 = vmatprep.subr.mxu0 0.0
        %4610 = vmatpush1.msra.mxu0 0.0
        %4611 = vmatprep.subr.mxu0 0.0
        %4612 = vmatpush1.msra.mxu0 0.0
        %4613 = vmatprep.subr.mxu0 0.0
        %4614 = vmatpush1.msra.mxu0 0.0
        %4615 = vmatprep.subr.mxu0 0.0
        %4616 = vmatpush1.msra.mxu0 0.0
        %4617 = vmatprep.subr.mxu0 0.0
        %4618 = vmatpush1.msra.mxu0 0.0
        %4619 = vmatprep.mubr.f32.mxu0 0.0
        %4620 = vmatmul.mubr.f32.gmra.mrb[0].mxu0 %v4550
        %v4621 = vpop.f32.mrb[0].mxu0
        %v4622 = vadd.f32 %v4546, %v4621
        %v4623 = vpop.f32.mrb[0].mxu0
        %4624 = vdwg.mxu0
        %v4625 = vld [vmem:[%s3] sm:$0xf]
        %v4626 = vld [vmem:[%s3 + $0x10] sm:$0xf]
        %v4628 = vsel %vm4471, %v3091, 0
        %v4631 = vsel %vm4475, %v4626, 0
        %4633 = vmatprep.subr.mxu0 0.0
        %4634 = vmatpush1.msra.mxu0 %v4631
        %4635 = vmatprep.subr.mxu0 0.0
        %4636 = vmatpush1.msra.mxu0 0.0
        %4637 = vmatprep.subr.mxu0 0.0
        %4638 = vmatpush1.msra.mxu0 0.0
        %4639 = vmatprep.subr.mxu0 0.0
        %4640 = vmatpush1.msra.mxu0 0.0
        %4641 = vmatprep.subr.mxu0 0.0
        %4642 = vmatpush1.msra.mxu0 0.0
        %4643 = vmatprep.subr.mxu0 0.0
        %4644 = vmatpush1.msra.mxu0 0.0
        %4645 = vmatprep.subr.mxu0 0.0
        %4646 = vmatpush1.msra.mxu0 0.0
        %4647 = vmatprep.subr.mxu0 0.0
        %4648 = vmatpush1.msra.mxu0 0.0
        %4649 = vmatprep.subr.mxu0 0.0
        %4650 = vmatpush1.msra.mxu0 0.0
        %4651 = vmatprep.subr.mxu0 0.0
        %4652 = vmatpush1.msra.mxu0 0.0
        %4653 = vmatprep.subr.mxu0 0.0
        %4654 = vmatpush1.msra.mxu0 0.0
        %4655 = vmatprep.subr.mxu0 0.0
        %4656 = vmatpush1.msra.mxu0 0.0
        %4657 = vmatprep.subr.mxu0 0.0
        %4658 = vmatpush1.msra.mxu0 0.0
        %4659 = vmatprep.subr.mxu0 0.0
        %4660 = vmatpush1.msra.mxu0 0.0
        %4661 = vmatprep.subr.mxu0 0.0
        %4662 = vmatpush1.msra.mxu0 0.0
        %4663 = vmatprep.subr.mxu0 0.0
        %4664 = vmatpush1.msra.mxu0 0.0
        %4665 = vmatprep.subr.mxu0 0.0
        %4666 = vmatpush1.msra.mxu0 0.0
        %4667 = vmatprep.subr.mxu0 0.0
        %4668 = vmatpush1.msra.mxu0 0.0
        %4669 = vmatprep.subr.mxu0 0.0
        %4670 = vmatpush1.msra.mxu0 0.0
        %4671 = vmatprep.subr.mxu0 0.0
        %4672 = vmatpush1.msra.mxu0 0.0
        %4673 = vmatprep.subr.mxu0 0.0
        %4674 = vmatpush1.msra.mxu0 0.0
        %4675 = vmatprep.subr.mxu0 0.0
        %4676 = vmatpush1.msra.mxu0 0.0
        %4677 = vmatprep.subr.mxu0 0.0
        %4678 = vmatpush1.msra.mxu0 0.0
        %4679 = vmatprep.subr.mxu0 0.0
        %4680 = vmatpush1.msra.mxu0 0.0
        %4681 = vmatprep.subr.mxu0 0.0
        %4682 = vmatpush1.msra.mxu0 0.0
        %4683 = vmatprep.subr.mxu0 0.0
        %4684 = vmatpush1.msra.mxu0 0.0
        %4685 = vmatprep.subr.mxu0 0.0
        %4686 = vmatpush1.msra.mxu0 0.0
        %4687 = vmatprep.subr.mxu0 0.0
        %4688 = vmatpush1.msra.mxu0 0.0
        %4689 = vmatprep.subr.mxu0 0.0
        %4690 = vmatpush1.msra.mxu0 0.0
        %4691 = vmatprep.subr.mxu0 0.0
        %4692 = vmatpush1.msra.mxu0 0.0
        %4693 = vmatprep.subr.mxu0 0.0
        %4694 = vmatpush1.msra.mxu0 0.0
        %4695 = vmatprep.subr.mxu0 0.0
        %4696 = vmatpush1.msra.mxu0 0.0
        %4697 = vmatprep.mubr.f32.mxu0 0.0
        %4698 = vmatmul.mubr.f32.gmra.mrb[0].mxu0 %v4628
        %v4699 = vpop.f32.mrb[0].mxu0
        %v4700 = vadd.f32 0.0, %v4699
        %v4701 = vpop.f32.mrb[0].mxu0
        %4702 = vdwg.mxu0
        %v4703 = vadd.f32 %v4622, %v4700
        %v4704 = vld [vmem:[%s3 + $0x14] sm:$0xf]
        %v4706 = vsel %vm4471, %v3093, 0
        %v4709 = vsel %vm4475, %v4704, 0
        %4711 = vmatprep.subr.mxu0 0.0
        %4712 = vmatpush1.msra.mxu0 %v4709
        %4713 = vmatprep.subr.mxu0 0.0
        %4714 = vmatpush1.msra.mxu0 0.0
        %4715 = vmatprep.subr.mxu0 0.0
        %4716 = vmatpush1.msra.mxu0 0.0
        %4717 = vmatprep.subr.mxu0 0.0
        %4718 = vmatpush1.msra.mxu0 0.0
        %4719 = vmatprep.subr.mxu0 0.0
        %4720 = vmatpush1.msra.mxu0 0.0
        %4721 = vmatprep.subr.mxu0 0.0
        %4722 = vmatpush1.msra.mxu0 0.0
        %4723 = vmatprep.subr.mxu0 0.0
        %4724 = vmatpush1.msra.mxu0 0.0
        %4725 = vmatprep.subr.mxu0 0.0
        %4726 = vmatpush1.msra.mxu0 0.0
        %4727 = vmatprep.subr.mxu0 0.0
        %4728 = vmatpush1.msra.mxu0 0.0
        %4729 = vmatprep.subr.mxu0 0.0
        %4730 = vmatpush1.msra.mxu0 0.0
        %4731 = vmatprep.subr.mxu0 0.0
        %4732 = vmatpush1.msra.mxu0 0.0
        %4733 = vmatprep.subr.mxu0 0.0
        %4734 = vmatpush1.msra.mxu0 0.0
        %4735 = vmatprep.subr.mxu0 0.0
        %4736 = vmatpush1.msra.mxu0 0.0
        %4737 = vmatprep.subr.mxu0 0.0
        %4738 = vmatpush1.msra.mxu0 0.0
        %4739 = vmatprep.subr.mxu0 0.0
        %4740 = vmatpush1.msra.mxu0 0.0
        %4741 = vmatprep.subr.mxu0 0.0
        %4742 = vmatpush1.msra.mxu0 0.0
        %4743 = vmatprep.subr.mxu0 0.0
        %4744 = vmatpush1.msra.mxu0 0.0
        %4745 = vmatprep.subr.mxu0 0.0
        %4746 = vmatpush1.msra.mxu0 0.0
        %4747 = vmatprep.subr.mxu0 0.0
        %4748 = vmatpush1.msra.mxu0 0.0
        %4749 = vmatprep.subr.mxu0 0.0
        %4750 = vmatpush1.msra.mxu0 0.0
        %4751 = vmatprep.subr.mxu0 0.0
        %4752 = vmatpush1.msra.mxu0 0.0
        %4753 = vmatprep.subr.mxu0 0.0
        %4754 = vmatpush1.msra.mxu0 0.0
        %4755 = vmatprep.subr.mxu0 0.0
        %4756 = vmatpush1.msra.mxu0 0.0
        %4757 = vmatprep.subr.mxu0 0.0
        %4758 = vmatpush1.msra.mxu0 0.0
        %4759 = vmatprep.subr.mxu0 0.0
        %4760 = vmatpush1.msra.mxu0 0.0
        %4761 = vmatprep.subr.mxu0 0.0
        %4762 = vmatpush1.msra.mxu0 0.0
        %4763 = vmatprep.subr.mxu0 0.0
        %4764 = vmatpush1.msra.mxu0 0.0
        %4765 = vmatprep.subr.mxu0 0.0
        %4766 = vmatpush1.msra.mxu0 0.0
        %4767 = vmatprep.subr.mxu0 0.0
        %4768 = vmatpush1.msra.mxu0 0.0
        %4769 = vmatprep.subr.mxu0 0.0
        %4770 = vmatpush1.msra.mxu0 0.0
        %4771 = vmatprep.subr.mxu0 0.0
        %4772 = vmatpush1.msra.mxu0 0.0
        %4773 = vmatprep.subr.mxu0 0.0
        %4774 = vmatpush1.msra.mxu0 0.0
        %4775 = vmatprep.mubr.f32.mxu0 0.0
        %4776 = vmatmul.mubr.f32.gmra.mrb[0].mxu0 %v4706
        %v4777 = vpop.f32.mrb[0].mxu0
        %v4778 = vadd.f32 0.0, %v4777
        %v4779 = vpop.f32.mrb[0].mxu0
        %4780 = vdwg.mxu0
        %v4781 = vadd.f32 %v4703, %v4778
        %v4782 = vld [vmem:[%s3 + $0xc] sm:$0xf]
        %v4784 = vsel %vm4475, %v4782, 0
        %4786 = vmatprep.subr.mxu0 0.0
        %4787 = vmatpush1.msra.mxu0 %v4784
        %4788 = vmatprep.subr.mxu0 0.0
        %4789 = vmatpush1.msra.mxu0 0.0
        %4790 = vmatprep.subr.mxu0 0.0
        %4791 = vmatpush1.msra.mxu0 0.0
        %4792 = vmatprep.subr.mxu0 0.0
        %4793 = vmatpush1.msra.mxu0 0.0
        %4794 = vmatprep.subr.mxu0 0.0
        %4795 = vmatpush1.msra.mxu0 0.0
        %4796 = vmatprep.subr.mxu0 0.0
        %4797 = vmatpush1.msra.mxu0 0.0
        %4798 = vmatprep.subr.mxu0 0.0
        %4799 = vmatpush1.msra.mxu0 0.0
        %4800 = vmatprep.subr.mxu0 0.0
        %4801 = vmatpush1.msra.mxu0 0.0
        %4802 = vmatprep.subr.mxu0 0.0
        %4803 = vmatpush1.msra.mxu0 0.0
        %4804 = vmatprep.subr.mxu0 0.0
        %4805 = vmatpush1.msra.mxu0 0.0
        %4806 = vmatprep.subr.mxu0 0.0
        %4807 = vmatpush1.msra.mxu0 0.0
        %4808 = vmatprep.subr.mxu0 0.0
        %4809 = vmatpush1.msra.mxu0 0.0
        %4810 = vmatprep.subr.mxu0 0.0
        %4811 = vmatpush1.msra.mxu0 0.0
        %4812 = vmatprep.subr.mxu0 0.0
        %4813 = vmatpush1.msra.mxu0 0.0
        %4814 = vmatprep.subr.mxu0 0.0
        %4815 = vmatpush1.msra.mxu0 0.0
        %4816 = vmatprep.subr.mxu0 0.0
        %4817 = vmatpush1.msra.mxu0 0.0
        %4818 = vmatprep.subr.mxu0 0.0
        %4819 = vmatpush1.msra.mxu0 0.0
        %4820 = vmatprep.subr.mxu0 0.0
        %4821 = vmatpush1.msra.mxu0 0.0
        %4822 = vmatprep.subr.mxu0 0.0
        %4823 = vmatpush1.msra.mxu0 0.0
        %4824 = vmatprep.subr.mxu0 0.0
        %4825 = vmatpush1.msra.mxu0 0.0
        %4826 = vmatprep.subr.mxu0 0.0
        %4827 = vmatpush1.msra.mxu0 0.0
        %4828 = vmatprep.subr.mxu0 0.0
        %4829 = vmatpush1.msra.mxu0 0.0
        %4830 = vmatprep.subr.mxu0 0.0
        %4831 = vmatpush1.msra.mxu0 0.0
        %4832 = vmatprep.subr.mxu0 0.0
        %4833 = vmatpush1.msra.mxu0 0.0
        %4834 = vmatprep.subr.mxu0 0.0
        %4835 = vmatpush1.msra.mxu0 0.0
        %4836 = vmatprep.subr.mxu0 0.0
        %4837 = vmatpush1.msra.mxu0 0.0
        %4838 = vmatprep.subr.mxu0 0.0
        %4839 = vmatpush1.msra.mxu0 0.0
        %4840 = vmatprep.subr.mxu0 0.0
        %4841 = vmatpush1.msra.mxu0 0.0
        %4842 = vmatprep.subr.mxu0 0.0
        %4843 = vmatpush1.msra.mxu0 0.0
        %4844 = vmatprep.subr.mxu0 0.0
        %4845 = vmatpush1.msra.mxu0 0.0
        %4846 = vmatprep.subr.mxu0 0.0
        %4847 = vmatpush1.msra.mxu0 0.0
        %4848 = vmatprep.subr.mxu0 0.0
        %4849 = vmatpush1.msra.mxu0 0.0
        %4850 = vmatprep.mubr.f32.mxu0 0.0
        %4851 = vmatmul.mubr.f32.gmra.mrb[0].mxu0 %v4706
        %v4852 = vpop.f32.mrb[0].mxu0
        %v4853 = vadd.f32 0.0, %v4852
        %v4854 = vpop.f32.mrb[0].mxu0
        %4855 = vdwg.mxu0
        %v4857 = vsel %vm4475, %v4625, 0
        %4859 = vmatprep.subr.mxu0 0.0
        %4860 = vmatpush1.msra.mxu0 %v4857
        %4861 = vmatprep.subr.mxu0 0.0
        %4862 = vmatpush1.msra.mxu0 0.0
        %4863 = vmatprep.subr.mxu0 0.0
        %4864 = vmatpush1.msra.mxu0 0.0
        %4865 = vmatprep.subr.mxu0 0.0
        %4866 = vmatpush1.msra.mxu0 0.0
        %4867 = vmatprep.subr.mxu0 0.0
        %4868 = vmatpush1.msra.mxu0 0.0
        %4869 = vmatprep.subr.mxu0 0.0
        %4870 = vmatpush1.msra.mxu0 0.0
        %4871 = vmatprep.subr.mxu0 0.0
        %4872 = vmatpush1.msra.mxu0 0.0
        %4873 = vmatprep.subr.mxu0 0.0
        %4874 = vmatpush1.msra.mxu0 0.0
        %4875 = vmatprep.subr.mxu0 0.0
        %4876 = vmatpush1.msra.mxu0 0.0
        %4877 = vmatprep.subr.mxu0 0.0
        %4878 = vmatpush1.msra.mxu0 0.0
        %4879 = vmatprep.subr.mxu0 0.0
        %4880 = vmatpush1.msra.mxu0 0.0
        %4881 = vmatprep.subr.mxu0 0.0
        %4882 = vmatpush1.msra.mxu0 0.0
        %4883 = vmatprep.subr.mxu0 0.0
        %4884 = vmatpush1.msra.mxu0 0.0
        %4885 = vmatprep.subr.mxu0 0.0
        %4886 = vmatpush1.msra.mxu0 0.0
        %4887 = vmatprep.subr.mxu0 0.0
        %4888 = vmatpush1.msra.mxu0 0.0
        %4889 = vmatprep.subr.mxu0 0.0
        %4890 = vmatpush1.msra.mxu0 0.0
        %4891 = vmatprep.subr.mxu0 0.0
        %4892 = vmatpush1.msra.mxu0 0.0
        %4893 = vmatprep.subr.mxu0 0.0
        %4894 = vmatpush1.msra.mxu0 0.0
        %4895 = vmatprep.subr.mxu0 0.0
        %4896 = vmatpush1.msra.mxu0 0.0
        %4897 = vmatprep.subr.mxu0 0.0
        %4898 = vmatpush1.msra.mxu0 0.0
        %4899 = vmatprep.subr.mxu0 0.0
        %4900 = vmatpush1.msra.mxu0 0.0
        %4901 = vmatprep.subr.mxu0 0.0
        %4902 = vmatpush1.msra.mxu0 0.0
        %4903 = vmatprep.subr.mxu0 0.0
        %4904 = vmatpush1.msra.mxu0 0.0
        %4905 = vmatprep.subr.mxu0 0.0
        %4906 = vmatpush1.msra.mxu0 0.0
        %4907 = vmatprep.subr.mxu0 0.0
        %4908 = vmatpush1.msra.mxu0 0.0
        %4909 = vmatprep.subr.mxu0 0.0
        %4910 = vmatpush1.msra.mxu0 0.0
        %4911 = vmatprep.subr.mxu0 0.0
        %4912 = vmatpush1.msra.mxu0 0.0
        %4913 = vmatprep.subr.mxu0 0.0
        %4914 = vmatpush1.msra.mxu0 0.0
        %4915 = vmatprep.subr.mxu0 0.0
        %4916 = vmatpush1.msra.mxu0 0.0
        %4917 = vmatprep.subr.mxu0 0.0
        %4918 = vmatpush1.msra.mxu0 0.0
        %4919 = vmatprep.subr.mxu0 0.0
        %4920 = vmatpush1.msra.mxu0 0.0
        %4921 = vmatprep.subr.mxu0 0.0
        %4922 = vmatpush1.msra.mxu0 0.0
        %4923 = vmatprep.mubr.f32.mxu0 0.0
        %4924 = vmatmul.mubr.f32.gmra.mrb[0].mxu0 %v4473
        %v4925 = vpop.f32.mrb[0].mxu0
        %v4926 = vadd.f32 %v4853, %v4925
        %v4927 = vpop.f32.mrb[0].mxu0
        %4928 = vdwg.mxu0
        %v4929 = vld [vmem:[%s3 + $0x1c] sm:$0xf]
        %v4931 = vsel %vm4471, %v4466, 0
        %v4934 = vsel %vm4475, %v4929, 0
        %4936 = vmatprep.subr.mxu0 0.0
        %4937 = vmatpush1.msra.mxu0 %v4934
        %4938 = vmatprep.subr.mxu0 0.0
        %4939 = vmatpush1.msra.mxu0 0.0
        %4940 = vmatprep.subr.mxu0 0.0
        %4941 = vmatpush1.msra.mxu0 0.0
        %4942 = vmatprep.subr.mxu0 0.0
        %4943 = vmatpush1.msra.mxu0 0.0
        %4944 = vmatprep.subr.mxu0 0.0
        %4945 = vmatpush1.msra.mxu0 0.0
        %4946 = vmatprep.subr.mxu0 0.0
        %4947 = vmatpush1.msra.mxu0 0.0
        %4948 = vmatprep.subr.mxu0 0.0
        %4949 = vmatpush1.msra.mxu0 0.0
        %4950 = vmatprep.subr.mxu0 0.0
        %4951 = vmatpush1.msra.mxu0 0.0
        %4952 = vmatprep.subr.mxu0 0.0
        %4953 = vmatpush1.msra.mxu0 0.0
        %4954 = vmatprep.subr.mxu0 0.0
        %4955 = vmatpush1.msra.mxu0 0.0
        %4956 = vmatprep.subr.mxu0 0.0
        %4957 = vmatpush1.msra.mxu0 0.0
        %4958 = vmatprep.subr.mxu0 0.0
        %4959 = vmatpush1.msra.mxu0 0.0
        %4960 = vmatprep.subr.mxu0 0.0
        %4961 = vmatpush1.msra.mxu0 0.0
        %4962 = vmatprep.subr.mxu0 0.0
        %4963 = vmatpush1.msra.mxu0 0.0
        %4964 = vmatprep.subr.mxu0 0.0
        %4965 = vmatpush1.msra.mxu0 0.0
        %4966 = vmatprep.subr.mxu0 0.0
        %4967 = vmatpush1.msra.mxu0 0.0
        %4968 = vmatprep.subr.mxu0 0.0
        %4969 = vmatpush1.msra.mxu0 0.0
        %4970 = vmatprep.subr.mxu0 0.0
        %4971 = vmatpush1.msra.mxu0 0.0
        %4972 = vmatprep.subr.mxu0 0.0
        %4973 = vmatpush1.msra.mxu0 0.0
        %4974 = vmatprep.subr.mxu0 0.0
        %4975 = vmatpush1.msra.mxu0 0.0
        %4976 = vmatprep.subr.mxu0 0.0
        %4977 = vmatpush1.msra.mxu0 0.0
        %4978 = vmatprep.subr.mxu0 0.0
        %4979 = vmatpush1.msra.mxu0 0.0
        %4980 = vmatprep.subr.mxu0 0.0
        %4981 = vmatpush1.msra.mxu0 0.0
        %4982 = vmatprep.subr.mxu0 0.0
        %4983 = vmatpush1.msra.mxu0 0.0
        %4984 = vmatprep.subr.mxu0 0.0
        %4985 = vmatpush1.msra.mxu0 0.0
        %4986 = vmatprep.subr.mxu0 0.0
        %4987 = vmatpush1.msra.mxu0 0.0
        %4988 = vmatprep.subr.mxu0 0.0
        %4989 = vmatpush1.msra.mxu0 0.0
        %4990 = vmatprep.subr.mxu0 0.0
        %4991 = vmatpush1.msra.mxu0 0.0
        %4992 = vmatprep.subr.mxu0 0.0
        %4993 = vmatpush1.msra.mxu0 0.0
        %4994 = vmatprep.subr.mxu0 0.0
        %4995 = vmatpush1.msra.mxu0 0.0
        %4996 = vmatprep.subr.mxu0 0.0
        %4997 = vmatpush1.msra.mxu0 0.0
        %4998 = vmatprep.subr.mxu0 0.0
        %4999 = vmatpush1.msra.mxu0 0.0
        %5000 = vmatprep.mubr.f32.mxu0 0.0
        %5001 = vmatmul.mubr.f32.gmra.mrb[0].mxu0 %v4931
        %v5002 = vpop.f32.mrb[0].mxu0
        %v5003 = vadd.f32 0.0, %v5002
        %v5004 = vpop.f32.mrb[0].mxu0
        %5005 = vdwg.mxu0
        %v5006 = vadd.f32 %v4781, %v5003
        %v5007 = vld [vmem:[%s3 + $0x20] sm:$0xf]
        %v5009 = vsel %vm4471, %v4468, 0
        %v5012 = vsel %vm4475, %v5007, 0
        %5014 = vmatprep.subr.mxu0 0.0
        %5015 = vmatpush1.msra.mxu0 %v5012
        %5016 = vmatprep.subr.mxu0 0.0
        %5017 = vmatpush1.msra.mxu0 0.0
        %5018 = vmatprep.subr.mxu0 0.0
        %5019 = vmatpush1.msra.mxu0 0.0
        %5020 = vmatprep.subr.mxu0 0.0
        %5021 = vmatpush1.msra.mxu0 0.0
        %5022 = vmatprep.subr.mxu0 0.0
        %5023 = vmatpush1.msra.mxu0 0.0
        %5024 = vmatprep.subr.mxu0 0.0
        %5025 = vmatpush1.msra.mxu0 0.0
        %5026 = vmatprep.subr.mxu0 0.0
        %5027 = vmatpush1.msra.mxu0 0.0
        %5028 = vmatprep.subr.mxu0 0.0
        %5029 = vmatpush1.msra.mxu0 0.0
        %5030 = vmatprep.subr.mxu0 0.0
        %5031 = vmatpush1.msra.mxu0 0.0
        %5032 = vmatprep.subr.mxu0 0.0
        %5033 = vmatpush1.msra.mxu0 0.0
        %5034 = vmatprep.subr.mxu0 0.0
        %5035 = vmatpush1.msra.mxu0 0.0
        %5036 = vmatprep.subr.mxu0 0.0
        %5037 = vmatpush1.msra.mxu0 0.0
        %5038 = vmatprep.subr.mxu0 0.0
        %5039 = vmatpush1.msra.mxu0 0.0
        %5040 = vmatprep.subr.mxu0 0.0
        %5041 = vmatpush1.msra.mxu0 0.0
        %5042 = vmatprep.subr.mxu0 0.0
        %5043 = vmatpush1.msra.mxu0 0.0
        %5044 = vmatprep.subr.mxu0 0.0
        %5045 = vmatpush1.msra.mxu0 0.0
        %5046 = vmatprep.subr.mxu0 0.0
        %5047 = vmatpush1.msra.mxu0 0.0
        %5048 = vmatprep.subr.mxu0 0.0
        %5049 = vmatpush1.msra.mxu0 0.0
        %5050 = vmatprep.subr.mxu0 0.0
        %5051 = vmatpush1.msra.mxu0 0.0
        %5052 = vmatprep.subr.mxu0 0.0
        %5053 = vmatpush1.msra.mxu0 0.0
        %5054 = vmatprep.subr.mxu0 0.0
        %5055 = vmatpush1.msra.mxu0 0.0
        %5056 = vmatprep.subr.mxu0 0.0
        %5057 = vmatpush1.msra.mxu0 0.0
        %5058 = vmatprep.subr.mxu0 0.0
        %5059 = vmatpush1.msra.mxu0 0.0
        %5060 = vmatprep.subr.mxu0 0.0
        %5061 = vmatpush1.msra.mxu0 0.0
        %5062 = vmatprep.subr.mxu0 0.0
        %5063 = vmatpush1.msra.mxu0 0.0
        %5064 = vmatprep.subr.mxu0 0.0
        %5065 = vmatpush1.msra.mxu0 0.0
        %5066 = vmatprep.subr.mxu0 0.0
        %5067 = vmatpush1.msra.mxu0 0.0
        %5068 = vmatprep.subr.mxu0 0.0
        %5069 = vmatpush1.msra.mxu0 0.0
        %5070 = vmatprep.subr.mxu0 0.0
        %5071 = vmatpush1.msra.mxu0 0.0
        %5072 = vmatprep.subr.mxu0 0.0
        %5073 = vmatpush1.msra.mxu0 0.0
        %5074 = vmatprep.subr.mxu0 0.0
        %5075 = vmatpush1.msra.mxu0 0.0
        %5076 = vmatprep.subr.mxu0 0.0
        %5077 = vmatpush1.msra.mxu0 0.0
        %5078 = vmatprep.mubr.f32.mxu0 0.0
        %5079 = vmatmul.mubr.f32.gmra.mrb[0].mxu0 %v5009
        %v5080 = vpop.f32.mrb[0].mxu0
        %v5081 = vadd.f32 0.0, %v5080
        %v5082 = vpop.f32.mrb[0].mxu0
        %5083 = vdwg.mxu0
        %v5084 = vadd.f32 %v5006, %v5081
        %v5085 = vld [vmem:[%s3 + $0x18] sm:$0xf]
        %v5087 = vsel %vm4475, %v5085, 0
        %5089 = vmatprep.subr.mxu0 0.0
        %5090 = vmatpush1.msra.mxu0 %v5087
        %5091 = vmatprep.subr.mxu0 0.0
        %5092 = vmatpush1.msra.mxu0 0.0
        %5093 = vmatprep.subr.mxu0 0.0
        %5094 = vmatpush1.msra.mxu0 0.0
        %5095 = vmatprep.subr.mxu0 0.0
        %5096 = vmatpush1.msra.mxu0 0.0
        %5097 = vmatprep.subr.mxu0 0.0
        %5098 = vmatpush1.msra.mxu0 0.0
        %5099 = vmatprep.subr.mxu0 0.0
        %5100 = vmatpush1.msra.mxu0 0.0
        %5101 = vmatprep.subr.mxu0 0.0
        %5102 = vmatpush1.msra.mxu0 0.0
        %5103 = vmatprep.subr.mxu0 0.0
        %5104 = vmatpush1.msra.mxu0 0.0
        %5105 = vmatprep.subr.mxu0 0.0
        %5106 = vmatpush1.msra.mxu0 0.0
        %5107 = vmatprep.subr.mxu0 0.0
        %5108 = vmatpush1.msra.mxu0 0.0
        %5109 = vmatprep.subr.mxu0 0.0
        %5110 = vmatpush1.msra.mxu0 0.0
        %5111 = vmatprep.subr.mxu0 0.0
        %5112 = vmatpush1.msra.mxu0 0.0
        %5113 = vmatprep.subr.mxu0 0.0
        %5114 = vmatpush1.msra.mxu0 0.0
        %5115 = vmatprep.subr.mxu0 0.0
        %5116 = vmatpush1.msra.mxu0 0.0
        %5117 = vmatprep.subr.mxu0 0.0
        %5118 = vmatpush1.msra.mxu0 0.0
        %5119 = vmatprep.subr.mxu0 0.0
        %5120 = vmatpush1.msra.mxu0 0.0
        %5121 = vmatprep.subr.mxu0 0.0
        %5122 = vmatpush1.msra.mxu0 0.0
        %5123 = vmatprep.subr.mxu0 0.0
        %5124 = vmatpush1.msra.mxu0 0.0
        %5125 = vmatprep.subr.mxu0 0.0
        %5126 = vmatpush1.msra.mxu0 0.0
        %5127 = vmatprep.subr.mxu0 0.0
        %5128 = vmatpush1.msra.mxu0 0.0
        %5129 = vmatprep.subr.mxu0 0.0
        %5130 = vmatpush1.msra.mxu0 0.0
        %5131 = vmatprep.subr.mxu0 0.0
        %5132 = vmatpush1.msra.mxu0 0.0
        %5133 = vmatprep.subr.mxu0 0.0
        %5134 = vmatpush1.msra.mxu0 0.0
        %5135 = vmatprep.subr.mxu0 0.0
        %5136 = vmatpush1.msra.mxu0 0.0
        %5137 = vmatprep.subr.mxu0 0.0
        %5138 = vmatpush1.msra.mxu0 0.0
        %5139 = vmatprep.subr.mxu0 0.0
        %5140 = vmatpush1.msra.mxu0 0.0
        %5141 = vmatprep.subr.mxu0 0.0
        %5142 = vmatpush1.msra.mxu0 0.0
        %5143 = vmatprep.subr.mxu0 0.0
        %5144 = vmatpush1.msra.mxu0 0.0
        %5145 = vmatprep.subr.mxu0 0.0
        %5146 = vmatpush1.msra.mxu0 0.0
        %5147 = vmatprep.subr.mxu0 0.0
        %5148 = vmatpush1.msra.mxu0 0.0
        %5149 = vmatprep.subr.mxu0 0.0
        %5150 = vmatpush1.msra.mxu0 0.0
        %5151 = vmatprep.subr.mxu0 0.0
        %5152 = vmatpush1.msra.mxu0 0.0
        %5153 = vmatprep.mubr.f32.mxu0 0.0
        %5154 = vmatmul.mubr.f32.gmra.mrb[0].mxu0 %v5009
        %v5155 = vpop.f32.mrb[0].mxu0
        %v5156 = vadd.f32 0.0, %v5155
        %v5157 = vpop.f32.mrb[0].mxu0
        %5158 = vdwg.mxu0
        %v5159 = vadd.f32 %v4926, %v5156
        %v5160 = vlaneseq
        %v5161 = vshrl.u32 %v5160, 7
        %v5162 = vlaneseq
        %v5163 = vand.u32 %v5162, 127
        %v5164 = vadd.s32 %v5163, 1
        %vm5165 = vcmp.eq.s32.totalorder %v5161, %v5164
        %v5166 = vsel %vm5165, 1, 0
        %v5167 = vcvt.s32.f32 %v5166
        %v5169 = vsel %vm4471, %v5167, 0
        %v5172 = vsel %vm4475, %v5159, 0
        %5174 = vmatprep.subr.mxu0 0.0
        %5175 = vmatpush1.msra.mxu0 %v5172
        %5176 = vmatprep.subr.mxu0 0.0
        %5177 = vmatpush1.msra.mxu0 0.0
        %5178 = vmatprep.subr.mxu0 0.0
        %5179 = vmatpush1.msra.mxu0 0.0
        %5180 = vmatprep.subr.mxu0 0.0
        %5181 = vmatpush1.msra.mxu0 0.0
        %5182 = vmatprep.subr.mxu0 0.0
        %5183 = vmatpush1.msra.mxu0 0.0
        %5184 = vmatprep.subr.mxu0 0.0
        %5185 = vmatpush1.msra.mxu0 0.0
        %5186 = vmatprep.subr.mxu0 0.0
        %5187 = vmatpush1.msra.mxu0 0.0
        %5188 = vmatprep.subr.mxu0 0.0
        %5189 = vmatpush1.msra.mxu0 0.0
        %5190 = vmatprep.subr.mxu0 0.0
        %5191 = vmatpush1.msra.mxu0 0.0
        %5192 = vmatprep.subr.mxu0 0.0
        %5193 = vmatpush1.msra.mxu0 0.0
        %5194 = vmatprep.subr.mxu0 0.0
        %5195 = vmatpush1.msra.mxu0 0.0
        %5196 = vmatprep.subr.mxu0 0.0
        %5197 = vmatpush1.msra.mxu0 0.0
        %5198 = vmatprep.subr.mxu0 0.0
        %5199 = vmatpush1.msra.mxu0 0.0
        %5200 = vmatprep.subr.mxu0 0.0
        %5201 = vmatpush1.msra.mxu0 0.0
        %5202 = vmatprep.subr.mxu0 0.0
        %5203 = vmatpush1.msra.mxu0 0.0
        %5204 = vmatprep.subr.mxu0 0.0
        %5205 = vmatpush1.msra.mxu0 0.0
        %5206 = vmatprep.subr.mxu0 0.0
        %5207 = vmatpush1.msra.mxu0 0.0
        %5208 = vmatprep.subr.mxu0 0.0
        %5209 = vmatpush1.msra.mxu0 0.0
        %5210 = vmatprep.subr.mxu0 0.0
        %5211 = vmatpush1.msra.mxu0 0.0
        %5212 = vmatprep.subr.mxu0 0.0
        %5213 = vmatpush1.msra.mxu0 0.0
        %5214 = vmatprep.subr.mxu0 0.0
        %5215 = vmatpush1.msra.mxu0 0.0
        %5216 = vmatprep.subr.mxu0 0.0
        %5217 = vmatpush1.msra.mxu0 0.0
        %5218 = vmatprep.subr.mxu0 0.0
        %5219 = vmatpush1.msra.mxu0 0.0
        %5220 = vmatprep.subr.mxu0 0.0
        %5221 = vmatpush1.msra.mxu0 0.0
        %5222 = vmatprep.subr.mxu0 0.0
        %5223 = vmatpush1.msra.mxu0 0.0
        %5224 = vmatprep.subr.mxu0 0.0
        %5225 = vmatpush1.msra.mxu0 0.0
        %5226 = vmatprep.subr.mxu0 0.0
        %5227 = vmatpush1.msra.mxu0 0.0
        %5228 = vmatprep.subr.mxu0 0.0
        %5229 = vmatpush1.msra.mxu0 0.0
        %5230 = vmatprep.subr.mxu0 0.0
        %5231 = vmatpush1.msra.mxu0 0.0
        %5232 = vmatprep.subr.mxu0 0.0
        %5233 = vmatpush1.msra.mxu0 0.0
        %5234 = vmatprep.subr.mxu0 0.0
        %5235 = vmatpush1.msra.mxu0 0.0
        %5236 = vmatprep.subr.mxu0 0.0
        %5237 = vmatpush1.msra.mxu0 0.0
        %5238 = vmatprep.mubr.f32.mxu0 0.0
        %5239 = vmatmul.mubr.f32.gmra.mrb[0].mxu0 %v5169
        %v5240 = vpop.f32.mrb[0].mxu0
        %v5241 = vadd.f32 0.0, %v5240
        %v5242 = vpop.f32.mrb[0].mxu0
        %5243 = vdwg.mxu0
        %v5244 = vadd.f32 %v5084, %v5241
        %v5245 = vld [vmem:[%s4] sm:$0x1]
        %v5247 = vlaneseq
        %v5248 = vshrl.u32 %v5247, 7
        %v5249 = vsub.s32 0, %v5248
        %v5250 = vrot.slane %v5245, %v5249
        %v5252 = vadd.f32 %v5244, %v5250
        %v5253 = vmax.f32 %v5252, 0.0
        %v5254 = vld [vmem:[%s5] sm:$0xff]
        %v5255 = vld [vmem:[%s6] sm:$0x1]
        %v5257 = vlaneseq
        %v5258 = vshrl.u32 %v5257, 7
        %v5259 = vsub.s32 0, %v5258
        %v5260 = vrot.slane %v5255, %v5259
        %vm5262 = vcmask 64512
        %v5264 = vsel %vm5262, %v5253, 0
        %5266 = vmatprep.subr.mxu0 0.0
        %5267 = vmatpush1.msra.mxu0 %v5254
        %5268 = vmatprep.subr.mxu0 0.0
        %5269 = vmatpush1.msra.mxu0 0.0
        %5270 = vmatprep.subr.mxu0 0.0
        %5271 = vmatpush1.msra.mxu0 0.0
        %5272 = vmatprep.subr.mxu0 0.0
        %5273 = vmatpush1.msra.mxu0 0.0
        %5274 = vmatprep.subr.mxu0 0.0
        %5275 = vmatpush1.msra.mxu0 0.0
        %5276 = vmatprep.subr.mxu0 0.0
        %5277 = vmatpush1.msra.mxu0 0.0
        %5278 = vmatprep.subr.mxu0 0.0
        %5279 = vmatpush1.msra.mxu0 0.0
        %5280 = vmatprep.subr.mxu0 0.0
        %5281 = vmatpush1.msra.mxu0 0.0
        %5282 = vmatprep.subr.mxu0 0.0
        %5283 = vmatpush1.msra.mxu0 0.0
        %5284 = vmatprep.subr.mxu0 0.0
        %5285 = vmatpush1.msra.mxu0 0.0
        %5286 = vmatprep.subr.mxu0 0.0
        %5287 = vmatpush1.msra.mxu0 0.0
        %5288 = vmatprep.subr.mxu0 0.0
        %5289 = vmatpush1.msra.mxu0 0.0
        %5290 = vmatprep.subr.mxu0 0.0
        %5291 = vmatpush1.msra.mxu0 0.0
        %5292 = vmatprep.subr.mxu0 0.0
        %5293 = vmatpush1.msra.mxu0 0.0
        %5294 = vmatprep.subr.mxu0 0.0
        %5295 = vmatpush1.msra.mxu0 0.0
        %5296 = vmatprep.subr.mxu0 0.0
        %5297 = vmatpush1.msra.mxu0 0.0
        %5298 = vmatprep.subr.mxu0 0.0
        %5299 = vmatpush1.msra.mxu0 0.0
        %5300 = vmatprep.subr.mxu0 0.0
        %5301 = vmatpush1.msra.mxu0 0.0
        %5302 = vmatprep.subr.mxu0 0.0
        %5303 = vmatpush1.msra.mxu0 0.0
        %5304 = vmatprep.subr.mxu0 0.0
        %5305 = vmatpush1.msra.mxu0 0.0
        %5306 = vmatprep.subr.mxu0 0.0
        %5307 = vmatpush1.msra.mxu0 0.0
        %5308 = vmatprep.subr.mxu0 0.0
        %5309 = vmatpush1.msra.mxu0 0.0
        %5310 = vmatprep.subr.mxu0 0.0
        %5311 = vmatpush1.msra.mxu0 0.0
        %5312 = vmatprep.subr.mxu0 0.0
        %5313 = vmatpush1.msra.mxu0 0.0
        %5314 = vmatprep.subr.mxu0 0.0
        %5315 = vmatpush1.msra.mxu0 0.0
        %5316 = vmatprep.subr.mxu0 0.0
        %5317 = vmatpush1.msra.mxu0 0.0
        %5318 = vmatprep.subr.mxu0 0.0
        %5319 = vmatpush1.msra.mxu0 0.0
        %5320 = vmatprep.subr.mxu0 0.0
        %5321 = vmatpush1.msra.mxu0 0.0
        %5322 = vmatprep.subr.mxu0 0.0
        %5323 = vmatpush1.msra.mxu0 0.0
        %5324 = vmatprep.subr.mxu0 0.0
        %5325 = vmatpush1.msra.mxu0 0.0
        %5326 = vmatprep.subr.mxu0 0.0
        %5327 = vmatpush1.msra.mxu0 0.0
        %5328 = vmatprep.subr.mxu0 0.0
        %5329 = vmatpush1.msra.mxu0 0.0
        %5330 = vmatprep.mubr.f32.mxu0 0.0
        %5331 = vmatmul.mubr.f32.gmra.mrb[0].mxu0 %v5264
        %v5332 = vpop.f32.mrb[0].mxu0
        %v5333 = vadd.f32 %v5260, %v5332
        %v5334 = vpop.f32.mrb[0].mxu0
        %5335 = vdwg.mxu0
        %vm5336 = vcmask 257024
        %5337 = vst.msk [vmem:[%s285] sm:$0xf] %vm5336, %v5333
        %s5338 = sand.u32 %s195, 1
        %s5339 = scalar_lea.sflag [#allocation3], %s5338
        %s5340 = sand.u32 %s195, 1
        %s5341 = smul.addr %s5340, 4
        %s5342 = scalar_lea.vmem [#allocation2], %s5341
        // Predicated region
        $region49: #{conv_stem_forward.1} parent=47 // pred_check
          %p5343 = pneg %p205
        $region50: #{conv_stem_forward.1} parent=47 // pred_check_branch
          %5345 = sbr.rel (%p5343) target = $region52
        $region51: #{conv_stem_forward.1} parent=47 // pred_region
          %s5347 = ssub.s32 64, 64
          %5348 = vsyncadd %s5339, %s5347
          %s5349 = smul.addr %s25, 4
          %s5350 = sadd.s32 %s26, %s5349
          %s5351 = smul.addr %s5350, 64
          %s5352 = scalar_lea.hbm %s7, %s5351
          %s5354 = sshll.u32 %s5342, 4
          %s5355 = int_to_ptr.vmem [resolvable:$true] %s5354
          %5357 = dma.vmem_to_hbm [thread:$0]  %s5355, 64, %s5352, %s5339
        $region52: #{conv_stem_forward.1} parent=47 // pred_fallthru
          _
      $region48: #{conv_stem_forward.1} parent=5 // pred_fallthru
        _
      %p5358 = scmp.le.s32.totalorder 2, %s16
      // Predicated region
      $region53: #{conv_stem_forward.1} parent=5 // pred_check
        %p5359 = pneg %p5358
      $region54: #{conv_stem_forward.1} parent=5 // pred_check_branch
        %5361 = sbr.rel (%p5359) target = $region56
      $region55: #{conv_stem_forward.1} parent=5 // pred_region
        %s5362 = ssub.s32 %s16, 2
        // Predicated region
        $region57: #{conv_stem_forward.1} parent=55 // pred_check
          %p5363 = pneg %p211
        $region58: #{conv_stem_forward.1} parent=55 // pred_check_branch
          %5365 = sbr.rel (%p5363) target = $region60
        $region59: #{conv_stem_forward.1} parent=55 // pred_region
          %s5366 = sand.u32 %s196, 1
          %s5367 = scalar_lea.sflag [#allocation3], %s5366
          %s5368 = sand.u32 %s196, 1
          %s5369 = smul.addr %s5368, 4
          %s5370 = scalar_lea.vmem [#allocation2], %s5369
          %5371 = dma.done %s5367, 64
        $region60: #{conv_stem_forward.1} parent=55 // pred_fallthru
          _
      $region56: #{conv_stem_forward.1} parent=5 // pred_fallthru
        _
    $region6: #{conv_stem_forward.1} parent=1 // loop_footer
      %s20 = sadd.s32 1, %s16
    $region7: #{conv_stem_forward.1} parent=1 // loop_footer_branch
      %15 = sbr.rel target = $region3
    $region8: #{conv_stem_forward.1} parent=1 // loop_exit
      _
    %5372 = vsyncpa [#allocation3], 1
    %s5373 = scalar_lea.sflag [#allocation3], 1
    %5374 = vsyncpa %s5373, 1

</llo_original>
